<compile_context>
chip_gen: v5e
topology: v5e:2x2
jax: 0.10.0
libtpu: 0.0.40
codegen_flags: <defaults>
</compile_context>

<pallas_src>
import functools

import jax
import jax.numpy as jnp
from jax.experimental import pallas as pl
from jax.experimental.pallas import tpu as pltpu

_LN_EPS = 1e-5
_BLOCK_M = 256  # row-tile for the token dimension (multiple of 8)
# TODO(synk): for production CLIP sizes on v7x (64 MiB VMEM) also tile the MLP
# hidden dim and the attention key length (flash-style); toy shapes fit easily.


def _layernorm_f32(x, g_ref, b_ref):
    """fp32 LayerNorm (matches the LayerNorm subclass that upcasts to fp32)."""
    mu = jnp.mean(x, axis=-1, keepdims=True)
    var = jnp.mean(jnp.square(x - mu), axis=-1, keepdims=True)
    xn = (x - mu) * jax.lax.rsqrt(var + _LN_EPS)
    return xn * g_ref[...].astype(jnp.float32) + b_ref[...].astype(jnp.float32)


# --------------------- fused LayerNorm + N linear heads ---------------------

def _ln_multilinear_kernel(*refs, n_out):
    x_ref, g_ref, b_ref = refs[0], refs[1], refs[2]
    wrefs = refs[3:3 + 2 * n_out]
    orefs = refs[3 + 2 * n_out:]
    xn = _layernorm_f32(x_ref[...].astype(jnp.float32), g_ref, b_ref)
    xb = xn.astype(jnp.bfloat16)                       # bf16 MXU input
    for i in range(n_out):
        w = wrefs[2 * i][...].astype(jnp.bfloat16)
        bias = wrefs[2 * i + 1][...].astype(jnp.float32)
        acc = jnp.dot(xb, w, preferred_element_type=jnp.float32) + bias
        orefs[i][...] = acc.astype(orefs[i].dtype)


def pallas_ln_linears(x, g, b, weights, biases, block_m=_BLOCK_M):
    """LayerNorm(x) followed by several linear projections, fused in one pass.

    x: (..., C);  weights[i]: (C, Ni);  biases[i]: (Ni,) -> list of (..., Ni).
    """
    lead, C = x.shape[:-1], x.shape[-1]
    x2 = x.reshape(-1, C)
    M = x2.shape[0]
    bm = M if M <= block_m else block_m
    n_out = len(weights)

    in_specs = [pl.BlockSpec((bm, C), lambda i: (i, 0)),
                pl.BlockSpec((1, C), lambda i: (0, 0)),
                pl.BlockSpec((1, C), lambda i: (0, 0))]
    args = [x2, g.reshape(1, C), b.reshape(1, C)]
    out_shapes, out_specs = [], []
    for w, bb in zip(weights, biases):
        Nout = w.shape[1]
        in_specs += [pl.BlockSpec((C, Nout), lambda i: (0, 0)),   # VMEM-resident
                     pl.BlockSpec((1, Nout), lambda i: (0, 0))]
        args += [w, bb.reshape(1, Nout)]
        out_shapes.append(jax.ShapeDtypeStruct((M, Nout), x.dtype))
        out_specs.append(pl.BlockSpec((bm, Nout), lambda i: (i, 0)))

    outs = pl.pallas_call(
        functools.partial(_ln_multilinear_kernel, n_out=n_out),
        out_shape=tuple(out_shapes),
        grid=(pl.cdiv(M, bm),),
        in_specs=in_specs,
        out_specs=tuple(out_specs),
        compiler_params=pltpu.CompilerParams(dimension_semantics=("parallel",)),
    )(*args)
    return [o.reshape(lead + (o.shape[-1],)) for o in outs]


# ------------------------ linear + residual (out proj) ----------------------

def _linear_residual_kernel(x_ref, w_ref, b_ref, res_ref, o_ref):
    acc = jnp.dot(x_ref[...].astype(jnp.bfloat16),
                  w_ref[...].astype(jnp.bfloat16),
                  preferred_element_type=jnp.float32)
    o_ref[...] = (res_ref[...].astype(jnp.float32) + acc +
                  b_ref[...].astype(jnp.float32)).astype(o_ref.dtype)


def pallas_linear_residual(x, w, b, res, block_m=_BLOCK_M):
    lead, C = x.shape[:-1], x.shape[-1]
    Nout = w.shape[1]
    x2 = x.reshape(-1, C)
    r2 = res.reshape(-1, Nout)
    M = x2.shape[0]
    bm = M if M <= block_m else block_m
    out = pl.pallas_call(
        _linear_residual_kernel,
        out_shape=jax.ShapeDtypeStruct((M, Nout), x.dtype),
        grid=(pl.cdiv(M, bm),),
        in_specs=[pl.BlockSpec((bm, C), lambda i: (i, 0)),
                  pl.BlockSpec((C, Nout), lambda i: (0, 0)),
                  pl.BlockSpec((1, Nout), lambda i: (0, 0)),
                  pl.BlockSpec((bm, Nout), lambda i: (i, 0))],
        out_specs=pl.BlockSpec((bm, Nout), lambda i: (i, 0)),
        compiler_params=pltpu.CompilerParams(dimension_semantics=("parallel",)),
    )(x2, w, b.reshape(1, Nout), r2)
    return out.reshape(lead + (Nout,))


# ------------------- fused LayerNorm + MLP (QuickGELU) + res ----------------

def _ln_mlp_residual_kernel(x_ref, g_ref, b_ref, w1_ref, b1_ref, w2_ref, b2_ref, o_ref):
    x = x_ref[...].astype(jnp.float32)
    xn = _layernorm_f32(x, g_ref, b_ref)
    h = jnp.dot(xn.astype(jnp.bfloat16), w1_ref[...].astype(jnp.bfloat16),
                preferred_element_type=jnp.float32) + b1_ref[...].astype(jnp.float32)
    h = h * jax.nn.sigmoid(1.702 * h)                  # QuickGELU in fp32
    o = jnp.dot(h.astype(jnp.bfloat16), w2_ref[...].astype(jnp.bfloat16),
                preferred_element_type=jnp.float32) + b2_ref[...].astype(jnp.float32)
    o_ref[...] = (x + o).astype(o_ref.dtype)           # residual folded in


def pallas_ln_mlp_residual(x, g, b, w1, b1, w2, b2, block_m=_BLOCK_M):
    lead, C = x.shape[:-1], x.shape[-1]
    Dh = w1.shape[1]
    x2 = x.reshape(-1, C)
    M = x2.shape[0]
    bm = M if M <= block_m else block_m
    out = pl.pallas_call(
        _ln_mlp_residual_kernel,
        out_shape=jax.ShapeDtypeStruct((M, C), x.dtype),
        grid=(pl.cdiv(M, bm),),
        in_specs=[pl.BlockSpec((bm, C), lambda i: (i, 0)),
                  pl.BlockSpec((1, C), lambda i: (0, 0)),
                  pl.BlockSpec((1, C), lambda i: (0, 0)),
                  pl.BlockSpec((C, Dh), lambda i: (0, 0)),
                  pl.BlockSpec((1, Dh), lambda i: (0, 0)),
                  pl.BlockSpec((Dh, C), lambda i: (0, 0)),
                  pl.BlockSpec((1, C), lambda i: (0, 0))],
        out_specs=pl.BlockSpec((bm, C), lambda i: (i, 0)),
        compiler_params=pltpu.CompilerParams(dimension_semantics=("parallel",)),
    )(x2, g.reshape(1, C), b.reshape(1, C), w1, b1.reshape(1, Dh), w2, b2.reshape(1, C))
    return out.reshape(lead + (C,))


# ------------------------------ multi-head attention ------------------------

def _mha_kernel(q_ref, k_ref, v_ref, o_ref, *, n_head, scale):
    Tq, C = q_ref.shape[1], q_ref.shape[2]
    Tk = k_ref.shape[1]
    D = C // n_head
    # Head split stays in VMEM (no HBM transposes); heads become the batch dim.
    q = jnp.transpose(q_ref[0].reshape(Tq, n_head, D), (1, 0, 2)).astype(jnp.bfloat16)
    k = jnp.transpose(k_ref[0].reshape(Tk, n_head, D), (1, 0, 2)).astype(jnp.bfloat16)
    v = jnp.transpose(v_ref[0].reshape(Tk, n_head, D), (1, 0, 2)).astype(jnp.bfloat16)
    s = jnp.einsum('hqd,hkd->hqk', q, k,
                   preferred_element_type=jnp.float32) * scale
    s = s - jnp.max(s, axis=-1, keepdims=True)
    p = jnp.exp(s)
    denom = jnp.sum(p, axis=-1, keepdims=True)
    p = p * pl.reciprocal(denom, approx=True)          # EUP, not VALU divide
    o = jnp.einsum('hqk,hkd->hqd', p.astype(jnp.bfloat16), v,
                   preferred_element_type=jnp.float32)
    o_ref[0] = jnp.transpose(o, (1, 0, 2)).reshape(Tq, C).astype(o_ref.dtype)


def pallas_mha(q, k, v, n_head):
    """q: (B, Tq, C), k/v: (B, Tk, C) -> (B, Tq, C). Grid over batch."""
    B, Tq, C = q.shape
    Tk = k.shape[1]
    D = C // n_head
    # TODO(synk): stream K/V (flash-style 'arbitrary' k-axis) for long Tk.
    kern = functools.partial(_mha_kernel, n_head=n_head, scale=1.0 / (D ** 0.5))
    return pl.pallas_call(
        kern,
        out_shape=jax.ShapeDtypeStruct((B, Tq, C), q.dtype),
        grid=(B,),
        in_specs=[pl.BlockSpec((1, Tq, C), lambda b: (b, 0, 0)),
                  pl.BlockSpec((1, Tk, C), lambda b: (b, 0, 0)),
                  pl.BlockSpec((1, Tk, C), lambda b: (b, 0, 0))],
        out_specs=pl.BlockSpec((1, Tq, C), lambda b: (b, 0, 0)),
        compiler_params=pltpu.CompilerParams(dimension_semantics=("parallel",)),
    )(q, k, v)


# ------------------------- depthwise 3x3x3 Conv3d ---------------------------

def _dwconv3d_kernel(x0_ref, x1_ref, x2_ref, w_ref, b_ref, o_ref):
    # x*_ref: three padded T-planes (1,1,H+2,W+2,C); o_ref: (1,1,H,W,C)
    H, W, C = o_ref.shape[2], o_ref.shape[3], o_ref.shape[4]
    wt = w_ref[...].astype(jnp.float32)                 # (27, C), loaded once
    bias = b_ref[0].astype(jnp.float32)                 # (C,)
    planes = (x0_ref[0, 0], x1_ref[0, 0], x2_ref[0, 0])
    acc = jnp.zeros((H, W, C), jnp.float32)
    for kt in range(3):
        xp = planes[kt].astype(jnp.float32)              # (H+2, W+2, C)
        for kh in range(3):
            for kw in range(3):
                acc = acc + xp[kh:kh + H, kw:kw + W, :] * wt[kt * 9 + kh * 3 + kw, :]
    o_ref[0, 0] = (acc + bias).astype(o_ref.dtype)


def pallas_dwconv3d(x, w, b):
    """Depthwise Conv3d, k=3, stride 1, pad 1, groups=C (channels-last layout).

    x: (N, T, H, W, C); w: (C, 1, 3, 3, 3); b: (C,) -> (N, T, H, W, C)."""
    N, T, H, W, C = x.shape
    xp = jnp.pad(x, ((0, 0), (1, 1), (1, 1), (1, 1), (0, 0)))
    w27 = w.reshape(C, 27).T                             # (27, C), idx = kt*9+kh*3+kw
    plane = (1, 1, H + 2, W + 2, C)
    return pl.pallas_call(
        _dwconv3d_kernel,
        out_shape=jax.ShapeDtypeStruct((N, T, H, W, C), x.dtype),
        grid=(N, T),
        in_specs=[pl.BlockSpec(plane, lambda n, t: (n, t, 0, 0, 0)),
                  pl.BlockSpec(plane, lambda n, t: (n, t + 1, 0, 0, 0)),
                  pl.BlockSpec(plane, lambda n, t: (n, t + 2, 0, 0, 0)),
                  pl.BlockSpec((27, C), lambda n, t: (0, 0)),
                  pl.BlockSpec((1, C), lambda n, t: (0, 0))],
        out_specs=pl.BlockSpec((1, 1, H, W, C), lambda n, t: (n, t, 0, 0, 0)),
        compiler_params=pltpu.CompilerParams(
            dimension_semantics=("parallel", "parallel")),
    )(xp, xp, xp, w27, b.reshape(1, C))


# ------------------------------ final combine -------------------------------

def _combine_kernel(x_ref, cls_ref, bal_ref, feats_ref, final_ref):
    # x_ref: (1, T, L, C) batch-first; cls_ref/bal_ref: (1, 1, C)
    w = jax.nn.sigmoid(bal_ref[0].astype(jnp.float32))   # (1, C)
    x = x_ref[0].astype(jnp.float32)                     # (T, L, C)
    cls = cls_ref[0].astype(jnp.float32)                 # (1, C)
    residual = jnp.mean(x[:, 0, :], axis=0, keepdims=True)   # mean over T at l=0
    feats_ref[0] = ((1.0 - w) * cls + w * residual).astype(feats_ref.dtype)
    final_ref[0] = ((1.0 - w) * cls + w * x).astype(final_ref.dtype)


def pallas_combine(xb4, cls, balance):
    """xb4: (N, T, L, C); cls: (N, 1, C); balance: (C,)."""
    N, T, L, C = xb4.shape
    feats, final_bf = pl.pallas_call(
        _combine_kernel,
        out_shape=(jax.ShapeDtypeStruct((N, 1, C), xb4.dtype),
                   jax.ShapeDtypeStruct((N, T, L, C), xb4.dtype)),
        grid=(N,),
        in_specs=[pl.BlockSpec((1, T, L, C), lambda n: (n, 0, 0, 0)),
                  pl.BlockSpec((1, 1, C), lambda n: (n, 0, 0)),
                  pl.BlockSpec((1, 1, C), lambda n: (0, 0, 0))],
        out_specs=(pl.BlockSpec((1, 1, C), lambda n: (n, 0, 0)),
                   pl.BlockSpec((1, T, L, C), lambda n: (n, 0, 0, 0))),
        compiler_params=pltpu.CompilerParams(dimension_semantics=("parallel",)),
    )(xb4, cls, balance.reshape(1, 1, C))
    return feats.reshape(N, C), final_bf


# ----------------------------- model glue (JAX) -----------------------------

def resblock_forward(x, p, n_head):
    """ResidualAttentionBlock on batch-first x: (NB, L, C)."""
    a = p['attn']
    q, k, v = pallas_ln_linears(x, p['ln1_g'], p['ln1_b'],
                                [a['wq'], a['wk'], a['wv']],
                                [a['bq'], a['bk'], a['bv']])
    o = pallas_mha(q, k, v, n_head)
    x = pallas_linear_residual(o, a['wo'], a['bo'], x)
    x = pallas_ln_mlp_residual(x, p['ln2_g'], p['ln2_b'],
                               p['mlp_w1'], p['mlp_b1'], p['mlp_w2'], p['mlp_b2'])
    return x


def extractor_forward(cls, y, p, n_head):
    """Extractor (cross-attention). cls: (N, 1, C); y: (N, S, C)."""
    a = p['attn']
    (q,) = pallas_ln_linears(cls, p['ln1_g'], p['ln1_b'], [a['wq']], [a['bq']])
    k, v = pallas_ln_linears(y, p['ln3_g'], p['ln3_b'],
                             [a['wk'], a['wv']], [a['bk'], a['bv']])
    o = pallas_mha(q, k, v, n_head)
    x = pallas_linear_residual(o, a['wo'], a['bo'], cls)
    x = pallas_ln_mlp_residual(x, p['ln2_g'], p['ln2_b'],
                               p['mlp_w1'], p['mlp_b1'], p['mlp_w2'], p['mlp_b2'])
    return x


def transformer_forward(x, params, *, T, n_head, return_list):
    """x: (L, N*T, C) sequence-first (like the PyTorch module).

    Returns (feats (N, C), final (L, N, T, C))."""
    L, NT, C = x.shape
    T_down = T
    N = NT // T_down
    H = W = int(round((L - 1) ** 0.5))

    # batch-first working layout: (N*T, L, C)   (single HBM transpose at entry)
    xb = jnp.transpose(x, (1, 0, 2))
    cls = jnp.broadcast_to(params['temporal_cls_token'].reshape(1, 1, C), (N, 1, C))

    j = -1
    for i, rp in enumerate(params['resblocks']):
        xb = resblock_forward(xb, rp, n_head)
        if i in return_list:                               # static python check
            j += 1
            tmp = xb.reshape(N, T_down, L, C)
            spatial = tmp[:, :, 1:, :].reshape(N, T_down, H, W, C)
            conv = pallas_dwconv3d(spatial, params['dpe'][j]['w'], params['dpe'][j]['b'])
            conv = conv.reshape(N, T_down, L - 1, C)
            tmp = jnp.concatenate([tmp[:, :, :1, :], tmp[:, :, 1:, :] + conv], axis=2)
            y = tmp.reshape(N, T_down * L, C)              # (t, l) ordering, reshape only
            cls = extractor_forward(cls, y, params['dec'][j], n_head)

    xb4 = xb.reshape(N, T_down, L, C)
    feats, final_bf = pallas_combine(xb4, cls, params['balance'])
    final = jnp.transpose(final_bf, (2, 0, 1, 3))          # back to (L, N, T, C)
    return feats, final


# ------------------------- deterministic parameters -------------------------

def _normal(key, shape, scale=0.02):
    return (scale * jax.random.normal(key, shape)).astype(jnp.float32)


def init_attn_params(key, C):
    ks = jax.random.split(key, 8)
    return dict(wq=_normal(ks[0], (C, C)), bq=_normal(ks[1], (C,)),
                wk=_normal(ks[2], (C, C)), bk=_normal(ks[3], (C,)),
                wv=_normal(ks[4], (C, C)), bv=_normal(ks[5], (C,)),
                wo=_normal(ks[6], (C, C)), bo=_normal(ks[7], (C,)))


def init_block_params(key, C, mlp_factor=4.0, with_ln3=False):
    d_mlp = int(round(mlp_factor * C))
    ks = jax.random.split(key, 5)
    p = dict(
        ln1_g=jnp.ones((C,), jnp.float32), ln1_b=jnp.zeros((C,), jnp.float32),
        ln2_g=jnp.ones((C,), jnp.float32), ln2_b=jnp.zeros((C,), jnp.float32),
        attn=init_attn_params(ks[0], C),
        mlp_w1=_normal(ks[1], (C, d_mlp)), mlp_b1=_normal(ks[2], (d_mlp,)),
        mlp_w2=_normal(ks[3], (d_mlp, C)), mlp_b2=_normal(ks[4], (C,)),
    )
    if with_ln3:
        p['ln3_g'] = jnp.ones((C,), jnp.float32)
        p['ln3_b'] = jnp.zeros((C,), jnp.float32)
    return p


def init_params(key, C, layers, n_layers):
    ks = jax.random.split(key, layers + 2 * n_layers + 2)
    idx = 0
    resblocks = []
    for _ in range(layers):
        resblocks.append(init_block_params(ks[idx], C)); idx += 1
    dec = []
    for _ in range(n_layers):
        dec.append(init_block_params(ks[idx], C, with_ln3=True)); idx += 1
    dpe = []
    for _ in range(n_layers):
        dpe.append(dict(w=_normal(ks[idx], (C, 1, 3, 3, 3)),
                        b=jnp.zeros((C,), jnp.float32)))   # bias init 0 like module
        idx += 1
    return dict(
        resblocks=resblocks,
        dec=dec,
        dpe=dpe,
        temporal_cls_token=_normal(ks[idx], (1, 1, C)),
        balance=_normal(ks[idx + 1], (C,)),
    )


# ----------------------------------- main -----------------------------------

if __name__ == "__main__":
    # Small config consistent with the module: width == n_dim == C,
    # layers == n_layers == len(return_list), L = H*W + 1, NT = N * t_size.
    C, heads, layers = 64, 4, 2
    T, H, W = 2, 2, 2
    L = H * W + 1
    N = 2
    NT = N * T

    key = jax.random.PRNGKey(0)
    kx, kp = jax.random.split(key)
    x = jax.random.normal(kx, (L, NT, C), dtype=jnp.float32)
    params = init_params(kp, C, layers, layers)

    fwd = jax.jit(functools.partial(
        transformer_forward, T=T, n_head=heads,
        return_list=tuple(range(layers))))        # static -> no tracer bool check
    feats, final = fwd(x, params)
    jax.block_until_ready((feats, final))

    assert feats.shape == (N, C)
    assert final.shape == (L, N, T, C)
    print("KERNEL_OK")
</pallas_src>

<mosaic_0001>
module attributes {stable_mosaic.version = 11 : i64} {
  func.func @_ln_multilinear_kernel(%arg0: i32, %arg1: memref<20x64xf32, #tpu.memory_space<vmem>>, %arg2: memref<1x64xf32, #tpu.memory_space<vmem>>, %arg3: memref<1x64xf32, #tpu.memory_space<vmem>>, %arg4: memref<64x64xf32, #tpu.memory_space<vmem>>, %arg5: memref<1x64xf32, #tpu.memory_space<vmem>>, %arg6: memref<64x64xf32, #tpu.memory_space<vmem>>, %arg7: memref<1x64xf32, #tpu.memory_space<vmem>>, %arg8: memref<64x64xf32, #tpu.memory_space<vmem>>, %arg9: memref<1x64xf32, #tpu.memory_space<vmem>>, %arg10: memref<20x64xf32, #tpu.memory_space<vmem>>, %arg11: memref<20x64xf32, #tpu.memory_space<vmem>>, %arg12: memref<20x64xf32, #tpu.memory_space<vmem>>) attributes {dimension_semantics = [#tpu.dimension_semantics<parallel>], iteration_bounds = array<i64: 1>, scalar_prefetch = 0 : i64, scratch_operands = 0 : i64, tpu.core_type = #tpu.core_type<tc>, window_params = [{transform_indices = @transform_0, window_bounds = array<i64: 20, 64>}, {pipeline_mode = #tpu.pipeline_mode<synchronous>, transform_indices = @transform_1, window_bounds = array<i64: 1, 64>}, {pipeline_mode = #tpu.pipeline_mode<synchronous>, transform_indices = @transform_2, window_bounds = array<i64: 1, 64>}, {pipeline_mode = #tpu.pipeline_mode<synchronous>, transform_indices = @transform_3, window_bounds = array<i64: 64, 64>}, {pipeline_mode = #tpu.pipeline_mode<synchronous>, transform_indices = @transform_4, window_bounds = array<i64: 1, 64>}, {pipeline_mode = #tpu.pipeline_mode<synchronous>, transform_indices = @transform_5, window_bounds = array<i64: 64, 64>}, {pipeline_mode = #tpu.pipeline_mode<synchronous>, transform_indices = @transform_6, window_bounds = array<i64: 1, 64>}, {pipeline_mode = #tpu.pipeline_mode<synchronous>, transform_indices = @transform_7, window_bounds = array<i64: 64, 64>}, {pipeline_mode = #tpu.pipeline_mode<synchronous>, transform_indices = @transform_8, window_bounds = array<i64: 1, 64>}, {transform_indices = @transform_9, window_bounds = array<i64: 20, 64>}, {transform_indices = @transform_10, window_bounds = array<i64: 20, 64>}, {transform_indices = @transform_11, window_bounds = array<i64: 20, 64>}]} {
    %c0 = arith.constant 0 : index
    %c0_0 = arith.constant 0 : index
    %0 = vector.load %arg1[%c0, %c0_0] : memref<20x64xf32, #tpu.memory_space<vmem>>, vector<20x64xf32>
    %cst = arith.constant dense<0.000000e+00> : vector<20xf32>
    %1 = vector.multi_reduction <add>, %0, %cst [1] : vector<20x64xf32> to vector<20xf32>
    %2 = vector.shape_cast %1 : vector<20xf32> to vector<20x1xf32>
    %cst_1 = arith.constant 6.400000e+01 : f32
    %3 = vector.broadcast %cst_1 : f32 to vector<20x1xf32>
    %4 = arith.divf %2, %3 : vector<20x1xf32>
    %5 = vector.broadcast %4 : vector<20x1xf32> to vector<20x64xf32>
    %6 = arith.subf %0, %5 : vector<20x64xf32>
    %7 = arith.mulf %6, %6 : vector<20x64xf32>
    %cst_2 = arith.constant dense<0.000000e+00> : vector<20xf32>
    %8 = vector.multi_reduction <add>, %7, %cst_2 [1] : vector<20x64xf32> to vector<20xf32>
    %9 = vector.shape_cast %8 : vector<20xf32> to vector<20x1xf32>
    %cst_3 = arith.constant 6.400000e+01 : f32
    %10 = vector.broadcast %cst_3 : f32 to vector<20x1xf32>
    %11 = arith.divf %9, %10 : vector<20x1xf32>
    %12 = vector.broadcast %4 : vector<20x1xf32> to vector<20x64xf32>
    %13 = arith.subf %0, %12 : vector<20x64xf32>
    %cst_4 = arith.constant 9.99999974E-6 : f32
    %14 = vector.broadcast %cst_4 : f32 to vector<20x1xf32>
    %15 = arith.addf %11, %14 : vector<20x1xf32>
    %16 = math.rsqrt %15 : vector<20x1xf32>
    %17 = vector.broadcast %16 : vector<20x1xf32> to vector<20x64xf32>
    %18 = arith.mulf %13, %17 : vector<20x64xf32>
    %c0_5 = arith.constant 0 : index
    %c0_6 = arith.constant 0 : index
    %19 = vector.load %arg2[%c0_5, %c0_6] : memref<1x64xf32, #tpu.memory_space<vmem>>, vector<1x64xf32>
    %20 = vector.broadcast %19 : vector<1x64xf32> to vector<20x64xf32>
    %21 = arith.mulf %18, %20 : vector<20x64xf32>
    %c0_7 = arith.constant 0 : index
    %c0_8 = arith.constant 0 : index
    %22 = vector.load %arg3[%c0_7, %c0_8] : memref<1x64xf32, #tpu.memory_space<vmem>>, vector<1x64xf32>
    %23 = vector.broadcast %22 : vector<1x64xf32> to vector<20x64xf32>
    %24 = arith.addf %21, %23 : vector<20x64xf32>
    %25 = arith.truncf %24 : vector<20x64xf32> to vector<20x64xbf16>
    %c0_9 = arith.constant 0 : index
    %c0_10 = arith.constant 0 : index
    %26 = vector.load %arg4[%c0_9, %c0_10] : memref<64x64xf32, #tpu.memory_space<vmem>>, vector<64x64xf32>
    %27 = arith.truncf %26 : vector<64x64xf32> to vector<64x64xbf16>
    %c0_11 = arith.constant 0 : index
    %c0_12 = arith.constant 0 : index
    %28 = vector.load %arg5[%c0_11, %c0_12] : memref<1x64xf32, #tpu.memory_space<vmem>>, vector<1x64xf32>
    %cst_13 = arith.constant dense<0.000000e+00> : vector<20x64xf32>
    %29 = tpu.matmul %25, %27, %cst_13 {dimension_numbers = #tpu.dot_dimension_numbers<[1], [0], [0], [1], [0, 0, 1, 1], [], []>} : vector<20x64xbf16>, vector<64x64xbf16>, vector<20x64xf32> -> vector<20x64xf32>
    %30 = vector.broadcast %28 : vector<1x64xf32> to vector<20x64xf32>
    %31 = arith.addf %29, %30 : vector<20x64xf32>
    %c0_14 = arith.constant 0 : index
    %c0_15 = arith.constant 0 : index
    %32 = vector.load %arg10[%c0_14, %c0_15] : memref<20x64xf32, #tpu.memory_space<vmem>>, vector<20x64xf32>
    tpu.vector_store %arg10[%c0_14, %c0_15], %31 {strides = array<i32>} : memref<20x64xf32, #tpu.memory_space<vmem>>, vector<20x64xf32>,
    %c0_16 = arith.constant 0 : index
    %c0_17 = arith.constant 0 : index
    %33 = vector.load %arg6[%c0_16, %c0_17] : memref<64x64xf32, #tpu.memory_space<vmem>>, vector<64x64xf32>
    %34 = arith.truncf %33 : vector<64x64xf32> to vector<64x64xbf16>
    %c0_18 = arith.constant 0 : index
    %c0_19 = arith.constant 0 : index
    %35 = vector.load %arg7[%c0_18, %c0_19] : memref<1x64xf32, #tpu.memory_space<vmem>>, vector<1x64xf32>
    %cst_20 = arith.constant dense<0.000000e+00> : vector<20x64xf32>
    %36 = tpu.matmul %25, %34, %cst_20 {dimension_numbers = #tpu.dot_dimension_numbers<[1], [0], [0], [1], [0, 0, 1, 1], [], []>} : vector<20x64xbf16>, vector<64x64xbf16>, vector<20x64xf32> -> vector<20x64xf32>
    %37 = vector.broadcast %35 : vector<1x64xf32> to vector<20x64xf32>
    %38 = arith.addf %36, %37 : vector<20x64xf32>
    %c0_21 = arith.constant 0 : index
    %c0_22 = arith.constant 0 : index
    %39 = vector.load %arg11[%c0_21, %c0_22] : memref<20x64xf32, #tpu.memory_space<vmem>>, vector<20x64xf32>
    tpu.vector_store %arg11[%c0_21, %c0_22], %38 {strides = array<i32>} : memref<20x64xf32, #tpu.memory_space<vmem>>, vector<20x64xf32>,
    %c0_23 = arith.constant 0 : index
    %c0_24 = arith.constant 0 : index
    %40 = vector.load %arg8[%c0_23, %c0_24] : memref<64x64xf32, #tpu.memory_space<vmem>>, vector<64x64xf32>
    %41 = arith.truncf %40 : vector<64x64xf32> to vector<64x64xbf16>
    %c0_25 = arith.constant 0 : index
    %c0_26 = arith.constant 0 : index
    %42 = vector.load %arg9[%c0_25, %c0_26] : memref<1x64xf32, #tpu.memory_space<vmem>>, vector<1x64xf32>
    %cst_27 = arith.constant dense<0.000000e+00> : vector<20x64xf32>
    %43 = tpu.matmul %25, %41, %cst_27 {dimension_numbers = #tpu.dot_dimension_numbers<[1], [0], [0], [1], [0, 0, 1, 1], [], []>} : vector<20x64xbf16>, vector<64x64xbf16>, vector<20x64xf32> -> vector<20x64xf32>
    %44 = vector.broadcast %42 : vector<1x64xf32> to vector<20x64xf32>
    %45 = arith.addf %43, %44 : vector<20x64xf32>
    %c0_28 = arith.constant 0 : index
    %c0_29 = arith.constant 0 : index
    %46 = vector.load %arg12[%c0_28, %c0_29] : memref<20x64xf32, #tpu.memory_space<vmem>>, vector<20x64xf32>
    tpu.vector_store %arg12[%c0_28, %c0_29], %45 {strides = array<i32>} : memref<20x64xf32, #tpu.memory_space<vmem>>, vector<20x64xf32>,
    return
  }
  func.func @transform_0(%arg0: i32) -> (i32, i32) {
    %c0_i32 = arith.constant 0 : i32
    %c0_i32_0 = arith.constant 0 : i32
    return %arg0, %c0_i32 : i32, i32
  }
  func.func @transform_1(%arg0: i32) -> (i32, i32) {
    %c0_i32 = arith.constant 0 : i32
    %c0_i32_0 = arith.constant 0 : i32
    %c0_i32_1 = arith.constant 0 : i32
    return %c0_i32, %c0_i32_0 : i32, i32
  }
  func.func @transform_2(%arg0: i32) -> (i32, i32) {
    %c0_i32 = arith.constant 0 : i32
    %c0_i32_0 = arith.constant 0 : i32
    %c0_i32_1 = arith.constant 0 : i32
    return %c0_i32, %c0_i32_0 : i32, i32
  }
  func.func @transform_3(%arg0: i32) -> (i32, i32) {
    %c0_i32 = arith.constant 0 : i32
    %c0_i32_0 = arith.constant 0 : i32
    %c0_i32_1 = arith.constant 0 : i32
    return %c0_i32, %c0_i32_0 : i32, i32
  }
  func.func @transform_4(%arg0: i32) -> (i32, i32) {
    %c0_i32 = arith.constant 0 : i32
    %c0_i32_0 = arith.constant 0 : i32
    %c0_i32_1 = arith.constant 0 : i32
    return %c0_i32, %c0_i32_0 : i32, i32
  }
  func.func @transform_5(%arg0: i32) -> (i32, i32) {
    %c0_i32 = arith.constant 0 : i32
    %c0_i32_0 = arith.constant 0 : i32
    %c0_i32_1 = arith.constant 0 : i32
    return %c0_i32, %c0_i32_0 : i32, i32
  }
  func.func @transform_6(%arg0: i32) -> (i32, i32) {
    %c0_i32 = arith.constant 0 : i32
    %c0_i32_0 = arith.constant 0 : i32
    %c0_i32_1 = arith.constant 0 : i32
    return %c0_i32, %c0_i32_0 : i32, i32
  }
  func.func @transform_7(%arg0: i32) -> (i32, i32) {
    %c0_i32 = arith.constant 0 : i32
    %c0_i32_0 = arith.constant 0 : i32
    %c0_i32_1 = arith.constant 0 : i32
    return %c0_i32, %c0_i32_0 : i32, i32
  }
  func.func @transform_8(%arg0: i32) -> (i32, i32) {
    %c0_i32 = arith.constant 0 : i32
    %c0_i32_0 = arith.constant 0 : i32
    %c0_i32_1 = arith.constant 0 : i32
    return %c0_i32, %c0_i32_0 : i32, i32
  }
  func.func @transform_9(%arg0: i32) -> (i32, i32) {
    %c0_i32 = arith.constant 0 : i32
    %c0_i32_0 = arith.constant 0 : i32
    return %arg0, %c0_i32 : i32, i32
  }
  func.func @transform_10(%arg0: i32) -> (i32, i32) {
    %c0_i32 = arith.constant 0 : i32
    %c0_i32_0 = arith.constant 0 : i32
    return %arg0, %c0_i32 : i32, i32
  }
  func.func @transform_11(%arg0: i32) -> (i32, i32) {
    %c0_i32 = arith.constant 0 : i32
    %c0_i32_0 = arith.constant 0 : i32
    return %arg0, %c0_i32 : i32, i32
  }
}

module attributes {stable_mosaic.version = 11 : i64} {
  func.func @_mha_kernel(%arg0: i32, %arg1: memref<1x5x64xf32, #tpu.memory_space<vmem>>, %arg2: memref<1x5x64xf32, #tpu.memory_space<vmem>>, %arg3: memref<1x5x64xf32, #tpu.memory_space<vmem>>, %arg4: memref<1x5x64xf32, #tpu.memory_space<vmem>>) attributes {dimension_semantics = [#tpu.dimension_semantics<parallel>], iteration_bounds = array<i64: 4>, scalar_prefetch = 0 : i64, scratch_operands = 0 : i64, tpu.core_type = #tpu.core_type<tc>, window_params = [{transform_indices = @transform_0, window_bounds = array<i64: 1, 5, 64>}, {transform_indices = @transform_1, window_bounds = array<i64: 1, 5, 64>}, {transform_indices = @transform_2, window_bounds = array<i64: 1, 5, 64>}, {transform_indices = @transform_3, window_bounds = array<i64: 1, 5, 64>}]} {
    %c0 = arith.constant 0 : index
    %c0_0 = arith.constant 0 : index
    %c0_1 = arith.constant 0 : index
    %0 = vector.load %arg1[%c0, %c0_0, %c0_1] : memref<1x5x64xf32, #tpu.memory_space<vmem>>, vector<1x5x64xf32>
    %1 = vector.shape_cast %0 : vector<1x5x64xf32> to vector<5x64xf32>
    %2 = vector.shape_cast %1 : vector<5x64xf32> to vector<5x4x16xf32>
    %3 = tpu.transpose %2, [1, 0, 2] : vector<5x4x16xf32> -> vector<4x5x16xf32>
    %4 = arith.truncf %3 : vector<4x5x16xf32> to vector<4x5x16xbf16>
    %c0_2 = arith.constant 0 : index
    %c0_3 = arith.constant 0 : index
    %c0_4 = arith.constant 0 : index
    %5 = vector.load %arg2[%c0_2, %c0_3, %c0_4] : memref<1x5x64xf32, #tpu.memory_space<vmem>>, vector<1x5x64xf32>
    %6 = vector.shape_cast %5 : vector<1x5x64xf32> to vector<5x64xf32>
    %7 = vector.shape_cast %6 : vector<5x64xf32> to vector<5x4x16xf32>
    %8 = tpu.transpose %7, [1, 0, 2] : vector<5x4x16xf32> -> vector<4x5x16xf32>
    %9 = arith.truncf %8 : vector<4x5x16xf32> to vector<4x5x16xbf16>
    %c0_5 = arith.constant 0 : index
    %c0_6 = arith.constant 0 : index
    %c0_7 = arith.constant 0 : index
    %10 = vector.load %arg3[%c0_5, %c0_6, %c0_7] : memref<1x5x64xf32, #tpu.memory_space<vmem>>, vector<1x5x64xf32>
    %11 = vector.shape_cast %10 : vector<1x5x64xf32> to vector<5x64xf32>
    %12 = vector.shape_cast %11 : vector<5x64xf32> to vector<5x4x16xf32>
    %13 = tpu.transpose %12, [1, 0, 2] : vector<5x4x16xf32> -> vector<4x5x16xf32>
    %14 = arith.truncf %13 : vector<4x5x16xf32> to vector<4x5x16xbf16>
    "tpu.trace_start"() <{level = 10 : i32, message = "hqd,hkd->hqk"}> : () -> ()
    %cst = arith.constant dense<0.000000e+00> : vector<4x5x5xf32>
    %15 = tpu.matmul %4, %9, %cst {dimension_numbers = #tpu.dot_dimension_numbers<[2], [2], [1], [1], [0, 0, 0, 1, 1, 1], [0], [0]>} : vector<4x5x16xbf16>, vector<4x5x16xbf16>, vector<4x5x5xf32> -> vector<4x5x5xf32>
    "tpu.trace_stop"() : () -> ()
    %cst_8 = arith.constant 2.500000e-01 : f32
    %16 = vector.broadcast %cst_8 : f32 to vector<4x5x5xf32>
    %17 = arith.mulf %15, %16 : vector<4x5x5xf32>
    %cst_9 = arith.constant dense<0xFF800000> : vector<4x5xf32>
    %18 = vector.multi_reduction <maximumf>, %17, %cst_9 [2] : vector<4x5x5xf32> to vector<4x5xf32>
    %19 = vector.shape_cast %18 : vector<4x5xf32> to vector<4x5x1xf32>
    %20 = vector.broadcast %19 : vector<4x5x1xf32> to vector<4x5x5xf32>
    %21 = arith.subf %17, %20 : vector<4x5x5xf32>
    %22 = math.exp %21 : vector<4x5x5xf32>
    %cst_10 = arith.constant dense<0.000000e+00> : vector<4x5xf32>
    %23 = vector.multi_reduction <add>, %22, %cst_10 [2] : vector<4x5x5xf32> to vector<4x5xf32>
    %24 = vector.shape_cast %23 : vector<4x5xf32> to vector<4x5x1xf32>
    %25 = tpu.reciprocal %24 {approx = true} : vector<4x5x1xf32> -> vector<4x5x1xf32>
    %26 = vector.broadcast %25 : vector<4x5x1xf32> to vector<4x5x5xf32>
    %27 = arith.mulf %22, %26 : vector<4x5x5xf32>
    %28 = arith.truncf %27 : vector<4x5x5xf32> to vector<4x5x5xbf16>
    "tpu.trace_start"() <{level = 10 : i32, message = "hqk,hkd->hqd"}> : () -> ()
    %cst_11 = arith.constant dense<0.000000e+00> : vector<4x5x16xf32>
    %29 = tpu.matmul %28, %14, %cst_11 {dimension_numbers = #tpu.dot_dimension_numbers<[2], [1], [1], [2], [0, 0, 0, 1, 1, 2], [0], [0]>} : vector<4x5x5xbf16>, vector<4x5x16xbf16>, vector<4x5x16xf32> -> vector<4x5x16xf32>
    "tpu.trace_stop"() : () -> ()
    %30 = tpu.transpose %29, [1, 0, 2] : vector<4x5x16xf32> -> vector<5x4x16xf32>
    %31 = vector.shape_cast %30 : vector<5x4x16xf32> to vector<5x64xf32>
    %c0_12 = arith.constant 0 : index
    %c0_13 = arith.constant 0 : index
    %c0_14 = arith.constant 0 : index
    %32 = vector.load %arg4[%c0_12, %c0_13, %c0_14] : memref<1x5x64xf32, #tpu.memory_space<vmem>>, vector<1x5x64xf32>
    %33 = vector.shape_cast %32 : vector<1x5x64xf32> to vector<5x64xf32>
    %34 = vector.shape_cast %31 : vector<5x64xf32> to vector<1x5x64xf32>
    tpu.vector_store %arg4[%c0_12, %c0_13, %c0_14], %34 {strides = array<i32>} : memref<1x5x64xf32, #tpu.memory_space<vmem>>, vector<1x5x64xf32>,
    return
  }
  func.func @transform_0(%arg0: i32) -> (i32, i32, i32) {
    %c0_i32 = arith.constant 0 : i32
    %c0_i32_0 = arith.constant 0 : i32
    %c0_i32_1 = arith.constant 0 : i32
    return %arg0, %c0_i32, %c0_i32_0 : i32, i32, i32
  }
  func.func @transform_1(%arg0: i32) -> (i32, i32, i32) {
    %c0_i32 = arith.constant 0 : i32
    %c0_i32_0 = arith.constant 0 : i32
    %c0_i32_1 = arith.constant 0 : i32
    return %arg0, %c0_i32, %c0_i32_0 : i32, i32, i32
  }
  func.func @transform_2(%arg0: i32) -> (i32, i32, i32) {
    %c0_i32 = arith.constant 0 : i32
    %c0_i32_0 = arith.constant 0 : i32
    %c0_i32_1 = arith.constant 0 : i32
    return %arg0, %c0_i32, %c0_i32_0 : i32, i32, i32
  }
  func.func @transform_3(%arg0: i32) -> (i32, i32, i32) {
    %c0_i32 = arith.constant 0 : i32
    %c0_i32_0 = arith.constant 0 : i32
    %c0_i32_1 = arith.constant 0 : i32
    return %arg0, %c0_i32, %c0_i32_0 : i32, i32, i32
  }
}

module attributes {stable_mosaic.version = 11 : i64} {
  func.func @_linear_residual_kernel(%arg0: i32, %arg1: memref<20x64xf32, #tpu.memory_space<vmem>>, %arg2: memref<64x64xf32, #tpu.memory_space<vmem>>, %arg3: memref<1x64xf32, #tpu.memory_space<vmem>>, %arg4: memref<20x64xf32, #tpu.memory_space<vmem>>, %arg5: memref<20x64xf32, #tpu.memory_space<vmem>>) attributes {dimension_semantics = [#tpu.dimension_semantics<parallel>], iteration_bounds = array<i64: 1>, scalar_prefetch = 0 : i64, scratch_operands = 0 : i64, tpu.core_type = #tpu.core_type<tc>, window_params = [{transform_indices = @transform_0, window_bounds = array<i64: 20, 64>}, {pipeline_mode = #tpu.pipeline_mode<synchronous>, transform_indices = @transform_1, window_bounds = array<i64: 64, 64>}, {pipeline_mode = #tpu.pipeline_mode<synchronous>, transform_indices = @transform_2, window_bounds = array<i64: 1, 64>}, {transform_indices = @transform_3, window_bounds = array<i64: 20, 64>}, {transform_indices = @transform_4, window_bounds = array<i64: 20, 64>}]} {
    %c0 = arith.constant 0 : index
    %c0_0 = arith.constant 0 : index
    %0 = vector.load %arg1[%c0, %c0_0] : memref<20x64xf32, #tpu.memory_space<vmem>>, vector<20x64xf32>
    %1 = arith.truncf %0 : vector<20x64xf32> to vector<20x64xbf16>
    %c0_1 = arith.constant 0 : index
    %c0_2 = arith.constant 0 : index
    %2 = vector.load %arg2[%c0_1, %c0_2] : memref<64x64xf32, #tpu.memory_space<vmem>>, vector<64x64xf32>
    %3 = arith.truncf %2 : vector<64x64xf32> to vector<64x64xbf16>
    %cst = arith.constant dense<0.000000e+00> : vector<20x64xf32>
    %4 = tpu.matmul %1, %3, %cst {dimension_numbers = #tpu.dot_dimension_numbers<[1], [0], [0], [1], [0, 0, 1, 1], [], []>} : vector<20x64xbf16>, vector<64x64xbf16>, vector<20x64xf32> -> vector<20x64xf32>
    %c0_3 = arith.constant 0 : index
    %c0_4 = arith.constant 0 : index
    %5 = vector.load %arg4[%c0_3, %c0_4] : memref<20x64xf32, #tpu.memory_space<vmem>>, vector<20x64xf32>
    %6 = arith.addf %5, %4 : vector<20x64xf32>
    %c0_5 = arith.constant 0 : index
    %c0_6 = arith.constant 0 : index
    %7 = vector.load %arg3[%c0_5, %c0_6] : memref<1x64xf32, #tpu.memory_space<vmem>>, vector<1x64xf32>
    %8 = vector.broadcast %7 : vector<1x64xf32> to vector<20x64xf32>
    %9 = arith.addf %6, %8 : vector<20x64xf32>
    %c0_7 = arith.constant 0 : index
    %c0_8 = arith.constant 0 : index
    %10 = vector.load %arg5[%c0_7, %c0_8] : memref<20x64xf32, #tpu.memory_space<vmem>>, vector<20x64xf32>
    tpu.vector_store %arg5[%c0_7, %c0_8], %9 {strides = array<i32>} : memref<20x64xf32, #tpu.memory_space<vmem>>, vector<20x64xf32>,
    return
  }
  func.func @transform_0(%arg0: i32) -> (i32, i32) {
    %c0_i32 = arith.constant 0 : i32
    %c0_i32_0 = arith.constant 0 : i32
    return %arg0, %c0_i32 : i32, i32
  }
  func.func @transform_1(%arg0: i32) -> (i32, i32) {
    %c0_i32 = arith.constant 0 : i32
    %c0_i32_0 = arith.constant 0 : i32
    %c0_i32_1 = arith.constant 0 : i32
    return %c0_i32, %c0_i32_0 : i32, i32
  }
  func.func @transform_2(%arg0: i32) -> (i32, i32) {
    %c0_i32 = arith.constant 0 : i32
    %c0_i32_0 = arith.constant 0 : i32
    %c0_i32_1 = arith.constant 0 : i32
    return %c0_i32, %c0_i32_0 : i32, i32
  }
  func.func @transform_3(%arg0: i32) -> (i32, i32) {
    %c0_i32 = arith.constant 0 : i32
    %c0_i32_0 = arith.constant 0 : i32
    return %arg0, %c0_i32 : i32, i32
  }
  func.func @transform_4(%arg0: i32) -> (i32, i32) {
    %c0_i32 = arith.constant 0 : i32
    %c0_i32_0 = arith.constant 0 : i32
    return %arg0, %c0_i32 : i32, i32
  }
}

module attributes {stable_mosaic.version = 11 : i64} {
  func.func @_ln_mlp_residual_kernel(%arg0: i32, %arg1: memref<20x64xf32, #tpu.memory_space<vmem>>, %arg2: memref<1x64xf32, #tpu.memory_space<vmem>>, %arg3: memref<1x64xf32, #tpu.memory_space<vmem>>, %arg4: memref<64x256xf32, #tpu.memory_space<vmem>>, %arg5: memref<1x256xf32, #tpu.memory_space<vmem>>, %arg6: memref<256x64xf32, #tpu.memory_space<vmem>>, %arg7: memref<1x64xf32, #tpu.memory_space<vmem>>, %arg8: memref<20x64xf32, #tpu.memory_space<vmem>>) attributes {dimension_semantics = [#tpu.dimension_semantics<parallel>], iteration_bounds = array<i64: 1>, scalar_prefetch = 0 : i64, scratch_operands = 0 : i64, tpu.core_type = #tpu.core_type<tc>, window_params = [{transform_indices = @transform_0, window_bounds = array<i64: 20, 64>}, {pipeline_mode = #tpu.pipeline_mode<synchronous>, transform_indices = @transform_1, window_bounds = array<i64: 1, 64>}, {pipeline_mode = #tpu.pipeline_mode<synchronous>, transform_indices = @transform_2, window_bounds = array<i64: 1, 64>}, {pipeline_mode = #tpu.pipeline_mode<synchronous>, transform_indices = @transform_3, window_bounds = array<i64: 64, 256>}, {pipeline_mode = #tpu.pipeline_mode<synchronous>, transform_indices = @transform_4, window_bounds = array<i64: 1, 256>}, {pipeline_mode = #tpu.pipeline_mode<synchronous>, transform_indices = @transform_5, window_bounds = array<i64: 256, 64>}, {pipeline_mode = #tpu.pipeline_mode<synchronous>, transform_indices = @transform_6, window_bounds = array<i64: 1, 64>}, {transform_indices = @transform_7, window_bounds = array<i64: 20, 64>}]} {
    %c0 = arith.constant 0 : index
    %c0_0 = arith.constant 0 : index
    %0 = vector.load %arg1[%c0, %c0_0] : memref<20x64xf32, #tpu.memory_space<vmem>>, vector<20x64xf32>
    %cst = arith.constant dense<0.000000e+00> : vector<20xf32>
    %1 = vector.multi_reduction <add>, %0, %cst [1] : vector<20x64xf32> to vector<20xf32>
    %2 = vector.shape_cast %1 : vector<20xf32> to vector<20x1xf32>
    %cst_1 = arith.constant 6.400000e+01 : f32
    %3 = vector.broadcast %cst_1 : f32 to vector<20x1xf32>
    %4 = arith.divf %2, %3 : vector<20x1xf32>
    %5 = vector.broadcast %4 : vector<20x1xf32> to vector<20x64xf32>
    %6 = arith.subf %0, %5 : vector<20x64xf32>
    %7 = arith.mulf %6, %6 : vector<20x64xf32>
    %cst_2 = arith.constant dense<0.000000e+00> : vector<20xf32>
    %8 = vector.multi_reduction <add>, %7, %cst_2 [1] : vector<20x64xf32> to vector<20xf32>
    %9 = vector.shape_cast %8 : vector<20xf32> to vector<20x1xf32>
    %cst_3 = arith.constant 6.400000e+01 : f32
    %10 = vector.broadcast %cst_3 : f32 to vector<20x1xf32>
    %11 = arith.divf %9, %10 : vector<20x1xf32>
    %12 = vector.broadcast %4 : vector<20x1xf32> to vector<20x64xf32>
    %13 = arith.subf %0, %12 : vector<20x64xf32>
    %cst_4 = arith.constant 9.99999974E-6 : f32
    %14 = vector.broadcast %cst_4 : f32 to vector<20x1xf32>
    %15 = arith.addf %11, %14 : vector<20x1xf32>
    %16 = math.rsqrt %15 : vector<20x1xf32>
    %17 = vector.broadcast %16 : vector<20x1xf32> to vector<20x64xf32>
    %18 = arith.mulf %13, %17 : vector<20x64xf32>
    %c0_5 = arith.constant 0 : index
    %c0_6 = arith.constant 0 : index
    %19 = vector.load %arg2[%c0_5, %c0_6] : memref<1x64xf32, #tpu.memory_space<vmem>>, vector<1x64xf32>
    %20 = vector.broadcast %19 : vector<1x64xf32> to vector<20x64xf32>
    %21 = arith.mulf %18, %20 : vector<20x64xf32>
    %c0_7 = arith.constant 0 : index
    %c0_8 = arith.constant 0 : index
    %22 = vector.load %arg3[%c0_7, %c0_8] : memref<1x64xf32, #tpu.memory_space<vmem>>, vector<1x64xf32>
    %23 = vector.broadcast %22 : vector<1x64xf32> to vector<20x64xf32>
    %24 = arith.addf %21, %23 : vector<20x64xf32>
    %25 = arith.truncf %24 : vector<20x64xf32> to vector<20x64xbf16>
    %c0_9 = arith.constant 0 : index
    %c0_10 = arith.constant 0 : index
    %26 = vector.load %arg4[%c0_9, %c0_10] : memref<64x256xf32, #tpu.memory_space<vmem>>, vector<64x256xf32>
    %27 = arith.truncf %26 : vector<64x256xf32> to vector<64x256xbf16>
    %cst_11 = arith.constant dense<0.000000e+00> : vector<20x256xf32>
    %28 = tpu.matmul %25, %27, %cst_11 {dimension_numbers = #tpu.dot_dimension_numbers<[1], [0], [0], [1], [0, 0, 1, 1], [], []>} : vector<20x64xbf16>, vector<64x256xbf16>, vector<20x256xf32> -> vector<20x256xf32>
    %c0_12 = arith.constant 0 : index
    %c0_13 = arith.constant 0 : index
    %29 = vector.load %arg5[%c0_12, %c0_13] : memref<1x256xf32, #tpu.memory_space<vmem>>, vector<1x256xf32>
    %30 = vector.broadcast %29 : vector<1x256xf32> to vector<20x256xf32>
    %31 = arith.addf %28, %30 : vector<20x256xf32>
    %cst_14 = arith.constant 1.702000e+00 : f32
    %32 = vector.broadcast %cst_14 : f32 to vector<20x256xf32>
    %33 = arith.mulf %32, %31 : vector<20x256xf32>
    %34 = arith.negf %33 : vector<20x256xf32>
    %35 = math.exp %34 : vector<20x256xf32>
    %cst_15 = arith.constant 1.000000e+00 : f32
    %36 = vector.broadcast %cst_15 : f32 to vector<20x256xf32>
    %37 = arith.addf %36, %35 : vector<20x256xf32>
    %38 = arith.divf %36, %37 : vector<20x256xf32>
    %39 = arith.mulf %31, %38 : vector<20x256xf32>
    %40 = arith.truncf %39 : vector<20x256xf32> to vector<20x256xbf16>
    %c0_16 = arith.constant 0 : index
    %c0_17 = arith.constant 0 : index
    %41 = vector.load %arg6[%c0_16, %c0_17] : memref<256x64xf32, #tpu.memory_space<vmem>>, vector<256x64xf32>
    %42 = arith.truncf %41 : vector<256x64xf32> to vector<256x64xbf16>
    %cst_18 = arith.constant dense<0.000000e+00> : vector<20x64xf32>
    %43 = tpu.matmul %40, %42, %cst_18 {dimension_numbers = #tpu.dot_dimension_numbers<[1], [0], [0], [1], [0, 0, 1, 1], [], []>} : vector<20x256xbf16>, vector<256x64xbf16>, vector<20x64xf32> -> vector<20x64xf32>
    %c0_19 = arith.constant 0 : index
    %c0_20 = arith.constant 0 : index
    %44 = vector.load %arg7[%c0_19, %c0_20] : memref<1x64xf32, #tpu.memory_space<vmem>>, vector<1x64xf32>
    %45 = vector.broadcast %44 : vector<1x64xf32> to vector<20x64xf32>
    %46 = arith.addf %43, %45 : vector<20x64xf32>
    %47 = arith.addf %0, %46 : vector<20x64xf32>
    %c0_21 = arith.constant 0 : index
    %c0_22 = arith.constant 0 : index
    %48 = vector.load %arg8[%c0_21, %c0_22] : memref<20x64xf32, #tpu.memory_space<vmem>>, vector<20x64xf32>
    tpu.vector_store %arg8[%c0_21, %c0_22], %47 {strides = array<i32>} : memref<20x64xf32, #tpu.memory_space<vmem>>, vector<20x64xf32>,
    return
  }
  func.func @transform_0(%arg0: i32) -> (i32, i32) {
    %c0_i32 = arith.constant 0 : i32
    %c0_i32_0 = arith.constant 0 : i32
    return %arg0, %c0_i32 : i32, i32
  }
  func.func @transform_1(%arg0: i32) -> (i32, i32) {
    %c0_i32 = arith.constant 0 : i32
    %c0_i32_0 = arith.constant 0 : i32
    %c0_i32_1 = arith.constant 0 : i32
    return %c0_i32, %c0_i32_0 : i32, i32
  }
  func.func @transform_2(%arg0: i32) -> (i32, i32) {
    %c0_i32 = arith.constant 0 : i32
    %c0_i32_0 = arith.constant 0 : i32
    %c0_i32_1 = arith.constant 0 : i32
    return %c0_i32, %c0_i32_0 : i32, i32
  }
  func.func @transform_3(%arg0: i32) -> (i32, i32) {
    %c0_i32 = arith.constant 0 : i32
    %c0_i32_0 = arith.constant 0 : i32
    %c0_i32_1 = arith.constant 0 : i32
    return %c0_i32, %c0_i32_0 : i32, i32
  }
  func.func @transform_4(%arg0: i32) -> (i32, i32) {
    %c0_i32 = arith.constant 0 : i32
    %c0_i32_0 = arith.constant 0 : i32
    %c0_i32_1 = arith.constant 0 : i32
    return %c0_i32, %c0_i32_0 : i32, i32
  }
  func.func @transform_5(%arg0: i32) -> (i32, i32) {
    %c0_i32 = arith.constant 0 : i32
    %c0_i32_0 = arith.constant 0 : i32
    %c0_i32_1 = arith.constant 0 : i32
    return %c0_i32, %c0_i32_0 : i32, i32
  }
  func.func @transform_6(%arg0: i32) -> (i32, i32) {
    %c0_i32 = arith.constant 0 : i32
    %c0_i32_0 = arith.constant 0 : i32
    %c0_i32_1 = arith.constant 0 : i32
    return %c0_i32, %c0_i32_0 : i32, i32
  }
  func.func @transform_7(%arg0: i32) -> (i32, i32) {
    %c0_i32 = arith.constant 0 : i32
    %c0_i32_0 = arith.constant 0 : i32
    return %arg0, %c0_i32 : i32, i32
  }
}

module attributes {stable_mosaic.version = 11 : i64} {
  func.func @_ln_multilinear_kernel(%arg0: i32, %arg1: memref<20x64xf32, #tpu.memory_space<vmem>>, %arg2: memref<1x64xf32, #tpu.memory_space<vmem>>, %arg3: memref<1x64xf32, #tpu.memory_space<vmem>>, %arg4: memref<64x64xf32, #tpu.memory_space<vmem>>, %arg5: memref<1x64xf32, #tpu.memory_space<vmem>>, %arg6: memref<64x64xf32, #tpu.memory_space<vmem>>, %arg7: memref<1x64xf32, #tpu.memory_space<vmem>>, %arg8: memref<64x64xf32, #tpu.memory_space<vmem>>, %arg9: memref<1x64xf32, #tpu.memory_space<vmem>>, %arg10: memref<20x64xf32, #tpu.memory_space<vmem>>, %arg11: memref<20x64xf32, #tpu.memory_space<vmem>>, %arg12: memref<20x64xf32, #tpu.memory_space<vmem>>) attributes {dimension_semantics = [#tpu.dimension_semantics<parallel>], iteration_bounds = array<i64: 1>, scalar_prefetch = 0 : i64, scratch_operands = 0 : i64, tpu.core_type = #tpu.core_type<tc>, window_params = [{transform_indices = @transform_0, window_bounds = array<i64: 20, 64>}, {pipeline_mode = #tpu.pipeline_mode<synchronous>, transform_indices = @transform_1, window_bounds = array<i64: 1, 64>}, {pipeline_mode = #tpu.pipeline_mode<synchronous>, transform_indices = @transform_2, window_bounds = array<i64: 1, 64>}, {pipeline_mode = #tpu.pipeline_mode<synchronous>, transform_indices = @transform_3, window_bounds = array<i64: 64, 64>}, {pipeline_mode = #tpu.pipeline_mode<synchronous>, transform_indices = @transform_4, window_bounds = array<i64: 1, 64>}, {pipeline_mode = #tpu.pipeline_mode<synchronous>, transform_indices = @transform_5, window_bounds = array<i64: 64, 64>}, {pipeline_mode = #tpu.pipeline_mode<synchronous>, transform_indices = @transform_6, window_bounds = array<i64: 1, 64>}, {pipeline_mode = #tpu.pipeline_mode<synchronous>, transform_indices = @transform_7, window_bounds = array<i64: 64, 64>}, {pipeline_mode = #tpu.pipeline_mode<synchronous>, transform_indices = @transform_8, window_bounds = array<i64: 1, 64>}, {transform_indices = @transform_9, window_bounds = array<i64: 20, 64>}, {transform_indices = @transform_10, window_bounds = array<i64: 20, 64>}, {transform_indices = @transform_11, window_bounds = array<i64: 20, 64>}]} {
    %c0 = arith.constant 0 : index
    %c0_0 = arith.constant 0 : index
    %0 = vector.load %arg1[%c0, %c0_0] : memref<20x64xf32, #tpu.memory_space<vmem>>, vector<20x64xf32>
    %cst = arith.constant dense<0.000000e+00> : vector<20xf32>
    %1 = vector.multi_reduction <add>, %0, %cst [1] : vector<20x64xf32> to vector<20xf32>
    %2 = vector.shape_cast %1 : vector<20xf32> to vector<20x1xf32>
    %cst_1 = arith.constant 6.400000e+01 : f32
    %3 = vector.broadcast %cst_1 : f32 to vector<20x1xf32>
    %4 = arith.divf %2, %3 : vector<20x1xf32>
    %5 = vector.broadcast %4 : vector<20x1xf32> to vector<20x64xf32>
    %6 = arith.subf %0, %5 : vector<20x64xf32>
    %7 = arith.mulf %6, %6 : vector<20x64xf32>
    %cst_2 = arith.constant dense<0.000000e+00> : vector<20xf32>
    %8 = vector.multi_reduction <add>, %7, %cst_2 [1] : vector<20x64xf32> to vector<20xf32>
    %9 = vector.shape_cast %8 : vector<20xf32> to vector<20x1xf32>
    %cst_3 = arith.constant 6.400000e+01 : f32
    %10 = vector.broadcast %cst_3 : f32 to vector<20x1xf32>
    %11 = arith.divf %9, %10 : vector<20x1xf32>
    %12 = vector.broadcast %4 : vector<20x1xf32> to vector<20x64xf32>
    %13 = arith.subf %0, %12 : vector<20x64xf32>
    %cst_4 = arith.constant 9.99999974E-6 : f32
    %14 = vector.broadcast %cst_4 : f32 to vector<20x1xf32>
    %15 = arith.addf %11, %14 : vector<20x1xf32>
    %16 = math.rsqrt %15 : vector<20x1xf32>
    %17 = vector.broadcast %16 : vector<20x1xf32> to vector<20x64xf32>
    %18 = arith.mulf %13, %17 : vector<20x64xf32>
    %c0_5 = arith.constant 0 : index
    %c0_6 = arith.constant 0 : index
    %19 = vector.load %arg2[%c0_5, %c0_6] : memref<1x64xf32, #tpu.memory_space<vmem>>, vector<1x64xf32>
    %20 = vector.broadcast %19 : vector<1x64xf32> to vector<20x64xf32>
    %21 = arith.mulf %18, %20 : vector<20x64xf32>
    %c0_7 = arith.constant 0 : index
    %c0_8 = arith.constant 0 : index
    %22 = vector.load %arg3[%c0_7, %c0_8] : memref<1x64xf32, #tpu.memory_space<vmem>>, vector<1x64xf32>
    %23 = vector.broadcast %22 : vector<1x64xf32> to vector<20x64xf32>
    %24 = arith.addf %21, %23 : vector<20x64xf32>
    %25 = arith.truncf %24 : vector<20x64xf32> to vector<20x64xbf16>
    %c0_9 = arith.constant 0 : index
    %c0_10 = arith.constant 0 : index
    %26 = vector.load %arg4[%c0_9, %c0_10] : memref<64x64xf32, #tpu.memory_space<vmem>>, vector<64x64xf32>
    %27 = arith.truncf %26 : vector<64x64xf32> to vector<64x64xbf16>
    %c0_11 = arith.constant 0 : index
    %c0_12 = arith.constant 0 : index
    %28 = vector.load %arg5[%c0_11, %c0_12] : memref<1x64xf32, #tpu.memory_space<vmem>>, vector<1x64xf32>
    %cst_13 = arith.constant dense<0.000000e+00> : vector<20x64xf32>
    %29 = tpu.matmul %25, %27, %cst_13 {dimension_numbers = #tpu.dot_dimension_numbers<[1], [0], [0], [1], [0, 0, 1, 1], [], []>} : vector<20x64xbf16>, vector<64x64xbf16>, vector<20x64xf32> -> vector<20x64xf32>
    %30 = vector.broadcast %28 : vector<1x64xf32> to vector<20x64xf32>
    %31 = arith.addf %29, %30 : vector<20x64xf32>
    %c0_14 = arith.constant 0 : index
    %c0_15 = arith.constant 0 : index
    %32 = vector.load %arg10[%c0_14, %c0_15] : memref<20x64xf32, #tpu.memory_space<vmem>>, vector<20x64xf32>
    tpu.vector_store %arg10[%c0_14, %c0_15], %31 {strides = array<i32>} : memref<20x64xf32, #tpu.memory_space<vmem>>, vector<20x64xf32>,
    %c0_16 = arith.constant 0 : index
    %c0_17 = arith.constant 0 : index
    %33 = vector.load %arg6[%c0_16, %c0_17] : memref<64x64xf32, #tpu.memory_space<vmem>>, vector<64x64xf32>
    %34 = arith.truncf %33 : vector<64x64xf32> to vector<64x64xbf16>
    %c0_18 = arith.constant 0 : index
    %c0_19 = arith.constant 0 : index
    %35 = vector.load %arg7[%c0_18, %c0_19] : memref<1x64xf32, #tpu.memory_space<vmem>>, vector<1x64xf32>
    %cst_20 = arith.constant dense<0.000000e+00> : vector<20x64xf32>
    %36 = tpu.matmul %25, %34, %cst_20 {dimension_numbers = #tpu.dot_dimension_numbers<[1], [0], [0], [1], [0, 0, 1, 1], [], []>} : vector<20x64xbf16>, vector<64x64xbf16>, vector<20x64xf32> -> vector<20x64xf32>
    %37 = vector.broadcast %35 : vector<1x64xf32> to vector<20x64xf32>
    %38 = arith.addf %36, %37 : vector<20x64xf32>
    %c0_21 = arith.constant 0 : index
    %c0_22 = arith.constant 0 : index
    %39 = vector.load %arg11[%c0_21, %c0_22] : memref<20x64xf32, #tpu.memory_space<vmem>>, vector<20x64xf32>
    tpu.vector_store %arg11[%c0_21, %c0_22], %38 {strides = array<i32>} : memref<20x64xf32, #tpu.memory_space<vmem>>, vector<20x64xf32>,
    %c0_23 = arith.constant 0 : index
    %c0_24 = arith.constant 0 : index
    %40 = vector.load %arg8[%c0_23, %c0_24] : memref<64x64xf32, #tpu.memory_space<vmem>>, vector<64x64xf32>
    %41 = arith.truncf %40 : vector<64x64xf32> to vector<64x64xbf16>
    %c0_25 = arith.constant 0 : index
    %c0_26 = arith.constant 0 : index
    %42 = vector.load %arg9[%c0_25, %c0_26] : memref<1x64xf32, #tpu.memory_space<vmem>>, vector<1x64xf32>
    %cst_27 = arith.constant dense<0.000000e+00> : vector<20x64xf32>
    %43 = tpu.matmul %25, %41, %cst_27 {dimension_numbers = #tpu.dot_dimension_numbers<[1], [0], [0], [1], [0, 0, 1, 1], [], []>} : vector<20x64xbf16>, vector<64x64xbf16>, vector<20x64xf32> -> vector<20x64xf32>
    %44 = vector.broadcast %42 : vector<1x64xf32> to vector<20x64xf32>
    %45 = arith.addf %43, %44 : vector<20x64xf32>
    %c0_28 = arith.constant 0 : index
    %c0_29 = arith.constant 0 : index
    %46 = vector.load %arg12[%c0_28, %c0_29] : memref<20x64xf32, #tpu.memory_space<vmem>>, vector<20x64xf32>
    tpu.vector_store %arg12[%c0_28, %c0_29], %45 {strides = array<i32>} : memref<20x64xf32, #tpu.memory_space<vmem>>, vector<20x64xf32>,
    return
  }
  func.func @transform_0(%arg0: i32) -> (i32, i32) {
    %c0_i32 = arith.constant 0 : i32
    %c0_i32_0 = arith.constant 0 : i32
    return %arg0, %c0_i32 : i32, i32
  }
  func.func @transform_1(%arg0: i32) -> (i32, i32) {
    %c0_i32 = arith.constant 0 : i32
    %c0_i32_0 = arith.constant 0 : i32
    %c0_i32_1 = arith.constant 0 : i32
    return %c0_i32, %c0_i32_0 : i32, i32
  }
  func.func @transform_2(%arg0: i32) -> (i32, i32) {
    %c0_i32 = arith.constant 0 : i32
    %c0_i32_0 = arith.constant 0 : i32
    %c0_i32_1 = arith.constant 0 : i32
    return %c0_i32, %c0_i32_0 : i32, i32
  }
  func.func @transform_3(%arg0: i32) -> (i32, i32) {
    %c0_i32 = arith.constant 0 : i32
    %c0_i32_0 = arith.constant 0 : i32
    %c0_i32_1 = arith.constant 0 : i32
    return %c0_i32, %c0_i32_0 : i32, i32
  }
  func.func @transform_4(%arg0: i32) -> (i32, i32) {
    %c0_i32 = arith.constant 0 : i32
    %c0_i32_0 = arith.constant 0 : i32
    %c0_i32_1 = arith.constant 0 : i32
    return %c0_i32, %c0_i32_0 : i32, i32
  }
  func.func @transform_5(%arg0: i32) -> (i32, i32) {
    %c0_i32 = arith.constant 0 : i32
    %c0_i32_0 = arith.constant 0 : i32
    %c0_i32_1 = arith.constant 0 : i32
    return %c0_i32, %c0_i32_0 : i32, i32
  }
  func.func @transform_6(%arg0: i32) -> (i32, i32) {
    %c0_i32 = arith.constant 0 : i32
    %c0_i32_0 = arith.constant 0 : i32
    %c0_i32_1 = arith.constant 0 : i32
    return %c0_i32, %c0_i32_0 : i32, i32
  }
  func.func @transform_7(%arg0: i32) -> (i32, i32) {
    %c0_i32 = arith.constant 0 : i32
    %c0_i32_0 = arith.constant 0 : i32
    %c0_i32_1 = arith.constant 0 : i32
    return %c0_i32, %c0_i32_0 : i32, i32
  }
  func.func @transform_8(%arg0: i32) -> (i32, i32) {
    %c0_i32 = arith.constant 0 : i32
    %c0_i32_0 = arith.constant 0 : i32
    %c0_i32_1 = arith.constant 0 : i32
    return %c0_i32, %c0_i32_0 : i32, i32
  }
  func.func @transform_9(%arg0: i32) -> (i32, i32) {
    %c0_i32 = arith.constant 0 : i32
    %c0_i32_0 = arith.constant 0 : i32
    return %arg0, %c0_i32 : i32, i32
  }
  func.func @transform_10(%arg0: i32) -> (i32, i32) {
    %c0_i32 = arith.constant 0 : i32
    %c0_i32_0 = arith.constant 0 : i32
    return %arg0, %c0_i32 : i32, i32
  }
  func.func @transform_11(%arg0: i32) -> (i32, i32) {
    %c0_i32 = arith.constant 0 : i32
    %c0_i32_0 = arith.constant 0 : i32
    return %arg0, %c0_i32 : i32, i32
  }
}

module attributes {stable_mosaic.version = 11 : i64} {
  func.func @_ln_multilinear_kernel(%arg0: i32, %arg1: memref<2x64xf32, #tpu.memory_space<vmem>>, %arg2: memref<1x64xf32, #tpu.memory_space<vmem>>, %arg3: memref<1x64xf32, #tpu.memory_space<vmem>>, %arg4: memref<64x64xf32, #tpu.memory_space<vmem>>, %arg5: memref<1x64xf32, #tpu.memory_space<vmem>>, %arg6: memref<2x64xf32, #tpu.memory_space<vmem>>) attributes {dimension_semantics = [#tpu.dimension_semantics<parallel>], iteration_bounds = array<i64: 1>, scalar_prefetch = 0 : i64, scratch_operands = 0 : i64, tpu.core_type = #tpu.core_type<tc>, window_params = [{transform_indices = @transform_0, window_bounds = array<i64: 2, 64>}, {pipeline_mode = #tpu.pipeline_mode<synchronous>, transform_indices = @transform_1, window_bounds = array<i64: 1, 64>}, {pipeline_mode = #tpu.pipeline_mode<synchronous>, transform_indices = @transform_2, window_bounds = array<i64: 1, 64>}, {pipeline_mode = #tpu.pipeline_mode<synchronous>, transform_indices = @transform_3, window_bounds = array<i64: 64, 64>}, {pipeline_mode = #tpu.pipeline_mode<synchronous>, transform_indices = @transform_4, window_bounds = array<i64: 1, 64>}, {transform_indices = @transform_5, window_bounds = array<i64: 2, 64>}]} {
    %c0 = arith.constant 0 : index
    %c0_0 = arith.constant 0 : index
    %0 = vector.load %arg1[%c0, %c0_0] : memref<2x64xf32, #tpu.memory_space<vmem>>, vector<2x64xf32>
    %cst = arith.constant dense<0.000000e+00> : vector<2xf32>
    %1 = vector.multi_reduction <add>, %0, %cst [1] : vector<2x64xf32> to vector<2xf32>
    %2 = vector.shape_cast %1 : vector<2xf32> to vector<2x1xf32>
    %cst_1 = arith.constant 6.400000e+01 : f32
    %3 = vector.broadcast %cst_1 : f32 to vector<2x1xf32>
    %4 = arith.divf %2, %3 : vector<2x1xf32>
    %5 = vector.broadcast %4 : vector<2x1xf32> to vector<2x64xf32>
    %6 = arith.subf %0, %5 : vector<2x64xf32>
    %7 = arith.mulf %6, %6 : vector<2x64xf32>
    %cst_2 = arith.constant dense<0.000000e+00> : vector<2xf32>
    %8 = vector.multi_reduction <add>, %7, %cst_2 [1] : vector<2x64xf32> to vector<2xf32>
    %9 = vector.shape_cast %8 : vector<2xf32> to vector<2x1xf32>
    %cst_3 = arith.constant 6.400000e+01 : f32
    %10 = vector.broadcast %cst_3 : f32 to vector<2x1xf32>
    %11 = arith.divf %9, %10 : vector<2x1xf32>
    %12 = vector.broadcast %4 : vector<2x1xf32> to vector<2x64xf32>
    %13 = arith.subf %0, %12 : vector<2x64xf32>
    %cst_4 = arith.constant 9.99999974E-6 : f32
    %14 = vector.broadcast %cst_4 : f32 to vector<2x1xf32>
    %15 = arith.addf %11, %14 : vector<2x1xf32>
    %16 = math.rsqrt %15 : vector<2x1xf32>
    %17 = vector.broadcast %16 : vector<2x1xf32> to vector<2x64xf32>
    %18 = arith.mulf %13, %17 : vector<2x64xf32>
    %c0_5 = arith.constant 0 : index
    %c0_6 = arith.constant 0 : index
    %19 = vector.load %arg2[%c0_5, %c0_6] : memref<1x64xf32, #tpu.memory_space<vmem>>, vector<1x64xf32>
    %20 = vector.broadcast %19 : vector<1x64xf32> to vector<2x64xf32>
    %21 = arith.mulf %18, %20 : vector<2x64xf32>
    %c0_7 = arith.constant 0 : index
    %c0_8 = arith.constant 0 : index
    %22 = vector.load %arg3[%c0_7, %c0_8] : memref<1x64xf32, #tpu.memory_space<vmem>>, vector<1x64xf32>
    %23 = vector.broadcast %22 : vector<1x64xf32> to vector<2x64xf32>
    %24 = arith.addf %21, %23 : vector<2x64xf32>
    %25 = arith.truncf %24 : vector<2x64xf32> to vector<2x64xbf16>
    %c0_9 = arith.constant 0 : index
    %c0_10 = arith.constant 0 : index
    %26 = vector.load %arg4[%c0_9, %c0_10] : memref<64x64xf32, #tpu.memory_space<vmem>>, vector<64x64xf32>
    %27 = arith.truncf %26 : vector<64x64xf32> to vector<64x64xbf16>
    %c0_11 = arith.constant 0 : index
    %c0_12 = arith.constant 0 : index
    %28 = vector.load %arg5[%c0_11, %c0_12] : memref<1x64xf32, #tpu.memory_space<vmem>>, vector<1x64xf32>
    %cst_13 = arith.constant dense<0.000000e+00> : vector<2x64xf32>
    %29 = tpu.matmul %25, %27, %cst_13 {dimension_numbers = #tpu.dot_dimension_numbers<[1], [0], [0], [1], [0, 0, 1, 1], [], []>} : vector<2x64xbf16>, vector<64x64xbf16>, vector<2x64xf32> -> vector<2x64xf32>
    %30 = vector.broadcast %28 : vector<1x64xf32> to vector<2x64xf32>
    %31 = arith.addf %29, %30 : vector<2x64xf32>
    %c0_14 = arith.constant 0 : index
    %c0_15 = arith.constant 0 : index
    %32 = vector.load %arg6[%c0_14, %c0_15] : memref<2x64xf32, #tpu.memory_space<vmem>>, vector<2x64xf32>
    tpu.vector_store %arg6[%c0_14, %c0_15], %31 {strides = array<i32>} : memref<2x64xf32, #tpu.memory_space<vmem>>, vector<2x64xf32>,
    return
  }
  func.func @transform_0(%arg0: i32) -> (i32, i32) {
    %c0_i32 = arith.constant 0 : i32
    %c0_i32_0 = arith.constant 0 : i32
    return %arg0, %c0_i32 : i32, i32
  }
  func.func @transform_1(%arg0: i32) -> (i32, i32) {
    %c0_i32 = arith.constant 0 : i32
    %c0_i32_0 = arith.constant 0 : i32
    %c0_i32_1 = arith.constant 0 : i32
    return %c0_i32, %c0_i32_0 : i32, i32
  }
  func.func @transform_2(%arg0: i32) -> (i32, i32) {
    %c0_i32 = arith.constant 0 : i32
    %c0_i32_0 = arith.constant 0 : i32
    %c0_i32_1 = arith.constant 0 : i32
    return %c0_i32, %c0_i32_0 : i32, i32
  }
  func.func @transform_3(%arg0: i32) -> (i32, i32) {
    %c0_i32 = arith.constant 0 : i32
    %c0_i32_0 = arith.constant 0 : i32
    %c0_i32_1 = arith.constant 0 : i32
    return %c0_i32, %c0_i32_0 : i32, i32
  }
  func.func @transform_4(%arg0: i32) -> (i32, i32) {
    %c0_i32 = arith.constant 0 : i32
    %c0_i32_0 = arith.constant 0 : i32
    %c0_i32_1 = arith.constant 0 : i32
    return %c0_i32, %c0_i32_0 : i32, i32
  }
  func.func @transform_5(%arg0: i32) -> (i32, i32) {
    %c0_i32 = arith.constant 0 : i32
    %c0_i32_0 = arith.constant 0 : i32
    return %arg0, %c0_i32 : i32, i32
  }
}

module attributes {stable_mosaic.version = 11 : i64} {
  func.func @_dwconv3d_kernel(%arg0: i32, %arg1: i32, %arg2: memref<1x1x4x4x64xf32, #tpu.memory_space<vmem>>, %arg3: memref<1x1x4x4x64xf32, #tpu.memory_space<vmem>>, %arg4: memref<1x1x4x4x64xf32, #tpu.memory_space<vmem>>, %arg5: memref<27x64xf32, #tpu.memory_space<vmem>>, %arg6: memref<1x64xf32, #tpu.memory_space<vmem>>, %arg7: memref<1x1x2x2x64xf32, #tpu.memory_space<vmem>>) attributes {dimension_semantics = [#tpu.dimension_semantics<parallel>, #tpu.dimension_semantics<parallel>], iteration_bounds = array<i64: 2, 2>, scalar_prefetch = 0 : i64, scratch_operands = 0 : i64, tpu.core_type = #tpu.core_type<tc>, window_params = [{transform_indices = @transform_0, window_bounds = array<i64: 1, 1, 4, 4, 64>}, {transform_indices = @transform_1, window_bounds = array<i64: 1, 1, 4, 4, 64>}, {transform_indices = @transform_2, window_bounds = array<i64: 1, 1, 4, 4, 64>}, {pipeline_mode = #tpu.pipeline_mode<synchronous>, transform_indices = @transform_3, window_bounds = array<i64: 27, 64>}, {pipeline_mode = #tpu.pipeline_mode<synchronous>, transform_indices = @transform_4, window_bounds = array<i64: 1, 64>}, {transform_indices = @transform_5, window_bounds = array<i64: 1, 1, 2, 2, 64>}]} {
    %c0 = arith.constant 0 : index
    %c0_0 = arith.constant 0 : index
    %0 = vector.load %arg5[%c0, %c0_0] : memref<27x64xf32, #tpu.memory_space<vmem>>, vector<27x64xf32>
    %c0_1 = arith.constant 0 : index
    %c0_2 = arith.constant 0 : index
    %1 = vector.load %arg6[%c0_1, %c0_2] : memref<1x64xf32, #tpu.memory_space<vmem>>, vector<1x64xf32>
    %2 = vector.shape_cast %1 : vector<1x64xf32> to vector<64xf32>
    %c0_3 = arith.constant 0 : index
    %c0_4 = arith.constant 0 : index
    %c0_5 = arith.constant 0 : index
    %c0_6 = arith.constant 0 : index
    %c0_7 = arith.constant 0 : index
    %3 = vector.load %arg2[%c0_3, %c0_4, %c0_5, %c0_6, %c0_7] : memref<1x1x4x4x64xf32, #tpu.memory_space<vmem>>, vector<1x1x4x4x64xf32>
    %4 = vector.shape_cast %3 : vector<1x1x4x4x64xf32> to vector<4x4x64xf32>
    %c0_8 = arith.constant 0 : index
    %c0_9 = arith.constant 0 : index
    %c0_10 = arith.constant 0 : index
    %c0_11 = arith.constant 0 : index
    %c0_12 = arith.constant 0 : index
    %5 = vector.load %arg3[%c0_8, %c0_9, %c0_10, %c0_11, %c0_12] : memref<1x1x4x4x64xf32, #tpu.memory_space<vmem>>, vector<1x1x4x4x64xf32>
    %6 = vector.shape_cast %5 : vector<1x1x4x4x64xf32> to vector<4x4x64xf32>
    %c0_13 = arith.constant 0 : index
    %c0_14 = arith.constant 0 : index
    %c0_15 = arith.constant 0 : index
    %c0_16 = arith.constant 0 : index
    %c0_17 = arith.constant 0 : index
    %7 = vector.load %arg4[%c0_13, %c0_14, %c0_15, %c0_16, %c0_17] : memref<1x1x4x4x64xf32, #tpu.memory_space<vmem>>, vector<1x1x4x4x64xf32>
    %8 = vector.shape_cast %7 : vector<1x1x4x4x64xf32> to vector<4x4x64xf32>
    %cst = arith.constant 0.000000e+00 : f32
    %9 = vector.broadcast %cst : f32 to vector<2x2x64xf32>
    %10 = vector.extract_strided_slice %4 {offsets = [0, 0, 0], sizes = [2, 2, 64], strides = [1, 1, 1]} : vector<4x4x64xf32> to vector<2x2x64xf32>
    %11 = vector.extract_strided_slice %0 {offsets = [0, 0], sizes = [1, 64], strides = [1, 1]} : vector<27x64xf32> to vector<1x64xf32>
    %12 = vector.shape_cast %11 : vector<1x64xf32> to vector<64xf32>
    %13 = vector.shape_cast %12 : vector<64xf32> to vector<1x1x64xf32>
    %14 = vector.broadcast %13 : vector<1x1x64xf32> to vector<2x2x64xf32>
    %15 = arith.mulf %10, %14 : vector<2x2x64xf32>
    %16 = arith.addf %9, %15 : vector<2x2x64xf32>
    %17 = vector.extract_strided_slice %4 {offsets = [0, 1, 0], sizes = [2, 2, 64], strides = [1, 1, 1]} : vector<4x4x64xf32> to vector<2x2x64xf32>
    %18 = vector.extract_strided_slice %0 {offsets = [1, 0], sizes = [1, 64], strides = [1, 1]} : vector<27x64xf32> to vector<1x64xf32>
    %19 = vector.shape_cast %18 : vector<1x64xf32> to vector<64xf32>
    %20 = vector.shape_cast %19 : vector<64xf32> to vector<1x1x64xf32>
    %21 = vector.broadcast %20 : vector<1x1x64xf32> to vector<2x2x64xf32>
    %22 = arith.mulf %17, %21 : vector<2x2x64xf32>
    %23 = arith.addf %16, %22 : vector<2x2x64xf32>
    %24 = vector.extract_strided_slice %4 {offsets = [0, 2, 0], sizes = [2, 2, 64], strides = [1, 1, 1]} : vector<4x4x64xf32> to vector<2x2x64xf32>
    %25 = vector.extract_strided_slice %0 {offsets = [2, 0], sizes = [1, 64], strides = [1, 1]} : vector<27x64xf32> to vector<1x64xf32>
    %26 = vector.shape_cast %25 : vector<1x64xf32> to vector<64xf32>
    %27 = vector.shape_cast %26 : vector<64xf32> to vector<1x1x64xf32>
    %28 = vector.broadcast %27 : vector<1x1x64xf32> to vector<2x2x64xf32>
    %29 = arith.mulf %24, %28 : vector<2x2x64xf32>
    %30 = arith.addf %23, %29 : vector<2x2x64xf32>
    %31 = vector.extract_strided_slice %4 {offsets = [1, 0, 0], sizes = [2, 2, 64], strides = [1, 1, 1]} : vector<4x4x64xf32> to vector<2x2x64xf32>
    %32 = vector.extract_strided_slice %0 {offsets = [3, 0], sizes = [1, 64], strides = [1, 1]} : vector<27x64xf32> to vector<1x64xf32>
    %33 = vector.shape_cast %32 : vector<1x64xf32> to vector<64xf32>
    %34 = vector.shape_cast %33 : vector<64xf32> to vector<1x1x64xf32>
    %35 = vector.broadcast %34 : vector<1x1x64xf32> to vector<2x2x64xf32>
    %36 = arith.mulf %31, %35 : vector<2x2x64xf32>
    %37 = arith.addf %30, %36 : vector<2x2x64xf32>
    %38 = vector.extract_strided_slice %4 {offsets = [1, 1, 0], sizes = [2, 2, 64], strides = [1, 1, 1]} : vector<4x4x64xf32> to vector<2x2x64xf32>
    %39 = vector.extract_strided_slice %0 {offsets = [4, 0], sizes = [1, 64], strides = [1, 1]} : vector<27x64xf32> to vector<1x64xf32>
    %40 = vector.shape_cast %39 : vector<1x64xf32> to vector<64xf32>
    %41 = vector.shape_cast %40 : vector<64xf32> to vector<1x1x64xf32>
    %42 = vector.broadcast %41 : vector<1x1x64xf32> to vector<2x2x64xf32>
    %43 = arith.mulf %38, %42 : vector<2x2x64xf32>
    %44 = arith.addf %37, %43 : vector<2x2x64xf32>
    %45 = vector.extract_strided_slice %4 {offsets = [1, 2, 0], sizes = [2, 2, 64], strides = [1, 1, 1]} : vector<4x4x64xf32> to vector<2x2x64xf32>
    %46 = vector.extract_strided_slice %0 {offsets = [5, 0], sizes = [1, 64], strides = [1, 1]} : vector<27x64xf32> to vector<1x64xf32>
    %47 = vector.shape_cast %46 : vector<1x64xf32> to vector<64xf32>
    %48 = vector.shape_cast %47 : vector<64xf32> to vector<1x1x64xf32>
    %49 = vector.broadcast %48 : vector<1x1x64xf32> to vector<2x2x64xf32>
    %50 = arith.mulf %45, %49 : vector<2x2x64xf32>
    %51 = arith.addf %44, %50 : vector<2x2x64xf32>
    %52 = vector.extract_strided_slice %4 {offsets = [2, 0, 0], sizes = [2, 2, 64], strides = [1, 1, 1]} : vector<4x4x64xf32> to vector<2x2x64xf32>
    %53 = vector.extract_strided_slice %0 {offsets = [6, 0], sizes = [1, 64], strides = [1, 1]} : vector<27x64xf32> to vector<1x64xf32>
    %54 = vector.shape_cast %53 : vector<1x64xf32> to vector<64xf32>
    %55 = vector.shape_cast %54 : vector<64xf32> to vector<1x1x64xf32>
    %56 = vector.broadcast %55 : vector<1x1x64xf32> to vector<2x2x64xf32>
    %57 = arith.mulf %52, %56 : vector<2x2x64xf32>
    %58 = arith.addf %51, %57 : vector<2x2x64xf32>
    %59 = vector.extract_strided_slice %4 {offsets = [2, 1, 0], sizes = [2, 2, 64], strides = [1, 1, 1]} : vector<4x4x64xf32> to vector<2x2x64xf32>
    %60 = vector.extract_strided_slice %0 {offsets = [7, 0], sizes = [1, 64], strides = [1, 1]} : vector<27x64xf32> to vector<1x64xf32>
    %61 = vector.shape_cast %60 : vector<1x64xf32> to vector<64xf32>
    %62 = vector.shape_cast %61 : vector<64xf32> to vector<1x1x64xf32>
    %63 = vector.broadcast %62 : vector<1x1x64xf32> to vector<2x2x64xf32>
    %64 = arith.mulf %59, %63 : vector<2x2x64xf32>
    %65 = arith.addf %58, %64 : vector<2x2x64xf32>
    %66 = vector.extract_strided_slice %4 {offsets = [2, 2, 0], sizes = [2, 2, 64], strides = [1, 1, 1]} : vector<4x4x64xf32> to vector<2x2x64xf32>
    %67 = vector.extract_strided_slice %0 {offsets = [8, 0], sizes = [1, 64], strides = [1, 1]} : vector<27x64xf32> to vector<1x64xf32>
    %68 = vector.shape_cast %67 : vector<1x64xf32> to vector<64xf32>
    %69 = vector.shape_cast %68 : vector<64xf32> to vector<1x1x64xf32>
    %70 = vector.broadcast %69 : vector<1x1x64xf32> to vector<2x2x64xf32>
    %71 = arith.mulf %66, %70 : vector<2x2x64xf32>
    %72 = arith.addf %65, %71 : vector<2x2x64xf32>
    %73 = vector.extract_strided_slice %6 {offsets = [0, 0, 0], sizes = [2, 2, 64], strides = [1, 1, 1]} : vector<4x4x64xf32> to vector<2x2x64xf32>
    %74 = vector.extract_strided_slice %0 {offsets = [9, 0], sizes = [1, 64], strides = [1, 1]} : vector<27x64xf32> to vector<1x64xf32>
    %75 = vector.shape_cast %74 : vector<1x64xf32> to vector<64xf32>
    %76 = vector.shape_cast %75 : vector<64xf32> to vector<1x1x64xf32>
    %77 = vector.broadcast %76 : vector<1x1x64xf32> to vector<2x2x64xf32>
    %78 = arith.mulf %73, %77 : vector<2x2x64xf32>
    %79 = arith.addf %72, %78 : vector<2x2x64xf32>
    %80 = vector.extract_strided_slice %6 {offsets = [0, 1, 0], sizes = [2, 2, 64], strides = [1, 1, 1]} : vector<4x4x64xf32> to vector<2x2x64xf32>
    %81 = vector.extract_strided_slice %0 {offsets = [10, 0], sizes = [1, 64], strides = [1, 1]} : vector<27x64xf32> to vector<1x64xf32>
    %82 = vector.shape_cast %81 : vector<1x64xf32> to vector<64xf32>
    %83 = vector.shape_cast %82 : vector<64xf32> to vector<1x1x64xf32>
    %84 = vector.broadcast %83 : vector<1x1x64xf32> to vector<2x2x64xf32>
    %85 = arith.mulf %80, %84 : vector<2x2x64xf32>
    %86 = arith.addf %79, %85 : vector<2x2x64xf32>
    %87 = vector.extract_strided_slice %6 {offsets = [0, 2, 0], sizes = [2, 2, 64], strides = [1, 1, 1]} : vector<4x4x64xf32> to vector<2x2x64xf32>
    %88 = vector.extract_strided_slice %0 {offsets = [11, 0], sizes = [1, 64], strides = [1, 1]} : vector<27x64xf32> to vector<1x64xf32>
    %89 = vector.shape_cast %88 : vector<1x64xf32> to vector<64xf32>
    %90 = vector.shape_cast %89 : vector<64xf32> to vector<1x1x64xf32>
    %91 = vector.broadcast %90 : vector<1x1x64xf32> to vector<2x2x64xf32>
    %92 = arith.mulf %87, %91 : vector<2x2x64xf32>
    %93 = arith.addf %86, %92 : vector<2x2x64xf32>
    %94 = vector.extract_strided_slice %6 {offsets = [1, 0, 0], sizes = [2, 2, 64], strides = [1, 1, 1]} : vector<4x4x64xf32> to vector<2x2x64xf32>
    %95 = vector.extract_strided_slice %0 {offsets = [12, 0], sizes = [1, 64], strides = [1, 1]} : vector<27x64xf32> to vector<1x64xf32>
    %96 = vector.shape_cast %95 : vector<1x64xf32> to vector<64xf32>
    %97 = vector.shape_cast %96 : vector<64xf32> to vector<1x1x64xf32>
    %98 = vector.broadcast %97 : vector<1x1x64xf32> to vector<2x2x64xf32>
    %99 = arith.mulf %94, %98 : vector<2x2x64xf32>
    %100 = arith.addf %93, %99 : vector<2x2x64xf32>
    %101 = vector.extract_strided_slice %6 {offsets = [1, 1, 0], sizes = [2, 2, 64], strides = [1, 1, 1]} : vector<4x4x64xf32> to vector<2x2x64xf32>
    %102 = vector.extract_strided_slice %0 {offsets = [13, 0], sizes = [1, 64], strides = [1, 1]} : vector<27x64xf32> to vector<1x64xf32>
    %103 = vector.shape_cast %102 : vector<1x64xf32> to vector<64xf32>
    %104 = vector.shape_cast %103 : vector<64xf32> to vector<1x1x64xf32>
    %105 = vector.broadcast %104 : vector<1x1x64xf32> to vector<2x2x64xf32>
    %106 = arith.mulf %101, %105 : vector<2x2x64xf32>
    %107 = arith.addf %100, %106 : vector<2x2x64xf32>
    %108 = vector.extract_strided_slice %6 {offsets = [1, 2, 0], sizes = [2, 2, 64], strides = [1, 1, 1]} : vector<4x4x64xf32> to vector<2x2x64xf32>
    %109 = vector.extract_strided_slice %0 {offsets = [14, 0], sizes = [1, 64], strides = [1, 1]} : vector<27x64xf32> to vector<1x64xf32>
    %110 = vector.shape_cast %109 : vector<1x64xf32> to vector<64xf32>
    %111 = vector.shape_cast %110 : vector<64xf32> to vector<1x1x64xf32>
    %112 = vector.broadcast %111 : vector<1x1x64xf32> to vector<2x2x64xf32>
    %113 = arith.mulf %108, %112 : vector<2x2x64xf32>
    %114 = arith.addf %107, %113 : vector<2x2x64xf32>
    %115 = vector.extract_strided_slice %6 {offsets = [2, 0, 0], sizes = [2, 2, 64], strides = [1, 1, 1]} : vector<4x4x64xf32> to vector<2x2x64xf32>
    %116 = vector.extract_strided_slice %0 {offsets = [15, 0], sizes = [1, 64], strides = [1, 1]} : vector<27x64xf32> to vector<1x64xf32>
    %117 = vector.shape_cast %116 : vector<1x64xf32> to vector<64xf32>
    %118 = vector.shape_cast %117 : vector<64xf32> to vector<1x1x64xf32>
    %119 = vector.broadcast %118 : vector<1x1x64xf32> to vector<2x2x64xf32>
    %120 = arith.mulf %115, %119 : vector<2x2x64xf32>
    %121 = arith.addf %114, %120 : vector<2x2x64xf32>
    %122 = vector.extract_strided_slice %6 {offsets = [2, 1, 0], sizes = [2, 2, 64], strides = [1, 1, 1]} : vector<4x4x64xf32> to vector<2x2x64xf32>
    %123 = vector.extract_strided_slice %0 {offsets = [16, 0], sizes = [1, 64], strides = [1, 1]} : vector<27x64xf32> to vector<1x64xf32>
    %124 = vector.shape_cast %123 : vector<1x64xf32> to vector<64xf32>
    %125 = vector.shape_cast %124 : vector<64xf32> to vector<1x1x64xf32>
    %126 = vector.broadcast %125 : vector<1x1x64xf32> to vector<2x2x64xf32>
    %127 = arith.mulf %122, %126 : vector<2x2x64xf32>
    %128 = arith.addf %121, %127 : vector<2x2x64xf32>
    %129 = vector.extract_strided_slice %6 {offsets = [2, 2, 0], sizes = [2, 2, 64], strides = [1, 1, 1]} : vector<4x4x64xf32> to vector<2x2x64xf32>
    %130 = vector.extract_strided_slice %0 {offsets = [17, 0], sizes = [1, 64], strides = [1, 1]} : vector<27x64xf32> to vector<1x64xf32>
    %131 = vector.shape_cast %130 : vector<1x64xf32> to vector<64xf32>
    %132 = vector.shape_cast %131 : vector<64xf32> to vector<1x1x64xf32>
    %133 = vector.broadcast %132 : vector<1x1x64xf32> to vector<2x2x64xf32>
    %134 = arith.mulf %129, %133 : vector<2x2x64xf32>
    %135 = arith.addf %128, %134 : vector<2x2x64xf32>
    %136 = vector.extract_strided_slice %8 {offsets = [0, 0, 0], sizes = [2, 2, 64], strides = [1, 1, 1]} : vector<4x4x64xf32> to vector<2x2x64xf32>
    %137 = vector.extract_strided_slice %0 {offsets = [18, 0], sizes = [1, 64], strides = [1, 1]} : vector<27x64xf32> to vector<1x64xf32>
    %138 = vector.shape_cast %137 : vector<1x64xf32> to vector<64xf32>
    %139 = vector.shape_cast %138 : vector<64xf32> to vector<1x1x64xf32>
    %140 = vector.broadcast %139 : vector<1x1x64xf32> to vector<2x2x64xf32>
    %141 = arith.mulf %136, %140 : vector<2x2x64xf32>
    %142 = arith.addf %135, %141 : vector<2x2x64xf32>
    %143 = vector.extract_strided_slice %8 {offsets = [0, 1, 0], sizes = [2, 2, 64], strides = [1, 1, 1]} : vector<4x4x64xf32> to vector<2x2x64xf32>
    %144 = vector.extract_strided_slice %0 {offsets = [19, 0], sizes = [1, 64], strides = [1, 1]} : vector<27x64xf32> to vector<1x64xf32>
    %145 = vector.shape_cast %144 : vector<1x64xf32> to vector<64xf32>
    %146 = vector.shape_cast %145 : vector<64xf32> to vector<1x1x64xf32>
    %147 = vector.broadcast %146 : vector<1x1x64xf32> to vector<2x2x64xf32>
    %148 = arith.mulf %143, %147 : vector<2x2x64xf32>
    %149 = arith.addf %142, %148 : vector<2x2x64xf32>
    %150 = vector.extract_strided_slice %8 {offsets = [0, 2, 0], sizes = [2, 2, 64], strides = [1, 1, 1]} : vector<4x4x64xf32> to vector<2x2x64xf32>
    %151 = vector.extract_strided_slice %0 {offsets = [20, 0], sizes = [1, 64], strides = [1, 1]} : vector<27x64xf32> to vector<1x64xf32>
    %152 = vector.shape_cast %151 : vector<1x64xf32> to vector<64xf32>
    %153 = vector.shape_cast %152 : vector<64xf32> to vector<1x1x64xf32>
    %154 = vector.broadcast %153 : vector<1x1x64xf32> to vector<2x2x64xf32>
    %155 = arith.mulf %150, %154 : vector<2x2x64xf32>
    %156 = arith.addf %149, %155 : vector<2x2x64xf32>
    %157 = vector.extract_strided_slice %8 {offsets = [1, 0, 0], sizes = [2, 2, 64], strides = [1, 1, 1]} : vector<4x4x64xf32> to vector<2x2x64xf32>
    %158 = vector.extract_strided_slice %0 {offsets = [21, 0], sizes = [1, 64], strides = [1, 1]} : vector<27x64xf32> to vector<1x64xf32>
    %159 = vector.shape_cast %158 : vector<1x64xf32> to vector<64xf32>
    %160 = vector.shape_cast %159 : vector<64xf32> to vector<1x1x64xf32>
    %161 = vector.broadcast %160 : vector<1x1x64xf32> to vector<2x2x64xf32>
    %162 = arith.mulf %157, %161 : vector<2x2x64xf32>
    %163 = arith.addf %156, %162 : vector<2x2x64xf32>
    %164 = vector.extract_strided_slice %8 {offsets = [1, 1, 0], sizes = [2, 2, 64], strides = [1, 1, 1]} : vector<4x4x64xf32> to vector<2x2x64xf32>
    %165 = vector.extract_strided_slice %0 {offsets = [22, 0], sizes = [1, 64], strides = [1, 1]} : vector<27x64xf32> to vector<1x64xf32>
    %166 = vector.shape_cast %165 : vector<1x64xf32> to vector<64xf32>
    %167 = vector.shape_cast %166 : vector<64xf32> to vector<1x1x64xf32>
    %168 = vector.broadcast %167 : vector<1x1x64xf32> to vector<2x2x64xf32>
    %169 = arith.mulf %164, %168 : vector<2x2x64xf32>
    %170 = arith.addf %163, %169 : vector<2x2x64xf32>
    %171 = vector.extract_strided_slice %8 {offsets = [1, 2, 0], sizes = [2, 2, 64], strides = [1, 1, 1]} : vector<4x4x64xf32> to vector<2x2x64xf32>
    %172 = vector.extract_strided_slice %0 {offsets = [23, 0], sizes = [1, 64], strides = [1, 1]} : vector<27x64xf32> to vector<1x64xf32>
    %173 = vector.shape_cast %172 : vector<1x64xf32> to vector<64xf32>
    %174 = vector.shape_cast %173 : vector<64xf32> to vector<1x1x64xf32>
    %175 = vector.broadcast %174 : vector<1x1x64xf32> to vector<2x2x64xf32>
    %176 = arith.mulf %171, %175 : vector<2x2x64xf32>
    %177 = arith.addf %170, %176 : vector<2x2x64xf32>
    %178 = vector.extract_strided_slice %8 {offsets = [2, 0, 0], sizes = [2, 2, 64], strides = [1, 1, 1]} : vector<4x4x64xf32> to vector<2x2x64xf32>
    %179 = vector.extract_strided_slice %0 {offsets = [24, 0], sizes = [1, 64], strides = [1, 1]} : vector<27x64xf32> to vector<1x64xf32>
    %180 = vector.shape_cast %179 : vector<1x64xf32> to vector<64xf32>
    %181 = vector.shape_cast %180 : vector<64xf32> to vector<1x1x64xf32>
    %182 = vector.broadcast %181 : vector<1x1x64xf32> to vector<2x2x64xf32>
    %183 = arith.mulf %178, %182 : vector<2x2x64xf32>
    %184 = arith.addf %177, %183 : vector<2x2x64xf32>
    %185 = vector.extract_strided_slice %8 {offsets = [2, 1, 0], sizes = [2, 2, 64], strides = [1, 1, 1]} : vector<4x4x64xf32> to vector<2x2x64xf32>
    %186 = vector.extract_strided_slice %0 {offsets = [25, 0], sizes = [1, 64], strides = [1, 1]} : vector<27x64xf32> to vector<1x64xf32>
    %187 = vector.shape_cast %186 : vector<1x64xf32> to vector<64xf32>
    %188 = vector.shape_cast %187 : vector<64xf32> to vector<1x1x64xf32>
    %189 = vector.broadcast %188 : vector<1x1x64xf32> to vector<2x2x64xf32>
    %190 = arith.mulf %185, %189 : vector<2x2x64xf32>
    %191 = arith.addf %184, %190 : vector<2x2x64xf32>
    %192 = vector.extract_strided_slice %8 {offsets = [2, 2, 0], sizes = [2, 2, 64], strides = [1, 1, 1]} : vector<4x4x64xf32> to vector<2x2x64xf32>
    %193 = vector.extract_strided_slice %0 {offsets = [26, 0], sizes = [1, 64], strides = [1, 1]} : vector<27x64xf32> to vector<1x64xf32>
    %194 = vector.shape_cast %193 : vector<1x64xf32> to vector<64xf32>
    %195 = vector.shape_cast %194 : vector<64xf32> to vector<1x1x64xf32>
    %196 = vector.broadcast %195 : vector<1x1x64xf32> to vector<2x2x64xf32>
    %197 = arith.mulf %192, %196 : vector<2x2x64xf32>
    %198 = arith.addf %191, %197 : vector<2x2x64xf32>
    %199 = vector.shape_cast %2 : vector<64xf32> to vector<1x1x64xf32>
    %200 = vector.broadcast %199 : vector<1x1x64xf32> to vector<2x2x64xf32>
    %201 = arith.addf %198, %200 : vector<2x2x64xf32>
    %c0_18 = arith.constant 0 : index
    %c0_19 = arith.constant 0 : index
    %c0_20 = arith.constant 0 : index
    %c0_21 = arith.constant 0 : index
    %c0_22 = arith.constant 0 : index
    %202 = vector.load %arg7[%c0_18, %c0_19, %c0_20, %c0_21, %c0_22] : memref<1x1x2x2x64xf32, #tpu.memory_space<vmem>>, vector<1x1x2x2x64xf32>
    %203 = vector.shape_cast %202 : vector<1x1x2x2x64xf32> to vector<2x2x64xf32>
    %204 = vector.shape_cast %201 : vector<2x2x64xf32> to vector<1x1x2x2x64xf32>
    tpu.vector_store %arg7[%c0_18, %c0_19, %c0_20, %c0_21, %c0_22], %204 {strides = array<i32>} : memref<1x1x2x2x64xf32, #tpu.memory_space<vmem>>, vector<1x1x2x2x64xf32>,
    return
  }
  func.func @transform_0(%arg0: i32, %arg1: i32) -> (i32, i32, i32, i32, i32) {
    %c0_i32 = arith.constant 0 : i32
    %c0_i32_0 = arith.constant 0 : i32
    %c0_i32_1 = arith.constant 0 : i32
    %c0_i32_2 = arith.constant 0 : i32
    return %arg0, %arg1, %c0_i32, %c0_i32_0, %c0_i32_1 : i32, i32, i32, i32, i32
  }
  func.func @transform_1(%arg0: i32, %arg1: i32) -> (i32, i32, i32, i32, i32) {
    %c1_i32 = arith.constant 1 : i32
    %0 = arith.addi %arg1, %c1_i32 : i32
    %c0_i32 = arith.constant 0 : i32
    %c0_i32_0 = arith.constant 0 : i32
    %c0_i32_1 = arith.constant 0 : i32
    %c0_i32_2 = arith.constant 0 : i32
    return %arg0, %0, %c0_i32, %c0_i32_0, %c0_i32_1 : i32, i32, i32, i32, i32
  }
  func.func @transform_2(%arg0: i32, %arg1: i32) -> (i32, i32, i32, i32, i32) {
    %c2_i32 = arith.constant 2 : i32
    %0 = arith.addi %arg1, %c2_i32 : i32
    %c0_i32 = arith.constant 0 : i32
    %c0_i32_0 = arith.constant 0 : i32
    %c0_i32_1 = arith.constant 0 : i32
    %c0_i32_2 = arith.constant 0 : i32
    return %arg0, %0, %c0_i32, %c0_i32_0, %c0_i32_1 : i32, i32, i32, i32, i32
  }
  func.func @transform_3(%arg0: i32, %arg1: i32) -> (i32, i32) {
    %c0_i32 = arith.constant 0 : i32
    %c0_i32_0 = arith.constant 0 : i32
    %c0_i32_1 = arith.constant 0 : i32
    return %c0_i32, %c0_i32_0 : i32, i32
  }
  func.func @transform_4(%arg0: i32, %arg1: i32) -> (i32, i32) {
    %c0_i32 = arith.constant 0 : i32
    %c0_i32_0 = arith.constant 0 : i32
    %c0_i32_1 = arith.constant 0 : i32
    return %c0_i32, %c0_i32_0 : i32, i32
  }
  func.func @transform_5(%arg0: i32, %arg1: i32) -> (i32, i32, i32, i32, i32) {
    %c0_i32 = arith.constant 0 : i32
    %c0_i32_0 = arith.constant 0 : i32
    %c0_i32_1 = arith.constant 0 : i32
    %c0_i32_2 = arith.constant 0 : i32
    return %arg0, %arg1, %c0_i32, %c0_i32_0, %c0_i32_1 : i32, i32, i32, i32, i32
  }
}

module attributes {stable_mosaic.version = 11 : i64} {
  func.func @_mha_kernel(%arg0: i32, %arg1: memref<1x1x64xf32, #tpu.memory_space<vmem>>, %arg2: memref<1x10x64xf32, #tpu.memory_space<vmem>>, %arg3: memref<1x10x64xf32, #tpu.memory_space<vmem>>, %arg4: memref<1x1x64xf32, #tpu.memory_space<vmem>>) attributes {dimension_semantics = [#tpu.dimension_semantics<parallel>], iteration_bounds = array<i64: 2>, scalar_prefetch = 0 : i64, scratch_operands = 0 : i64, tpu.core_type = #tpu.core_type<tc>, window_params = [{transform_indices = @transform_0, window_bounds = array<i64: 1, 1, 64>}, {transform_indices = @transform_1, window_bounds = array<i64: 1, 10, 64>}, {transform_indices = @transform_2, window_bounds = array<i64: 1, 10, 64>}, {transform_indices = @transform_3, window_bounds = array<i64: 1, 1, 64>}]} {
    %c0 = arith.constant 0 : index
    %c0_0 = arith.constant 0 : index
    %c0_1 = arith.constant 0 : index
    %0 = vector.load %arg1[%c0, %c0_0, %c0_1] : memref<1x1x64xf32, #tpu.memory_space<vmem>>, vector<1x1x64xf32>
    %1 = vector.shape_cast %0 : vector<1x1x64xf32> to vector<1x64xf32>
    %2 = vector.shape_cast %1 : vector<1x64xf32> to vector<1x4x16xf32>
    %3 = tpu.transpose %2, [1, 0, 2] : vector<1x4x16xf32> -> vector<4x1x16xf32>
    %4 = arith.truncf %3 : vector<4x1x16xf32> to vector<4x1x16xbf16>
    %c0_2 = arith.constant 0 : index
    %c0_3 = arith.constant 0 : index
    %c0_4 = arith.constant 0 : index
    %5 = vector.load %arg2[%c0_2, %c0_3, %c0_4] : memref<1x10x64xf32, #tpu.memory_space<vmem>>, vector<1x10x64xf32>
    %6 = vector.shape_cast %5 : vector<1x10x64xf32> to vector<10x64xf32>
    %7 = vector.shape_cast %6 : vector<10x64xf32> to vector<10x4x16xf32>
    %8 = tpu.transpose %7, [1, 0, 2] : vector<10x4x16xf32> -> vector<4x10x16xf32>
    %9 = arith.truncf %8 : vector<4x10x16xf32> to vector<4x10x16xbf16>
    %c0_5 = arith.constant 0 : index
    %c0_6 = arith.constant 0 : index
    %c0_7 = arith.constant 0 : index
    %10 = vector.load %arg3[%c0_5, %c0_6, %c0_7] : memref<1x10x64xf32, #tpu.memory_space<vmem>>, vector<1x10x64xf32>
    %11 = vector.shape_cast %10 : vector<1x10x64xf32> to vector<10x64xf32>
    %12 = vector.shape_cast %11 : vector<10x64xf32> to vector<10x4x16xf32>
    %13 = tpu.transpose %12, [1, 0, 2] : vector<10x4x16xf32> -> vector<4x10x16xf32>
    %14 = arith.truncf %13 : vector<4x10x16xf32> to vector<4x10x16xbf16>
    "tpu.trace_start"() <{level = 10 : i32, message = "hqd,hkd->hqk"}> : () -> ()
    %cst = arith.constant dense<0.000000e+00> : vector<4x1x10xf32>
    %15 = tpu.matmul %4, %9, %cst {dimension_numbers = #tpu.dot_dimension_numbers<[2], [2], [1], [1], [0, 0, 0, 1, 1, 1], [0], [0]>} : vector<4x1x16xbf16>, vector<4x10x16xbf16>, vector<4x1x10xf32> -> vector<4x1x10xf32>
    "tpu.trace_stop"() : () -> ()
    %cst_8 = arith.constant 2.500000e-01 : f32
    %16 = vector.broadcast %cst_8 : f32 to vector<4x1x10xf32>
    %17 = arith.mulf %15, %16 : vector<4x1x10xf32>
    %cst_9 = arith.constant dense<0xFF800000> : vector<4x1xf32>
    %18 = vector.multi_reduction <maximumf>, %17, %cst_9 [2] : vector<4x1x10xf32> to vector<4x1xf32>
    %19 = vector.shape_cast %18 : vector<4x1xf32> to vector<4x1x1xf32>
    %20 = vector.broadcast %19 : vector<4x1x1xf32> to vector<4x1x10xf32>
    %21 = arith.subf %17, %20 : vector<4x1x10xf32>
    %22 = math.exp %21 : vector<4x1x10xf32>
    %cst_10 = arith.constant dense<0.000000e+00> : vector<4x1xf32>
    %23 = vector.multi_reduction <add>, %22, %cst_10 [2] : vector<4x1x10xf32> to vector<4x1xf32>
    %24 = vector.shape_cast %23 : vector<4x1xf32> to vector<4x1x1xf32>
    %25 = tpu.reciprocal %24 {approx = true} : vector<4x1x1xf32> -> vector<4x1x1xf32>
    %26 = vector.broadcast %25 : vector<4x1x1xf32> to vector<4x1x10xf32>
    %27 = arith.mulf %22, %26 : vector<4x1x10xf32>
    %28 = arith.truncf %27 : vector<4x1x10xf32> to vector<4x1x10xbf16>
    "tpu.trace_start"() <{level = 10 : i32, message = "hqk,hkd->hqd"}> : () -> ()
    %cst_11 = arith.constant dense<0.000000e+00> : vector<4x1x16xf32>
    %29 = tpu.matmul %28, %14, %cst_11 {dimension_numbers = #tpu.dot_dimension_numbers<[2], [1], [1], [2], [0, 0, 0, 1, 1, 2], [0], [0]>} : vector<4x1x10xbf16>, vector<4x10x16xbf16>, vector<4x1x16xf32> -> vector<4x1x16xf32>
    "tpu.trace_stop"() : () -> ()
    %30 = tpu.transpose %29, [1, 0, 2] : vector<4x1x16xf32> -> vector<1x4x16xf32>
    %31 = vector.shape_cast %30 : vector<1x4x16xf32> to vector<1x64xf32>
    %c0_12 = arith.constant 0 : index
    %c0_13 = arith.constant 0 : index
    %c0_14 = arith.constant 0 : index
    %32 = vector.load %arg4[%c0_12, %c0_13, %c0_14] : memref<1x1x64xf32, #tpu.memory_space<vmem>>, vector<1x1x64xf32>
    %33 = vector.shape_cast %32 : vector<1x1x64xf32> to vector<1x64xf32>
    %34 = vector.shape_cast %31 : vector<1x64xf32> to vector<1x1x64xf32>
    tpu.vector_store %arg4[%c0_12, %c0_13, %c0_14], %34 {strides = array<i32>} : memref<1x1x64xf32, #tpu.memory_space<vmem>>, vector<1x1x64xf32>,
    return
  }
  func.func @transform_0(%arg0: i32) -> (i32, i32, i32) {
    %c0_i32 = arith.constant 0 : i32
    %c0_i32_0 = arith.constant 0 : i32
    %c0_i32_1 = arith.constant 0 : i32
    return %arg0, %c0_i32, %c0_i32_0 : i32, i32, i32
  }
  func.func @transform_1(%arg0: i32) -> (i32, i32, i32) {
    %c0_i32 = arith.constant 0 : i32
    %c0_i32_0 = arith.constant 0 : i32
    %c0_i32_1 = arith.constant 0 : i32
    return %arg0, %c0_i32, %c0_i32_0 : i32, i32, i32
  }
  func.func @transform_2(%arg0: i32) -> (i32, i32, i32) {
    %c0_i32 = arith.constant 0 : i32
    %c0_i32_0 = arith.constant 0 : i32
    %c0_i32_1 = arith.constant 0 : i32
    return %arg0, %c0_i32, %c0_i32_0 : i32, i32, i32
  }
  func.func @transform_3(%arg0: i32) -> (i32, i32, i32) {
    %c0_i32 = arith.constant 0 : i32
    %c0_i32_0 = arith.constant 0 : i32
    %c0_i32_1 = arith.constant 0 : i32
    return %arg0, %c0_i32, %c0_i32_0 : i32, i32, i32
  }
}

module attributes {stable_mosaic.version = 11 : i64} {
  func.func @_ln_multilinear_kernel(%arg0: i32, %arg1: memref<20x64xf32, #tpu.memory_space<vmem>>, %arg2: memref<1x64xf32, #tpu.memory_space<vmem>>, %arg3: memref<1x64xf32, #tpu.memory_space<vmem>>, %arg4: memref<64x64xf32, #tpu.memory_space<vmem>>, %arg5: memref<1x64xf32, #tpu.memory_space<vmem>>, %arg6: memref<64x64xf32, #tpu.memory_space<vmem>>, %arg7: memref<1x64xf32, #tpu.memory_space<vmem>>, %arg8: memref<20x64xf32, #tpu.memory_space<vmem>>, %arg9: memref<20x64xf32, #tpu.memory_space<vmem>>) attributes {dimension_semantics = [#tpu.dimension_semantics<parallel>], iteration_bounds = array<i64: 1>, scalar_prefetch = 0 : i64, scratch_operands = 0 : i64, tpu.core_type = #tpu.core_type<tc>, window_params = [{transform_indices = @transform_0, window_bounds = array<i64: 20, 64>}, {pipeline_mode = #tpu.pipeline_mode<synchronous>, transform_indices = @transform_1, window_bounds = array<i64: 1, 64>}, {pipeline_mode = #tpu.pipeline_mode<synchronous>, transform_indices = @transform_2, window_bounds = array<i64: 1, 64>}, {pipeline_mode = #tpu.pipeline_mode<synchronous>, transform_indices = @transform_3, window_bounds = array<i64: 64, 64>}, {pipeline_mode = #tpu.pipeline_mode<synchronous>, transform_indices = @transform_4, window_bounds = array<i64: 1, 64>}, {pipeline_mode = #tpu.pipeline_mode<synchronous>, transform_indices = @transform_5, window_bounds = array<i64: 64, 64>}, {pipeline_mode = #tpu.pipeline_mode<synchronous>, transform_indices = @transform_6, window_bounds = array<i64: 1, 64>}, {transform_indices = @transform_7, window_bounds = array<i64: 20, 64>}, {transform_indices = @transform_8, window_bounds = array<i64: 20, 64>}]} {
    %c0 = arith.constant 0 : index
    %c0_0 = arith.constant 0 : index
    %0 = vector.load %arg1[%c0, %c0_0] : memref<20x64xf32, #tpu.memory_space<vmem>>, vector<20x64xf32>
    %cst = arith.constant dense<0.000000e+00> : vector<20xf32>
    %1 = vector.multi_reduction <add>, %0, %cst [1] : vector<20x64xf32> to vector<20xf32>
    %2 = vector.shape_cast %1 : vector<20xf32> to vector<20x1xf32>
    %cst_1 = arith.constant 6.400000e+01 : f32
    %3 = vector.broadcast %cst_1 : f32 to vector<20x1xf32>
    %4 = arith.divf %2, %3 : vector<20x1xf32>
    %5 = vector.broadcast %4 : vector<20x1xf32> to vector<20x64xf32>
    %6 = arith.subf %0, %5 : vector<20x64xf32>
    %7 = arith.mulf %6, %6 : vector<20x64xf32>
    %cst_2 = arith.constant dense<0.000000e+00> : vector<20xf32>
    %8 = vector.multi_reduction <add>, %7, %cst_2 [1] : vector<20x64xf32> to vector<20xf32>
    %9 = vector.shape_cast %8 : vector<20xf32> to vector<20x1xf32>
    %cst_3 = arith.constant 6.400000e+01 : f32
    %10 = vector.broadcast %cst_3 : f32 to vector<20x1xf32>
    %11 = arith.divf %9, %10 : vector<20x1xf32>
    %12 = vector.broadcast %4 : vector<20x1xf32> to vector<20x64xf32>
    %13 = arith.subf %0, %12 : vector<20x64xf32>
    %cst_4 = arith.constant 9.99999974E-6 : f32
    %14 = vector.broadcast %cst_4 : f32 to vector<20x1xf32>
    %15 = arith.addf %11, %14 : vector<20x1xf32>
    %16 = math.rsqrt %15 : vector<20x1xf32>
    %17 = vector.broadcast %16 : vector<20x1xf32> to vector<20x64xf32>
    %18 = arith.mulf %13, %17 : vector<20x64xf32>
    %c0_5 = arith.constant 0 : index
    %c0_6 = arith.constant 0 : index
    %19 = vector.load %arg2[%c0_5, %c0_6] : memref<1x64xf32, #tpu.memory_space<vmem>>, vector<1x64xf32>
    %20 = vector.broadcast %19 : vector<1x64xf32> to vector<20x64xf32>
    %21 = arith.mulf %18, %20 : vector<20x64xf32>
    %c0_7 = arith.constant 0 : index
    %c0_8 = arith.constant 0 : index
    %22 = vector.load %arg3[%c0_7, %c0_8] : memref<1x64xf32, #tpu.memory_space<vmem>>, vector<1x64xf32>
    %23 = vector.broadcast %22 : vector<1x64xf32> to vector<20x64xf32>
    %24 = arith.addf %21, %23 : vector<20x64xf32>
    %25 = arith.truncf %24 : vector<20x64xf32> to vector<20x64xbf16>
    %c0_9 = arith.constant 0 : index
    %c0_10 = arith.constant 0 : index
    %26 = vector.load %arg4[%c0_9, %c0_10] : memref<64x64xf32, #tpu.memory_space<vmem>>, vector<64x64xf32>
    %27 = arith.truncf %26 : vector<64x64xf32> to vector<64x64xbf16>
    %c0_11 = arith.constant 0 : index
    %c0_12 = arith.constant 0 : index
    %28 = vector.load %arg5[%c0_11, %c0_12] : memref<1x64xf32, #tpu.memory_space<vmem>>, vector<1x64xf32>
    %cst_13 = arith.constant dense<0.000000e+00> : vector<20x64xf32>
    %29 = tpu.matmul %25, %27, %cst_13 {dimension_numbers = #tpu.dot_dimension_numbers<[1], [0], [0], [1], [0, 0, 1, 1], [], []>} : vector<20x64xbf16>, vector<64x64xbf16>, vector<20x64xf32> -> vector<20x64xf32>
    %30 = vector.broadcast %28 : vector<1x64xf32> to vector<20x64xf32>
    %31 = arith.addf %29, %30 : vector<20x64xf32>
    %c0_14 = arith.constant 0 : index
    %c0_15 = arith.constant 0 : index
    %32 = vector.load %arg8[%c0_14, %c0_15] : memref<20x64xf32, #tpu.memory_space<vmem>>, vector<20x64xf32>
    tpu.vector_store %arg8[%c0_14, %c0_15], %31 {strides = array<i32>} : memref<20x64xf32, #tpu.memory_space<vmem>>, vector<20x64xf32>,
    %c0_16 = arith.constant 0 : index
    %c0_17 = arith.constant 0 : index
    %33 = vector.load %arg6[%c0_16, %c0_17] : memref<64x64xf32, #tpu.memory_space<vmem>>, vector<64x64xf32>
    %34 = arith.truncf %33 : vector<64x64xf32> to vector<64x64xbf16>
    %c0_18 = arith.constant 0 : index
    %c0_19 = arith.constant 0 : index
    %35 = vector.load %arg7[%c0_18, %c0_19] : memref<1x64xf32, #tpu.memory_space<vmem>>, vector<1x64xf32>
    %cst_20 = arith.constant dense<0.000000e+00> : vector<20x64xf32>
    %36 = tpu.matmul %25, %34, %cst_20 {dimension_numbers = #tpu.dot_dimension_numbers<[1], [0], [0], [1], [0, 0, 1, 1], [], []>} : vector<20x64xbf16>, vector<64x64xbf16>, vector<20x64xf32> -> vector<20x64xf32>
    %37 = vector.broadcast %35 : vector<1x64xf32> to vector<20x64xf32>
    %38 = arith.addf %36, %37 : vector<20x64xf32>
    %c0_21 = arith.constant 0 : index
    %c0_22 = arith.constant 0 : index
    %39 = vector.load %arg9[%c0_21, %c0_22] : memref<20x64xf32, #tpu.memory_space<vmem>>, vector<20x64xf32>
    tpu.vector_store %arg9[%c0_21, %c0_22], %38 {strides = array<i32>} : memref<20x64xf32, #tpu.memory_space<vmem>>, vector<20x64xf32>,
    return
  }
  func.func @transform_0(%arg0: i32) -> (i32, i32) {
    %c0_i32 = arith.constant 0 : i32
    %c0_i32_0 = arith.constant 0 : i32
    return %arg0, %c0_i32 : i32, i32
  }
  func.func @transform_1(%arg0: i32) -> (i32, i32) {
    %c0_i32 = arith.constant 0 : i32
    %c0_i32_0 = arith.constant 0 : i32
    %c0_i32_1 = arith.constant 0 : i32
    return %c0_i32, %c0_i32_0 : i32, i32
  }
  func.func @transform_2(%arg0: i32) -> (i32, i32) {
    %c0_i32 = arith.constant 0 : i32
    %c0_i32_0 = arith.constant 0 : i32
    %c0_i32_1 = arith.constant 0 : i32
    return %c0_i32, %c0_i32_0 : i32, i32
  }
  func.func @transform_3(%arg0: i32) -> (i32, i32) {
    %c0_i32 = arith.constant 0 : i32
    %c0_i32_0 = arith.constant 0 : i32
    %c0_i32_1 = arith.constant 0 : i32
    return %c0_i32, %c0_i32_0 : i32, i32
  }
  func.func @transform_4(%arg0: i32) -> (i32, i32) {
    %c0_i32 = arith.constant 0 : i32
    %c0_i32_0 = arith.constant 0 : i32
    %c0_i32_1 = arith.constant 0 : i32
    return %c0_i32, %c0_i32_0 : i32, i32
  }
  func.func @transform_5(%arg0: i32) -> (i32, i32) {
    %c0_i32 = arith.constant 0 : i32
    %c0_i32_0 = arith.constant 0 : i32
    %c0_i32_1 = arith.constant 0 : i32
    return %c0_i32, %c0_i32_0 : i32, i32
  }
  func.func @transform_6(%arg0: i32) -> (i32, i32) {
    %c0_i32 = arith.constant 0 : i32
    %c0_i32_0 = arith.constant 0 : i32
    %c0_i32_1 = arith.constant 0 : i32
    return %c0_i32, %c0_i32_0 : i32, i32
  }
  func.func @transform_7(%arg0: i32) -> (i32, i32) {
    %c0_i32 = arith.constant 0 : i32
    %c0_i32_0 = arith.constant 0 : i32
    return %arg0, %c0_i32 : i32, i32
  }
  func.func @transform_8(%arg0: i32) -> (i32, i32) {
    %c0_i32 = arith.constant 0 : i32
    %c0_i32_0 = arith.constant 0 : i32
    return %arg0, %c0_i32 : i32, i32
  }
}

module attributes {stable_mosaic.version = 11 : i64} {
  func.func @_linear_residual_kernel(%arg0: i32, %arg1: memref<2x64xf32, #tpu.memory_space<vmem>>, %arg2: memref<64x64xf32, #tpu.memory_space<vmem>>, %arg3: memref<1x64xf32, #tpu.memory_space<vmem>>, %arg4: memref<2x64xf32, #tpu.memory_space<vmem>>, %arg5: memref<2x64xf32, #tpu.memory_space<vmem>>) attributes {dimension_semantics = [#tpu.dimension_semantics<parallel>], iteration_bounds = array<i64: 1>, scalar_prefetch = 0 : i64, scratch_operands = 0 : i64, tpu.core_type = #tpu.core_type<tc>, window_params = [{transform_indices = @transform_0, window_bounds = array<i64: 2, 64>}, {pipeline_mode = #tpu.pipeline_mode<synchronous>, transform_indices = @transform_1, window_bounds = array<i64: 64, 64>}, {pipeline_mode = #tpu.pipeline_mode<synchronous>, transform_indices = @transform_2, window_bounds = array<i64: 1, 64>}, {transform_indices = @transform_3, window_bounds = array<i64: 2, 64>}, {transform_indices = @transform_4, window_bounds = array<i64: 2, 64>}]} {
    %c0 = arith.constant 0 : index
    %c0_0 = arith.constant 0 : index
    %0 = vector.load %arg1[%c0, %c0_0] : memref<2x64xf32, #tpu.memory_space<vmem>>, vector<2x64xf32>
    %1 = arith.truncf %0 : vector<2x64xf32> to vector<2x64xbf16>
    %c0_1 = arith.constant 0 : index
    %c0_2 = arith.constant 0 : index
    %2 = vector.load %arg2[%c0_1, %c0_2] : memref<64x64xf32, #tpu.memory_space<vmem>>, vector<64x64xf32>
    %3 = arith.truncf %2 : vector<64x64xf32> to vector<64x64xbf16>
    %cst = arith.constant dense<0.000000e+00> : vector<2x64xf32>
    %4 = tpu.matmul %1, %3, %cst {dimension_numbers = #tpu.dot_dimension_numbers<[1], [0], [0], [1], [0, 0, 1, 1], [], []>} : vector<2x64xbf16>, vector<64x64xbf16>, vector<2x64xf32> -> vector<2x64xf32>
    %c0_3 = arith.constant 0 : index
    %c0_4 = arith.constant 0 : index
    %5 = vector.load %arg4[%c0_3, %c0_4] : memref<2x64xf32, #tpu.memory_space<vmem>>, vector<2x64xf32>
    %6 = arith.addf %5, %4 : vector<2x64xf32>
    %c0_5 = arith.constant 0 : index
    %c0_6 = arith.constant 0 : index
    %7 = vector.load %arg3[%c0_5, %c0_6] : memref<1x64xf32, #tpu.memory_space<vmem>>, vector<1x64xf32>
    %8 = vector.broadcast %7 : vector<1x64xf32> to vector<2x64xf32>
    %9 = arith.addf %6, %8 : vector<2x64xf32>
    %c0_7 = arith.constant 0 : index
    %c0_8 = arith.constant 0 : index
    %10 = vector.load %arg5[%c0_7, %c0_8] : memref<2x64xf32, #tpu.memory_space<vmem>>, vector<2x64xf32>
    tpu.vector_store %arg5[%c0_7, %c0_8], %9 {strides = array<i32>} : memref<2x64xf32, #tpu.memory_space<vmem>>, vector<2x64xf32>,
    return
  }
  func.func @transform_0(%arg0: i32) -> (i32, i32) {
    %c0_i32 = arith.constant 0 : i32
    %c0_i32_0 = arith.constant 0 : i32
    return %arg0, %c0_i32 : i32, i32
  }
  func.func @transform_1(%arg0: i32) -> (i32, i32) {
    %c0_i32 = arith.constant 0 : i32
    %c0_i32_0 = arith.constant 0 : i32
    %c0_i32_1 = arith.constant 0 : i32
    return %c0_i32, %c0_i32_0 : i32, i32
  }
  func.func @transform_2(%arg0: i32) -> (i32, i32) {
    %c0_i32 = arith.constant 0 : i32
    %c0_i32_0 = arith.constant 0 : i32
    %c0_i32_1 = arith.constant 0 : i32
    return %c0_i32, %c0_i32_0 : i32, i32
  }
  func.func @transform_3(%arg0: i32) -> (i32, i32) {
    %c0_i32 = arith.constant 0 : i32
    %c0_i32_0 = arith.constant 0 : i32
    return %arg0, %c0_i32 : i32, i32
  }
  func.func @transform_4(%arg0: i32) -> (i32, i32) {
    %c0_i32 = arith.constant 0 : i32
    %c0_i32_0 = arith.constant 0 : i32
    return %arg0, %c0_i32 : i32, i32
  }
}

module attributes {stable_mosaic.version = 11 : i64} {
  func.func @_ln_mlp_residual_kernel(%arg0: i32, %arg1: memref<2x64xf32, #tpu.memory_space<vmem>>, %arg2: memref<1x64xf32, #tpu.memory_space<vmem>>, %arg3: memref<1x64xf32, #tpu.memory_space<vmem>>, %arg4: memref<64x256xf32, #tpu.memory_space<vmem>>, %arg5: memref<1x256xf32, #tpu.memory_space<vmem>>, %arg6: memref<256x64xf32, #tpu.memory_space<vmem>>, %arg7: memref<1x64xf32, #tpu.memory_space<vmem>>, %arg8: memref<2x64xf32, #tpu.memory_space<vmem>>) attributes {dimension_semantics = [#tpu.dimension_semantics<parallel>], iteration_bounds = array<i64: 1>, scalar_prefetch = 0 : i64, scratch_operands = 0 : i64, tpu.core_type = #tpu.core_type<tc>, window_params = [{transform_indices = @transform_0, window_bounds = array<i64: 2, 64>}, {pipeline_mode = #tpu.pipeline_mode<synchronous>, transform_indices = @transform_1, window_bounds = array<i64: 1, 64>}, {pipeline_mode = #tpu.pipeline_mode<synchronous>, transform_indices = @transform_2, window_bounds = array<i64: 1, 64>}, {pipeline_mode = #tpu.pipeline_mode<synchronous>, transform_indices = @transform_3, window_bounds = array<i64: 64, 256>}, {pipeline_mode = #tpu.pipeline_mode<synchronous>, transform_indices = @transform_4, window_bounds = array<i64: 1, 256>}, {pipeline_mode = #tpu.pipeline_mode<synchronous>, transform_indices = @transform_5, window_bounds = array<i64: 256, 64>}, {pipeline_mode = #tpu.pipeline_mode<synchronous>, transform_indices = @transform_6, window_bounds = array<i64: 1, 64>}, {transform_indices = @transform_7, window_bounds = array<i64: 2, 64>}]} {
    %c0 = arith.constant 0 : index
    %c0_0 = arith.constant 0 : index
    %0 = vector.load %arg1[%c0, %c0_0] : memref<2x64xf32, #tpu.memory_space<vmem>>, vector<2x64xf32>
    %cst = arith.constant dense<0.000000e+00> : vector<2xf32>
    %1 = vector.multi_reduction <add>, %0, %cst [1] : vector<2x64xf32> to vector<2xf32>
    %2 = vector.shape_cast %1 : vector<2xf32> to vector<2x1xf32>
    %cst_1 = arith.constant 6.400000e+01 : f32
    %3 = vector.broadcast %cst_1 : f32 to vector<2x1xf32>
    %4 = arith.divf %2, %3 : vector<2x1xf32>
    %5 = vector.broadcast %4 : vector<2x1xf32> to vector<2x64xf32>
    %6 = arith.subf %0, %5 : vector<2x64xf32>
    %7 = arith.mulf %6, %6 : vector<2x64xf32>
    %cst_2 = arith.constant dense<0.000000e+00> : vector<2xf32>
    %8 = vector.multi_reduction <add>, %7, %cst_2 [1] : vector<2x64xf32> to vector<2xf32>
    %9 = vector.shape_cast %8 : vector<2xf32> to vector<2x1xf32>
    %cst_3 = arith.constant 6.400000e+01 : f32
    %10 = vector.broadcast %cst_3 : f32 to vector<2x1xf32>
    %11 = arith.divf %9, %10 : vector<2x1xf32>
    %12 = vector.broadcast %4 : vector<2x1xf32> to vector<2x64xf32>
    %13 = arith.subf %0, %12 : vector<2x64xf32>
    %cst_4 = arith.constant 9.99999974E-6 : f32
    %14 = vector.broadcast %cst_4 : f32 to vector<2x1xf32>
    %15 = arith.addf %11, %14 : vector<2x1xf32>
    %16 = math.rsqrt %15 : vector<2x1xf32>
    %17 = vector.broadcast %16 : vector<2x1xf32> to vector<2x64xf32>
    %18 = arith.mulf %13, %17 : vector<2x64xf32>
    %c0_5 = arith.constant 0 : index
    %c0_6 = arith.constant 0 : index
    %19 = vector.load %arg2[%c0_5, %c0_6] : memref<1x64xf32, #tpu.memory_space<vmem>>, vector<1x64xf32>
    %20 = vector.broadcast %19 : vector<1x64xf32> to vector<2x64xf32>
    %21 = arith.mulf %18, %20 : vector<2x64xf32>
    %c0_7 = arith.constant 0 : index
    %c0_8 = arith.constant 0 : index
    %22 = vector.load %arg3[%c0_7, %c0_8] : memref<1x64xf32, #tpu.memory_space<vmem>>, vector<1x64xf32>
    %23 = vector.broadcast %22 : vector<1x64xf32> to vector<2x64xf32>
    %24 = arith.addf %21, %23 : vector<2x64xf32>
    %25 = arith.truncf %24 : vector<2x64xf32> to vector<2x64xbf16>
    %c0_9 = arith.constant 0 : index
    %c0_10 = arith.constant 0 : index
    %26 = vector.load %arg4[%c0_9, %c0_10] : memref<64x256xf32, #tpu.memory_space<vmem>>, vector<64x256xf32>
    %27 = arith.truncf %26 : vector<64x256xf32> to vector<64x256xbf16>
    %cst_11 = arith.constant dense<0.000000e+00> : vector<2x256xf32>
    %28 = tpu.matmul %25, %27, %cst_11 {dimension_numbers = #tpu.dot_dimension_numbers<[1], [0], [0], [1], [0, 0, 1, 1], [], []>} : vector<2x64xbf16>, vector<64x256xbf16>, vector<2x256xf32> -> vector<2x256xf32>
    %c0_12 = arith.constant 0 : index
    %c0_13 = arith.constant 0 : index
    %29 = vector.load %arg5[%c0_12, %c0_13] : memref<1x256xf32, #tpu.memory_space<vmem>>, vector<1x256xf32>
    %30 = vector.broadcast %29 : vector<1x256xf32> to vector<2x256xf32>
    %31 = arith.addf %28, %30 : vector<2x256xf32>
    %cst_14 = arith.constant 1.702000e+00 : f32
    %32 = vector.broadcast %cst_14 : f32 to vector<2x256xf32>
    %33 = arith.mulf %32, %31 : vector<2x256xf32>
    %34 = arith.negf %33 : vector<2x256xf32>
    %35 = math.exp %34 : vector<2x256xf32>
    %cst_15 = arith.constant 1.000000e+00 : f32
    %36 = vector.broadcast %cst_15 : f32 to vector<2x256xf32>
    %37 = arith.addf %36, %35 : vector<2x256xf32>
    %38 = arith.divf %36, %37 : vector<2x256xf32>
    %39 = arith.mulf %31, %38 : vector<2x256xf32>
    %40 = arith.truncf %39 : vector<2x256xf32> to vector<2x256xbf16>
    %c0_16 = arith.constant 0 : index
    %c0_17 = arith.constant 0 : index
    %41 = vector.load %arg6[%c0_16, %c0_17] : memref<256x64xf32, #tpu.memory_space<vmem>>, vector<256x64xf32>
    %42 = arith.truncf %41 : vector<256x64xf32> to vector<256x64xbf16>
    %cst_18 = arith.constant dense<0.000000e+00> : vector<2x64xf32>
    %43 = tpu.matmul %40, %42, %cst_18 {dimension_numbers = #tpu.dot_dimension_numbers<[1], [0], [0], [1], [0, 0, 1, 1], [], []>} : vector<2x256xbf16>, vector<256x64xbf16>, vector<2x64xf32> -> vector<2x64xf32>
    %c0_19 = arith.constant 0 : index
    %c0_20 = arith.constant 0 : index
    %44 = vector.load %arg7[%c0_19, %c0_20] : memref<1x64xf32, #tpu.memory_space<vmem>>, vector<1x64xf32>
    %45 = vector.broadcast %44 : vector<1x64xf32> to vector<2x64xf32>
    %46 = arith.addf %43, %45 : vector<2x64xf32>
    %47 = arith.addf %0, %46 : vector<2x64xf32>
    %c0_21 = arith.constant 0 : index
    %c0_22 = arith.constant 0 : index
    %48 = vector.load %arg8[%c0_21, %c0_22] : memref<2x64xf32, #tpu.memory_space<vmem>>, vector<2x64xf32>
    tpu.vector_store %arg8[%c0_21, %c0_22], %47 {strides = array<i32>} : memref<2x64xf32, #tpu.memory_space<vmem>>, vector<2x64xf32>,
    return
  }
  func.func @transform_0(%arg0: i32) -> (i32, i32) {
    %c0_i32 = arith.constant 0 : i32
    %c0_i32_0 = arith.constant 0 : i32
    return %arg0, %c0_i32 : i32, i32
  }
  func.func @transform_1(%arg0: i32) -> (i32, i32) {
    %c0_i32 = arith.constant 0 : i32
    %c0_i32_0 = arith.constant 0 : i32
    %c0_i32_1 = arith.constant 0 : i32
    return %c0_i32, %c0_i32_0 : i32, i32
  }
  func.func @transform_2(%arg0: i32) -> (i32, i32) {
    %c0_i32 = arith.constant 0 : i32
    %c0_i32_0 = arith.constant 0 : i32
    %c0_i32_1 = arith.constant 0 : i32
    return %c0_i32, %c0_i32_0 : i32, i32
  }
  func.func @transform_3(%arg0: i32) -> (i32, i32) {
    %c0_i32 = arith.constant 0 : i32
    %c0_i32_0 = arith.constant 0 : i32
    %c0_i32_1 = arith.constant 0 : i32
    return %c0_i32, %c0_i32_0 : i32, i32
  }
  func.func @transform_4(%arg0: i32) -> (i32, i32) {
    %c0_i32 = arith.constant 0 : i32
    %c0_i32_0 = arith.constant 0 : i32
    %c0_i32_1 = arith.constant 0 : i32
    return %c0_i32, %c0_i32_0 : i32, i32
  }
  func.func @transform_5(%arg0: i32) -> (i32, i32) {
    %c0_i32 = arith.constant 0 : i32
    %c0_i32_0 = arith.constant 0 : i32
    %c0_i32_1 = arith.constant 0 : i32
    return %c0_i32, %c0_i32_0 : i32, i32
  }
  func.func @transform_6(%arg0: i32) -> (i32, i32) {
    %c0_i32 = arith.constant 0 : i32
    %c0_i32_0 = arith.constant 0 : i32
    %c0_i32_1 = arith.constant 0 : i32
    return %c0_i32, %c0_i32_0 : i32, i32
  }
  func.func @transform_7(%arg0: i32) -> (i32, i32) {
    %c0_i32 = arith.constant 0 : i32
    %c0_i32_0 = arith.constant 0 : i32
    return %arg0, %c0_i32 : i32, i32
  }
}

module attributes {stable_mosaic.version = 11 : i64} {
  func.func @_combine_kernel(%arg0: i32, %arg1: memref<1x2x5x64xf32, #tpu.memory_space<vmem>>, %arg2: memref<1x1x64xf32, #tpu.memory_space<vmem>>, %arg3: memref<1x1x64xf32, #tpu.memory_space<vmem>>, %arg4: memref<1x1x64xf32, #tpu.memory_space<vmem>>, %arg5: memref<1x2x5x64xf32, #tpu.memory_space<vmem>>) attributes {dimension_semantics = [#tpu.dimension_semantics<parallel>], iteration_bounds = array<i64: 2>, scalar_prefetch = 0 : i64, scratch_operands = 0 : i64, tpu.core_type = #tpu.core_type<tc>, window_params = [{transform_indices = @transform_0, window_bounds = array<i64: 1, 2, 5, 64>}, {transform_indices = @transform_1, window_bounds = array<i64: 1, 1, 64>}, {pipeline_mode = #tpu.pipeline_mode<synchronous>, transform_indices = @transform_2, window_bounds = array<i64: 1, 1, 64>}, {transform_indices = @transform_3, window_bounds = array<i64: 1, 1, 64>}, {transform_indices = @transform_4, window_bounds = array<i64: 1, 2, 5, 64>}]} {
    %c0 = arith.constant 0 : index
    %c0_0 = arith.constant 0 : index
    %c0_1 = arith.constant 0 : index
    %0 = vector.load %arg3[%c0, %c0_0, %c0_1] : memref<1x1x64xf32, #tpu.memory_space<vmem>>, vector<1x1x64xf32>
    %1 = vector.shape_cast %0 : vector<1x1x64xf32> to vector<1x64xf32>
    %2 = arith.negf %1 : vector<1x64xf32>
    %3 = math.exp %2 : vector<1x64xf32>
    %cst = arith.constant 1.000000e+00 : f32
    %4 = vector.broadcast %cst : f32 to vector<1x64xf32>
    %5 = arith.addf %4, %3 : vector<1x64xf32>
    %6 = arith.divf %4, %5 : vector<1x64xf32>
    %c0_2 = arith.constant 0 : index
    %c0_3 = arith.constant 0 : index
    %c0_4 = arith.constant 0 : index
    %c0_5 = arith.constant 0 : index
    %7 = vector.load %arg1[%c0_2, %c0_3, %c0_4, %c0_5] : memref<1x2x5x64xf32, #tpu.memory_space<vmem>>, vector<1x2x5x64xf32>
    %8 = vector.shape_cast %7 : vector<1x2x5x64xf32> to vector<2x5x64xf32>
    %c0_6 = arith.constant 0 : index
    %c0_7 = arith.constant 0 : index
    %c0_8 = arith.constant 0 : index
    %9 = vector.load %arg2[%c0_6, %c0_7, %c0_8] : memref<1x1x64xf32, #tpu.memory_space<vmem>>, vector<1x1x64xf32>
    %10 = vector.shape_cast %9 : vector<1x1x64xf32> to vector<1x64xf32>
    %11 = vector.extract_strided_slice %8 {offsets = [0, 0, 0], sizes = [2, 1, 64], strides = [1, 1, 1]} : vector<2x5x64xf32> to vector<2x1x64xf32>
    %12 = vector.shape_cast %11 : vector<2x1x64xf32> to vector<2x64xf32>
    %cst_9 = arith.constant dense<0.000000e+00> : vector<64xf32>
    %13 = vector.multi_reduction <add>, %12, %cst_9 [0] : vector<2x64xf32> to vector<64xf32>
    %14 = vector.shape_cast %13 : vector<64xf32> to vector<1x64xf32>
    %cst_10 = arith.constant 2.000000e+00 : f32
    %15 = vector.broadcast %cst_10 : f32 to vector<1x64xf32>
    %16 = arith.divf %14, %15 : vector<1x64xf32>
    %cst_11 = arith.constant 1.000000e+00 : f32
    %17 = vector.broadcast %cst_11 : f32 to vector<1x64xf32>
    %18 = arith.subf %17, %6 : vector<1x64xf32>
    %19 = arith.mulf %18, %10 : vector<1x64xf32>
    %20 = arith.mulf %6, %16 : vector<1x64xf32>
    %21 = arith.addf %19, %20 : vector<1x64xf32>
    %c0_12 = arith.constant 0 : index
    %c0_13 = arith.constant 0 : index
    %c0_14 = arith.constant 0 : index
    %22 = vector.load %arg4[%c0_12, %c0_13, %c0_14] : memref<1x1x64xf32, #tpu.memory_space<vmem>>, vector<1x1x64xf32>
    %23 = vector.shape_cast %22 : vector<1x1x64xf32> to vector<1x64xf32>
    %24 = vector.shape_cast %21 : vector<1x64xf32> to vector<1x1x64xf32>
    tpu.vector_store %arg4[%c0_12, %c0_13, %c0_14], %24 {strides = array<i32>} : memref<1x1x64xf32, #tpu.memory_space<vmem>>, vector<1x1x64xf32>,
    %cst_15 = arith.constant 1.000000e+00 : f32
    %25 = vector.broadcast %cst_15 : f32 to vector<1x64xf32>
    %26 = arith.subf %25, %6 : vector<1x64xf32>
    %27 = arith.mulf %26, %10 : vector<1x64xf32>
    %28 = vector.shape_cast %6 : vector<1x64xf32> to vector<1x1x64xf32>
    %29 = vector.broadcast %28 : vector<1x1x64xf32> to vector<2x5x64xf32>
    %30 = arith.mulf %29, %8 : vector<2x5x64xf32>
    %31 = vector.shape_cast %27 : vector<1x64xf32> to vector<1x1x64xf32>
    %32 = vector.broadcast %31 : vector<1x1x64xf32> to vector<2x5x64xf32>
    %33 = arith.addf %32, %30 : vector<2x5x64xf32>
    %c0_16 = arith.constant 0 : index
    %c0_17 = arith.constant 0 : index
    %c0_18 = arith.constant 0 : index
    %c0_19 = arith.constant 0 : index
    %34 = vector.load %arg5[%c0_16, %c0_17, %c0_18, %c0_19] : memref<1x2x5x64xf32, #tpu.memory_space<vmem>>, vector<1x2x5x64xf32>
    %35 = vector.shape_cast %34 : vector<1x2x5x64xf32> to vector<2x5x64xf32>
    %36 = vector.shape_cast %33 : vector<2x5x64xf32> to vector<1x2x5x64xf32>
    tpu.vector_store %arg5[%c0_16, %c0_17, %c0_18, %c0_19], %36 {strides = array<i32>} : memref<1x2x5x64xf32, #tpu.memory_space<vmem>>, vector<1x2x5x64xf32>,
    return
  }
  func.func @transform_0(%arg0: i32) -> (i32, i32, i32, i32) {
    %c0_i32 = arith.constant 0 : i32
    %c0_i32_0 = arith.constant 0 : i32
    %c0_i32_1 = arith.constant 0 : i32
    %c0_i32_2 = arith.constant 0 : i32
    return %arg0, %c0_i32, %c0_i32_0, %c0_i32_1 : i32, i32, i32, i32
  }
  func.func @transform_1(%arg0: i32) -> (i32, i32, i32) {
    %c0_i32 = arith.constant 0 : i32
    %c0_i32_0 = arith.constant 0 : i32
    %c0_i32_1 = arith.constant 0 : i32
    return %arg0, %c0_i32, %c0_i32_0 : i32, i32, i32
  }
  func.func @transform_2(%arg0: i32) -> (i32, i32, i32) {
    %c0_i32 = arith.constant 0 : i32
    %c0_i32_0 = arith.constant 0 : i32
    %c0_i32_1 = arith.constant 0 : i32
    %c0_i32_2 = arith.constant 0 : i32
    return %c0_i32, %c0_i32_0, %c0_i32_1 : i32, i32, i32
  }
  func.func @transform_3(%arg0: i32) -> (i32, i32, i32) {
    %c0_i32 = arith.constant 0 : i32
    %c0_i32_0 = arith.constant 0 : i32
    %c0_i32_1 = arith.constant 0 : i32
    return %arg0, %c0_i32, %c0_i32_0 : i32, i32, i32
  }
  func.func @transform_4(%arg0: i32) -> (i32, i32, i32, i32) {
    %c0_i32 = arith.constant 0 : i32
    %c0_i32_0 = arith.constant 0 : i32
    %c0_i32_1 = arith.constant 0 : i32
    %c0_i32_2 = arith.constant 0 : i32
    return %arg0, %c0_i32, %c0_i32_0, %c0_i32_1 : i32, i32, i32, i32
  }
}

</mosaic_0001>

<llo_original>
// kernel: transformer_forward.23
$region0: #{transformer_forward.23}
  #allocation0 [shape = 'u32[]', space=smem, size = 0x4, offset = 0x4, fixed_abs, tag = 'smem constant byte address 0x4 - core index']
  #allocation1 [shape = 'u32[72,128]{1,0:T(1,128)}', space=vmem, size = 0x9000, scoped, tag = 'internal scratch']
  %s0 = inlined_call_operand.vmem [shape: f32[20,64], index: 0, kind: input, shape index: {}]
  %s1 = inlined_call_operand.vmem [shape: f32[64,64], index: 1, kind: input, shape index: {}]
  %s2 = inlined_call_operand.vmem [shape: f32[1,64], index: 2, kind: input, shape index: {}]
  %s3 = inlined_call_operand.vmem [shape: f32[20,64], index: 3, kind: input, shape index: {}]
  %s4 = inlined_call_operand.vmem [shape: f32[20,64], index: 4, kind: output, shape index: {}]
  %s5 = sld [smem:[#allocation0]]
  $region26: #{transformer_forward.23} parent=0
    _
  %s7 = ssub.s32 1, %s5
  %s8 = scalar_select 0, %s7, %s5
  // Predicated region
  $region2: #{transformer_forward.23} parent=0 // pred_check
    _
  $region3: #{transformer_forward.23} parent=0 // pred_check_branch
    %10 = sbr.rel (0) target = $region5
  $region4: #{transformer_forward.23} parent=0 // pred_region
    _
  $region5: #{transformer_forward.23} parent=0 // pred_fallthru
    _
  // Predicated region
  $region6: #{transformer_forward.23} parent=0 // pred_check
    _
  $region7: #{transformer_forward.23} parent=0 // pred_check_branch
    %12 = sbr.rel (0) target = $region9
  $region8: #{transformer_forward.23} parent=0 // pred_region
    _
  $region9: #{transformer_forward.23} parent=0 // pred_fallthru
    _
  // Predicated region
  $region10: #{transformer_forward.23} parent=0 // pred_check
    _
  $region11: #{transformer_forward.23} parent=0 // pred_check_branch
    %14 = sbr.rel (0) target = $region13
  $region12: #{transformer_forward.23} parent=0 // pred_region
    _
  $region13: #{transformer_forward.23} parent=0 // pred_fallthru
    _
  // Predicated region
  $region14: #{transformer_forward.23} parent=0 // pred_check
    _
  $region15: #{transformer_forward.23} parent=0 // pred_check_branch
    %16 = sbr.rel (0) target = $region17
  $region16: #{transformer_forward.23} parent=0 // pred_region
    _
  $region17: #{transformer_forward.23} parent=0 // pred_fallthru
    _
  %v18 = vld [vmem:[%s0] sm:$0xff]
  %v19 = vld [vmem:[%s0 + $0x8] sm:$0xff]
  %v20 = vld [vmem:[%s0 + $0x10] sm:$0xf]
  %v21 = vpack.c.bf16 %v19, %v18
  %v22 = vpack.c.bf16 %v20, %v20
  %v23 = vld [vmem:[%s1] sm:$0xff]
  %v24 = vld [vmem:[%s1 + $0x8] sm:$0xff]
  %v25 = vld [vmem:[%s1 + $0x10] sm:$0xff]
  %v26 = vld [vmem:[%s1 + $0x18] sm:$0xff]
  %v27 = vld [vmem:[%s1 + $0x20] sm:$0xff]
  %v28 = vld [vmem:[%s1 + $0x28] sm:$0xff]
  %v29 = vld [vmem:[%s1 + $0x30] sm:$0xff]
  %v30 = vld [vmem:[%s1 + $0x38] sm:$0xff]
  %v31 = vpack.c.bf16 %v24, %v23
  %v32 = vpack.c.bf16 %v26, %v25
  %v33 = vpack.c.bf16 %v28, %v27
  %v34 = vpack.c.bf16 %v30, %v29
  %vm35 = vcmask 523264
  %v37 = vsel %vm35, %v21, 0
  %v40 = vsel %vm35, %v22, 0
  %42 = vmatpush.bf16.msra.mxu0 0
  %43 = vmatpush.bf16.msra.mxu0 0
  %44 = vmatpush.bf16.msra.mxu0 0
  %45 = vmatpush.bf16.msra.mxu0 0
  %46 = vmatpush.bf16.msra.mxu0 %v34
  %47 = vmatpush.bf16.msra.mxu0 %v33
  %48 = vmatpush.bf16.msra.mxu0 %v32
  %49 = vmatpush.bf16.msra.mxu0 %v31
  %50 = vmatmul.bf16.gmra.mxu0 %v37
  %v51 = vpop.f32.mrf.mxu0
  %v52 = vadd.f32 0.0, %v51
  %v53 = vpop.f32.mrf.mxu0
  %v54 = vadd.f32 0.0, %v53
  %55 = vmatmul.bf16.gmra.mxu0 %v40
  %v56 = vpop.f32.mrf.mxu0
  %v57 = vadd.f32 0.0, %v56
  %v58 = vpop.f32.mrf.mxu0
  %59 = vdwg.mxu0
  %v60 = vld [vmem:[%s3] sm:$0xff]
  %v61 = vld [vmem:[%s3 + $0x8] sm:$0xff]
  %v62 = vld [vmem:[%s3 + $0x10] sm:$0xf]
  %v63 = vadd.f32 %v60, %v52
  %v64 = vadd.f32 %v61, %v54
  %v65 = vadd.f32 %v62, %v57
  %v66 = vld [vmem:[%s2] sm:$0x1]
  %v68 = vperm.slane %v66, 0
  %v70 = vadd.f32 %v63, %v68
  %v71 = vadd.f32 %v64, %v68
  %v72 = vadd.f32 %v65, %v68
  %73 = vst.msk [vmem:[%s4] sm:$0xff] %vm35, %v70
  %74 = vst.msk [vmem:[%s4 + $0x8] sm:$0xff] %vm35, %v71
  %vm75 = vcmask 519168
  %76 = vst.msk [vmem:[%s4 + $0x10] sm:$0xf] %vm75, %v72
  // Predicated region
  $region18: #{transformer_forward.23} parent=0 // pred_check
    _
  $region19: #{transformer_forward.23} parent=0 // pred_check_branch
    %78 = sbr.rel (0) target = $region21
  $region20: #{transformer_forward.23} parent=0 // pred_region
    _
  $region21: #{transformer_forward.23} parent=0 // pred_fallthru
    _
  // Predicated region
  $region22: #{transformer_forward.23} parent=0 // pred_check
    _
  $region23: #{transformer_forward.23} parent=0 // pred_check_branch
    %80 = sbr.rel (0) target = $region25
  $region24: #{transformer_forward.23} parent=0 // pred_region
    _
  $region25: #{transformer_forward.23} parent=0 // pred_fallthru
    _

// kernel: transformer_forward.21
$region0: #{transformer_forward.21}
  #allocation0 [shape = 'u32[]', space=smem, size = 0x4, offset = 0x4, fixed_abs, tag = 'smem constant byte address 0x4 - core index']
  #allocation1 [shape = 'u32[72,128]{1,0:T(1,128)}', space=vmem, size = 0x9000, scoped, tag = 'internal scratch']
  %s0 = inlined_call_operand.vmem [shape: f32[20,64], index: 0, kind: input, shape index: {}]
  %s1 = inlined_call_operand.vmem [shape: f32[1,64], index: 1, kind: input, shape index: {}]
  %s2 = inlined_call_operand.vmem [shape: f32[1,64], index: 2, kind: input, shape index: {}]
  %s3 = inlined_call_operand.vmem [shape: f32[64,64], index: 3, kind: input, shape index: {}]
  %s4 = inlined_call_operand.vmem [shape: f32[1,64], index: 4, kind: input, shape index: {}]
  %s5 = inlined_call_operand.vmem [shape: f32[64,64], index: 5, kind: input, shape index: {}]
  %s6 = inlined_call_operand.vmem [shape: f32[1,64], index: 6, kind: input, shape index: {}]
  %s7 = inlined_call_operand.hbm [shape: f32[64,64], index: 7, kind: input, shape index: {}]
  %s8 = inlined_call_operand.vmem [shape: f32[1,64], index: 8, kind: input, shape index: {}]
  %s9 = inlined_call_operand.vmem [shape: f32[20,64], index: 9, kind: output, shape index: {0}]
  %s10 = inlined_call_operand.vmem [shape: f32[20,64], index: 10, kind: output, shape index: {1}]
  %s11 = inlined_call_operand.vmem [shape: f32[20,64], index: 11, kind: output, shape index: {2}]
  %12 = xla_tuple %s9, %s10, %s11
  %s13 = sld [smem:[#allocation0]]
  $region66: #{transformer_forward.21} parent=0
    _
  %s15 = ssub.s32 1, %s13
  %s16 = scalar_select 0, %s15, %s13
  $region1: #{transformer_forward.21} parent=0
    #allocation2 [shape = 'u8[32768]{0}', space=vmem, size = 0x8000, scoped, tag = 'input window, operand 7, single buffered']
    #allocation3 [shape = 's32[1]{0}', space=sflag, size = 0x4, scoped, tag = 'scoped memory for transformer_forward.21']
    %17 = vsyncpa [#allocation3], 0
    // Predicated region
    $region2: #{transformer_forward.21} parent=1 // pred_check
      _
    $region3: #{transformer_forward.21} parent=1 // pred_check_branch
      %19 = sbr.rel (0) target = $region5
    $region4: #{transformer_forward.21} parent=1 // pred_region
      _
    $region5: #{transformer_forward.21} parent=1 // pred_fallthru
      _
    // Predicated region
    $region6: #{transformer_forward.21} parent=1 // pred_check
      _
    $region7: #{transformer_forward.21} parent=1 // pred_check_branch
      %21 = sbr.rel (0) target = $region9
    $region8: #{transformer_forward.21} parent=1 // pred_region
      _
    $region9: #{transformer_forward.21} parent=1 // pred_fallthru
      _
    // Predicated region
    $region10: #{transformer_forward.21} parent=1 // pred_check
      _
    $region11: #{transformer_forward.21} parent=1 // pred_check_branch
      %23 = sbr.rel (0) target = $region13
    $region12: #{transformer_forward.21} parent=1 // pred_region
      _
    $region13: #{transformer_forward.21} parent=1 // pred_fallthru
      _
    // Predicated region
    $region14: #{transformer_forward.21} parent=1 // pred_check
      _
    $region15: #{transformer_forward.21} parent=1 // pred_check_branch
      %25 = sbr.rel (0) target = $region17
    $region16: #{transformer_forward.21} parent=1 // pred_region
      _
    $region17: #{transformer_forward.21} parent=1 // pred_fallthru
      _
    // Predicated region
    $region18: #{transformer_forward.21} parent=1 // pred_check
      _
    $region19: #{transformer_forward.21} parent=1 // pred_check_branch
      %27 = sbr.rel (0) target = $region21
    $region20: #{transformer_forward.21} parent=1 // pred_region
      _
    $region21: #{transformer_forward.21} parent=1 // pred_fallthru
      _
    // Predicated region
    $region22: #{transformer_forward.21} parent=1 // pred_check
      _
    $region23: #{transformer_forward.21} parent=1 // pred_check_branch
      %29 = sbr.rel (0) target = $region25
    $region24: #{transformer_forward.21} parent=1 // pred_region
      _
    $region25: #{transformer_forward.21} parent=1 // pred_fallthru
      _
    // Predicated region
    $region26: #{transformer_forward.21} parent=1 // pred_check
      _
    $region27: #{transformer_forward.21} parent=1 // pred_check_branch
      %31 = sbr.rel (0) target = $region29
    $region28: #{transformer_forward.21} parent=1 // pred_region
      _
    $region29: #{transformer_forward.21} parent=1 // pred_fallthru
      _
    // Predicated region
    $region30: #{transformer_forward.21} parent=1 // pred_check
      _
    $region31: #{transformer_forward.21} parent=1 // pred_check_branch
      %33 = sbr.rel (0) target = $region33
    $region32: #{transformer_forward.21} parent=1 // pred_region
      %35 = vsyncadd [#allocation3], 0
      %s36 = sshll.u32 %s7, 4
      %s37 = int_to_ptr.hbm [resolvable:$true] %s36
      %s38 = sshll.u32 [#allocation2], 4
      %s39 = int_to_ptr.vmem [resolvable:$true] %s38
      %44 = dma.hbm_to_vmem [thread:$0]  %s37, 1024, %s39, [#allocation3], 128, 128, 8
    $region33: #{transformer_forward.21} parent=1 // pred_fallthru
      _
    // Predicated region
    $region34: #{transformer_forward.21} parent=1 // pred_check
      _
    $region35: #{transformer_forward.21} parent=1 // pred_check_branch
      %46 = sbr.rel (0) target = $region37
    $region36: #{transformer_forward.21} parent=1 // pred_region
      _
    $region37: #{transformer_forward.21} parent=1 // pred_fallthru
      _
    // Predicated region
    $region38: #{transformer_forward.21} parent=1 // pred_check
      _
    $region39: #{transformer_forward.21} parent=1 // pred_check_branch
      %48 = sbr.rel (0) target = $region41
    $region40: #{transformer_forward.21} parent=1 // pred_region
      %50 = dma.done [#allocation3], 1024
    $region41: #{transformer_forward.21} parent=1 // pred_fallthru
      _
    %v52 = vld [vmem:[%s0] sm:$0xff]
    %v53 = vld [vmem:[%s0 + $0x8] sm:$0xff]
    %v54 = vld [vmem:[%s0 + $0x10] sm:$0xf]
    %vm55 = vcmask 523264
    %v56 = vsel %vm55, %v52, 0.0
    %57 = vadd.xlane.f32.xlu0 %v56
    %v58 = vpop.xlane.xlu0 %57
    %v59 = vsel %vm55, %v53, 0.0
    %60 = vadd.xlane.f32.xlu0 %v59
    %v61 = vpop.xlane.xlu0 %60
    %vm62 = vcmask 519168
    %v63 = vsel %vm62, %v54, 0.0
    %64 = vadd.xlane.f32.xlu0 %v63
    %v65 = vpop.xlane.xlu0 %64
    %v66 = vrcp.pop 64.0
    %v67 = vmul.f32 64.0, %v66
    %v68 = vsub.f32 1.0, %v67
    %v69 = vmul.f32 %v66, %v68
    %v70 = vadd.f32 %v66, %v69
    %vm71 = vweird.f32 %v66
    %v72 = vsel %vm71, %v66, %v70
    %v73 = vmul.f32 %v58, %v72
    %v74 = vmul.f32 %v61, %v72
    %v75 = vmul.f32 %v65, %v72
    %v76 = vsub.f32 %v52, %v73
    %v77 = vsub.f32 %v53, %v74
    %v78 = vsub.f32 %v54, %v75
    %v79 = vmul.f32 %v76, %v76
    %v80 = vmul.f32 %v77, %v77
    %v81 = vmul.f32 %v78, %v78
    %v82 = vsel %vm55, %v79, 0.0
    %83 = vadd.xlane.f32.xlu0 %v82
    %v84 = vpop.xlane.xlu0 %83
    %v85 = vsel %vm55, %v80, 0.0
    %86 = vadd.xlane.f32.xlu0 %v85
    %v87 = vpop.xlane.xlu0 %86
    %v88 = vsel %vm62, %v81, 0.0
    %89 = vadd.xlane.f32.xlu0 %v88
    %v90 = vpop.xlane.xlu0 %89
    %v91 = vmul.f32 %v84, %v72
    %v92 = vmul.f32 %v87, %v72
    %v93 = vmul.f32 %v90, %v72
    %v94 = vadd.f32 %v91, 1e-05
    %v95 = vadd.f32 %v92, 1e-05
    %v96 = vadd.f32 %v93, 1e-05
    %v97 = vrsqrt.pop %v94
    %v98 = vmul.f32 %v97, %v94
    %v99 = vmul.f32 %v98, %v97
    %v100 = vmul.f32 0.5, %v99
    %v101 = vsub.f32 1.5, %v100
    %v102 = vmul.f32 %v97, %v101
    %vm103 = vweird.f32 %v94
    %vm104 = vweird.f32 %v97
    %vm105 = vmor %vm103, %vm104
    %v106 = vsel %vm105, %v97, %v102
    %v107 = vrsqrt.pop %v95
    %v108 = vmul.f32 %v107, %v95
    %v109 = vmul.f32 %v108, %v107
    %v110 = vmul.f32 0.5, %v109
    %v111 = vsub.f32 1.5, %v110
    %v112 = vmul.f32 %v107, %v111
    %vm113 = vweird.f32 %v95
    %vm114 = vweird.f32 %v107
    %vm115 = vmor %vm113, %vm114
    %v116 = vsel %vm115, %v107, %v112
    %v117 = vrsqrt.pop %v96
    %v118 = vmul.f32 %v117, %v96
    %v119 = vmul.f32 %v118, %v117
    %v120 = vmul.f32 0.5, %v119
    %v121 = vsub.f32 1.5, %v120
    %v122 = vmul.f32 %v117, %v121
    %vm123 = vweird.f32 %v96
    %vm124 = vweird.f32 %v117
    %vm125 = vmor %vm123, %vm124
    %v126 = vsel %vm125, %v117, %v122
    %v127 = vmul.f32 %v76, %v106
    %v128 = vmul.f32 %v77, %v116
    %v129 = vmul.f32 %v78, %v126
    %v130 = vld [vmem:[%s1] sm:$0x1]
    %v132 = vperm.slane %v130, 0
    %v134 = vmul.f32 %v127, %v132
    %v135 = vmul.f32 %v128, %v132
    %v136 = vmul.f32 %v129, %v132
    %v137 = vld [vmem:[%s2] sm:$0x1]
    %v139 = vperm.slane %v137, 0
    %v141 = vadd.f32 %v134, %v139
    %v142 = vadd.f32 %v135, %v139
    %v143 = vadd.f32 %v136, %v139
    %v144 = vpack.c.bf16 %v142, %v141
    %v145 = vpack.c.bf16 %v143, %v143
    %v146 = vld [vmem:[%s3] sm:$0xff]
    %v147 = vld [vmem:[%s3 + $0x8] sm:$0xff]
    %v148 = vld [vmem:[%s3 + $0x10] sm:$0xff]
    %v149 = vld [vmem:[%s3 + $0x18] sm:$0xff]
    %v150 = vld [vmem:[%s3 + $0x20] sm:$0xff]
    %v151 = vld [vmem:[%s3 + $0x28] sm:$0xff]
    %v152 = vld [vmem:[%s3 + $0x30] sm:$0xff]
    %v153 = vld [vmem:[%s3 + $0x38] sm:$0xff]
    %v154 = vpack.c.bf16 %v147, %v146
    %v155 = vpack.c.bf16 %v149, %v148
    %v156 = vpack.c.bf16 %v151, %v150
    %v157 = vpack.c.bf16 %v153, %v152
    %v158 = vld [vmem:[%s4] sm:$0x1]
    %v160 = vperm.slane %v158, 0
    %v163 = vsel %vm55, %v144, 0
    %v166 = vsel %vm55, %v145, 0
    %168 = vmatpush.bf16.msra.mxu0 0
    %169 = vmatpush.bf16.msra.mxu0 0
    %170 = vmatpush.bf16.msra.mxu0 0
    %171 = vmatpush.bf16.msra.mxu0 0
    %172 = vmatpush.bf16.msra.mxu0 %v157
    %173 = vmatpush.bf16.msra.mxu0 %v156
    %174 = vmatpush.bf16.msra.mxu0 %v155
    %175 = vmatpush.bf16.msra.mxu0 %v154
    %176 = vmatmul.bf16.gmra.mxu0 %v163
    %v177 = vpop.f32.mrf.mxu0
    %v178 = vadd.f32 %v160, %v177
    %v179 = vpop.f32.mrf.mxu0
    %v180 = vadd.f32 %v160, %v179
    %181 = vmatmul.bf16.gmra.mxu0 %v166
    %v182 = vpop.f32.mrf.mxu0
    %v183 = vadd.f32 %v160, %v182
    %v184 = vpop.f32.mrf.mxu0
    %185 = vdwg.mxu0
    %186 = vst.msk [vmem:[%s9] sm:$0xff] %vm55, %v178
    %187 = vst.msk [vmem:[%s9 + $0x8] sm:$0xff] %vm55, %v180
    %188 = vst.msk [vmem:[%s9 + $0x10] sm:$0xf] %vm62, %v183
    %v189 = vld [vmem:[%s5] sm:$0xff]
    %v190 = vld [vmem:[%s5 + $0x8] sm:$0xff]
    %v191 = vld [vmem:[%s5 + $0x10] sm:$0xff]
    %v192 = vld [vmem:[%s5 + $0x18] sm:$0xff]
    %v193 = vld [vmem:[%s5 + $0x20] sm:$0xff]
    %v194 = vld [vmem:[%s5 + $0x28] sm:$0xff]
    %v195 = vld [vmem:[%s5 + $0x30] sm:$0xff]
    %v196 = vld [vmem:[%s5 + $0x38] sm:$0xff]
    %v197 = vpack.c.bf16 %v190, %v189
    %v198 = vpack.c.bf16 %v192, %v191
    %v199 = vpack.c.bf16 %v194, %v193
    %v200 = vpack.c.bf16 %v196, %v195
    %v201 = vld [vmem:[%s6] sm:$0x1]
    %v203 = vperm.slane %v201, 0
    %205 = vmatpush.bf16.msra.mxu0 0
    %206 = vmatpush.bf16.msra.mxu0 0
    %207 = vmatpush.bf16.msra.mxu0 0
    %208 = vmatpush.bf16.msra.mxu0 0
    %209 = vmatpush.bf16.msra.mxu0 %v200
    %210 = vmatpush.bf16.msra.mxu0 %v199
    %211 = vmatpush.bf16.msra.mxu0 %v198
    %212 = vmatpush.bf16.msra.mxu0 %v197
    %213 = vmatmul.bf16.gmra.mxu0 %v163
    %v214 = vpop.f32.mrf.mxu0
    %v215 = vadd.f32 %v203, %v214
    %v216 = vpop.f32.mrf.mxu0
    %v217 = vadd.f32 %v203, %v216
    %218 = vmatmul.bf16.gmra.mxu0 %v166
    %v219 = vpop.f32.mrf.mxu0
    %v220 = vadd.f32 %v203, %v219
    %v221 = vpop.f32.mrf.mxu0
    %222 = vdwg.mxu0
    %223 = vst.msk [vmem:[%s10] sm:$0xff] %vm55, %v215
    %224 = vst.msk [vmem:[%s10 + $0x8] sm:$0xff] %vm55, %v217
    %225 = vst.msk [vmem:[%s10 + $0x10] sm:$0xf] %vm62, %v220
    %v226 = vld [vmem:[#allocation2] sm:$0xff]
    %v227 = vld [vmem:[#allocation2 + $0x8] sm:$0xff]
    %v228 = vld [vmem:[#allocation2 + $0x10] sm:$0xff]
    %v229 = vld [vmem:[#allocation2 + $0x18] sm:$0xff]
    %v230 = vld [vmem:[#allocation2 + $0x20] sm:$0xff]
    %v231 = vld [vmem:[#allocation2 + $0x28] sm:$0xff]
    %v232 = vld [vmem:[#allocation2 + $0x30] sm:$0xff]
    %v233 = vld [vmem:[#allocation2 + $0x38] sm:$0xff]
    %v234 = vpack.c.bf16 %v227, %v226
    %v235 = vpack.c.bf16 %v229, %v228
    %v236 = vpack.c.bf16 %v231, %v230
    %v237 = vpack.c.bf16 %v233, %v232
    %v238 = vld [vmem:[%s8] sm:$0x1]
    %v240 = vperm.slane %v238, 0
    %242 = vmatpush.bf16.msra.mxu0 0
    %243 = vmatpush.bf16.msra.mxu0 0
    %244 = vmatpush.bf16.msra.mxu0 0
    %245 = vmatpush.bf16.msra.mxu0 0
    %246 = vmatpush.bf16.msra.mxu0 %v237
    %247 = vmatpush.bf16.msra.mxu0 %v236
    %248 = vmatpush.bf16.msra.mxu0 %v235
    %249 = vmatpush.bf16.msra.mxu0 %v234
    %250 = vmatmul.bf16.gmra.mxu0 %v163
    %v251 = vpop.f32.mrf.mxu0
    %v252 = vadd.f32 %v240, %v251
    %v253 = vpop.f32.mrf.mxu0
    %v254 = vadd.f32 %v240, %v253
    %255 = vmatmul.bf16.gmra.mxu0 %v166
    %v256 = vpop.f32.mrf.mxu0
    %v257 = vadd.f32 %v240, %v256
    %v258 = vpop.f32.mrf.mxu0
    %259 = vdwg.mxu0
    %260 = vst.msk [vmem:[%s11] sm:$0xff] %vm55, %v252
    %261 = vst.msk [vmem:[%s11 + $0x8] sm:$0xff] %vm55, %v254
    %262 = vst.msk [vmem:[%s11 + $0x10] sm:$0xf] %vm62, %v257
    // Predicated region
    $region42: #{transformer_forward.21} parent=1 // pred_check
      _
    $region43: #{transformer_forward.21} parent=1 // pred_check_branch
      %264 = sbr.rel (0) target = $region45
    $region44: #{transformer_forward.21} parent=1 // pred_region
      _
    $region45: #{transformer_forward.21} parent=1 // pred_fallthru
      _
    // Predicated region
    $region46: #{transformer_forward.21} parent=1 // pred_check
      _
    $region47: #{transformer_forward.21} parent=1 // pred_check_branch
      %266 = sbr.rel (0) target = $region49
    $region48: #{transformer_forward.21} parent=1 // pred_region
      _
    $region49: #{transformer_forward.21} parent=1 // pred_fallthru
      _
    // Predicated region
    $region50: #{transformer_forward.21} parent=1 // pred_check
      _
    $region51: #{transformer_forward.21} parent=1 // pred_check_branch
      %268 = sbr.rel (0) target = $region53
    $region52: #{transformer_forward.21} parent=1 // pred_region
      _
    $region53: #{transformer_forward.21} parent=1 // pred_fallthru
      _
    // Predicated region
    $region54: #{transformer_forward.21} parent=1 // pred_check
      _
    $region55: #{transformer_forward.21} parent=1 // pred_check_branch
      %270 = sbr.rel (0) target = $region57
    $region56: #{transformer_forward.21} parent=1 // pred_region
      _
    $region57: #{transformer_forward.21} parent=1 // pred_fallthru
      _
    // Predicated region
    $region58: #{transformer_forward.21} parent=1 // pred_check
      _
    $region59: #{transformer_forward.21} parent=1 // pred_check_branch
      %272 = sbr.rel (0) target = $region61
    $region60: #{transformer_forward.21} parent=1 // pred_region
      _
    $region61: #{transformer_forward.21} parent=1 // pred_fallthru
      _
    // Predicated region
    $region62: #{transformer_forward.21} parent=1 // pred_check
      _
    $region63: #{transformer_forward.21} parent=1 // pred_check_branch
      %274 = sbr.rel (0) target = $region65
    $region64: #{transformer_forward.21} parent=1 // pred_region
      _
    $region65: #{transformer_forward.21} parent=1 // pred_fallthru
      _
    %275 = vsyncpa [#allocation3], 1

// kernel: transformer_forward.22
$region0: #{transformer_forward.22}
  #allocation0 [shape = 'u32[]', space=smem, size = 0x4, offset = 0x4, fixed_abs, tag = 'smem constant byte address 0x4 - core index']
  #allocation1 [shape = 'u32[72,128]{1,0:T(1,128)}', space=vmem, size = 0x9000, scoped, tag = 'internal scratch']
  %s0 = inlined_call_operand.vmem [shape: f32[4,5,64], index: 0, kind: input, shape index: {}]
  %s1 = inlined_call_operand.vmem [shape: f32[4,5,64], index: 1, kind: input, shape index: {}]
  %s2 = inlined_call_operand.vmem [shape: f32[4,5,64], index: 2, kind: input, shape index: {}]
  %s3 = inlined_call_operand.vmem [shape: f32[4,5,64], index: 3, kind: output, shape index: {}]
  %s4 = sld [smem:[#allocation0]]
  $region45: #{transformer_forward.22} parent=0
    _
  %s6 = ssub.s32 1, %s4
  %s7 = scalar_select 0, %s6, %s4
  loop: start=0, step=1, limit=6
  $region2: #{transformer_forward.22} parent=0 // loop_pre_header
    _
  $region3: #{transformer_forward.22} parent=0 // loop_header
    %s9 = sphi 0, %s13
    %p10 = scmp.ge.s32.totalorder %s9, 6
    %s19 = sphi 0, %s21
    %s22 = sphi 0, %s19
    %s23 = sphi 0, %s22
    %s39 = sphi 0, %s23
    %s45 = sphi 0, %s47
    %s48 = sphi 0, %s45
    %s49 = sphi 0, %s48
    %s65 = sphi 0, %s49
    %s71 = sphi 0, %s73
    %s74 = sphi 0, %s71
    %s75 = sphi 0, %s74
    %s91 = sphi 0, %s75
    %s97 = sphi 0, %s99
    %s100 = sphi 0, %s97
    %s101 = sphi 0, %s100
    %s117 = sphi 0, %s101
  $region4: #{transformer_forward.22} parent=0 // loop_header_branch
    %12 = sbr.rel (%p10) target = $region8
  $region5: #{transformer_forward.22} parent=0 // loop_body
    %s14 = ssub.s32 %s9, 1
    %s15 = ssub.s32 %s9, 2
    %s16 = sadd.s32 %s9, 1
    %s17 = ssub.s32 %s9, %s16
    %p18 = scmp.eq.s32.totalorder %s17, 0
    %s20 = sadd.s32 %s19, 1
    %s21 = scalar_select %p18, %s19, %s20
    %p24 = pneg %p18
    %p25 = scmp.eq.s32.totalorder %s9, 3
    %p26 = por %p24, %p25
    %p27 = scmp.ne.s32.totalorder %s19, %s22
    %p28 = scmp.eq.s32.totalorder %s9, 0
    %p29 = por %p27, %p28
    %p30 = scmp.ne.s32.totalorder %s19, %s22
    %p31 = scmp.eq.s32.totalorder %s14, 3
    %p32 = por %p30, %p31
    %p33 = scmp.ne.s32.totalorder %s22, %s23
    %p34 = scmp.eq.s32.totalorder %s14, 0
    %p35 = por %p33, %p34
    %p36 = scmp.ne.s32.totalorder %s22, %s23
    %p37 = scmp.eq.s32.totalorder %s15, 3
    %p38 = por %p36, %p37
    %p40 = scmp.ne.s32.totalorder %s23, %s39
    %p41 = scmp.eq.s32.totalorder %s15, 0
    %p42 = por %p40, %p41
    %s43 = ssub.s32 %s9, %s16
    %p44 = scmp.eq.s32.totalorder %s43, 0
    %s46 = sadd.s32 %s45, 1
    %s47 = scalar_select %p44, %s45, %s46
    %p50 = pneg %p44
    %p51 = scmp.eq.s32.totalorder %s9, 3
    %p52 = por %p50, %p51
    %p53 = scmp.ne.s32.totalorder %s45, %s48
    %p54 = scmp.eq.s32.totalorder %s9, 0
    %p55 = por %p53, %p54
    %p56 = scmp.ne.s32.totalorder %s45, %s48
    %p57 = scmp.eq.s32.totalorder %s14, 3
    %p58 = por %p56, %p57
    %p59 = scmp.ne.s32.totalorder %s48, %s49
    %p60 = scmp.eq.s32.totalorder %s14, 0
    %p61 = por %p59, %p60
    %p62 = scmp.ne.s32.totalorder %s48, %s49
    %p63 = scmp.eq.s32.totalorder %s15, 3
    %p64 = por %p62, %p63
    %p66 = scmp.ne.s32.totalorder %s49, %s65
    %p67 = scmp.eq.s32.totalorder %s15, 0
    %p68 = por %p66, %p67
    %s69 = ssub.s32 %s9, %s16
    %p70 = scmp.eq.s32.totalorder %s69, 0
    %s72 = sadd.s32 %s71, 1
    %s73 = scalar_select %p70, %s71, %s72
    %p76 = pneg %p70
    %p77 = scmp.eq.s32.totalorder %s9, 3
    %p78 = por %p76, %p77
    %p79 = scmp.ne.s32.totalorder %s71, %s74
    %p80 = scmp.eq.s32.totalorder %s9, 0
    %p81 = por %p79, %p80
    %p82 = scmp.ne.s32.totalorder %s71, %s74
    %p83 = scmp.eq.s32.totalorder %s14, 3
    %p84 = por %p82, %p83
    %p85 = scmp.ne.s32.totalorder %s74, %s75
    %p86 = scmp.eq.s32.totalorder %s14, 0
    %p87 = por %p85, %p86
    %p88 = scmp.ne.s32.totalorder %s74, %s75
    %p89 = scmp.eq.s32.totalorder %s15, 3
    %p90 = por %p88, %p89
    %p92 = scmp.ne.s32.totalorder %s75, %s91
    %p93 = scmp.eq.s32.totalorder %s15, 0
    %p94 = por %p92, %p93
    %s95 = ssub.s32 %s9, %s16
    %p96 = scmp.eq.s32.totalorder %s95, 0
    %s98 = sadd.s32 %s97, 1
    %s99 = scalar_select %p96, %s97, %s98
    %p102 = pneg %p96
    %p103 = scmp.eq.s32.totalorder %s9, 3
    %p104 = por %p102, %p103
    %p105 = scmp.ne.s32.totalorder %s97, %s100
    %p106 = scmp.eq.s32.totalorder %s9, 0
    %p107 = por %p105, %p106
    %p108 = scmp.ne.s32.totalorder %s97, %s100
    %p109 = scmp.eq.s32.totalorder %s14, 3
    %p110 = por %p108, %p109
    %p111 = scmp.ne.s32.totalorder %s100, %s101
    %p112 = scmp.eq.s32.totalorder %s14, 0
    %p113 = por %p111, %p112
    %p114 = scmp.ne.s32.totalorder %s100, %s101
    %p115 = scmp.eq.s32.totalorder %s15, 3
    %p116 = por %p114, %p115
    %p118 = scmp.ne.s32.totalorder %s101, %s117
    %p119 = scmp.eq.s32.totalorder %s15, 0
    %p120 = por %p118, %p119
    %p121 = scmp.le.s32.totalorder 1, %s9
    %p122 = scmp.lt.s32.totalorder %s9, 5
    %p123 = pnand %p121, %p122
    %p124 = pneg %p123
    // Predicated region
    $region9: #{transformer_forward.22} parent=5 // pred_check
      _
    $region10: #{transformer_forward.22} parent=5 // pred_check_branch
      %126 = sbr.rel (%p123) target = $region12
    $region11: #{transformer_forward.22} parent=5 // pred_region
      %s127 = ssub.s32 %s9, 1
    $region12: #{transformer_forward.22} parent=5 // pred_fallthru
      _
    %p128 = scmp.lt.s32.totalorder %s9, 4
    // Predicated region
    $region13: #{transformer_forward.22} parent=5 // pred_check
      %p129 = pneg %p128
    $region14: #{transformer_forward.22} parent=5 // pred_check_branch
      %131 = sbr.rel (%p129) target = $region16
    $region15: #{transformer_forward.22} parent=5 // pred_region
      // Predicated region
      $region17: #{transformer_forward.22} parent=15 // pred_check
        %p132 = pneg %p29
      $region18: #{transformer_forward.22} parent=15 // pred_check_branch
        %134 = sbr.rel (%p132) target = $region20
      $region19: #{transformer_forward.22} parent=15 // pred_region
        %p135 = scmp.lt.s32.totalorder %s9, 3
        %s136 = scalar_select %p135, %s9, 3
        %s137 = smul.addr %s136, 8
        %s138 = scalar_lea.vmem %s0, %s137
      $region20: #{transformer_forward.22} parent=15 // pred_fallthru
        _
      // Predicated region
      $region21: #{transformer_forward.22} parent=15 // pred_check
        %p139 = pneg %p55
      $region22: #{transformer_forward.22} parent=15 // pred_check_branch
        %141 = sbr.rel (%p139) target = $region24
      $region23: #{transformer_forward.22} parent=15 // pred_region
        %p142 = scmp.lt.s32.totalorder %s9, 3
        %s143 = scalar_select %p142, %s9, 3
        %s144 = smul.addr %s143, 8
        %s145 = scalar_lea.vmem %s1, %s144
      $region24: #{transformer_forward.22} parent=15 // pred_fallthru
        _
      // Predicated region
      $region25: #{transformer_forward.22} parent=15 // pred_check
        %p146 = pneg %p81
      $region26: #{transformer_forward.22} parent=15 // pred_check_branch
        %148 = sbr.rel (%p146) target = $region28
      $region27: #{transformer_forward.22} parent=15 // pred_region
        %p149 = scmp.lt.s32.totalorder %s9, 3
        %s150 = scalar_select %p149, %s9, 3
        %s151 = smul.addr %s150, 8
        %s152 = scalar_lea.vmem %s2, %s151
      $region28: #{transformer_forward.22} parent=15 // pred_fallthru
        _
    $region16: #{transformer_forward.22} parent=5 // pred_fallthru
      _
    %p153 = scmp.le.s32.totalorder 1, %s9
    %p154 = scmp.lt.s32.totalorder %s9, 5
    %p155 = pnand %p153, %p154
    %p156 = pneg %p155
    // Predicated region
    $region29: #{transformer_forward.22} parent=5 // pred_check
      _
    $region30: #{transformer_forward.22} parent=5 // pred_check_branch
      %158 = sbr.rel (%p155) target = $region32
    $region31: #{transformer_forward.22} parent=5 // pred_region
      %s159 = ssub.s32 %s9, 1
      %p160 = scmp.lt.s32.totalorder %s14, 3
      %s161 = scalar_select %p160, %s14, 3
      %s162 = smul.addr %s161, 8
      %s163 = scalar_lea.vmem %s0, %s162
      %p164 = pneg %p35
      %p165 = pneg %p32
      %p166 = scmp.lt.s32.totalorder %s14, 3
      %s167 = scalar_select %p166, %s14, 3
      %s168 = smul.addr %s167, 8
      %s169 = scalar_lea.vmem %s1, %s168
      %p170 = pneg %p61
      %p171 = pneg %p58
      %p172 = scmp.lt.s32.totalorder %s14, 3
      %s173 = scalar_select %p172, %s14, 3
      %s174 = smul.addr %s173, 8
      %s175 = scalar_lea.vmem %s2, %s174
      %p176 = pneg %p87
      %p177 = pneg %p84
      %p178 = pneg %p113
      %p179 = pneg %p110
      %p180 = scmp.lt.s32.totalorder %s14, 3
      %s181 = scalar_select %p180, %s14, 3
      %s182 = smul.addr %s181, 8
      %s183 = scalar_lea.vmem %s3, %s182
      %p184 = scmp.lt.s32.totalorder %s14, 3
      %s185 = scalar_select %p184, %s14, 3
      %s186 = smul.addr %s185, 8
      %s187 = scalar_lea.vmem %s0, %s186
      %p188 = scmp.lt.s32.totalorder %s14, 3
      %s189 = scalar_select %p188, %s14, 3
      %s190 = smul.addr %s189, 8
      %s191 = scalar_lea.vmem %s1, %s190
      %p192 = scmp.lt.s32.totalorder %s14, 3
      %s193 = scalar_select %p192, %s14, 3
      %s194 = smul.addr %s193, 8
      %s195 = scalar_lea.vmem %s2, %s194
      %p196 = scmp.lt.s32.totalorder %s14, 3
      %s197 = scalar_select %p196, %s14, 3
      %s198 = smul.addr %s197, 8
      %s199 = scalar_lea.vmem %s3, %s198
      %v201 = vld [vmem:[%s187] sm:$0x1f]
      %203 = vrot.lane.b32.xlu0 %v201, 112
      %v204 = vpop.permute.xlu0 %203
      %206 = vrot.lane.b32.xlu0 %v201, 96
      %v207 = vpop.permute.xlu0 %206
      %209 = vrot.lane.b32.xlu0 %v201, 80
      %v210 = vpop.permute.xlu0 %209
      %v212 = vrot.slane %v207, 4
      %vm213 = vcmask 1047556
      %v214 = vsel %vm213, %v212, %v201
      %v215 = vrot.slane %v201, 4
      %v216 = vsel %vm213, %v207, %v215
      %v218 = vunpack.c.l.s4 1983009808
      %v219 = vunpack.c.0.s8 %v218
      %v220 = vperm.slane %v214, %v219
      %v222 = vunpack.c.l.s4 1983009808
      %v223 = vunpack.c.0.s8 %v222
      %v224 = vperm.slane %v216, %v223
      %v225 = vrot.slane %v210, 4
      %v226 = vsel %vm213, %v225, %v204
      %v227 = vrot.slane %v204, 4
      %v228 = vsel %vm213, %v210, %v227
      %v230 = vunpack.c.l.s4 1983009808
      %v231 = vunpack.c.0.s8 %v230
      %v232 = vperm.slane %v226, %v231
      %v234 = vunpack.c.l.s4 1983009808
      %v235 = vunpack.c.0.s8 %v234
      %v236 = vperm.slane %v228, %v235
      %v237 = vrot.slane %v232, 4
      %v238 = vsel %vm213, %v237, %v220
      %v239 = vrot.slane %v220, 4
      %v240 = vsel %vm213, %v232, %v239
      %v242 = vunpack.c.l.s4 1934713408
      %v243 = vunpack.c.0.s8 %v242
      %v244 = vperm.slane %v238, %v243
      %v246 = vunpack.c.l.s4 1934713408
      %v247 = vunpack.c.0.s8 %v246
      %v248 = vperm.slane %v240, %v247
      %v249 = vrot.slane %v236, 4
      %v250 = vsel %vm213, %v249, %v224
      %v251 = vrot.slane %v244, 4
      %v252 = vsel %vm213, 0.0, %v251
      %v253 = vrot.slane %v248, 4
      %v254 = vsel %vm213, 0.0, %v253
      %v255 = vsel %vm213, %v253, %v244
      %v257 = vunpack.c.l.s4 1983009808
      %v258 = vunpack.c.0.s8 %v257
      %v259 = vperm.slane %v255, %v258
      %v260 = vrot.slane %v254, 4
      %v261 = vsel %vm213, %v260, %v252
      %v263 = vunpack.c.l.s4 1983009808
      %v264 = vunpack.c.0.s8 %v263
      %v265 = vperm.slane %v261, %v264
      %v267 = vunpack.c.l.s4 1934713408
      %v268 = vunpack.c.0.s8 %v267
      %v269 = vperm.slane %v250, %v268
      %v271 = vunpack.c.l.s4 1983009808
      %v272 = vunpack.c.0.s8 %v271
      %v273 = vperm.slane %v269, %v272
      %v274 = vrot.slane %v265, 4
      %v275 = vsel %vm213, %v274, %v259
      %v276 = vrot.slane %v259, 4
      %v277 = vsel %vm213, %v265, %v276
      %v279 = vunpack.c.l.s4 1934713408
      %v280 = vunpack.c.0.s8 %v279
      %v281 = vperm.slane %v275, %v280
      %v283 = vunpack.c.l.s4 1934713408
      %v284 = vunpack.c.0.s8 %v283
      %v285 = vperm.slane %v277, %v284
      %v286 = vrot.slane %v273, 4
      %v287 = vsel %vm213, 0.0, %v286
      %v289 = vunpack.c.l.s4 1934713408
      %v290 = vunpack.c.0.s8 %v289
      %v291 = vperm.slane %v273, %v290
      %v293 = vunpack.c.l.s4 1934713408
      %v294 = vunpack.c.0.s8 %v293
      %v295 = vperm.slane %v287, %v294
      %v296 = vrot.slane %v291, 4
      %v297 = vsel %vm213, %v296, %v281
      %v298 = vrot.slane %v281, 4
      %v299 = vsel %vm213, %v291, %v298
      %v300 = vrot.slane %v295, 4
      %v301 = vsel %vm213, %v300, %v285
      %v302 = vrot.slane %v285, 4
      %v303 = vsel %vm213, %v295, %v302
      %v304 = vpack.c.bf16 %v297, %v297
      %v305 = vpack.c.bf16 %v299, %v299
      %v306 = vpack.c.bf16 %v301, %v301
      %v307 = vpack.c.bf16 %v303, %v303
      %v308 = vld [vmem:[%s191] sm:$0x1f]
      %310 = vrot.lane.b32.xlu0 %v308, 112
      %v311 = vpop.permute.xlu0 %310
      %313 = vrot.lane.b32.xlu0 %v308, 96
      %v314 = vpop.permute.xlu0 %313
      %316 = vrot.lane.b32.xlu0 %v308, 80
      %v317 = vpop.permute.xlu0 %316
      %v319 = vrot.slane %v314, 4
      %v320 = vsel %vm213, %v319, %v308
      %v321 = vrot.slane %v308, 4
      %v322 = vsel %vm213, %v314, %v321
      %v324 = vunpack.c.l.s4 1983009808
      %v325 = vunpack.c.0.s8 %v324
      %v326 = vperm.slane %v320, %v325
      %v328 = vunpack.c.l.s4 1983009808
      %v329 = vunpack.c.0.s8 %v328
      %v330 = vperm.slane %v322, %v329
      %v331 = vrot.slane %v317, 4
      %v332 = vsel %vm213, %v331, %v311
      %v333 = vrot.slane %v311, 4
      %v334 = vsel %vm213, %v317, %v333
      %v336 = vunpack.c.l.s4 1983009808
      %v337 = vunpack.c.0.s8 %v336
      %v338 = vperm.slane %v332, %v337
      %v340 = vunpack.c.l.s4 1983009808
      %v341 = vunpack.c.0.s8 %v340
      %v342 = vperm.slane %v334, %v341
      %v343 = vrot.slane %v338, 4
      %v344 = vsel %vm213, %v343, %v326
      %v345 = vrot.slane %v326, 4
      %v346 = vsel %vm213, %v338, %v345
      %v348 = vunpack.c.l.s4 1934713408
      %v349 = vunpack.c.0.s8 %v348
      %v350 = vperm.slane %v344, %v349
      %v352 = vunpack.c.l.s4 1934713408
      %v353 = vunpack.c.0.s8 %v352
      %v354 = vperm.slane %v346, %v353
      %v355 = vrot.slane %v342, 4
      %v356 = vsel %vm213, %v355, %v330
      %v357 = vrot.slane %v350, 4
      %v358 = vsel %vm213, 0.0, %v357
      %v359 = vrot.slane %v354, 4
      %v360 = vsel %vm213, 0.0, %v359
      %v361 = vsel %vm213, %v359, %v350
      %v363 = vunpack.c.l.s4 1983009808
      %v364 = vunpack.c.0.s8 %v363
      %v365 = vperm.slane %v361, %v364
      %v366 = vrot.slane %v360, 4
      %v367 = vsel %vm213, %v366, %v358
      %v369 = vunpack.c.l.s4 1983009808
      %v370 = vunpack.c.0.s8 %v369
      %v371 = vperm.slane %v367, %v370
      %v373 = vunpack.c.l.s4 1934713408
      %v374 = vunpack.c.0.s8 %v373
      %v375 = vperm.slane %v356, %v374
      %v377 = vunpack.c.l.s4 1983009808
      %v378 = vunpack.c.0.s8 %v377
      %v379 = vperm.slane %v375, %v378
      %v380 = vrot.slane %v371, 4
      %v381 = vsel %vm213, %v380, %v365
      %v382 = vrot.slane %v365, 4
      %v383 = vsel %vm213, %v371, %v382
      %v385 = vunpack.c.l.s4 1934713408
      %v386 = vunpack.c.0.s8 %v385
      %v387 = vperm.slane %v381, %v386
      %v389 = vunpack.c.l.s4 1934713408
      %v390 = vunpack.c.0.s8 %v389
      %v391 = vperm.slane %v383, %v390
      %v392 = vrot.slane %v379, 4
      %v393 = vsel %vm213, 0.0, %v392
      %v395 = vunpack.c.l.s4 1934713408
      %v396 = vunpack.c.0.s8 %v395
      %v397 = vperm.slane %v379, %v396
      %v399 = vunpack.c.l.s4 1934713408
      %v400 = vunpack.c.0.s8 %v399
      %v401 = vperm.slane %v393, %v400
      %v402 = vrot.slane %v397, 4
      %v403 = vsel %vm213, %v402, %v387
      %v404 = vrot.slane %v387, 4
      %v405 = vsel %vm213, %v397, %v404
      %v406 = vrot.slane %v401, 4
      %v407 = vsel %vm213, %v406, %v391
      %v408 = vrot.slane %v391, 4
      %v409 = vsel %vm213, %v401, %v408
      %v410 = vpack.c.bf16 %v403, %v403
      %v411 = vpack.c.bf16 %v405, %v405
      %v412 = vpack.c.bf16 %v407, %v407
      %v413 = vpack.c.bf16 %v409, %v409
      %v414 = vld [vmem:[%s195] sm:$0x1f]
      %416 = vrot.lane.b32.xlu0 %v414, 112
      %v417 = vpop.permute.xlu0 %416
      %419 = vrot.lane.b32.xlu0 %v414, 96
      %v420 = vpop.permute.xlu0 %419
      %422 = vrot.lane.b32.xlu0 %v414, 80
      %v423 = vpop.permute.xlu0 %422
      %v425 = vrot.slane %v420, 4
      %v426 = vsel %vm213, %v425, %v414
      %v427 = vrot.slane %v414, 4
      %v428 = vsel %vm213, %v420, %v427
      %v430 = vunpack.c.l.s4 1983009808
      %v431 = vunpack.c.0.s8 %v430
      %v432 = vperm.slane %v426, %v431
      %v434 = vunpack.c.l.s4 1983009808
      %v435 = vunpack.c.0.s8 %v434
      %v436 = vperm.slane %v428, %v435
      %v437 = vrot.slane %v423, 4
      %v438 = vsel %vm213, %v437, %v417
      %v439 = vrot.slane %v417, 4
      %v440 = vsel %vm213, %v423, %v439
      %v442 = vunpack.c.l.s4 1983009808
      %v443 = vunpack.c.0.s8 %v442
      %v444 = vperm.slane %v438, %v443
      %v446 = vunpack.c.l.s4 1983009808
      %v447 = vunpack.c.0.s8 %v446
      %v448 = vperm.slane %v440, %v447
      %v449 = vrot.slane %v444, 4
      %v450 = vsel %vm213, %v449, %v432
      %v451 = vrot.slane %v432, 4
      %v452 = vsel %vm213, %v444, %v451
      %v454 = vunpack.c.l.s4 1934713408
      %v455 = vunpack.c.0.s8 %v454
      %v456 = vperm.slane %v450, %v455
      %v458 = vunpack.c.l.s4 1934713408
      %v459 = vunpack.c.0.s8 %v458
      %v460 = vperm.slane %v452, %v459
      %v461 = vrot.slane %v448, 4
      %v462 = vsel %vm213, %v461, %v436
      %v463 = vrot.slane %v456, 4
      %v464 = vsel %vm213, 0.0, %v463
      %v465 = vrot.slane %v460, 4
      %v466 = vsel %vm213, 0.0, %v465
      %v467 = vsel %vm213, %v465, %v456
      %v469 = vunpack.c.l.s4 1983009808
      %v470 = vunpack.c.0.s8 %v469
      %v471 = vperm.slane %v467, %v470
      %v472 = vrot.slane %v466, 4
      %v473 = vsel %vm213, %v472, %v464
      %v475 = vunpack.c.l.s4 1983009808
      %v476 = vunpack.c.0.s8 %v475
      %v477 = vperm.slane %v473, %v476
      %v479 = vunpack.c.l.s4 1934713408
      %v480 = vunpack.c.0.s8 %v479
      %v481 = vperm.slane %v462, %v480
      %v483 = vunpack.c.l.s4 1983009808
      %v484 = vunpack.c.0.s8 %v483
      %v485 = vperm.slane %v481, %v484
      %v486 = vrot.slane %v477, 4
      %v487 = vsel %vm213, %v486, %v471
      %v488 = vrot.slane %v471, 4
      %v489 = vsel %vm213, %v477, %v488
      %v491 = vunpack.c.l.s4 1934713408
      %v492 = vunpack.c.0.s8 %v491
      %v493 = vperm.slane %v487, %v492
      %v495 = vunpack.c.l.s4 1934713408
      %v496 = vunpack.c.0.s8 %v495
      %v497 = vperm.slane %v489, %v496
      %v498 = vrot.slane %v485, 4
      %v499 = vsel %vm213, 0.0, %v498
      %v501 = vunpack.c.l.s4 1934713408
      %v502 = vunpack.c.0.s8 %v501
      %v503 = vperm.slane %v485, %v502
      %v505 = vunpack.c.l.s4 1934713408
      %v506 = vunpack.c.0.s8 %v505
      %v507 = vperm.slane %v499, %v506
      %v508 = vrot.slane %v503, 4
      %v509 = vsel %vm213, %v508, %v493
      %v510 = vrot.slane %v493, 4
      %v511 = vsel %vm213, %v503, %v510
      %v512 = vrot.slane %v507, 4
      %v513 = vsel %vm213, %v512, %v497
      %v514 = vrot.slane %v497, 4
      %v515 = vsel %vm213, %v507, %v514
      %v516 = vpack.c.bf16 %v509, %v509
      %v517 = vpack.c.bf16 %v511, %v511
      %v518 = vpack.c.bf16 %v513, %v513
      %v519 = vpack.c.bf16 %v515, %v515
      %vm520 = vcmask 130048
      %v522 = vsel %vm520, %v304, 0
      %v525 = vsel %vm520, %v410, 0
      %527 = vmatpush.bf16.xpose.msra.mxu0 0
      %528 = vmatpush.bf16.xpose.msra.mxu0 0
      %529 = vmatpush.bf16.xpose.msra.mxu0 0
      %530 = vmatpush.bf16.xpose.msra.mxu0 0
      %531 = vmatpush.bf16.xpose.msra.mxu0 0
      %532 = vmatpush.bf16.xpose.msra.mxu0 0
      %533 = vmatpush.bf16.xpose.msra.mxu0 0
      %534 = vmatpush.bf16.xpose.msra.mxu0 %v525
      %535 = vmatmul.bf16.gmra.mxu0 %v522
      %v536 = vpop.f32.mrf.mxu0
      %v537 = vadd.f32 0.0, %v536
      %v538 = vpop.f32.mrf.mxu0
      %539 = vdwg.mxu0
      %v541 = vsel %vm520, %v305, 0
      %v544 = vsel %vm520, %v411, 0
      %546 = vmatpush.bf16.xpose.msra.mxu0 0
      %547 = vmatpush.bf16.xpose.msra.mxu0 0
      %548 = vmatpush.bf16.xpose.msra.mxu0 0
      %549 = vmatpush.bf16.xpose.msra.mxu0 0
      %550 = vmatpush.bf16.xpose.msra.mxu0 0
      %551 = vmatpush.bf16.xpose.msra.mxu0 0
      %552 = vmatpush.bf16.xpose.msra.mxu0 0
      %553 = vmatpush.bf16.xpose.msra.mxu0 %v544
      %554 = vmatmul.bf16.gmra.mxu0 %v541
      %v555 = vpop.f32.mrf.mxu0
      %v556 = vadd.f32 0.0, %v555
      %v557 = vpop.f32.mrf.mxu0
      %558 = vdwg.mxu0
      %v560 = vsel %vm520, %v306, 0
      %v563 = vsel %vm520, %v412, 0
      %565 = vmatpush.bf16.xpose.msra.mxu0 0
      %566 = vmatpush.bf16.xpose.msra.mxu0 0
      %567 = vmatpush.bf16.xpose.msra.mxu0 0
      %568 = vmatpush.bf16.xpose.msra.mxu0 0
      %569 = vmatpush.bf16.xpose.msra.mxu0 0
      %570 = vmatpush.bf16.xpose.msra.mxu0 0
      %571 = vmatpush.bf16.xpose.msra.mxu0 0
      %572 = vmatpush.bf16.xpose.msra.mxu0 %v563
      %573 = vmatmul.bf16.gmra.mxu0 %v560
      %v574 = vpop.f32.mrf.mxu0
      %v575 = vadd.f32 0.0, %v574
      %v576 = vpop.f32.mrf.mxu0
      %577 = vdwg.mxu0
      %v579 = vsel %vm520, %v307, 0
      %v582 = vsel %vm520, %v413, 0
      %584 = vmatpush.bf16.xpose.msra.mxu0 0
      %585 = vmatpush.bf16.xpose.msra.mxu0 0
      %586 = vmatpush.bf16.xpose.msra.mxu0 0
      %587 = vmatpush.bf16.xpose.msra.mxu0 0
      %588 = vmatpush.bf16.xpose.msra.mxu0 0
      %589 = vmatpush.bf16.xpose.msra.mxu0 0
      %590 = vmatpush.bf16.xpose.msra.mxu0 0
      %591 = vmatpush.bf16.xpose.msra.mxu0 %v582
      %592 = vmatmul.bf16.gmra.mxu0 %v579
      %v593 = vpop.f32.mrf.mxu0
      %v594 = vadd.f32 0.0, %v593
      %v595 = vpop.f32.mrf.mxu0
      %596 = vdwg.mxu0
      %v597 = vmul.f32 %v537, 0.25
      %v598 = vmul.f32 %v556, 0.25
      %v599 = vmul.f32 %v575, 0.25
      %v600 = vmul.f32 %v594, 0.25
      %vm601 = vcmask 36864
      %v602 = vsel %vm601, %v597, -inf
      %603 = vmax.xlane.f32.xlu0 %v602
      %v604 = vpop.xlane.xlu0 %603
      %v605 = vsel %vm601, %v598, -inf
      %606 = vmax.xlane.f32.xlu0 %v605
      %v607 = vpop.xlane.xlu0 %606
      %v608 = vsel %vm601, %v599, -inf
      %609 = vmax.xlane.f32.xlu0 %v608
      %v610 = vpop.xlane.xlu0 %609
      %v611 = vsel %vm601, %v600, -inf
      %612 = vmax.xlane.f32.xlu0 %v611
      %v613 = vpop.xlane.xlu0 %612
      %v614 = vsub.f32 %v597, %v604
      %v615 = vsub.f32 %v598, %v607
      %v616 = vsub.f32 %v599, %v610
      %v617 = vsub.f32 %v600, %v613
      %v618 = vmul.f32 %v614, 1.442695
      %v619 = vpow.pop %v618
      %v620 = vmul.f32 %v615, 1.442695
      %v621 = vpow.pop %v620
      %v622 = vmul.f32 %v616, 1.442695
      %v623 = vpow.pop %v622
      %v624 = vmul.f32 %v617, 1.442695
      %v625 = vpow.pop %v624
      %v626 = vsel %vm601, %v619, 0.0
      %627 = vadd.xlane.f32.xlu0 %v626
      %v628 = vpop.xlane.xlu0 %627
      %v629 = vsel %vm601, %v621, 0.0
      %630 = vadd.xlane.f32.xlu0 %v629
      %v631 = vpop.xlane.xlu0 %630
      %v632 = vsel %vm601, %v623, 0.0
      %633 = vadd.xlane.f32.xlu0 %v632
      %v634 = vpop.xlane.xlu0 %633
      %v635 = vsel %vm601, %v625, 0.0
      %636 = vadd.xlane.f32.xlu0 %v635
      %v637 = vpop.xlane.xlu0 %636
      %v638 = vrcp.pop %v628
      %v639 = vrcp.pop %v631
      %v640 = vrcp.pop %v634
      %v641 = vrcp.pop %v637
      %v642 = vmul.f32 %v619, %v638
      %v643 = vmul.f32 %v621, %v639
      %v644 = vmul.f32 %v623, %v640
      %v645 = vmul.f32 %v625, %v641
      %v646 = vpack.c.bf16 %v642, %v642
      %v647 = vpack.c.bf16 %v643, %v643
      %v648 = vpack.c.bf16 %v644, %v644
      %v649 = vpack.c.bf16 %v645, %v645
      %vm650 = vcmask 39936
      %v652 = vsel %vm650, %v646, 0
      %vm654 = vcmask 1041408
      %vm655 = vcmask 1042432
      %v656 = vsel %vm654, 4294967295, 65535
      %v657 = vsel %vm655, %v656, 0
      %v659 = vand.u32 %v516, %v657
      %661 = vmatpush.bf16.msra.mxu0 0
      %662 = vmatpush.bf16.msra.mxu0 0
      %663 = vmatpush.bf16.msra.mxu0 0
      %664 = vmatpush.bf16.msra.mxu0 0
      %665 = vmatpush.bf16.msra.mxu0 0
      %666 = vmatpush.bf16.msra.mxu0 0
      %667 = vmatpush.bf16.msra.mxu0 0
      %668 = vmatpush.bf16.msra.mxu0 %v659
      %669 = vmatmul.bf16.gmra.mxu0 %v652
      %v670 = vpop.f32.mrf.mxu0
      %v671 = vadd.f32 0.0, %v670
      %v672 = vpop.f32.mrf.mxu0
      %673 = vdwg.mxu0
      %v675 = vsel %vm650, %v647, 0
      %v678 = vand.u32 %v517, %v657
      %680 = vmatpush.bf16.msra.mxu0 0
      %681 = vmatpush.bf16.msra.mxu0 0
      %682 = vmatpush.bf16.msra.mxu0 0
      %683 = vmatpush.bf16.msra.mxu0 0
      %684 = vmatpush.bf16.msra.mxu0 0
      %685 = vmatpush.bf16.msra.mxu0 0
      %686 = vmatpush.bf16.msra.mxu0 0
      %687 = vmatpush.bf16.msra.mxu0 %v678
      %688 = vmatmul.bf16.gmra.mxu0 %v675
      %v689 = vpop.f32.mrf.mxu0
      %v690 = vadd.f32 0.0, %v689
      %v691 = vpop.f32.mrf.mxu0
      %692 = vdwg.mxu0
      %v694 = vsel %vm650, %v648, 0
      %v697 = vand.u32 %v518, %v657
      %699 = vmatpush.bf16.msra.mxu0 0
      %700 = vmatpush.bf16.msra.mxu0 0
      %701 = vmatpush.bf16.msra.mxu0 0
      %702 = vmatpush.bf16.msra.mxu0 0
      %703 = vmatpush.bf16.msra.mxu0 0
      %704 = vmatpush.bf16.msra.mxu0 0
      %705 = vmatpush.bf16.msra.mxu0 0
      %706 = vmatpush.bf16.msra.mxu0 %v697
      %707 = vmatmul.bf16.gmra.mxu0 %v694
      %v708 = vpop.f32.mrf.mxu0
      %v709 = vadd.f32 0.0, %v708
      %v710 = vpop.f32.mrf.mxu0
      %711 = vdwg.mxu0
      %v713 = vsel %vm650, %v649, 0
      %v716 = vand.u32 %v519, %v657
      %718 = vmatpush.bf16.msra.mxu0 0
      %719 = vmatpush.bf16.msra.mxu0 0
      %720 = vmatpush.bf16.msra.mxu0 0
      %721 = vmatpush.bf16.msra.mxu0 0
      %722 = vmatpush.bf16.msra.mxu0 0
      %723 = vmatpush.bf16.msra.mxu0 0
      %724 = vmatpush.bf16.msra.mxu0 0
      %725 = vmatpush.bf16.msra.mxu0 %v716
      %726 = vmatmul.bf16.gmra.mxu0 %v713
      %v727 = vpop.f32.mrf.mxu0
      %v728 = vadd.f32 0.0, %v727
      %v729 = vpop.f32.mrf.mxu0
      %730 = vdwg.mxu0
      %v731 = vrot.slane %v709, 4
      %v732 = vsel %vm213, %v731, %v671
      %v733 = vrot.slane %v671, 4
      %v734 = vsel %vm213, %v709, %v733
      %v736 = vunpack.c.l.s4 1983009808
      %v737 = vunpack.c.0.s8 %v736
      %v738 = vperm.slane %v732, %v737
      %v740 = vunpack.c.l.s4 1983009808
      %v741 = vunpack.c.0.s8 %v740
      %v742 = vperm.slane %v734, %v741
      %v743 = vrot.slane %v728, 4
      %v744 = vsel %vm213, %v743, %v690
      %v745 = vrot.slane %v690, 4
      %v746 = vsel %vm213, %v728, %v745
      %v748 = vunpack.c.l.s4 1983009808
      %v749 = vunpack.c.0.s8 %v748
      %v750 = vperm.slane %v744, %v749
      %v752 = vunpack.c.l.s4 1983009808
      %v753 = vunpack.c.0.s8 %v752
      %v754 = vperm.slane %v746, %v753
      %v755 = vrot.slane %v750, 4
      %v756 = vsel %vm213, %v755, %v738
      %v757 = vrot.slane %v738, 4
      %v758 = vsel %vm213, %v750, %v757
      %v760 = vunpack.c.l.s4 1934713408
      %v761 = vunpack.c.0.s8 %v760
      %v762 = vperm.slane %v756, %v761
      %v764 = vunpack.c.l.s4 1934713408
      %v765 = vunpack.c.0.s8 %v764
      %v766 = vperm.slane %v758, %v765
      %v767 = vrot.slane %v754, 4
      %v768 = vsel %vm213, %v767, %v742
      %v769 = vrot.slane %v762, 4
      %v770 = vsel %vm213, 0.0, %v769
      %v771 = vrot.slane %v766, 4
      %v772 = vsel %vm213, 0.0, %v771
      %v773 = vsel %vm213, %v771, %v762
      %v775 = vunpack.c.l.s4 1983009808
      %v776 = vunpack.c.0.s8 %v775
      %v777 = vperm.slane %v773, %v776
      %v778 = vrot.slane %v772, 4
      %v779 = vsel %vm213, %v778, %v770
      %v781 = vunpack.c.l.s4 1983009808
      %v782 = vunpack.c.0.s8 %v781
      %v783 = vperm.slane %v779, %v782
      %v785 = vunpack.c.l.s4 1934713408
      %v786 = vunpack.c.0.s8 %v785
      %v787 = vperm.slane %v768, %v786
      %v789 = vunpack.c.l.s4 1983009808
      %v790 = vunpack.c.0.s8 %v789
      %v791 = vperm.slane %v787, %v790
      %v792 = vrot.slane %v783, 4
      %v793 = vsel %vm213, %v792, %v777
      %v794 = vrot.slane %v777, 4
      %v795 = vsel %vm213, %v783, %v794
      %v797 = vunpack.c.l.s4 1934713408
      %v798 = vunpack.c.0.s8 %v797
      %v799 = vperm.slane %v793, %v798
      %v801 = vunpack.c.l.s4 1934713408
      %v802 = vunpack.c.0.s8 %v801
      %v803 = vperm.slane %v795, %v802
      %v804 = vrot.slane %v791, 4
      %v805 = vsel %vm213, 0.0, %v804
      %v807 = vunpack.c.l.s4 1934713408
      %v808 = vunpack.c.0.s8 %v807
      %v809 = vperm.slane %v791, %v808
      %v811 = vunpack.c.l.s4 1934713408
      %v812 = vunpack.c.0.s8 %v811
      %v813 = vperm.slane %v805, %v812
      %v814 = vrot.slane %v809, 4
      %v815 = vsel %vm213, %v814, %v799
      %v816 = vrot.slane %v799, 4
      %v817 = vsel %vm213, %v809, %v816
      %v818 = vrot.slane %v813, 4
      %v819 = vsel %vm213, %v818, %v803
      %v820 = vrot.slane %v803, 4
      %v821 = vsel %vm213, %v813, %v820
      %823 = vrot.lane.b32.xlu0 %v817, 16
      %v824 = vpop.permute.xlu0 %823
      %827 = vrot.lane.b32.xlu0 %v819, 32
      %v828 = vpop.permute.xlu0 %827
      %831 = vrot.lane.b32.xlu0 %v821, 48
      %v832 = vpop.permute.xlu0 %831
      %v834 = vsel %vm520, %v815, %v824
      %vm835 = vcmask 261120
      %v836 = vsel %vm835, %v834, %v828
      %vm837 = vcmask 392192
      %v838 = vsel %vm837, %v836, %v832
      %vm839 = vcmask 520192
      %840 = vst.msk [vmem:[%s199] sm:$0x1f] %vm839, %v838
      %p841 = scmp.lt.s32.totalorder %s14, 3
      %s842 = scalar_select %p841, %s14, 3
      %s843 = smul.addr %s842, 8
      %s844 = scalar_lea.vmem %s3, %s843
      // Predicated region
      $region33: #{transformer_forward.22} parent=31 // pred_check
        %p845 = pneg %p110
      $region34: #{transformer_forward.22} parent=31 // pred_check_branch
        %847 = sbr.rel (%p845) target = $region36
      $region35: #{transformer_forward.22} parent=31 // pred_region
        _
      $region36: #{transformer_forward.22} parent=31 // pred_fallthru
        _
    $region32: #{transformer_forward.22} parent=5 // pred_fallthru
      _
    %p848 = scmp.le.s32.totalorder 2, %s9
    // Predicated region
    $region37: #{transformer_forward.22} parent=5 // pred_check
      %p849 = pneg %p848
    $region38: #{transformer_forward.22} parent=5 // pred_check_branch
      %851 = sbr.rel (%p849) target = $region40
    $region39: #{transformer_forward.22} parent=5 // pred_region
      %s852 = ssub.s32 %s9, 2
      // Predicated region
      $region41: #{transformer_forward.22} parent=39 // pred_check
        %p853 = pneg %p116
      $region42: #{transformer_forward.22} parent=39 // pred_check_branch
        %855 = sbr.rel (%p853) target = $region44
      $region43: #{transformer_forward.22} parent=39 // pred_region
        %p856 = scmp.lt.s32.totalorder %s15, 3
        %s857 = scalar_select %p856, %s15, 3
        %s858 = smul.addr %s857, 8
        %s859 = scalar_lea.vmem %s3, %s858
      $region44: #{transformer_forward.22} parent=39 // pred_fallthru
        _
    $region40: #{transformer_forward.22} parent=5 // pred_fallthru
      _
  $region6: #{transformer_forward.22} parent=0 // loop_footer
    %s13 = sadd.s32 1, %s9
  $region7: #{transformer_forward.22} parent=0 // loop_footer_branch
    %8 = sbr.rel target = $region3
  $region8: #{transformer_forward.22} parent=0 // loop_exit
    _

// kernel: transformer_forward.24
$region0: #{transformer_forward.24}
  #allocation0 [shape = 'u32[]', space=smem, size = 0x4, offset = 0x4, fixed_abs, tag = 'smem constant byte address 0x4 - core index']
  #allocation1 [shape = 'u32[72,128]{1,0:T(1,128)}', space=vmem, size = 0x9000, scoped, tag = 'internal scratch']
  %s0 = inlined_call_operand.vmem [shape: f32[20,64], index: 0, kind: input, shape index: {}]
  %s1 = inlined_call_operand.vmem [shape: f32[1,64], index: 1, kind: input, shape index: {}]
  %s2 = inlined_call_operand.vmem [shape: f32[1,64], index: 2, kind: input, shape index: {}]
  %s3 = inlined_call_operand.vmem [shape: f32[64,256], index: 3, kind: input, shape index: {}]
  %s4 = inlined_call_operand.vmem [shape: f32[1,256], index: 4, kind: input, shape index: {}]
  %s5 = inlined_call_operand.vmem [shape: f32[256,64], index: 5, kind: input, shape index: {}]
  %s6 = inlined_call_operand.vmem [shape: f32[1,64], index: 6, kind: input, shape index: {}]
  %s7 = inlined_call_operand.vmem [shape: f32[20,64], index: 7, kind: output, shape index: {}]
  %s8 = sld [smem:[#allocation0]]
  $region38: #{transformer_forward.24} parent=0
    _
  %s10 = ssub.s32 1, %s8
  %s11 = scalar_select 0, %s10, %s8
  // Predicated region
  $region2: #{transformer_forward.24} parent=0 // pred_check
    _
  $region3: #{transformer_forward.24} parent=0 // pred_check_branch
    %13 = sbr.rel (0) target = $region5
  $region4: #{transformer_forward.24} parent=0 // pred_region
    _
  $region5: #{transformer_forward.24} parent=0 // pred_fallthru
    _
  // Predicated region
  $region6: #{transformer_forward.24} parent=0 // pred_check
    _
  $region7: #{transformer_forward.24} parent=0 // pred_check_branch
    %15 = sbr.rel (0) target = $region9
  $region8: #{transformer_forward.24} parent=0 // pred_region
    _
  $region9: #{transformer_forward.24} parent=0 // pred_fallthru
    _
  // Predicated region
  $region10: #{transformer_forward.24} parent=0 // pred_check
    _
  $region11: #{transformer_forward.24} parent=0 // pred_check_branch
    %17 = sbr.rel (0) target = $region13
  $region12: #{transformer_forward.24} parent=0 // pred_region
    _
  $region13: #{transformer_forward.24} parent=0 // pred_fallthru
    _
  // Predicated region
  $region14: #{transformer_forward.24} parent=0 // pred_check
    _
  $region15: #{transformer_forward.24} parent=0 // pred_check_branch
    %19 = sbr.rel (0) target = $region17
  $region16: #{transformer_forward.24} parent=0 // pred_region
    _
  $region17: #{transformer_forward.24} parent=0 // pred_fallthru
    _
  // Predicated region
  $region18: #{transformer_forward.24} parent=0 // pred_check
    _
  $region19: #{transformer_forward.24} parent=0 // pred_check_branch
    %21 = sbr.rel (0) target = $region21
  $region20: #{transformer_forward.24} parent=0 // pred_region
    _
  $region21: #{transformer_forward.24} parent=0 // pred_fallthru
    _
  // Predicated region
  $region22: #{transformer_forward.24} parent=0 // pred_check
    _
  $region23: #{transformer_forward.24} parent=0 // pred_check_branch
    %23 = sbr.rel (0) target = $region25
  $region24: #{transformer_forward.24} parent=0 // pred_region
    _
  $region25: #{transformer_forward.24} parent=0 // pred_fallthru
    _
  // Predicated region
  $region26: #{transformer_forward.24} parent=0 // pred_check
    _
  $region27: #{transformer_forward.24} parent=0 // pred_check_branch
    %25 = sbr.rel (0) target = $region29
  $region28: #{transformer_forward.24} parent=0 // pred_region
    _
  $region29: #{transformer_forward.24} parent=0 // pred_fallthru
    _
  %v27 = vld [vmem:[%s0] sm:$0xff]
  %v28 = vld [vmem:[%s0 + $0x8] sm:$0xff]
  %v29 = vld [vmem:[%s0 + $0x10] sm:$0xf]
  %vm30 = vcmask 523264
  %v31 = vsel %vm30, %v27, 0.0
  %32 = vadd.xlane.f32.xlu0 %v31
  %v33 = vpop.xlane.xlu0 %32
  %v34 = vsel %vm30, %v28, 0.0
  %35 = vadd.xlane.f32.xlu0 %v34
  %v36 = vpop.xlane.xlu0 %35
  %vm37 = vcmask 519168
  %v38 = vsel %vm37, %v29, 0.0
  %39 = vadd.xlane.f32.xlu0 %v38
  %v40 = vpop.xlane.xlu0 %39
  %v41 = vrcp.pop 64.0
  %v42 = vmul.f32 64.0, %v41
  %v43 = vsub.f32 1.0, %v42
  %v44 = vmul.f32 %v41, %v43
  %v45 = vadd.f32 %v41, %v44
  %vm46 = vweird.f32 %v41
  %v47 = vsel %vm46, %v41, %v45
  %v48 = vmul.f32 %v33, %v47
  %v49 = vmul.f32 %v36, %v47
  %v50 = vmul.f32 %v40, %v47
  %v51 = vsub.f32 %v27, %v48
  %v52 = vsub.f32 %v28, %v49
  %v53 = vsub.f32 %v29, %v50
  %v54 = vmul.f32 %v51, %v51
  %v55 = vmul.f32 %v52, %v52
  %v56 = vmul.f32 %v53, %v53
  %v57 = vsel %vm30, %v54, 0.0
  %58 = vadd.xlane.f32.xlu0 %v57
  %v59 = vpop.xlane.xlu0 %58
  %v60 = vsel %vm30, %v55, 0.0
  %61 = vadd.xlane.f32.xlu0 %v60
  %v62 = vpop.xlane.xlu0 %61
  %v63 = vsel %vm37, %v56, 0.0
  %64 = vadd.xlane.f32.xlu0 %v63
  %v65 = vpop.xlane.xlu0 %64
  %v66 = vmul.f32 %v59, %v47
  %v67 = vmul.f32 %v62, %v47
  %v68 = vmul.f32 %v65, %v47
  %v69 = vadd.f32 %v66, 1e-05
  %v70 = vadd.f32 %v67, 1e-05
  %v71 = vadd.f32 %v68, 1e-05
  %v72 = vrsqrt.pop %v69
  %v73 = vmul.f32 %v72, %v69
  %v74 = vmul.f32 %v73, %v72
  %v75 = vmul.f32 0.5, %v74
  %v76 = vsub.f32 1.5, %v75
  %v77 = vmul.f32 %v72, %v76
  %vm78 = vweird.f32 %v69
  %vm79 = vweird.f32 %v72
  %vm80 = vmor %vm78, %vm79
  %v81 = vsel %vm80, %v72, %v77
  %v82 = vrsqrt.pop %v70
  %v83 = vmul.f32 %v82, %v70
  %v84 = vmul.f32 %v83, %v82
  %v85 = vmul.f32 0.5, %v84
  %v86 = vsub.f32 1.5, %v85
  %v87 = vmul.f32 %v82, %v86
  %vm88 = vweird.f32 %v70
  %vm89 = vweird.f32 %v82
  %vm90 = vmor %vm88, %vm89
  %v91 = vsel %vm90, %v82, %v87
  %v92 = vrsqrt.pop %v71
  %v93 = vmul.f32 %v92, %v71
  %v94 = vmul.f32 %v93, %v92
  %v95 = vmul.f32 0.5, %v94
  %v96 = vsub.f32 1.5, %v95
  %v97 = vmul.f32 %v92, %v96
  %vm98 = vweird.f32 %v71
  %vm99 = vweird.f32 %v92
  %vm100 = vmor %vm98, %vm99
  %v101 = vsel %vm100, %v92, %v97
  %v102 = vmul.f32 %v51, %v81
  %v103 = vmul.f32 %v52, %v91
  %v104 = vmul.f32 %v53, %v101
  %v105 = vld [vmem:[%s1] sm:$0x1]
  %v107 = vperm.slane %v105, 0
  %v109 = vmul.f32 %v102, %v107
  %v110 = vmul.f32 %v103, %v107
  %v111 = vmul.f32 %v104, %v107
  %v112 = vld [vmem:[%s2] sm:$0x1]
  %v114 = vperm.slane %v112, 0
  %v116 = vadd.f32 %v109, %v114
  %v117 = vadd.f32 %v110, %v114
  %v118 = vadd.f32 %v111, %v114
  %v119 = vpack.c.bf16 %v117, %v116
  %v120 = vpack.c.bf16 %v118, %v118
  %v121 = vld [vmem:[%s3] sm:$0xff]
  %v122 = vld [vmem:[%s3 + $0x8] sm:$0xff]
  %v123 = vld [vmem:[%s3 + $0x10] sm:$0xff]
  %v124 = vld [vmem:[%s3 + $0x18] sm:$0xff]
  %v125 = vld [vmem:[%s3 + $0x20] sm:$0xff]
  %v126 = vld [vmem:[%s3 + $0x28] sm:$0xff]
  %v127 = vld [vmem:[%s3 + $0x30] sm:$0xff]
  %v128 = vld [vmem:[%s3 + $0x38] sm:$0xff]
  %v129 = vld [vmem:[%s3 + $0x40] sm:$0xff]
  %v130 = vld [vmem:[%s3 + $0x48] sm:$0xff]
  %v131 = vld [vmem:[%s3 + $0x50] sm:$0xff]
  %v132 = vld [vmem:[%s3 + $0x58] sm:$0xff]
  %v133 = vld [vmem:[%s3 + $0x60] sm:$0xff]
  %v134 = vld [vmem:[%s3 + $0x68] sm:$0xff]
  %v135 = vld [vmem:[%s3 + $0x70] sm:$0xff]
  %v136 = vld [vmem:[%s3 + $0x78] sm:$0xff]
  %v137 = vpack.c.bf16 %v123, %v121
  %v138 = vpack.c.bf16 %v124, %v122
  %v139 = vpack.c.bf16 %v127, %v125
  %v140 = vpack.c.bf16 %v128, %v126
  %v141 = vpack.c.bf16 %v131, %v129
  %v142 = vpack.c.bf16 %v132, %v130
  %v143 = vpack.c.bf16 %v135, %v133
  %v144 = vpack.c.bf16 %v136, %v134
  %v145 = vld [vmem:[%s4] sm:$0x3]
  %v147 = vperm.slane %v145, 0
  %v148 = vperm.slane %v145, 1
  %v152 = vsel %vm30, %v119, 0
  %v155 = vsel %vm30, %v120, 0
  %157 = vmatpush.bf16.msra.mxu0 0
  %158 = vmatpush.bf16.msra.mxu0 0
  %159 = vmatpush.bf16.msra.mxu0 0
  %160 = vmatpush.bf16.msra.mxu0 0
  %161 = vmatpush.bf16.msra.mxu0 %v143
  %162 = vmatpush.bf16.msra.mxu0 %v141
  %163 = vmatpush.bf16.msra.mxu0 %v139
  %164 = vmatpush.bf16.msra.mxu0 %v137
  %165 = vmatmul.bf16.gmra.mxu0 %v152
  %v166 = vpop.f32.mrf.mxu0
  %v167 = vadd.f32 %v147, %v166
  %v168 = vpop.f32.mrf.mxu0
  %v169 = vadd.f32 %v147, %v168
  %170 = vmatmul.bf16.gmra.mxu0 %v155
  %v171 = vpop.f32.mrf.mxu0
  %v172 = vadd.f32 %v147, %v171
  %v173 = vpop.f32.mrf.mxu0
  %174 = vdwg.mxu0
  %175 = vmatpush.bf16.msra.mxu0 0
  %176 = vmatpush.bf16.msra.mxu0 0
  %177 = vmatpush.bf16.msra.mxu0 0
  %178 = vmatpush.bf16.msra.mxu0 0
  %179 = vmatpush.bf16.msra.mxu0 %v144
  %180 = vmatpush.bf16.msra.mxu0 %v142
  %181 = vmatpush.bf16.msra.mxu0 %v140
  %182 = vmatpush.bf16.msra.mxu0 %v138
  %183 = vmatmul.bf16.gmra.mxu0 %v152
  %v184 = vpop.f32.mrf.mxu0
  %v185 = vadd.f32 %v148, %v184
  %v186 = vpop.f32.mrf.mxu0
  %v187 = vadd.f32 %v148, %v186
  %188 = vmatmul.bf16.gmra.mxu0 %v155
  %v189 = vpop.f32.mrf.mxu0
  %v190 = vadd.f32 %v148, %v189
  %v191 = vpop.f32.mrf.mxu0
  %192 = vdwg.mxu0
  %v193 = vmul.f32 %v167, 1.702
  %v194 = vmul.f32 %v185, 1.702
  %v195 = vmul.f32 %v169, 1.702
  %v196 = vmul.f32 %v187, 1.702
  %v197 = vmul.f32 %v172, 1.702
  %v198 = vmul.f32 %v190, 1.702
  %v199 = vxor.u32 %v193, 2147483648
  %v200 = vxor.u32 %v194, 2147483648
  %v201 = vxor.u32 %v195, 2147483648
  %v202 = vxor.u32 %v196, 2147483648
  %v203 = vxor.u32 %v197, 2147483648
  %v204 = vxor.u32 %v198, 2147483648
  %v205 = vmul.f32 %v199, 1.442695
  %v206 = vpow.pop %v205
  %v207 = vmul.f32 %v200, 1.442695
  %v208 = vpow.pop %v207
  %v209 = vmul.f32 %v201, 1.442695
  %v210 = vpow.pop %v209
  %v211 = vmul.f32 %v202, 1.442695
  %v212 = vpow.pop %v211
  %v213 = vmul.f32 %v203, 1.442695
  %v214 = vpow.pop %v213
  %v215 = vmul.f32 %v204, 1.442695
  %v216 = vpow.pop %v215
  %v217 = vadd.f32 %v206, 1.0
  %v218 = vadd.f32 %v208, 1.0
  %v219 = vadd.f32 %v210, 1.0
  %v220 = vadd.f32 %v212, 1.0
  %v221 = vadd.f32 %v214, 1.0
  %v222 = vadd.f32 %v216, 1.0
  %v223 = vrcp.pop %v217
  %v224 = vmul.f32 %v217, %v223
  %v225 = vsub.f32 1.0, %v224
  %v226 = vmul.f32 %v223, %v225
  %v227 = vadd.f32 %v223, %v226
  %vm228 = vweird.f32 %v217
  %vm229 = vweird.f32 %v223
  %vm230 = vmor %vm228, %vm229
  %v231 = vsel %vm230, %v223, %v227
  %v232 = vand.u32 2147483647, %v217
  %vm233 = vcmp.eq.f32.partialorder %v232, 8.507059e+37
  %v234 = vand.u32 %v217, 2147483648
  %v235 = vor.u32 1.1754944e-38, %v234
  %v236 = vsel %vm233, %v235, %v231
  %v237 = vmul.f32 1.0, %v236
  %v238 = vrcp.pop %v218
  %v239 = vmul.f32 %v218, %v238
  %v240 = vsub.f32 1.0, %v239
  %v241 = vmul.f32 %v238, %v240
  %v242 = vadd.f32 %v238, %v241
  %vm243 = vweird.f32 %v218
  %vm244 = vweird.f32 %v238
  %vm245 = vmor %vm243, %vm244
  %v246 = vsel %vm245, %v238, %v242
  %v247 = vand.u32 2147483647, %v218
  %vm248 = vcmp.eq.f32.partialorder %v247, 8.507059e+37
  %v249 = vand.u32 %v218, 2147483648
  %v250 = vor.u32 1.1754944e-38, %v249
  %v251 = vsel %vm248, %v250, %v246
  %v252 = vmul.f32 1.0, %v251
  %v253 = vrcp.pop %v219
  %v254 = vmul.f32 %v219, %v253
  %v255 = vsub.f32 1.0, %v254
  %v256 = vmul.f32 %v253, %v255
  %v257 = vadd.f32 %v253, %v256
  %vm258 = vweird.f32 %v219
  %vm259 = vweird.f32 %v253
  %vm260 = vmor %vm258, %vm259
  %v261 = vsel %vm260, %v253, %v257
  %v262 = vand.u32 2147483647, %v219
  %vm263 = vcmp.eq.f32.partialorder %v262, 8.507059e+37
  %v264 = vand.u32 %v219, 2147483648
  %v265 = vor.u32 1.1754944e-38, %v264
  %v266 = vsel %vm263, %v265, %v261
  %v267 = vmul.f32 1.0, %v266
  %v268 = vrcp.pop %v220
  %v269 = vmul.f32 %v220, %v268
  %v270 = vsub.f32 1.0, %v269
  %v271 = vmul.f32 %v268, %v270
  %v272 = vadd.f32 %v268, %v271
  %vm273 = vweird.f32 %v220
  %vm274 = vweird.f32 %v268
  %vm275 = vmor %vm273, %vm274
  %v276 = vsel %vm275, %v268, %v272
  %v277 = vand.u32 2147483647, %v220
  %vm278 = vcmp.eq.f32.partialorder %v277, 8.507059e+37
  %v279 = vand.u32 %v220, 2147483648
  %v280 = vor.u32 1.1754944e-38, %v279
  %v281 = vsel %vm278, %v280, %v276
  %v282 = vmul.f32 1.0, %v281
  %v283 = vrcp.pop %v221
  %v284 = vmul.f32 %v221, %v283
  %v285 = vsub.f32 1.0, %v284
  %v286 = vmul.f32 %v283, %v285
  %v287 = vadd.f32 %v283, %v286
  %vm288 = vweird.f32 %v221
  %vm289 = vweird.f32 %v283
  %vm290 = vmor %vm288, %vm289
  %v291 = vsel %vm290, %v283, %v287
  %v292 = vand.u32 2147483647, %v221
  %vm293 = vcmp.eq.f32.partialorder %v292, 8.507059e+37
  %v294 = vand.u32 %v221, 2147483648
  %v295 = vor.u32 1.1754944e-38, %v294
  %v296 = vsel %vm293, %v295, %v291
  %v297 = vmul.f32 1.0, %v296
  %v298 = vrcp.pop %v222
  %v299 = vmul.f32 %v222, %v298
  %v300 = vsub.f32 1.0, %v299
  %v301 = vmul.f32 %v298, %v300
  %v302 = vadd.f32 %v298, %v301
  %vm303 = vweird.f32 %v222
  %vm304 = vweird.f32 %v298
  %vm305 = vmor %vm303, %vm304
  %v306 = vsel %vm305, %v298, %v302
  %v307 = vand.u32 2147483647, %v222
  %vm308 = vcmp.eq.f32.partialorder %v307, 8.507059e+37
  %v309 = vand.u32 %v222, 2147483648
  %v310 = vor.u32 1.1754944e-38, %v309
  %v311 = vsel %vm308, %v310, %v306
  %v312 = vmul.f32 1.0, %v311
  %v313 = vmul.f32 %v167, %v237
  %v314 = vmul.f32 %v185, %v252
  %v315 = vmul.f32 %v169, %v267
  %v316 = vmul.f32 %v187, %v282
  %v317 = vmul.f32 %v172, %v297
  %v318 = vmul.f32 %v190, %v312
  %v319 = vpack.c.bf16 %v315, %v313
  %v320 = vpack.c.bf16 %v316, %v314
  %v321 = vpack.c.bf16 %v317, %v317
  %v322 = vpack.c.bf16 %v318, %v318
  %v323 = vld [vmem:[%s5] sm:$0xff]
  %v324 = vld [vmem:[%s5 + $0x8] sm:$0xff]
  %v325 = vld [vmem:[%s5 + $0x10] sm:$0xff]
  %v326 = vld [vmem:[%s5 + $0x18] sm:$0xff]
  %v327 = vld [vmem:[%s5 + $0x20] sm:$0xff]
  %v328 = vld [vmem:[%s5 + $0x28] sm:$0xff]
  %v329 = vld [vmem:[%s5 + $0x30] sm:$0xff]
  %v330 = vld [vmem:[%s5 + $0x38] sm:$0xff]
  %v331 = vld [vmem:[%s5 + $0x40] sm:$0xff]
  %v332 = vld [vmem:[%s5 + $0x48] sm:$0xff]
  %v333 = vld [vmem:[%s5 + $0x50] sm:$0xff]
  %v334 = vld [vmem:[%s5 + $0x58] sm:$0xff]
  %v335 = vld [vmem:[%s5 + $0x60] sm:$0xff]
  %v336 = vld [vmem:[%s5 + $0x68] sm:$0xff]
  %v337 = vld [vmem:[%s5 + $0x70] sm:$0xff]
  %v338 = vld [vmem:[%s5 + $0x78] sm:$0xff]
  %v339 = vld [vmem:[%s5 + $0x80] sm:$0xff]
  %v340 = vld [vmem:[%s5 + $0x88] sm:$0xff]
  %v341 = vld [vmem:[%s5 + $0x90] sm:$0xff]
  %v342 = vld [vmem:[%s5 + $0x98] sm:$0xff]
  %v343 = vld [vmem:[%s5 + $0xa0] sm:$0xff]
  %v344 = vld [vmem:[%s5 + $0xa8] sm:$0xff]
  %v345 = vld [vmem:[%s5 + $0xb0] sm:$0xff]
  %v346 = vld [vmem:[%s5 + $0xb8] sm:$0xff]
  %v347 = vld [vmem:[%s5 + $0xc0] sm:$0xff]
  %v348 = vld [vmem:[%s5 + $0xc8] sm:$0xff]
  %v349 = vld [vmem:[%s5 + $0xd0] sm:$0xff]
  %v350 = vld [vmem:[%s5 + $0xd8] sm:$0xff]
  %v351 = vld [vmem:[%s5 + $0xe0] sm:$0xff]
  %v352 = vld [vmem:[%s5 + $0xe8] sm:$0xff]
  %v353 = vld [vmem:[%s5 + $0xf0] sm:$0xff]
  %v354 = vld [vmem:[%s5 + $0xf8] sm:$0xff]
  %v355 = vpack.c.bf16 %v324, %v323
  %v356 = vpack.c.bf16 %v326, %v325
  %v357 = vpack.c.bf16 %v328, %v327
  %v358 = vpack.c.bf16 %v330, %v329
  %v359 = vpack.c.bf16 %v332, %v331
  %v360 = vpack.c.bf16 %v334, %v333
  %v361 = vpack.c.bf16 %v336, %v335
  %v362 = vpack.c.bf16 %v338, %v337
  %v363 = vpack.c.bf16 %v340, %v339
  %v364 = vpack.c.bf16 %v342, %v341
  %v365 = vpack.c.bf16 %v344, %v343
  %v366 = vpack.c.bf16 %v346, %v345
  %v367 = vpack.c.bf16 %v348, %v347
  %v368 = vpack.c.bf16 %v350, %v349
  %v369 = vpack.c.bf16 %v352, %v351
  %v370 = vpack.c.bf16 %v354, %v353
  %v371 = vld [vmem:[%s6] sm:$0x1]
  %v373 = vperm.slane %v371, 0
  %375 = vmatpush.bf16.msra.mxu0 %v362
  %376 = vmatpush.bf16.msra.mxu0 %v361
  %377 = vmatpush.bf16.msra.mxu0 %v360
  %378 = vmatpush.bf16.msra.mxu0 %v359
  %379 = vmatpush.bf16.msra.mxu0 %v358
  %380 = vmatpush.bf16.msra.mxu0 %v357
  %381 = vmatpush.bf16.msra.mxu0 %v356
  %382 = vmatpush.bf16.msra.mxu0 %v355
  %383 = vmatmul.bf16.gmra.mxu0 %v319
  %v384 = vpop.f32.mrf.mxu0
  %v385 = vadd.f32 %v373, %v384
  %v386 = vpop.f32.mrf.mxu0
  %v387 = vadd.f32 %v373, %v386
  %388 = vmatmul.bf16.gmra.mxu0 %v321
  %v389 = vpop.f32.mrf.mxu0
  %v390 = vadd.f32 %v373, %v389
  %v391 = vpop.f32.mrf.mxu0
  %392 = vdwg.mxu0
  %393 = vmatpush.bf16.msra.mxu0 %v370
  %394 = vmatpush.bf16.msra.mxu0 %v369
  %395 = vmatpush.bf16.msra.mxu0 %v368
  %396 = vmatpush.bf16.msra.mxu0 %v367
  %397 = vmatpush.bf16.msra.mxu0 %v366
  %398 = vmatpush.bf16.msra.mxu0 %v365
  %399 = vmatpush.bf16.msra.mxu0 %v364
  %400 = vmatpush.bf16.msra.mxu0 %v363
  %401 = vmatmul.bf16.gmra.mxu0 %v320
  %v402 = vpop.f32.mrf.mxu0
  %v403 = vadd.f32 %v385, %v402
  %v404 = vpop.f32.mrf.mxu0
  %v405 = vadd.f32 %v387, %v404
  %406 = vmatmul.bf16.gmra.mxu0 %v322
  %v407 = vpop.f32.mrf.mxu0
  %v408 = vadd.f32 %v390, %v407
  %v409 = vpop.f32.mrf.mxu0
  %410 = vdwg.mxu0
  %v411 = vadd.f32 %v27, %v403
  %v412 = vadd.f32 %v28, %v405
  %v413 = vadd.f32 %v29, %v408
  %414 = vst.msk [vmem:[%s7] sm:$0xff] %vm30, %v411
  %415 = vst.msk [vmem:[%s7 + $0x8] sm:$0xff] %vm30, %v412
  %416 = vst.msk [vmem:[%s7 + $0x10] sm:$0xf] %vm37, %v413
  // Predicated region
  $region30: #{transformer_forward.24} parent=0 // pred_check
    _
  $region31: #{transformer_forward.24} parent=0 // pred_check_branch
    %418 = sbr.rel (0) target = $region33
  $region32: #{transformer_forward.24} parent=0 // pred_region
    _
  $region33: #{transformer_forward.24} parent=0 // pred_fallthru
    _
  // Predicated region
  $region34: #{transformer_forward.24} parent=0 // pred_check
    _
  $region35: #{transformer_forward.24} parent=0 // pred_check_branch
    %420 = sbr.rel (0) target = $region37
  $region36: #{transformer_forward.24} parent=0 // pred_region
    _
  $region37: #{transformer_forward.24} parent=0 // pred_fallthru
    _

// kernel: transformer_forward.26
$region0: #{transformer_forward.26}
  #allocation0 [shape = 'u32[]', space=smem, size = 0x4, offset = 0x4, fixed_abs, tag = 'smem constant byte address 0x4 - core index']
  #allocation1 [shape = 'u32[72,128]{1,0:T(1,128)}', space=vmem, size = 0x9000, scoped, tag = 'internal scratch']
  %s0 = inlined_call_operand.vmem [shape: f32[2,64], index: 0, kind: input, shape index: {}]
  %s1 = inlined_call_operand.vmem [shape: f32[1,64], index: 1, kind: input, shape index: {}]
  %s2 = inlined_call_operand.vmem [shape: f32[1,64], index: 2, kind: input, shape index: {}]
  %s3 = inlined_call_operand.vmem [shape: f32[64,64], index: 3, kind: input, shape index: {}]
  %s4 = inlined_call_operand.vmem [shape: f32[1,64], index: 4, kind: input, shape index: {}]
  %s5 = inlined_call_operand.vmem [shape: f32[2,64], index: 5, kind: output, shape index: {}]
  %s6 = sld [smem:[#allocation0]]
  $region30: #{transformer_forward.26} parent=0
    _
  %s8 = ssub.s32 1, %s6
  %s9 = scalar_select 0, %s8, %s6
  // Predicated region
  $region2: #{transformer_forward.26} parent=0 // pred_check
    _
  $region3: #{transformer_forward.26} parent=0 // pred_check_branch
    %11 = sbr.rel (0) target = $region5
  $region4: #{transformer_forward.26} parent=0 // pred_region
    _
  $region5: #{transformer_forward.26} parent=0 // pred_fallthru
    _
  // Predicated region
  $region6: #{transformer_forward.26} parent=0 // pred_check
    _
  $region7: #{transformer_forward.26} parent=0 // pred_check_branch
    %13 = sbr.rel (0) target = $region9
  $region8: #{transformer_forward.26} parent=0 // pred_region
    _
  $region9: #{transformer_forward.26} parent=0 // pred_fallthru
    _
  // Predicated region
  $region10: #{transformer_forward.26} parent=0 // pred_check
    _
  $region11: #{transformer_forward.26} parent=0 // pred_check_branch
    %15 = sbr.rel (0) target = $region13
  $region12: #{transformer_forward.26} parent=0 // pred_region
    _
  $region13: #{transformer_forward.26} parent=0 // pred_fallthru
    _
  // Predicated region
  $region14: #{transformer_forward.26} parent=0 // pred_check
    _
  $region15: #{transformer_forward.26} parent=0 // pred_check_branch
    %17 = sbr.rel (0) target = $region17
  $region16: #{transformer_forward.26} parent=0 // pred_region
    _
  $region17: #{transformer_forward.26} parent=0 // pred_fallthru
    _
  // Predicated region
  $region18: #{transformer_forward.26} parent=0 // pred_check
    _
  $region19: #{transformer_forward.26} parent=0 // pred_check_branch
    %19 = sbr.rel (0) target = $region21
  $region20: #{transformer_forward.26} parent=0 // pred_region
    _
  $region21: #{transformer_forward.26} parent=0 // pred_fallthru
    _
  %v21 = vld [vmem:[%s0] sm:$0x3]
  %vm22 = vcmask 517120
  %v23 = vsel %vm22, %v21, 0.0
  %24 = vadd.xlane.f32.xlu0 %v23
  %v25 = vpop.xlane.xlu0 %24
  %v26 = vrcp.pop 64.0
  %v27 = vmul.f32 64.0, %v26
  %v28 = vsub.f32 1.0, %v27
  %v29 = vmul.f32 %v26, %v28
  %v30 = vadd.f32 %v26, %v29
  %vm31 = vweird.f32 %v26
  %v32 = vsel %vm31, %v26, %v30
  %v33 = vmul.f32 %v25, %v32
  %v34 = vsub.f32 %v21, %v33
  %v35 = vmul.f32 %v34, %v34
  %v36 = vsel %vm22, %v35, 0.0
  %37 = vadd.xlane.f32.xlu0 %v36
  %v38 = vpop.xlane.xlu0 %37
  %v39 = vmul.f32 %v38, %v32
  %v40 = vadd.f32 %v39, 1e-05
  %v41 = vrsqrt.pop %v40
  %v42 = vmul.f32 %v41, %v40
  %v43 = vmul.f32 %v42, %v41
  %v44 = vmul.f32 0.5, %v43
  %v45 = vsub.f32 1.5, %v44
  %v46 = vmul.f32 %v41, %v45
  %vm47 = vweird.f32 %v40
  %vm48 = vweird.f32 %v41
  %vm49 = vmor %vm47, %vm48
  %v50 = vsel %vm49, %v41, %v46
  %v51 = vmul.f32 %v34, %v50
  %v52 = vld [vmem:[%s1] sm:$0x1]
  %v54 = vperm.slane %v52, 0
  %v56 = vmul.f32 %v51, %v54
  %v57 = vld [vmem:[%s2] sm:$0x1]
  %v59 = vperm.slane %v57, 0
  %v61 = vadd.f32 %v56, %v59
  %v62 = vpack.c.bf16 %v61, %v61
  %v63 = vld [vmem:[%s3] sm:$0xff]
  %v64 = vld [vmem:[%s3 + $0x8] sm:$0xff]
  %v65 = vld [vmem:[%s3 + $0x10] sm:$0xff]
  %v66 = vld [vmem:[%s3 + $0x18] sm:$0xff]
  %v67 = vld [vmem:[%s3 + $0x20] sm:$0xff]
  %v68 = vld [vmem:[%s3 + $0x28] sm:$0xff]
  %v69 = vld [vmem:[%s3 + $0x30] sm:$0xff]
  %v70 = vld [vmem:[%s3 + $0x38] sm:$0xff]
  %v71 = vpack.c.bf16 %v64, %v63
  %v72 = vpack.c.bf16 %v66, %v65
  %v73 = vpack.c.bf16 %v68, %v67
  %v74 = vpack.c.bf16 %v70, %v69
  %v75 = vld [vmem:[%s4] sm:$0x1]
  %v77 = vperm.slane %v75, 0
  %vm79 = vcmask 523264
  %v81 = vsel %vm79, %v62, 0
  %83 = vmatpush.bf16.msra.mxu0 0
  %84 = vmatpush.bf16.msra.mxu0 0
  %85 = vmatpush.bf16.msra.mxu0 0
  %86 = vmatpush.bf16.msra.mxu0 0
  %87 = vmatpush.bf16.msra.mxu0 %v74
  %88 = vmatpush.bf16.msra.mxu0 %v73
  %89 = vmatpush.bf16.msra.mxu0 %v72
  %90 = vmatpush.bf16.msra.mxu0 %v71
  %91 = vmatmul.bf16.gmra.mxu0 %v81
  %v92 = vpop.f32.mrf.mxu0
  %v93 = vadd.f32 %v77, %v92
  %v94 = vpop.f32.mrf.mxu0
  %95 = vdwg.mxu0
  %96 = vst.msk [vmem:[%s5] sm:$0x3] %vm22, %v93
  // Predicated region
  $region22: #{transformer_forward.26} parent=0 // pred_check
    _
  $region23: #{transformer_forward.26} parent=0 // pred_check_branch
    %98 = sbr.rel (0) target = $region25
  $region24: #{transformer_forward.26} parent=0 // pred_region
    _
  $region25: #{transformer_forward.26} parent=0 // pred_fallthru
    _
  // Predicated region
  $region26: #{transformer_forward.26} parent=0 // pred_check
    _
  $region27: #{transformer_forward.26} parent=0 // pred_check_branch
    %100 = sbr.rel (0) target = $region29
  $region28: #{transformer_forward.26} parent=0 // pred_region
    _
  $region29: #{transformer_forward.26} parent=0 // pred_fallthru
    _

// kernel: transformer_forward.31
$region0: #{transformer_forward.31}
  #allocation0 [shape = 'u32[]', space=smem, size = 0x4, offset = 0x4, fixed_abs, tag = 'smem constant byte address 0x4 - core index']
  #allocation1 [shape = 'u32[72,128]{1,0:T(1,128)}', space=vmem, size = 0x9000, scoped, tag = 'internal scratch']
  %s0 = inlined_call_operand.vmem [shape: f32[20,64], index: 0, kind: input, shape index: {}]
  %s1 = inlined_call_operand.vmem [shape: f32[1,64], index: 1, kind: input, shape index: {}]
  %s2 = inlined_call_operand.vmem [shape: f32[1,64], index: 2, kind: input, shape index: {}]
  %s3 = inlined_call_operand.vmem [shape: f32[64,64], index: 3, kind: input, shape index: {}]
  %s4 = inlined_call_operand.vmem [shape: f32[1,64], index: 4, kind: input, shape index: {}]
  %s5 = inlined_call_operand.vmem [shape: f32[64,64], index: 5, kind: input, shape index: {}]
  %s6 = inlined_call_operand.vmem [shape: f32[1,64], index: 6, kind: input, shape index: {}]
  %s7 = inlined_call_operand.vmem [shape: f32[64,64], index: 7, kind: input, shape index: {}]
  %s8 = inlined_call_operand.vmem [shape: f32[1,64], index: 8, kind: input, shape index: {}]
  %s9 = inlined_call_operand.vmem [shape: f32[20,64], index: 9, kind: output, shape index: {0}]
  %s10 = inlined_call_operand.vmem [shape: f32[20,64], index: 10, kind: output, shape index: {1}]
  %s11 = inlined_call_operand.vmem [shape: f32[20,64], index: 11, kind: output, shape index: {2}]
  %12 = xla_tuple %s9, %s10, %s11
  %s13 = sld [smem:[#allocation0]]
  $region62: #{transformer_forward.31} parent=0
    _
  %s15 = ssub.s32 1, %s13
  %s16 = scalar_select 0, %s15, %s13
  // Predicated region
  $region2: #{transformer_forward.31} parent=0 // pred_check
    _
  $region3: #{transformer_forward.31} parent=0 // pred_check_branch
    %18 = sbr.rel (0) target = $region5
  $region4: #{transformer_forward.31} parent=0 // pred_region
    _
  $region5: #{transformer_forward.31} parent=0 // pred_fallthru
    _
  // Predicated region
  $region6: #{transformer_forward.31} parent=0 // pred_check
    _
  $region7: #{transformer_forward.31} parent=0 // pred_check_branch
    %20 = sbr.rel (0) target = $region9
  $region8: #{transformer_forward.31} parent=0 // pred_region
    _
  $region9: #{transformer_forward.31} parent=0 // pred_fallthru
    _
  // Predicated region
  $region10: #{transformer_forward.31} parent=0 // pred_check
    _
  $region11: #{transformer_forward.31} parent=0 // pred_check_branch
    %22 = sbr.rel (0) target = $region13
  $region12: #{transformer_forward.31} parent=0 // pred_region
    _
  $region13: #{transformer_forward.31} parent=0 // pred_fallthru
    _
  // Predicated region
  $region14: #{transformer_forward.31} parent=0 // pred_check
    _
  $region15: #{transformer_forward.31} parent=0 // pred_check_branch
    %24 = sbr.rel (0) target = $region17
  $region16: #{transformer_forward.31} parent=0 // pred_region
    _
  $region17: #{transformer_forward.31} parent=0 // pred_fallthru
    _
  // Predicated region
  $region18: #{transformer_forward.31} parent=0 // pred_check
    _
  $region19: #{transformer_forward.31} parent=0 // pred_check_branch
    %26 = sbr.rel (0) target = $region21
  $region20: #{transformer_forward.31} parent=0 // pred_region
    _
  $region21: #{transformer_forward.31} parent=0 // pred_fallthru
    _
  // Predicated region
  $region22: #{transformer_forward.31} parent=0 // pred_check
    _
  $region23: #{transformer_forward.31} parent=0 // pred_check_branch
    %28 = sbr.rel (0) target = $region25
  $region24: #{transformer_forward.31} parent=0 // pred_region
    _
  $region25: #{transformer_forward.31} parent=0 // pred_fallthru
    _
  // Predicated region
  $region26: #{transformer_forward.31} parent=0 // pred_check
    _
  $region27: #{transformer_forward.31} parent=0 // pred_check_branch
    %30 = sbr.rel (0) target = $region29
  $region28: #{transformer_forward.31} parent=0 // pred_region
    _
  $region29: #{transformer_forward.31} parent=0 // pred_fallthru
    _
  // Predicated region
  $region30: #{transformer_forward.31} parent=0 // pred_check
    _
  $region31: #{transformer_forward.31} parent=0 // pred_check_branch
    %32 = sbr.rel (0) target = $region33
  $region32: #{transformer_forward.31} parent=0 // pred_region
    _
  $region33: #{transformer_forward.31} parent=0 // pred_fallthru
    _
  // Predicated region
  $region34: #{transformer_forward.31} parent=0 // pred_check
    _
  $region35: #{transformer_forward.31} parent=0 // pred_check_branch
    %34 = sbr.rel (0) target = $region37
  $region36: #{transformer_forward.31} parent=0 // pred_region
    _
  $region37: #{transformer_forward.31} parent=0 // pred_fallthru
    _
  %v36 = vld [vmem:[%s0] sm:$0xff]
  %v37 = vld [vmem:[%s0 + $0x8] sm:$0xff]
  %v38 = vld [vmem:[%s0 + $0x10] sm:$0xf]
  %vm39 = vcmask 523264
  %v40 = vsel %vm39, %v36, 0.0
  %41 = vadd.xlane.f32.xlu0 %v40
  %v42 = vpop.xlane.xlu0 %41
  %v43 = vsel %vm39, %v37, 0.0
  %44 = vadd.xlane.f32.xlu0 %v43
  %v45 = vpop.xlane.xlu0 %44
  %vm46 = vcmask 519168
  %v47 = vsel %vm46, %v38, 0.0
  %48 = vadd.xlane.f32.xlu0 %v47
  %v49 = vpop.xlane.xlu0 %48
  %v50 = vrcp.pop 64.0
  %v51 = vmul.f32 64.0, %v50
  %v52 = vsub.f32 1.0, %v51
  %v53 = vmul.f32 %v50, %v52
  %v54 = vadd.f32 %v50, %v53
  %vm55 = vweird.f32 %v50
  %v56 = vsel %vm55, %v50, %v54
  %v57 = vmul.f32 %v42, %v56
  %v58 = vmul.f32 %v45, %v56
  %v59 = vmul.f32 %v49, %v56
  %v60 = vsub.f32 %v36, %v57
  %v61 = vsub.f32 %v37, %v58
  %v62 = vsub.f32 %v38, %v59
  %v63 = vmul.f32 %v60, %v60
  %v64 = vmul.f32 %v61, %v61
  %v65 = vmul.f32 %v62, %v62
  %v66 = vsel %vm39, %v63, 0.0
  %67 = vadd.xlane.f32.xlu0 %v66
  %v68 = vpop.xlane.xlu0 %67
  %v69 = vsel %vm39, %v64, 0.0
  %70 = vadd.xlane.f32.xlu0 %v69
  %v71 = vpop.xlane.xlu0 %70
  %v72 = vsel %vm46, %v65, 0.0
  %73 = vadd.xlane.f32.xlu0 %v72
  %v74 = vpop.xlane.xlu0 %73
  %v75 = vmul.f32 %v68, %v56
  %v76 = vmul.f32 %v71, %v56
  %v77 = vmul.f32 %v74, %v56
  %v78 = vadd.f32 %v75, 1e-05
  %v79 = vadd.f32 %v76, 1e-05
  %v80 = vadd.f32 %v77, 1e-05
  %v81 = vrsqrt.pop %v78
  %v82 = vmul.f32 %v81, %v78
  %v83 = vmul.f32 %v82, %v81
  %v84 = vmul.f32 0.5, %v83
  %v85 = vsub.f32 1.5, %v84
  %v86 = vmul.f32 %v81, %v85
  %vm87 = vweird.f32 %v78
  %vm88 = vweird.f32 %v81
  %vm89 = vmor %vm87, %vm88
  %v90 = vsel %vm89, %v81, %v86
  %v91 = vrsqrt.pop %v79
  %v92 = vmul.f32 %v91, %v79
  %v93 = vmul.f32 %v92, %v91
  %v94 = vmul.f32 0.5, %v93
  %v95 = vsub.f32 1.5, %v94
  %v96 = vmul.f32 %v91, %v95
  %vm97 = vweird.f32 %v79
  %vm98 = vweird.f32 %v91
  %vm99 = vmor %vm97, %vm98
  %v100 = vsel %vm99, %v91, %v96
  %v101 = vrsqrt.pop %v80
  %v102 = vmul.f32 %v101, %v80
  %v103 = vmul.f32 %v102, %v101
  %v104 = vmul.f32 0.5, %v103
  %v105 = vsub.f32 1.5, %v104
  %v106 = vmul.f32 %v101, %v105
  %vm107 = vweird.f32 %v80
  %vm108 = vweird.f32 %v101
  %vm109 = vmor %vm107, %vm108
  %v110 = vsel %vm109, %v101, %v106
  %v111 = vmul.f32 %v60, %v90
  %v112 = vmul.f32 %v61, %v100
  %v113 = vmul.f32 %v62, %v110
  %v114 = vld [vmem:[%s1] sm:$0x1]
  %v116 = vperm.slane %v114, 0
  %v118 = vmul.f32 %v111, %v116
  %v119 = vmul.f32 %v112, %v116
  %v120 = vmul.f32 %v113, %v116
  %v121 = vld [vmem:[%s2] sm:$0x1]
  %v123 = vperm.slane %v121, 0
  %v125 = vadd.f32 %v118, %v123
  %v126 = vadd.f32 %v119, %v123
  %v127 = vadd.f32 %v120, %v123
  %v128 = vpack.c.bf16 %v126, %v125
  %v129 = vpack.c.bf16 %v127, %v127
  %v130 = vld [vmem:[%s3] sm:$0xff]
  %v131 = vld [vmem:[%s3 + $0x8] sm:$0xff]
  %v132 = vld [vmem:[%s3 + $0x10] sm:$0xff]
  %v133 = vld [vmem:[%s3 + $0x18] sm:$0xff]
  %v134 = vld [vmem:[%s3 + $0x20] sm:$0xff]
  %v135 = vld [vmem:[%s3 + $0x28] sm:$0xff]
  %v136 = vld [vmem:[%s3 + $0x30] sm:$0xff]
  %v137 = vld [vmem:[%s3 + $0x38] sm:$0xff]
  %v138 = vpack.c.bf16 %v131, %v130
  %v139 = vpack.c.bf16 %v133, %v132
  %v140 = vpack.c.bf16 %v135, %v134
  %v141 = vpack.c.bf16 %v137, %v136
  %v142 = vld [vmem:[%s4] sm:$0x1]
  %v144 = vperm.slane %v142, 0
  %v147 = vsel %vm39, %v128, 0
  %v150 = vsel %vm39, %v129, 0
  %152 = vmatpush.bf16.msra.mxu0 0
  %153 = vmatpush.bf16.msra.mxu0 0
  %154 = vmatpush.bf16.msra.mxu0 0
  %155 = vmatpush.bf16.msra.mxu0 0
  %156 = vmatpush.bf16.msra.mxu0 %v141
  %157 = vmatpush.bf16.msra.mxu0 %v140
  %158 = vmatpush.bf16.msra.mxu0 %v139
  %159 = vmatpush.bf16.msra.mxu0 %v138
  %160 = vmatmul.bf16.gmra.mxu0 %v147
  %v161 = vpop.f32.mrf.mxu0
  %v162 = vadd.f32 %v144, %v161
  %v163 = vpop.f32.mrf.mxu0
  %v164 = vadd.f32 %v144, %v163
  %165 = vmatmul.bf16.gmra.mxu0 %v150
  %v166 = vpop.f32.mrf.mxu0
  %v167 = vadd.f32 %v144, %v166
  %v168 = vpop.f32.mrf.mxu0
  %169 = vdwg.mxu0
  %170 = vst.msk [vmem:[%s9] sm:$0xff] %vm39, %v162
  %171 = vst.msk [vmem:[%s9 + $0x8] sm:$0xff] %vm39, %v164
  %172 = vst.msk [vmem:[%s9 + $0x10] sm:$0xf] %vm46, %v167
  %v173 = vld [vmem:[%s5] sm:$0xff]
  %v174 = vld [vmem:[%s5 + $0x8] sm:$0xff]
  %v175 = vld [vmem:[%s5 + $0x10] sm:$0xff]
  %v176 = vld [vmem:[%s5 + $0x18] sm:$0xff]
  %v177 = vld [vmem:[%s5 + $0x20] sm:$0xff]
  %v178 = vld [vmem:[%s5 + $0x28] sm:$0xff]
  %v179 = vld [vmem:[%s5 + $0x30] sm:$0xff]
  %v180 = vld [vmem:[%s5 + $0x38] sm:$0xff]
  %v181 = vpack.c.bf16 %v174, %v173
  %v182 = vpack.c.bf16 %v176, %v175
  %v183 = vpack.c.bf16 %v178, %v177
  %v184 = vpack.c.bf16 %v180, %v179
  %v185 = vld [vmem:[%s6] sm:$0x1]
  %v187 = vperm.slane %v185, 0
  %189 = vmatpush.bf16.msra.mxu0 0
  %190 = vmatpush.bf16.msra.mxu0 0
  %191 = vmatpush.bf16.msra.mxu0 0
  %192 = vmatpush.bf16.msra.mxu0 0
  %193 = vmatpush.bf16.msra.mxu0 %v184
  %194 = vmatpush.bf16.msra.mxu0 %v183
  %195 = vmatpush.bf16.msra.mxu0 %v182
  %196 = vmatpush.bf16.msra.mxu0 %v181
  %197 = vmatmul.bf16.gmra.mxu0 %v147
  %v198 = vpop.f32.mrf.mxu0
  %v199 = vadd.f32 %v187, %v198
  %v200 = vpop.f32.mrf.mxu0
  %v201 = vadd.f32 %v187, %v200
  %202 = vmatmul.bf16.gmra.mxu0 %v150
  %v203 = vpop.f32.mrf.mxu0
  %v204 = vadd.f32 %v187, %v203
  %v205 = vpop.f32.mrf.mxu0
  %206 = vdwg.mxu0
  %207 = vst.msk [vmem:[%s10] sm:$0xff] %vm39, %v199
  %208 = vst.msk [vmem:[%s10 + $0x8] sm:$0xff] %vm39, %v201
  %209 = vst.msk [vmem:[%s10 + $0x10] sm:$0xf] %vm46, %v204
  %v210 = vld [vmem:[%s7] sm:$0xff]
  %v211 = vld [vmem:[%s7 + $0x8] sm:$0xff]
  %v212 = vld [vmem:[%s7 + $0x10] sm:$0xff]
  %v213 = vld [vmem:[%s7 + $0x18] sm:$0xff]
  %v214 = vld [vmem:[%s7 + $0x20] sm:$0xff]
  %v215 = vld [vmem:[%s7 + $0x28] sm:$0xff]
  %v216 = vld [vmem:[%s7 + $0x30] sm:$0xff]
  %v217 = vld [vmem:[%s7 + $0x38] sm:$0xff]
  %v218 = vpack.c.bf16 %v211, %v210
  %v219 = vpack.c.bf16 %v213, %v212
  %v220 = vpack.c.bf16 %v215, %v214
  %v221 = vpack.c.bf16 %v217, %v216
  %v222 = vld [vmem:[%s8] sm:$0x1]
  %v224 = vperm.slane %v222, 0
  %226 = vmatpush.bf16.msra.mxu0 0
  %227 = vmatpush.bf16.msra.mxu0 0
  %228 = vmatpush.bf16.msra.mxu0 0
  %229 = vmatpush.bf16.msra.mxu0 0
  %230 = vmatpush.bf16.msra.mxu0 %v221
  %231 = vmatpush.bf16.msra.mxu0 %v220
  %232 = vmatpush.bf16.msra.mxu0 %v219
  %233 = vmatpush.bf16.msra.mxu0 %v218
  %234 = vmatmul.bf16.gmra.mxu0 %v147
  %v235 = vpop.f32.mrf.mxu0
  %v236 = vadd.f32 %v224, %v235
  %v237 = vpop.f32.mrf.mxu0
  %v238 = vadd.f32 %v224, %v237
  %239 = vmatmul.bf16.gmra.mxu0 %v150
  %v240 = vpop.f32.mrf.mxu0
  %v241 = vadd.f32 %v224, %v240
  %v242 = vpop.f32.mrf.mxu0
  %243 = vdwg.mxu0
  %244 = vst.msk [vmem:[%s11] sm:$0xff] %vm39, %v236
  %245 = vst.msk [vmem:[%s11 + $0x8] sm:$0xff] %vm39, %v238
  %246 = vst.msk [vmem:[%s11 + $0x10] sm:$0xf] %vm46, %v241
  // Predicated region
  $region38: #{transformer_forward.31} parent=0 // pred_check
    _
  $region39: #{transformer_forward.31} parent=0 // pred_check_branch
    %248 = sbr.rel (0) target = $region41
  $region40: #{transformer_forward.31} parent=0 // pred_region
    _
  $region41: #{transformer_forward.31} parent=0 // pred_fallthru
    _
  // Predicated region
  $region42: #{transformer_forward.31} parent=0 // pred_check
    _
  $region43: #{transformer_forward.31} parent=0 // pred_check_branch
    %250 = sbr.rel (0) target = $region45
  $region44: #{transformer_forward.31} parent=0 // pred_region
    _
  $region45: #{transformer_forward.31} parent=0 // pred_fallthru
    _
  // Predicated region
  $region46: #{transformer_forward.31} parent=0 // pred_check
    _
  $region47: #{transformer_forward.31} parent=0 // pred_check_branch
    %252 = sbr.rel (0) target = $region49
  $region48: #{transformer_forward.31} parent=0 // pred_region
    _
  $region49: #{transformer_forward.31} parent=0 // pred_fallthru
    _
  // Predicated region
  $region50: #{transformer_forward.31} parent=0 // pred_check
    _
  $region51: #{transformer_forward.31} parent=0 // pred_check_branch
    %254 = sbr.rel (0) target = $region53
  $region52: #{transformer_forward.31} parent=0 // pred_region
    _
  $region53: #{transformer_forward.31} parent=0 // pred_fallthru
    _
  // Predicated region
  $region54: #{transformer_forward.31} parent=0 // pred_check
    _
  $region55: #{transformer_forward.31} parent=0 // pred_check_branch
    %256 = sbr.rel (0) target = $region57
  $region56: #{transformer_forward.31} parent=0 // pred_region
    _
  $region57: #{transformer_forward.31} parent=0 // pred_fallthru
    _
  // Predicated region
  $region58: #{transformer_forward.31} parent=0 // pred_check
    _
  $region59: #{transformer_forward.31} parent=0 // pred_check_branch
    %258 = sbr.rel (0) target = $region61
  $region60: #{transformer_forward.31} parent=0 // pred_region
    _
  $region61: #{transformer_forward.31} parent=0 // pred_fallthru
    _

// kernel: transformer_forward.29
$region0: #{transformer_forward.29}
  #allocation0 [shape = 'u32[]', space=smem, size = 0x4, offset = 0x4, fixed_abs, tag = 'smem constant byte address 0x4 - core index']
  #allocation1 [shape = 'u32[72,128]{1,0:T(1,128)}', space=vmem, size = 0x9000, scoped, tag = 'internal scratch']
  %s0 = inlined_call_operand.vmem [shape: f32[2,64], index: 0, kind: input, shape index: {}]
  %s1 = inlined_call_operand.vmem [shape: f32[64,64], index: 1, kind: input, shape index: {}]
  %s2 = inlined_call_operand.vmem [shape: f32[1,64], index: 2, kind: input, shape index: {}]
  %s3 = inlined_call_operand.vmem [shape: f32[2,64], index: 3, kind: input, shape index: {}]
  %s4 = inlined_call_operand.vmem [shape: f32[2,64], index: 4, kind: output, shape index: {}]
  %s5 = sld [smem:[#allocation0]]
  $region26: #{transformer_forward.29} parent=0
    _
  %s7 = ssub.s32 1, %s5
  %s8 = scalar_select 0, %s7, %s5
  // Predicated region
  $region2: #{transformer_forward.29} parent=0 // pred_check
    _
  $region3: #{transformer_forward.29} parent=0 // pred_check_branch
    %10 = sbr.rel (0) target = $region5
  $region4: #{transformer_forward.29} parent=0 // pred_region
    _
  $region5: #{transformer_forward.29} parent=0 // pred_fallthru
    _
  // Predicated region
  $region6: #{transformer_forward.29} parent=0 // pred_check
    _
  $region7: #{transformer_forward.29} parent=0 // pred_check_branch
    %12 = sbr.rel (0) target = $region9
  $region8: #{transformer_forward.29} parent=0 // pred_region
    _
  $region9: #{transformer_forward.29} parent=0 // pred_fallthru
    _
  // Predicated region
  $region10: #{transformer_forward.29} parent=0 // pred_check
    _
  $region11: #{transformer_forward.29} parent=0 // pred_check_branch
    %14 = sbr.rel (0) target = $region13
  $region12: #{transformer_forward.29} parent=0 // pred_region
    _
  $region13: #{transformer_forward.29} parent=0 // pred_fallthru
    _
  // Predicated region
  $region14: #{transformer_forward.29} parent=0 // pred_check
    _
  $region15: #{transformer_forward.29} parent=0 // pred_check_branch
    %16 = sbr.rel (0) target = $region17
  $region16: #{transformer_forward.29} parent=0 // pred_region
    _
  $region17: #{transformer_forward.29} parent=0 // pred_fallthru
    _
  %v18 = vld [vmem:[%s0] sm:$0x3]
  %v19 = vpack.c.bf16 %v18, %v18
  %v20 = vld [vmem:[%s1] sm:$0xff]
  %v21 = vld [vmem:[%s1 + $0x8] sm:$0xff]
  %v22 = vld [vmem:[%s1 + $0x10] sm:$0xff]
  %v23 = vld [vmem:[%s1 + $0x18] sm:$0xff]
  %v24 = vld [vmem:[%s1 + $0x20] sm:$0xff]
  %v25 = vld [vmem:[%s1 + $0x28] sm:$0xff]
  %v26 = vld [vmem:[%s1 + $0x30] sm:$0xff]
  %v27 = vld [vmem:[%s1 + $0x38] sm:$0xff]
  %v28 = vpack.c.bf16 %v21, %v20
  %v29 = vpack.c.bf16 %v23, %v22
  %v30 = vpack.c.bf16 %v25, %v24
  %v31 = vpack.c.bf16 %v27, %v26
  %vm32 = vcmask 523264
  %v34 = vsel %vm32, %v19, 0
  %36 = vmatpush.bf16.msra.mxu0 0
  %37 = vmatpush.bf16.msra.mxu0 0
  %38 = vmatpush.bf16.msra.mxu0 0
  %39 = vmatpush.bf16.msra.mxu0 0
  %40 = vmatpush.bf16.msra.mxu0 %v31
  %41 = vmatpush.bf16.msra.mxu0 %v30
  %42 = vmatpush.bf16.msra.mxu0 %v29
  %43 = vmatpush.bf16.msra.mxu0 %v28
  %44 = vmatmul.bf16.gmra.mxu0 %v34
  %v45 = vpop.f32.mrf.mxu0
  %v46 = vadd.f32 0.0, %v45
  %v47 = vpop.f32.mrf.mxu0
  %48 = vdwg.mxu0
  %v49 = vld [vmem:[%s3] sm:$0x3]
  %v50 = vadd.f32 %v49, %v46
  %v51 = vld [vmem:[%s2] sm:$0x1]
  %v53 = vperm.slane %v51, 0
  %v55 = vadd.f32 %v50, %v53
  %vm56 = vcmask 517120
  %57 = vst.msk [vmem:[%s4] sm:$0x3] %vm56, %v55
  // Predicated region
  $region18: #{transformer_forward.29} parent=0 // pred_check
    _
  $region19: #{transformer_forward.29} parent=0 // pred_check_branch
    %59 = sbr.rel (0) target = $region21
  $region20: #{transformer_forward.29} parent=0 // pred_region
    _
  $region21: #{transformer_forward.29} parent=0 // pred_fallthru
    _
  // Predicated region
  $region22: #{transformer_forward.29} parent=0 // pred_check
    _
  $region23: #{transformer_forward.29} parent=0 // pred_check_branch
    %61 = sbr.rel (0) target = $region25
  $region24: #{transformer_forward.29} parent=0 // pred_region
    _
  $region25: #{transformer_forward.29} parent=0 // pred_fallthru
    _

// kernel: transformer_forward.27
$region0: #{transformer_forward.27}
  #allocation0 [shape = 'u32[]', space=smem, size = 0x4, offset = 0x4, fixed_abs, tag = 'smem constant byte address 0x4 - core index']
  #allocation1 [shape = 'u32[72,128]{1,0:T(1,128)}', space=vmem, size = 0x9000, scoped, tag = 'internal scratch']
  %s0 = inlined_call_operand.vmem [shape: f32[20,64], index: 0, kind: input, shape index: {}]
  %s1 = inlined_call_operand.vmem [shape: f32[1,64], index: 1, kind: input, shape index: {}]
  %s2 = inlined_call_operand.vmem [shape: f32[1,64], index: 2, kind: input, shape index: {}]
  %s3 = inlined_call_operand.vmem [shape: f32[64,64], index: 3, kind: input, shape index: {}]
  %s4 = inlined_call_operand.vmem [shape: f32[1,64], index: 4, kind: input, shape index: {}]
  %s5 = inlined_call_operand.vmem [shape: f32[64,64], index: 5, kind: input, shape index: {}]
  %s6 = inlined_call_operand.vmem [shape: f32[1,64], index: 6, kind: input, shape index: {}]
  %s7 = inlined_call_operand.vmem [shape: f32[20,64], index: 7, kind: output, shape index: {0}]
  %s8 = inlined_call_operand.vmem [shape: f32[20,64], index: 8, kind: output, shape index: {1}]
  %9 = xla_tuple %s7, %s8
  %s10 = sld [smem:[#allocation0]]
  $region46: #{transformer_forward.27} parent=0
    _
  %s12 = ssub.s32 1, %s10
  %s13 = scalar_select 0, %s12, %s10
  // Predicated region
  $region2: #{transformer_forward.27} parent=0 // pred_check
    _
  $region3: #{transformer_forward.27} parent=0 // pred_check_branch
    %15 = sbr.rel (0) target = $region5
  $region4: #{transformer_forward.27} parent=0 // pred_region
    _
  $region5: #{transformer_forward.27} parent=0 // pred_fallthru
    _
  // Predicated region
  $region6: #{transformer_forward.27} parent=0 // pred_check
    _
  $region7: #{transformer_forward.27} parent=0 // pred_check_branch
    %17 = sbr.rel (0) target = $region9
  $region8: #{transformer_forward.27} parent=0 // pred_region
    _
  $region9: #{transformer_forward.27} parent=0 // pred_fallthru
    _
  // Predicated region
  $region10: #{transformer_forward.27} parent=0 // pred_check
    _
  $region11: #{transformer_forward.27} parent=0 // pred_check_branch
    %19 = sbr.rel (0) target = $region13
  $region12: #{transformer_forward.27} parent=0 // pred_region
    _
  $region13: #{transformer_forward.27} parent=0 // pred_fallthru
    _
  // Predicated region
  $region14: #{transformer_forward.27} parent=0 // pred_check
    _
  $region15: #{transformer_forward.27} parent=0 // pred_check_branch
    %21 = sbr.rel (0) target = $region17
  $region16: #{transformer_forward.27} parent=0 // pred_region
    _
  $region17: #{transformer_forward.27} parent=0 // pred_fallthru
    _
  // Predicated region
  $region18: #{transformer_forward.27} parent=0 // pred_check
    _
  $region19: #{transformer_forward.27} parent=0 // pred_check_branch
    %23 = sbr.rel (0) target = $region21
  $region20: #{transformer_forward.27} parent=0 // pred_region
    _
  $region21: #{transformer_forward.27} parent=0 // pred_fallthru
    _
  // Predicated region
  $region22: #{transformer_forward.27} parent=0 // pred_check
    _
  $region23: #{transformer_forward.27} parent=0 // pred_check_branch
    %25 = sbr.rel (0) target = $region25
  $region24: #{transformer_forward.27} parent=0 // pred_region
    _
  $region25: #{transformer_forward.27} parent=0 // pred_fallthru
    _
  // Predicated region
  $region26: #{transformer_forward.27} parent=0 // pred_check
    _
  $region27: #{transformer_forward.27} parent=0 // pred_check_branch
    %27 = sbr.rel (0) target = $region29
  $region28: #{transformer_forward.27} parent=0 // pred_region
    _
  $region29: #{transformer_forward.27} parent=0 // pred_fallthru
    _
  %v29 = vld [vmem:[%s0] sm:$0xff]
  %v30 = vld [vmem:[%s0 + $0x8] sm:$0xff]
  %v31 = vld [vmem:[%s0 + $0x10] sm:$0xf]
  %vm32 = vcmask 523264
  %v33 = vsel %vm32, %v29, 0.0
  %34 = vadd.xlane.f32.xlu0 %v33
  %v35 = vpop.xlane.xlu0 %34
  %v36 = vsel %vm32, %v30, 0.0
  %37 = vadd.xlane.f32.xlu0 %v36
  %v38 = vpop.xlane.xlu0 %37
  %vm39 = vcmask 519168
  %v40 = vsel %vm39, %v31, 0.0
  %41 = vadd.xlane.f32.xlu0 %v40
  %v42 = vpop.xlane.xlu0 %41
  %v43 = vrcp.pop 64.0
  %v44 = vmul.f32 64.0, %v43
  %v45 = vsub.f32 1.0, %v44
  %v46 = vmul.f32 %v43, %v45
  %v47 = vadd.f32 %v43, %v46
  %vm48 = vweird.f32 %v43
  %v49 = vsel %vm48, %v43, %v47
  %v50 = vmul.f32 %v35, %v49
  %v51 = vmul.f32 %v38, %v49
  %v52 = vmul.f32 %v42, %v49
  %v53 = vsub.f32 %v29, %v50
  %v54 = vsub.f32 %v30, %v51
  %v55 = vsub.f32 %v31, %v52
  %v56 = vmul.f32 %v53, %v53
  %v57 = vmul.f32 %v54, %v54
  %v58 = vmul.f32 %v55, %v55
  %v59 = vsel %vm32, %v56, 0.0
  %60 = vadd.xlane.f32.xlu0 %v59
  %v61 = vpop.xlane.xlu0 %60
  %v62 = vsel %vm32, %v57, 0.0
  %63 = vadd.xlane.f32.xlu0 %v62
  %v64 = vpop.xlane.xlu0 %63
  %v65 = vsel %vm39, %v58, 0.0
  %66 = vadd.xlane.f32.xlu0 %v65
  %v67 = vpop.xlane.xlu0 %66
  %v68 = vmul.f32 %v61, %v49
  %v69 = vmul.f32 %v64, %v49
  %v70 = vmul.f32 %v67, %v49
  %v71 = vadd.f32 %v68, 1e-05
  %v72 = vadd.f32 %v69, 1e-05
  %v73 = vadd.f32 %v70, 1e-05
  %v74 = vrsqrt.pop %v71
  %v75 = vmul.f32 %v74, %v71
  %v76 = vmul.f32 %v75, %v74
  %v77 = vmul.f32 0.5, %v76
  %v78 = vsub.f32 1.5, %v77
  %v79 = vmul.f32 %v74, %v78
  %vm80 = vweird.f32 %v71
  %vm81 = vweird.f32 %v74
  %vm82 = vmor %vm80, %vm81
  %v83 = vsel %vm82, %v74, %v79
  %v84 = vrsqrt.pop %v72
  %v85 = vmul.f32 %v84, %v72
  %v86 = vmul.f32 %v85, %v84
  %v87 = vmul.f32 0.5, %v86
  %v88 = vsub.f32 1.5, %v87
  %v89 = vmul.f32 %v84, %v88
  %vm90 = vweird.f32 %v72
  %vm91 = vweird.f32 %v84
  %vm92 = vmor %vm90, %vm91
  %v93 = vsel %vm92, %v84, %v89
  %v94 = vrsqrt.pop %v73
  %v95 = vmul.f32 %v94, %v73
  %v96 = vmul.f32 %v95, %v94
  %v97 = vmul.f32 0.5, %v96
  %v98 = vsub.f32 1.5, %v97
  %v99 = vmul.f32 %v94, %v98
  %vm100 = vweird.f32 %v73
  %vm101 = vweird.f32 %v94
  %vm102 = vmor %vm100, %vm101
  %v103 = vsel %vm102, %v94, %v99
  %v104 = vmul.f32 %v53, %v83
  %v105 = vmul.f32 %v54, %v93
  %v106 = vmul.f32 %v55, %v103
  %v107 = vld [vmem:[%s1] sm:$0x1]
  %v109 = vperm.slane %v107, 0
  %v111 = vmul.f32 %v104, %v109
  %v112 = vmul.f32 %v105, %v109
  %v113 = vmul.f32 %v106, %v109
  %v114 = vld [vmem:[%s2] sm:$0x1]
  %v116 = vperm.slane %v114, 0
  %v118 = vadd.f32 %v111, %v116
  %v119 = vadd.f32 %v112, %v116
  %v120 = vadd.f32 %v113, %v116
  %v121 = vpack.c.bf16 %v119, %v118
  %v122 = vpack.c.bf16 %v120, %v120
  %v123 = vld [vmem:[%s3] sm:$0xff]
  %v124 = vld [vmem:[%s3 + $0x8] sm:$0xff]
  %v125 = vld [vmem:[%s3 + $0x10] sm:$0xff]
  %v126 = vld [vmem:[%s3 + $0x18] sm:$0xff]
  %v127 = vld [vmem:[%s3 + $0x20] sm:$0xff]
  %v128 = vld [vmem:[%s3 + $0x28] sm:$0xff]
  %v129 = vld [vmem:[%s3 + $0x30] sm:$0xff]
  %v130 = vld [vmem:[%s3 + $0x38] sm:$0xff]
  %v131 = vpack.c.bf16 %v124, %v123
  %v132 = vpack.c.bf16 %v126, %v125
  %v133 = vpack.c.bf16 %v128, %v127
  %v134 = vpack.c.bf16 %v130, %v129
  %v135 = vld [vmem:[%s4] sm:$0x1]
  %v137 = vperm.slane %v135, 0
  %v140 = vsel %vm32, %v121, 0
  %v143 = vsel %vm32, %v122, 0
  %145 = vmatpush.bf16.msra.mxu0 0
  %146 = vmatpush.bf16.msra.mxu0 0
  %147 = vmatpush.bf16.msra.mxu0 0
  %148 = vmatpush.bf16.msra.mxu0 0
  %149 = vmatpush.bf16.msra.mxu0 %v134
  %150 = vmatpush.bf16.msra.mxu0 %v133
  %151 = vmatpush.bf16.msra.mxu0 %v132
  %152 = vmatpush.bf16.msra.mxu0 %v131
  %153 = vmatmul.bf16.gmra.mxu0 %v140
  %v154 = vpop.f32.mrf.mxu0
  %v155 = vadd.f32 %v137, %v154
  %v156 = vpop.f32.mrf.mxu0
  %v157 = vadd.f32 %v137, %v156
  %158 = vmatmul.bf16.gmra.mxu0 %v143
  %v159 = vpop.f32.mrf.mxu0
  %v160 = vadd.f32 %v137, %v159
  %v161 = vpop.f32.mrf.mxu0
  %162 = vdwg.mxu0
  %163 = vst.msk [vmem:[%s7] sm:$0xff] %vm32, %v155
  %164 = vst.msk [vmem:[%s7 + $0x8] sm:$0xff] %vm32, %v157
  %165 = vst.msk [vmem:[%s7 + $0x10] sm:$0xf] %vm39, %v160
  %v166 = vld [vmem:[%s5] sm:$0xff]
  %v167 = vld [vmem:[%s5 + $0x8] sm:$0xff]
  %v168 = vld [vmem:[%s5 + $0x10] sm:$0xff]
  %v169 = vld [vmem:[%s5 + $0x18] sm:$0xff]
  %v170 = vld [vmem:[%s5 + $0x20] sm:$0xff]
  %v171 = vld [vmem:[%s5 + $0x28] sm:$0xff]
  %v172 = vld [vmem:[%s5 + $0x30] sm:$0xff]
  %v173 = vld [vmem:[%s5 + $0x38] sm:$0xff]
  %v174 = vpack.c.bf16 %v167, %v166
  %v175 = vpack.c.bf16 %v169, %v168
  %v176 = vpack.c.bf16 %v171, %v170
  %v177 = vpack.c.bf16 %v173, %v172
  %v178 = vld [vmem:[%s6] sm:$0x1]
  %v180 = vperm.slane %v178, 0
  %182 = vmatpush.bf16.msra.mxu0 0
  %183 = vmatpush.bf16.msra.mxu0 0
  %184 = vmatpush.bf16.msra.mxu0 0
  %185 = vmatpush.bf16.msra.mxu0 0
  %186 = vmatpush.bf16.msra.mxu0 %v177
  %187 = vmatpush.bf16.msra.mxu0 %v176
  %188 = vmatpush.bf16.msra.mxu0 %v175
  %189 = vmatpush.bf16.msra.mxu0 %v174
  %190 = vmatmul.bf16.gmra.mxu0 %v140
  %v191 = vpop.f32.mrf.mxu0
  %v192 = vadd.f32 %v180, %v191
  %v193 = vpop.f32.mrf.mxu0
  %v194 = vadd.f32 %v180, %v193
  %195 = vmatmul.bf16.gmra.mxu0 %v143
  %v196 = vpop.f32.mrf.mxu0
  %v197 = vadd.f32 %v180, %v196
  %v198 = vpop.f32.mrf.mxu0
  %199 = vdwg.mxu0
  %200 = vst.msk [vmem:[%s8] sm:$0xff] %vm32, %v192
  %201 = vst.msk [vmem:[%s8 + $0x8] sm:$0xff] %vm32, %v194
  %202 = vst.msk [vmem:[%s8 + $0x10] sm:$0xf] %vm39, %v197
  // Predicated region
  $region30: #{transformer_forward.27} parent=0 // pred_check
    _
  $region31: #{transformer_forward.27} parent=0 // pred_check_branch
    %204 = sbr.rel (0) target = $region33
  $region32: #{transformer_forward.27} parent=0 // pred_region
    _
  $region33: #{transformer_forward.27} parent=0 // pred_fallthru
    _
  // Predicated region
  $region34: #{transformer_forward.27} parent=0 // pred_check
    _
  $region35: #{transformer_forward.27} parent=0 // pred_check_branch
    %206 = sbr.rel (0) target = $region37
  $region36: #{transformer_forward.27} parent=0 // pred_region
    _
  $region37: #{transformer_forward.27} parent=0 // pred_fallthru
    _
  // Predicated region
  $region38: #{transformer_forward.27} parent=0 // pred_check
    _
  $region39: #{transformer_forward.27} parent=0 // pred_check_branch
    %208 = sbr.rel (0) target = $region41
  $region40: #{transformer_forward.27} parent=0 // pred_region
    _
  $region41: #{transformer_forward.27} parent=0 // pred_fallthru
    _
  // Predicated region
  $region42: #{transformer_forward.27} parent=0 // pred_check
    _
  $region43: #{transformer_forward.27} parent=0 // pred_check_branch
    %210 = sbr.rel (0) target = $region45
  $region44: #{transformer_forward.27} parent=0 // pred_region
    _
  $region45: #{transformer_forward.27} parent=0 // pred_fallthru
    _

// kernel: transformer_forward.25
$region0: #{transformer_forward.25}
  #allocation0 [shape = 'u32[]', space=smem, size = 0x4, offset = 0x4, fixed_abs, tag = 'smem constant byte address 0x4 - core index']
  #allocation1 [shape = 'u32[72,128]{1,0:T(1,128)}', space=vmem, size = 0x9000, scoped, tag = 'internal scratch']
  %s0 = inlined_call_operand.vmem [shape: f32[2,4,4,4,64], index: 0, kind: input, shape index: {}, may-alias: {0,1,2}]
  %s1 = inlined_call_operand.vmem [shape: f32[2,4,4,4,64], index: 1, kind: input, shape index: {}, may-alias: {0,1,2}]
  %s2 = inlined_call_operand.vmem [shape: f32[2,4,4,4,64], index: 2, kind: input, shape index: {}, may-alias: {0,1,2}]
  %s3 = inlined_call_operand.vmem [shape: f32[27,64], index: 3, kind: input, shape index: {}]
  %s4 = inlined_call_operand.vmem [shape: f32[1,64], index: 4, kind: input, shape index: {}]
  %s5 = inlined_call_operand.vmem [shape: f32[2,2,2,2,64], index: 5, kind: output, shape index: {}]
  %s6 = sld [smem:[#allocation0]]
  $region53: #{transformer_forward.25} parent=0
    _
  %s8 = ssub.s32 1, %s6
  %s9 = scalar_select 0, %s8, %s6
  loop: start=0, step=1, limit=6
  $region2: #{transformer_forward.25} parent=0 // loop_pre_header
    _
  $region3: #{transformer_forward.25} parent=0 // loop_header
    %s11 = sphi 0, %s15
    %p12 = scmp.ge.s32.totalorder %s11, 6
    %s18 = sphi 0, %s30
    %s19 = sphi 0, %s26
    %s20 = sphi 0, %s18
    %s21 = sphi 0, %s19
    %s22 = sphi 0, %s20
    %s23 = sphi 0, %s21
    %s35 = sphi 0, %s37
    %s38 = sphi 0, %s35
    %s39 = sphi 0, %s38
    %s55 = sphi 0, %s39
    %s65 = sphi 0, %s67
    %s68 = sphi 0, %s65
    %s69 = sphi 0, %s68
    %s85 = sphi 0, %s69
    %s95 = sphi 0, %s97
    %s98 = sphi 0, %s95
    %s99 = sphi 0, %s98
    %s115 = sphi 0, %s99
    %s119 = sphi 0, %s119
    %s121 = sphi 0, %s119
    %s122 = sphi 0, %s121
    %s136 = sphi 0, %s122
    %s140 = sphi 0, %s140
    %s142 = sphi 0, %s140
    %s143 = sphi 0, %s142
    %s157 = sphi 0, %s143
    %s165 = sphi 0, %s167
    %s168 = sphi 0, %s165
    %s169 = sphi 0, %s168
    %s185 = sphi 0, %s169
  $region4: #{transformer_forward.25} parent=0 // loop_header_branch
    %14 = sbr.rel (%p12) target = $region8
  $region5: #{transformer_forward.25} parent=0 // loop_body
    %s16 = ssub.s32 %s11, 1
    %s17 = ssub.s32 %s11, 2
    %s24 = sadd.s32 1, %s19
    %p25 = scmp.ge.s32.totalorder %s24, 2
    %s26 = scalar_select %p25, 0, %s24
    %s27 = sadd.s32 1, %s18
    %s28 = scalar_select %p25, %s27, %s18
    %p29 = scmp.ge.s32.totalorder %s28, 2
    %s30 = scalar_select %p29, 0, %s28
    %s31 = ssub.s32 %s18, %s30
    %s32 = ssub.s32 %s19, %s26
    %s33 = sor.u32 %s31, %s32
    %p34 = scmp.eq.s32.totalorder %s33, 0
    %s36 = sadd.s32 %s35, 1
    %s37 = scalar_select %p34, %s35, %s36
    %p40 = pneg %p34
    %p41 = scmp.eq.s32.totalorder %s11, 3
    %p42 = por %p40, %p41
    %p43 = scmp.ne.s32.totalorder %s35, %s38
    %p44 = scmp.eq.s32.totalorder %s11, 0
    %p45 = por %p43, %p44
    %p46 = scmp.ne.s32.totalorder %s35, %s38
    %p47 = scmp.eq.s32.totalorder %s16, 3
    %p48 = por %p46, %p47
    %p49 = scmp.ne.s32.totalorder %s38, %s39
    %p50 = scmp.eq.s32.totalorder %s16, 0
    %p51 = por %p49, %p50
    %p52 = scmp.ne.s32.totalorder %s38, %s39
    %p53 = scmp.eq.s32.totalorder %s17, 3
    %p54 = por %p52, %p53
    %p56 = scmp.ne.s32.totalorder %s39, %s55
    %p57 = scmp.eq.s32.totalorder %s17, 0
    %p58 = por %p56, %p57
    %s59 = sadd.s32 %s19, 1
    %s60 = sadd.s32 %s26, 1
    %s61 = ssub.s32 %s18, %s30
    %s62 = ssub.s32 %s59, %s60
    %s63 = sor.u32 %s61, %s62
    %p64 = scmp.eq.s32.totalorder %s63, 0
    %s66 = sadd.s32 %s65, 1
    %s67 = scalar_select %p64, %s65, %s66
    %p70 = pneg %p64
    %p71 = scmp.eq.s32.totalorder %s11, 3
    %p72 = por %p70, %p71
    %p73 = scmp.ne.s32.totalorder %s65, %s68
    %p74 = scmp.eq.s32.totalorder %s11, 0
    %p75 = por %p73, %p74
    %p76 = scmp.ne.s32.totalorder %s65, %s68
    %p77 = scmp.eq.s32.totalorder %s16, 3
    %p78 = por %p76, %p77
    %p79 = scmp.ne.s32.totalorder %s68, %s69
    %p80 = scmp.eq.s32.totalorder %s16, 0
    %p81 = por %p79, %p80
    %p82 = scmp.ne.s32.totalorder %s68, %s69
    %p83 = scmp.eq.s32.totalorder %s17, 3
    %p84 = por %p82, %p83
    %p86 = scmp.ne.s32.totalorder %s69, %s85
    %p87 = scmp.eq.s32.totalorder %s17, 0
    %p88 = por %p86, %p87
    %s89 = sadd.s32 %s19, 2
    %s90 = sadd.s32 %s26, 2
    %s91 = ssub.s32 %s18, %s30
    %s92 = ssub.s32 %s89, %s90
    %s93 = sor.u32 %s91, %s92
    %p94 = scmp.eq.s32.totalorder %s93, 0
    %s96 = sadd.s32 %s95, 1
    %s97 = scalar_select %p94, %s95, %s96
    %p100 = pneg %p94
    %p101 = scmp.eq.s32.totalorder %s11, 3
    %p102 = por %p100, %p101
    %p103 = scmp.ne.s32.totalorder %s95, %s98
    %p104 = scmp.eq.s32.totalorder %s11, 0
    %p105 = por %p103, %p104
    %p106 = scmp.ne.s32.totalorder %s95, %s98
    %p107 = scmp.eq.s32.totalorder %s16, 3
    %p108 = por %p106, %p107
    %p109 = scmp.ne.s32.totalorder %s98, %s99
    %p110 = scmp.eq.s32.totalorder %s16, 0
    %p111 = por %p109, %p110
    %p112 = scmp.ne.s32.totalorder %s98, %s99
    %p113 = scmp.eq.s32.totalorder %s17, 3
    %p114 = por %p112, %p113
    %p116 = scmp.ne.s32.totalorder %s99, %s115
    %p117 = scmp.eq.s32.totalorder %s17, 0
    %p118 = por %p116, %p117
    %s120 = sadd.s32 %s119, 1
    %p123 = scmp.eq.s32.totalorder %s11, 3
    %p124 = scmp.ne.s32.totalorder %s119, %s121
    %p125 = scmp.eq.s32.totalorder %s11, 0
    %p126 = por %p124, %p125
    %p127 = scmp.ne.s32.totalorder %s119, %s121
    %p128 = scmp.eq.s32.totalorder %s16, 3
    %p129 = por %p127, %p128
    %p130 = scmp.ne.s32.totalorder %s121, %s122
    %p131 = scmp.eq.s32.totalorder %s16, 0
    %p132 = por %p130, %p131
    %p133 = scmp.ne.s32.totalorder %s121, %s122
    %p134 = scmp.eq.s32.totalorder %s17, 3
    %p135 = por %p133, %p134
    %p137 = scmp.ne.s32.totalorder %s122, %s136
    %p138 = scmp.eq.s32.totalorder %s17, 0
    %p139 = por %p137, %p138
    %s141 = sadd.s32 %s140, 1
    %p144 = scmp.eq.s32.totalorder %s11, 3
    %p145 = scmp.ne.s32.totalorder %s140, %s142
    %p146 = scmp.eq.s32.totalorder %s11, 0
    %p147 = por %p145, %p146
    %p148 = scmp.ne.s32.totalorder %s140, %s142
    %p149 = scmp.eq.s32.totalorder %s16, 3
    %p150 = por %p148, %p149
    %p151 = scmp.ne.s32.totalorder %s142, %s143
    %p152 = scmp.eq.s32.totalorder %s16, 0
    %p153 = por %p151, %p152
    %p154 = scmp.ne.s32.totalorder %s142, %s143
    %p155 = scmp.eq.s32.totalorder %s17, 3
    %p156 = por %p154, %p155
    %p158 = scmp.ne.s32.totalorder %s143, %s157
    %p159 = scmp.eq.s32.totalorder %s17, 0
    %p160 = por %p158, %p159
    %s161 = ssub.s32 %s18, %s30
    %s162 = ssub.s32 %s19, %s26
    %s163 = sor.u32 %s161, %s162
    %p164 = scmp.eq.s32.totalorder %s163, 0
    %s166 = sadd.s32 %s165, 1
    %s167 = scalar_select %p164, %s165, %s166
    %p170 = pneg %p164
    %p171 = scmp.eq.s32.totalorder %s11, 3
    %p172 = por %p170, %p171
    %p173 = scmp.ne.s32.totalorder %s165, %s168
    %p174 = scmp.eq.s32.totalorder %s11, 0
    %p175 = por %p173, %p174
    %p176 = scmp.ne.s32.totalorder %s165, %s168
    %p177 = scmp.eq.s32.totalorder %s16, 3
    %p178 = por %p176, %p177
    %p179 = scmp.ne.s32.totalorder %s168, %s169
    %p180 = scmp.eq.s32.totalorder %s16, 0
    %p181 = por %p179, %p180
    %p182 = scmp.ne.s32.totalorder %s168, %s169
    %p183 = scmp.eq.s32.totalorder %s17, 3
    %p184 = por %p182, %p183
    %p186 = scmp.ne.s32.totalorder %s169, %s185
    %p187 = scmp.eq.s32.totalorder %s17, 0
    %p188 = por %p186, %p187
    %p189 = scmp.le.s32.totalorder 1, %s11
    %p190 = scmp.lt.s32.totalorder %s11, 5
    %p191 = pnand %p189, %p190
    %p192 = pneg %p191
    // Predicated region
    $region9: #{transformer_forward.25} parent=5 // pred_check
      _
    $region10: #{transformer_forward.25} parent=5 // pred_check_branch
      %194 = sbr.rel (%p191) target = $region12
    $region11: #{transformer_forward.25} parent=5 // pred_region
      %s195 = ssub.s32 %s11, 1
      // Predicated region
      $region13: #{transformer_forward.25} parent=11 // pred_check
        %p196 = pneg %p132
      $region14: #{transformer_forward.25} parent=11 // pred_check_branch
        %198 = sbr.rel (%p196) target = $region16
      $region15: #{transformer_forward.25} parent=11 // pred_region
        _
      $region16: #{transformer_forward.25} parent=11 // pred_fallthru
        _
      // Predicated region
      $region17: #{transformer_forward.25} parent=11 // pred_check
        %p199 = pneg %p153
      $region18: #{transformer_forward.25} parent=11 // pred_check_branch
        %201 = sbr.rel (%p199) target = $region20
      $region19: #{transformer_forward.25} parent=11 // pred_region
        _
      $region20: #{transformer_forward.25} parent=11 // pred_fallthru
        _
    $region12: #{transformer_forward.25} parent=5 // pred_fallthru
      _
    %p202 = scmp.lt.s32.totalorder %s11, 4
    // Predicated region
    $region21: #{transformer_forward.25} parent=5 // pred_check
      %p203 = pneg %p202
    $region22: #{transformer_forward.25} parent=5 // pred_check_branch
      %205 = sbr.rel (%p203) target = $region24
    $region23: #{transformer_forward.25} parent=5 // pred_region
      // Predicated region
      $region25: #{transformer_forward.25} parent=23 // pred_check
        %p206 = pneg %p45
      $region26: #{transformer_forward.25} parent=23 // pred_check_branch
        %208 = sbr.rel (%p206) target = $region28
      $region27: #{transformer_forward.25} parent=23 // pred_region
        %p209 = scmp.lt.s32.totalorder %s18, 1
        %s210 = scalar_select %p209, %s18, 1
        %p211 = scmp.lt.s32.totalorder %s19, 3
        %s212 = scalar_select %p211, %s19, 3
        %s213 = smul.addr %s212, 4
        %s214 = smul.addr %s210, 16
        %s215 = sadd.s32 %s213, %s214
        %s216 = smul.addr %s215, 4
        %s217 = scalar_lea.vmem %s0, %s216
      $region28: #{transformer_forward.25} parent=23 // pred_fallthru
        _
      // Predicated region
      $region29: #{transformer_forward.25} parent=23 // pred_check
        %p218 = pneg %p75
      $region30: #{transformer_forward.25} parent=23 // pred_check_branch
        %220 = sbr.rel (%p218) target = $region32
      $region31: #{transformer_forward.25} parent=23 // pred_region
        %s221 = sadd.s32 %s19, 1
        %p222 = scmp.lt.s32.totalorder %s18, 1
        %s223 = scalar_select %p222, %s18, 1
        %p224 = scmp.lt.s32.totalorder %s221, 3
        %s225 = scalar_select %p224, %s221, 3
        %s226 = smul.addr %s225, 4
        %s227 = smul.addr %s223, 16
        %s228 = sadd.s32 %s226, %s227
        %s229 = smul.addr %s228, 4
        %s230 = scalar_lea.vmem %s1, %s229
        %s231 = sadd.s32 %s19, 1
      $region32: #{transformer_forward.25} parent=23 // pred_fallthru
        _
      // Predicated region
      $region33: #{transformer_forward.25} parent=23 // pred_check
        %p232 = pneg %p105
      $region34: #{transformer_forward.25} parent=23 // pred_check_branch
        %234 = sbr.rel (%p232) target = $region36
      $region35: #{transformer_forward.25} parent=23 // pred_region
        %s235 = sadd.s32 %s19, 2
        %p236 = scmp.lt.s32.totalorder %s18, 1
        %s237 = scalar_select %p236, %s18, 1
        %p238 = scmp.lt.s32.totalorder %s235, 3
        %s239 = scalar_select %p238, %s235, 3
        %s240 = smul.addr %s239, 4
        %s241 = smul.addr %s237, 16
        %s242 = sadd.s32 %s240, %s241
        %s243 = smul.addr %s242, 4
        %s244 = scalar_lea.vmem %s2, %s243
        %s245 = sadd.s32 %s19, 2
      $region36: #{transformer_forward.25} parent=23 // pred_fallthru
        _
    $region24: #{transformer_forward.25} parent=5 // pred_fallthru
      _
    %p246 = scmp.le.s32.totalorder 1, %s11
    %p247 = scmp.lt.s32.totalorder %s11, 5
    %p248 = pnand %p246, %p247
    %p249 = pneg %p248
    // Predicated region
    $region37: #{transformer_forward.25} parent=5 // pred_check
      _
    $region38: #{transformer_forward.25} parent=5 // pred_check_branch
      %251 = sbr.rel (%p248) target = $region40
    $region39: #{transformer_forward.25} parent=5 // pred_region
      %s252 = ssub.s32 %s11, 1
      %p253 = scmp.lt.s32.totalorder %s20, 1
      %s254 = scalar_select %p253, %s20, 1
      %p255 = scmp.lt.s32.totalorder %s21, 3
      %s256 = scalar_select %p255, %s21, 3
      %s257 = smul.addr %s256, 4
      %s258 = smul.addr %s254, 16
      %s259 = sadd.s32 %s257, %s258
      %s260 = smul.addr %s259, 4
      %s261 = scalar_lea.vmem %s0, %s260
      %p262 = pneg %p51
      %p263 = pneg %p48
      %s264 = sadd.s32 %s21, 1
      %p265 = scmp.lt.s32.totalorder %s20, 1
      %s266 = scalar_select %p265, %s20, 1
      %p267 = scmp.lt.s32.totalorder %s264, 3
      %s268 = scalar_select %p267, %s264, 3
      %s269 = smul.addr %s268, 4
      %s270 = smul.addr %s266, 16
      %s271 = sadd.s32 %s269, %s270
      %s272 = smul.addr %s271, 4
      %s273 = scalar_lea.vmem %s1, %s272
      %p274 = pneg %p81
      %p275 = pneg %p78
      %s276 = sadd.s32 %s21, 2
      %p277 = scmp.lt.s32.totalorder %s20, 1
      %s278 = scalar_select %p277, %s20, 1
      %p279 = scmp.lt.s32.totalorder %s276, 3
      %s280 = scalar_select %p279, %s276, 3
      %s281 = smul.addr %s280, 4
      %s282 = smul.addr %s278, 16
      %s283 = sadd.s32 %s281, %s282
      %s284 = smul.addr %s283, 4
      %s285 = scalar_lea.vmem %s2, %s284
      %p286 = pneg %p111
      %p287 = pneg %p108
      %p288 = pneg %p132
      %p289 = pneg %p129
      %p290 = pneg %p153
      %p291 = pneg %p150
      %p292 = pneg %p181
      %p293 = pneg %p178
      %p294 = scmp.lt.s32.totalorder %s20, 1
      %s295 = scalar_select %p294, %s20, 1
      %p296 = scmp.lt.s32.totalorder %s21, 1
      %s297 = scalar_select %p296, %s21, 1
      %s298 = smul.addr %s297, 2
      %s299 = smul.addr %s295, 4
      %s300 = sadd.s32 %s298, %s299
      %s301 = smul.addr %s300, 2
      %s302 = scalar_lea.vmem %s5, %s301
      %p303 = scmp.lt.s32.totalorder %s20, 1
      %s304 = scalar_select %p303, %s20, 1
      %p305 = scmp.lt.s32.totalorder %s21, 3
      %s306 = scalar_select %p305, %s21, 3
      %s307 = smul.addr %s306, 4
      %s308 = smul.addr %s304, 16
      %s309 = sadd.s32 %s307, %s308
      %s310 = smul.addr %s309, 4
      %s311 = scalar_lea.vmem %s0, %s310
      %s312 = sadd.s32 %s21, 1
      %p313 = scmp.lt.s32.totalorder %s20, 1
      %s314 = scalar_select %p313, %s20, 1
      %p315 = scmp.lt.s32.totalorder %s312, 3
      %s316 = scalar_select %p315, %s312, 3
      %s317 = smul.addr %s316, 4
      %s318 = smul.addr %s314, 16
      %s319 = sadd.s32 %s317, %s318
      %s320 = smul.addr %s319, 4
      %s321 = scalar_lea.vmem %s1, %s320
      %s322 = sadd.s32 %s21, 1
      %s323 = sadd.s32 %s21, 2
      %p324 = scmp.lt.s32.totalorder %s20, 1
      %s325 = scalar_select %p324, %s20, 1
      %p326 = scmp.lt.s32.totalorder %s323, 3
      %s327 = scalar_select %p326, %s323, 3
      %s328 = smul.addr %s327, 4
      %s329 = smul.addr %s325, 16
      %s330 = sadd.s32 %s328, %s329
      %s331 = smul.addr %s330, 4
      %s332 = scalar_lea.vmem %s2, %s331
      %s333 = sadd.s32 %s21, 2
      %p334 = scmp.lt.s32.totalorder %s20, 1
      %s335 = scalar_select %p334, %s20, 1
      %p336 = scmp.lt.s32.totalorder %s21, 1
      %s337 = scalar_select %p336, %s21, 1
      %s338 = smul.addr %s337, 2
      %s339 = smul.addr %s335, 4
      %s340 = sadd.s32 %s338, %s339
      %s341 = smul.addr %s340, 2
      %s342 = scalar_lea.vmem %s5, %s341
      %v343 = vld [vmem:[%s3] sm:$0xff]
      %v344 = vld [vmem:[%s3 + $0x8] sm:$0xff]
      %v345 = vld [vmem:[%s3 + $0x10] sm:$0xff]
      %v346 = vld [vmem:[%s3 + $0x18] sm:$0x7]
      %v347 = vld [vmem:[%s4] sm:$0x1]
      %v348 = vld [vmem:[%s311] sm:$0xf]
      %v349 = vld [vmem:[%s311 + $0x4] sm:$0xf]
      %v350 = vld [vmem:[%s311 + $0x8] sm:$0xf]
      %v351 = vld [vmem:[%s311 + $0xc] sm:$0xf]
      %v352 = vld [vmem:[%s321] sm:$0xf]
      %v353 = vld [vmem:[%s321 + $0x4] sm:$0xf]
      %v354 = vld [vmem:[%s321 + $0x8] sm:$0xf]
      %v355 = vld [vmem:[%s321 + $0xc] sm:$0xf]
      %v356 = vld [vmem:[%s332] sm:$0xf]
      %v357 = vld [vmem:[%s332 + $0x4] sm:$0xf]
      %v358 = vld [vmem:[%s332 + $0x8] sm:$0xf]
      %v359 = vld [vmem:[%s332 + $0xc] sm:$0xf]
      %v360 = vperm.slane %v343, 0
      %v361 = vmul.f32 %v348, %v360
      %v362 = vmul.f32 %v349, %v360
      %v363 = vadd.f32 %v361, 0.0
      %v364 = vadd.f32 %v362, 0.0
      %v365 = vperm.slane %v343, 1
      %v366 = vmul.f32 %v348, %v365
      %v367 = vmul.f32 %v349, %v365
      %v370 = vrot.slane %v366, 1
      %v371 = vrot.slane %v367, 1
      %v374 = vadd.f32 %v363, %v370
      %v375 = vadd.f32 %v364, %v371
      %v376 = vperm.slane %v343, 2
      %v377 = vmul.f32 %v348, %v376
      %v378 = vmul.f32 %v349, %v376
      %v381 = vrot.slane %v377, 2
      %v382 = vrot.slane %v378, 2
      %v385 = vadd.f32 %v374, %v381
      %v386 = vadd.f32 %v375, %v382
      %v387 = vperm.slane %v343, 3
      %v388 = vmul.f32 %v349, %v387
      %v389 = vmul.f32 %v350, %v387
      %v390 = vadd.f32 %v385, %v388
      %v391 = vadd.f32 %v386, %v389
      %v392 = vperm.slane %v343, 4
      %v393 = vmul.f32 %v349, %v392
      %v394 = vmul.f32 %v350, %v392
      %v397 = vrot.slane %v393, 1
      %v398 = vrot.slane %v394, 1
      %v401 = vadd.f32 %v390, %v397
      %v402 = vadd.f32 %v391, %v398
      %v403 = vperm.slane %v343, 5
      %v404 = vmul.f32 %v349, %v403
      %v405 = vmul.f32 %v350, %v403
      %v408 = vrot.slane %v404, 2
      %v409 = vrot.slane %v405, 2
      %v412 = vadd.f32 %v401, %v408
      %v413 = vadd.f32 %v402, %v409
      %v414 = vperm.slane %v343, 6
      %v415 = vmul.f32 %v350, %v414
      %v416 = vmul.f32 %v351, %v414
      %v417 = vadd.f32 %v412, %v415
      %v418 = vadd.f32 %v413, %v416
      %v419 = vperm.slane %v343, 7
      %v420 = vmul.f32 %v350, %v419
      %v421 = vmul.f32 %v351, %v419
      %v424 = vrot.slane %v420, 1
      %v425 = vrot.slane %v421, 1
      %v428 = vadd.f32 %v417, %v424
      %v429 = vadd.f32 %v418, %v425
      %v430 = vperm.slane %v344, 0
      %v431 = vmul.f32 %v350, %v430
      %v432 = vmul.f32 %v351, %v430
      %v435 = vrot.slane %v431, 2
      %v436 = vrot.slane %v432, 2
      %v439 = vadd.f32 %v428, %v435
      %v440 = vadd.f32 %v429, %v436
      %v441 = vperm.slane %v344, 1
      %v442 = vmul.f32 %v352, %v441
      %v443 = vmul.f32 %v353, %v441
      %v444 = vadd.f32 %v439, %v442
      %v445 = vadd.f32 %v440, %v443
      %v446 = vperm.slane %v344, 2
      %v447 = vmul.f32 %v352, %v446
      %v448 = vmul.f32 %v353, %v446
      %v451 = vrot.slane %v447, 1
      %v452 = vrot.slane %v448, 1
      %v455 = vadd.f32 %v444, %v451
      %v456 = vadd.f32 %v445, %v452
      %v457 = vperm.slane %v344, 3
      %v458 = vmul.f32 %v352, %v457
      %v459 = vmul.f32 %v353, %v457
      %v462 = vrot.slane %v458, 2
      %v463 = vrot.slane %v459, 2
      %v466 = vadd.f32 %v455, %v462
      %v467 = vadd.f32 %v456, %v463
      %v468 = vperm.slane %v344, 4
      %v469 = vmul.f32 %v353, %v468
      %v470 = vmul.f32 %v354, %v468
      %v471 = vadd.f32 %v466, %v469
      %v472 = vadd.f32 %v467, %v470
      %v473 = vperm.slane %v344, 5
      %v474 = vmul.f32 %v353, %v473
      %v475 = vmul.f32 %v354, %v473
      %v478 = vrot.slane %v474, 1
      %v479 = vrot.slane %v475, 1
      %v482 = vadd.f32 %v471, %v478
      %v483 = vadd.f32 %v472, %v479
      %v484 = vperm.slane %v344, 6
      %v485 = vmul.f32 %v353, %v484
      %v486 = vmul.f32 %v354, %v484
      %v489 = vrot.slane %v485, 2
      %v490 = vrot.slane %v486, 2
      %v493 = vadd.f32 %v482, %v489
      %v494 = vadd.f32 %v483, %v490
      %v495 = vperm.slane %v344, 7
      %v496 = vmul.f32 %v354, %v495
      %v497 = vmul.f32 %v355, %v495
      %v498 = vadd.f32 %v493, %v496
      %v499 = vadd.f32 %v494, %v497
      %v500 = vperm.slane %v345, 0
      %v501 = vmul.f32 %v354, %v500
      %v502 = vmul.f32 %v355, %v500
      %v505 = vrot.slane %v501, 1
      %v506 = vrot.slane %v502, 1
      %v509 = vadd.f32 %v498, %v505
      %v510 = vadd.f32 %v499, %v506
      %v511 = vperm.slane %v345, 1
      %v512 = vmul.f32 %v354, %v511
      %v513 = vmul.f32 %v355, %v511
      %v516 = vrot.slane %v512, 2
      %v517 = vrot.slane %v513, 2
      %v520 = vadd.f32 %v509, %v516
      %v521 = vadd.f32 %v510, %v517
      %v522 = vperm.slane %v345, 2
      %v523 = vmul.f32 %v356, %v522
      %v524 = vmul.f32 %v357, %v522
      %v525 = vadd.f32 %v520, %v523
      %v526 = vadd.f32 %v521, %v524
      %v527 = vperm.slane %v345, 3
      %v528 = vmul.f32 %v356, %v527
      %v529 = vmul.f32 %v357, %v527
      %v532 = vrot.slane %v528, 1
      %v533 = vrot.slane %v529, 1
      %v536 = vadd.f32 %v525, %v532
      %v537 = vadd.f32 %v526, %v533
      %v538 = vperm.slane %v345, 4
      %v539 = vmul.f32 %v356, %v538
      %v540 = vmul.f32 %v357, %v538
      %v543 = vrot.slane %v539, 2
      %v544 = vrot.slane %v540, 2
      %v547 = vadd.f32 %v536, %v543
      %v548 = vadd.f32 %v537, %v544
      %v549 = vperm.slane %v345, 5
      %v550 = vmul.f32 %v357, %v549
      %v551 = vmul.f32 %v358, %v549
      %v552 = vadd.f32 %v547, %v550
      %v553 = vadd.f32 %v548, %v551
      %v554 = vperm.slane %v345, 6
      %v555 = vmul.f32 %v357, %v554
      %v556 = vmul.f32 %v358, %v554
      %v559 = vrot.slane %v555, 1
      %v560 = vrot.slane %v556, 1
      %v563 = vadd.f32 %v552, %v559
      %v564 = vadd.f32 %v553, %v560
      %v565 = vperm.slane %v345, 7
      %v566 = vmul.f32 %v357, %v565
      %v567 = vmul.f32 %v358, %v565
      %v570 = vrot.slane %v566, 2
      %v571 = vrot.slane %v567, 2
      %v574 = vadd.f32 %v563, %v570
      %v575 = vadd.f32 %v564, %v571
      %v576 = vperm.slane %v346, 0
      %v577 = vmul.f32 %v358, %v576
      %v578 = vmul.f32 %v359, %v576
      %v579 = vadd.f32 %v574, %v577
      %v580 = vadd.f32 %v575, %v578
      %v581 = vperm.slane %v346, 1
      %v582 = vmul.f32 %v358, %v581
      %v583 = vmul.f32 %v359, %v581
      %v586 = vrot.slane %v582, 1
      %v587 = vrot.slane %v583, 1
      %v590 = vadd.f32 %v579, %v586
      %v591 = vadd.f32 %v580, %v587
      %v592 = vperm.slane %v346, 2
      %v593 = vmul.f32 %v358, %v592
      %v594 = vmul.f32 %v359, %v592
      %v597 = vrot.slane %v593, 2
      %v598 = vrot.slane %v594, 2
      %v601 = vadd.f32 %v590, %v597
      %v602 = vadd.f32 %v591, %v598
      %v604 = vperm.slane %v347, 0
      %v606 = vadd.f32 %v601, %v604
      %v607 = vadd.f32 %v602, %v604
      %vm608 = vcmask 517120
      %609 = vst.msk [vmem:[%s342] sm:$0x3] %vm608, %v606
      %610 = vst.msk [vmem:[%s342 + $0x2] sm:$0x3] %vm608, %v607
      %p611 = scmp.lt.s32.totalorder %s20, 1
      %s612 = scalar_select %p611, %s20, 1
      %p613 = scmp.lt.s32.totalorder %s21, 1
      %s614 = scalar_select %p613, %s21, 1
      %s615 = smul.addr %s614, 2
      %s616 = smul.addr %s612, 4
      %s617 = sadd.s32 %s615, %s616
      %s618 = smul.addr %s617, 2
      %s619 = scalar_lea.vmem %s5, %s618
      // Predicated region
      $region41: #{transformer_forward.25} parent=39 // pred_check
        %p620 = pneg %p178
      $region42: #{transformer_forward.25} parent=39 // pred_check_branch
        %622 = sbr.rel (%p620) target = $region44
      $region43: #{transformer_forward.25} parent=39 // pred_region
        _
      $region44: #{transformer_forward.25} parent=39 // pred_fallthru
        _
    $region40: #{transformer_forward.25} parent=5 // pred_fallthru
      _
    %p623 = scmp.le.s32.totalorder 2, %s11
    // Predicated region
    $region45: #{transformer_forward.25} parent=5 // pred_check
      %p624 = pneg %p623
    $region46: #{transformer_forward.25} parent=5 // pred_check_branch
      %626 = sbr.rel (%p624) target = $region48
    $region47: #{transformer_forward.25} parent=5 // pred_region
      %s627 = ssub.s32 %s11, 2
      // Predicated region
      $region49: #{transformer_forward.25} parent=47 // pred_check
        %p628 = pneg %p184
      $region50: #{transformer_forward.25} parent=47 // pred_check_branch
        %630 = sbr.rel (%p628) target = $region52
      $region51: #{transformer_forward.25} parent=47 // pred_region
        %p631 = scmp.lt.s32.totalorder %s22, 1
        %s632 = scalar_select %p631, %s22, 1
        %p633 = scmp.lt.s32.totalorder %s23, 1
        %s634 = scalar_select %p633, %s23, 1
        %s635 = smul.addr %s634, 2
        %s636 = smul.addr %s632, 4
        %s637 = sadd.s32 %s635, %s636
        %s638 = smul.addr %s637, 2
        %s639 = scalar_lea.vmem %s5, %s638
      $region52: #{transformer_forward.25} parent=47 // pred_fallthru
        _
    $region48: #{transformer_forward.25} parent=5 // pred_fallthru
      _
  $region6: #{transformer_forward.25} parent=0 // loop_footer
    %s15 = sadd.s32 1, %s11
  $region7: #{transformer_forward.25} parent=0 // loop_footer_branch
    %10 = sbr.rel target = $region3
  $region8: #{transformer_forward.25} parent=0 // loop_exit
    _

// kernel: transformer_forward.28
$region0: #{transformer_forward.28}
  #allocation0 [shape = 'u32[]', space=smem, size = 0x4, offset = 0x4, fixed_abs, tag = 'smem constant byte address 0x4 - core index']
  #allocation1 [shape = 'u32[72,128]{1,0:T(1,128)}', space=vmem, size = 0x9000, scoped, tag = 'internal scratch']
  %s0 = inlined_call_operand.vmem [shape: f32[2,1,64], index: 0, kind: input, shape index: {}]
  %s1 = inlined_call_operand.vmem [shape: f32[2,10,64], index: 1, kind: input, shape index: {}]
  %s2 = inlined_call_operand.vmem [shape: f32[2,10,64], index: 2, kind: input, shape index: {}]
  %s3 = inlined_call_operand.vmem [shape: f32[2,1,64], index: 3, kind: output, shape index: {}]
  %s4 = sld [smem:[#allocation0]]
  $region45: #{transformer_forward.28} parent=0
    _
  %s6 = ssub.s32 1, %s4
  %s7 = scalar_select 0, %s6, %s4
  loop: start=0, step=1, limit=4
  $region2: #{transformer_forward.28} parent=0 // loop_pre_header
    _
  $region3: #{transformer_forward.28} parent=0 // loop_header
    %s9 = sphi 0, %s13
    %p10 = scmp.ge.s32.totalorder %s9, 4
    %s19 = sphi 0, %s21
    %s22 = sphi 0, %s19
    %s23 = sphi 0, %s22
    %s39 = sphi 0, %s23
    %s45 = sphi 0, %s47
    %s48 = sphi 0, %s45
    %s49 = sphi 0, %s48
    %s65 = sphi 0, %s49
    %s71 = sphi 0, %s73
    %s74 = sphi 0, %s71
    %s75 = sphi 0, %s74
    %s91 = sphi 0, %s75
    %s97 = sphi 0, %s99
    %s100 = sphi 0, %s97
    %s101 = sphi 0, %s100
    %s117 = sphi 0, %s101
  $region4: #{transformer_forward.28} parent=0 // loop_header_branch
    %12 = sbr.rel (%p10) target = $region8
  $region5: #{transformer_forward.28} parent=0 // loop_body
    %s14 = ssub.s32 %s9, 1
    %s15 = ssub.s32 %s9, 2
    %s16 = sadd.s32 %s9, 1
    %s17 = ssub.s32 %s9, %s16
    %p18 = scmp.eq.s32.totalorder %s17, 0
    %s20 = sadd.s32 %s19, 1
    %s21 = scalar_select %p18, %s19, %s20
    %p24 = pneg %p18
    %p25 = scmp.eq.s32.totalorder %s9, 1
    %p26 = por %p24, %p25
    %p27 = scmp.ne.s32.totalorder %s19, %s22
    %p28 = scmp.eq.s32.totalorder %s9, 0
    %p29 = por %p27, %p28
    %p30 = scmp.ne.s32.totalorder %s19, %s22
    %p31 = scmp.eq.s32.totalorder %s14, 1
    %p32 = por %p30, %p31
    %p33 = scmp.ne.s32.totalorder %s22, %s23
    %p34 = scmp.eq.s32.totalorder %s14, 0
    %p35 = por %p33, %p34
    %p36 = scmp.ne.s32.totalorder %s22, %s23
    %p37 = scmp.eq.s32.totalorder %s15, 1
    %p38 = por %p36, %p37
    %p40 = scmp.ne.s32.totalorder %s23, %s39
    %p41 = scmp.eq.s32.totalorder %s15, 0
    %p42 = por %p40, %p41
    %s43 = ssub.s32 %s9, %s16
    %p44 = scmp.eq.s32.totalorder %s43, 0
    %s46 = sadd.s32 %s45, 1
    %s47 = scalar_select %p44, %s45, %s46
    %p50 = pneg %p44
    %p51 = scmp.eq.s32.totalorder %s9, 1
    %p52 = por %p50, %p51
    %p53 = scmp.ne.s32.totalorder %s45, %s48
    %p54 = scmp.eq.s32.totalorder %s9, 0
    %p55 = por %p53, %p54
    %p56 = scmp.ne.s32.totalorder %s45, %s48
    %p57 = scmp.eq.s32.totalorder %s14, 1
    %p58 = por %p56, %p57
    %p59 = scmp.ne.s32.totalorder %s48, %s49
    %p60 = scmp.eq.s32.totalorder %s14, 0
    %p61 = por %p59, %p60
    %p62 = scmp.ne.s32.totalorder %s48, %s49
    %p63 = scmp.eq.s32.totalorder %s15, 1
    %p64 = por %p62, %p63
    %p66 = scmp.ne.s32.totalorder %s49, %s65
    %p67 = scmp.eq.s32.totalorder %s15, 0
    %p68 = por %p66, %p67
    %s69 = ssub.s32 %s9, %s16
    %p70 = scmp.eq.s32.totalorder %s69, 0
    %s72 = sadd.s32 %s71, 1
    %s73 = scalar_select %p70, %s71, %s72
    %p76 = pneg %p70
    %p77 = scmp.eq.s32.totalorder %s9, 1
    %p78 = por %p76, %p77
    %p79 = scmp.ne.s32.totalorder %s71, %s74
    %p80 = scmp.eq.s32.totalorder %s9, 0
    %p81 = por %p79, %p80
    %p82 = scmp.ne.s32.totalorder %s71, %s74
    %p83 = scmp.eq.s32.totalorder %s14, 1
    %p84 = por %p82, %p83
    %p85 = scmp.ne.s32.totalorder %s74, %s75
    %p86 = scmp.eq.s32.totalorder %s14, 0
    %p87 = por %p85, %p86
    %p88 = scmp.ne.s32.totalorder %s74, %s75
    %p89 = scmp.eq.s32.totalorder %s15, 1
    %p90 = por %p88, %p89
    %p92 = scmp.ne.s32.totalorder %s75, %s91
    %p93 = scmp.eq.s32.totalorder %s15, 0
    %p94 = por %p92, %p93
    %s95 = ssub.s32 %s9, %s16
    %p96 = scmp.eq.s32.totalorder %s95, 0
    %s98 = sadd.s32 %s97, 1
    %s99 = scalar_select %p96, %s97, %s98
    %p102 = pneg %p96
    %p103 = scmp.eq.s32.totalorder %s9, 1
    %p104 = por %p102, %p103
    %p105 = scmp.ne.s32.totalorder %s97, %s100
    %p106 = scmp.eq.s32.totalorder %s9, 0
    %p107 = por %p105, %p106
    %p108 = scmp.ne.s32.totalorder %s97, %s100
    %p109 = scmp.eq.s32.totalorder %s14, 1
    %p110 = por %p108, %p109
    %p111 = scmp.ne.s32.totalorder %s100, %s101
    %p112 = scmp.eq.s32.totalorder %s14, 0
    %p113 = por %p111, %p112
    %p114 = scmp.ne.s32.totalorder %s100, %s101
    %p115 = scmp.eq.s32.totalorder %s15, 1
    %p116 = por %p114, %p115
    %p118 = scmp.ne.s32.totalorder %s101, %s117
    %p119 = scmp.eq.s32.totalorder %s15, 0
    %p120 = por %p118, %p119
    %p121 = scmp.le.s32.totalorder 1, %s9
    %p122 = scmp.lt.s32.totalorder %s9, 3
    %p123 = pnand %p121, %p122
    %p124 = pneg %p123
    // Predicated region
    $region9: #{transformer_forward.28} parent=5 // pred_check
      _
    $region10: #{transformer_forward.28} parent=5 // pred_check_branch
      %126 = sbr.rel (%p123) target = $region12
    $region11: #{transformer_forward.28} parent=5 // pred_region
      %s127 = ssub.s32 %s9, 1
    $region12: #{transformer_forward.28} parent=5 // pred_fallthru
      _
    %p128 = scmp.lt.s32.totalorder %s9, 2
    // Predicated region
    $region13: #{transformer_forward.28} parent=5 // pred_check
      %p129 = pneg %p128
    $region14: #{transformer_forward.28} parent=5 // pred_check_branch
      %131 = sbr.rel (%p129) target = $region16
    $region15: #{transformer_forward.28} parent=5 // pred_region
      // Predicated region
      $region17: #{transformer_forward.28} parent=15 // pred_check
        %p132 = pneg %p29
      $region18: #{transformer_forward.28} parent=15 // pred_check_branch
        %134 = sbr.rel (%p132) target = $region20
      $region19: #{transformer_forward.28} parent=15 // pred_region
        %p135 = scmp.lt.s32.totalorder %s9, 1
        %s136 = scalar_select %p135, %s9, 1
        %s137 = scalar_lea.vmem %s0, %s136
      $region20: #{transformer_forward.28} parent=15 // pred_fallthru
        _
      // Predicated region
      $region21: #{transformer_forward.28} parent=15 // pred_check
        %p138 = pneg %p55
      $region22: #{transformer_forward.28} parent=15 // pred_check_branch
        %140 = sbr.rel (%p138) target = $region24
      $region23: #{transformer_forward.28} parent=15 // pred_region
        %p141 = scmp.lt.s32.totalorder %s9, 1
        %s142 = scalar_select %p141, %s9, 1
        %s143 = smul.addr %s142, 2
        %s144 = smul.addr %s143, 8
        %s145 = scalar_lea.vmem %s1, %s144
      $region24: #{transformer_forward.28} parent=15 // pred_fallthru
        _
      // Predicated region
      $region25: #{transformer_forward.28} parent=15 // pred_check
        %p146 = pneg %p81
      $region26: #{transformer_forward.28} parent=15 // pred_check_branch
        %148 = sbr.rel (%p146) target = $region28
      $region27: #{transformer_forward.28} parent=15 // pred_region
        %p149 = scmp.lt.s32.totalorder %s9, 1
        %s150 = scalar_select %p149, %s9, 1
        %s151 = smul.addr %s150, 2
        %s152 = smul.addr %s151, 8
        %s153 = scalar_lea.vmem %s2, %s152
      $region28: #{transformer_forward.28} parent=15 // pred_fallthru
        _
    $region16: #{transformer_forward.28} parent=5 // pred_fallthru
      _
    %p154 = scmp.le.s32.totalorder 1, %s9
    %p155 = scmp.lt.s32.totalorder %s9, 3
    %p156 = pnand %p154, %p155
    %p157 = pneg %p156
    // Predicated region
    $region29: #{transformer_forward.28} parent=5 // pred_check
      _
    $region30: #{transformer_forward.28} parent=5 // pred_check_branch
      %159 = sbr.rel (%p156) target = $region32
    $region31: #{transformer_forward.28} parent=5 // pred_region
      %s160 = ssub.s32 %s9, 1
      %p161 = scmp.lt.s32.totalorder %s14, 1
      %s162 = scalar_select %p161, %s14, 1
      %s163 = scalar_lea.vmem %s0, %s162
      %p164 = pneg %p35
      %p165 = pneg %p32
      %p166 = scmp.lt.s32.totalorder %s14, 1
      %s167 = scalar_select %p166, %s14, 1
      %s168 = smul.addr %s167, 2
      %s169 = smul.addr %s168, 8
      %s170 = scalar_lea.vmem %s1, %s169
      %p171 = pneg %p61
      %p172 = pneg %p58
      %p173 = scmp.lt.s32.totalorder %s14, 1
      %s174 = scalar_select %p173, %s14, 1
      %s175 = smul.addr %s174, 2
      %s176 = smul.addr %s175, 8
      %s177 = scalar_lea.vmem %s2, %s176
      %p178 = pneg %p87
      %p179 = pneg %p84
      %p180 = pneg %p113
      %p181 = pneg %p110
      %p182 = scmp.lt.s32.totalorder %s14, 1
      %s183 = scalar_select %p182, %s14, 1
      %s184 = scalar_lea.vmem %s3, %s183
      %p185 = scmp.lt.s32.totalorder %s14, 1
      %s186 = scalar_select %p185, %s14, 1
      %s187 = scalar_lea.vmem %s0, %s186
      %p188 = scmp.lt.s32.totalorder %s14, 1
      %s189 = scalar_select %p188, %s14, 1
      %s190 = smul.addr %s189, 2
      %s191 = smul.addr %s190, 8
      %s192 = scalar_lea.vmem %s1, %s191
      %p193 = scmp.lt.s32.totalorder %s14, 1
      %s194 = scalar_select %p193, %s14, 1
      %s195 = smul.addr %s194, 2
      %s196 = smul.addr %s195, 8
      %s197 = scalar_lea.vmem %s2, %s196
      %p198 = scmp.lt.s32.totalorder %s14, 1
      %s199 = scalar_select %p198, %s14, 1
      %s200 = scalar_lea.vmem %s3, %s199
      %v202 = vld [vmem:[%s187] sm:$0x1]
      %204 = vrot.lane.b32.xlu0 %v202, 112
      %v205 = vpop.permute.xlu0 %204
      %207 = vrot.lane.b32.xlu0 %v202, 96
      %v208 = vpop.permute.xlu0 %207
      %210 = vrot.lane.b32.xlu0 %v202, 80
      %v211 = vpop.permute.xlu0 %210
      %v213 = vpack.c.bf16 %v202, %v202
      %v214 = vpack.c.bf16 %v205, %v205
      %v215 = vpack.c.bf16 %v208, %v208
      %v216 = vpack.c.bf16 %v211, %v211
      %v217 = vld [vmem:[%s192] sm:$0xff]
      %v218 = vld [vmem:[%s192 + $0x8] sm:$0x3]
      %221 = vrot.lane.b32.xlu0 %v217, 112
      %v222 = vpop.permute.xlu0 %221
      %223 = vrot.lane.b32.xlu0 %v218, 112
      %v224 = vpop.permute.xlu0 %223
      %227 = vrot.lane.b32.xlu0 %v217, 96
      %v228 = vpop.permute.xlu0 %227
      %229 = vrot.lane.b32.xlu0 %v218, 96
      %v230 = vpop.permute.xlu0 %229
      %233 = vrot.lane.b32.xlu0 %v217, 80
      %v234 = vpop.permute.xlu0 %233
      %235 = vrot.lane.b32.xlu0 %v218, 80
      %v236 = vpop.permute.xlu0 %235
      %v239 = vrot.slane %v228, 4
      %vm240 = vcmask 1047556
      %v241 = vsel %vm240, %v239, %v217
      %v242 = vrot.slane %v217, 4
      %v243 = vsel %vm240, %v228, %v242
      %v245 = vunpack.c.l.s4 1983009808
      %v246 = vunpack.c.0.s8 %v245
      %v247 = vperm.slane %v241, %v246
      %v249 = vunpack.c.l.s4 1983009808
      %v250 = vunpack.c.0.s8 %v249
      %v251 = vperm.slane %v243, %v250
      %v252 = vrot.slane %v234, 4
      %v253 = vsel %vm240, %v252, %v222
      %v254 = vrot.slane %v222, 4
      %v255 = vsel %vm240, %v234, %v254
      %v257 = vunpack.c.l.s4 1983009808
      %v258 = vunpack.c.0.s8 %v257
      %v259 = vperm.slane %v253, %v258
      %v261 = vunpack.c.l.s4 1983009808
      %v262 = vunpack.c.0.s8 %v261
      %v263 = vperm.slane %v255, %v262
      %v264 = vrot.slane %v259, 4
      %v265 = vsel %vm240, %v264, %v247
      %v266 = vrot.slane %v247, 4
      %v267 = vsel %vm240, %v259, %v266
      %v269 = vunpack.c.l.s4 1934713408
      %v270 = vunpack.c.0.s8 %v269
      %v271 = vperm.slane %v265, %v270
      %v273 = vunpack.c.l.s4 1934713408
      %v274 = vunpack.c.0.s8 %v273
      %v275 = vperm.slane %v267, %v274
      %v276 = vrot.slane %v263, 4
      %v277 = vsel %vm240, %v276, %v251
      %v278 = vrot.slane %v251, 4
      %v279 = vsel %vm240, %v263, %v278
      %v281 = vunpack.c.l.s4 1934713408
      %v282 = vunpack.c.0.s8 %v281
      %v283 = vperm.slane %v277, %v282
      %v285 = vunpack.c.l.s4 1934713408
      %v286 = vunpack.c.0.s8 %v285
      %v287 = vperm.slane %v279, %v286
      %v288 = vrot.slane %v271, 4
      %v289 = vsel %vm240, 0.0, %v288
      %v290 = vrot.slane %v275, 4
      %v291 = vsel %vm240, 0.0, %v290
      %v292 = vrot.slane %v283, 4
      %v293 = vsel %vm240, 0.0, %v292
      %v294 = vrot.slane %v287, 4
      %v295 = vsel %vm240, 0.0, %v294
      %v296 = vrot.slane %v230, 4
      %v297 = vsel %vm240, %v296, %v218
      %v299 = vunpack.c.l.s4 1983009808
      %v300 = vunpack.c.0.s8 %v299
      %v301 = vperm.slane %v297, %v300
      %v302 = vrot.slane %v236, 4
      %v303 = vsel %vm240, %v302, %v224
      %v305 = vunpack.c.l.s4 1983009808
      %v306 = vunpack.c.0.s8 %v305
      %v307 = vperm.slane %v303, %v306
      %v308 = vrot.slane %v307, 4
      %v309 = vsel %vm240, %v308, %v301
      %v311 = vunpack.c.l.s4 1934713408
      %v312 = vunpack.c.0.s8 %v311
      %v313 = vperm.slane %v309, %v312
      %v314 = vsel %vm240, %v290, %v271
      %v316 = vunpack.c.l.s4 1983009808
      %v317 = vunpack.c.0.s8 %v316
      %v318 = vperm.slane %v314, %v317
      %v319 = vrot.slane %v291, 4
      %v320 = vsel %vm240, %v319, %v289
      %v322 = vunpack.c.l.s4 1983009808
      %v323 = vunpack.c.0.s8 %v322
      %v324 = vperm.slane %v320, %v323
      %v325 = vsel %vm240, %v294, %v283
      %v327 = vunpack.c.l.s4 1983009808
      %v328 = vunpack.c.0.s8 %v327
      %v329 = vperm.slane %v325, %v328
      %v330 = vrot.slane %v295, 4
      %v331 = vsel %vm240, %v330, %v293
      %v333 = vunpack.c.l.s4 1983009808
      %v334 = vunpack.c.0.s8 %v333
      %v335 = vperm.slane %v331, %v334
      %v336 = vrot.slane %v324, 4
      %v337 = vsel %vm240, %v336, %v318
      %v338 = vrot.slane %v318, 4
      %v339 = vsel %vm240, %v324, %v338
      %v341 = vunpack.c.l.s4 1934713408
      %v342 = vunpack.c.0.s8 %v341
      %v343 = vperm.slane %v337, %v342
      %v345 = vunpack.c.l.s4 1934713408
      %v346 = vunpack.c.0.s8 %v345
      %v347 = vperm.slane %v339, %v346
      %v348 = vrot.slane %v335, 4
      %v349 = vsel %vm240, %v348, %v329
      %v350 = vrot.slane %v329, 4
      %v351 = vsel %vm240, %v335, %v350
      %v353 = vunpack.c.l.s4 1934713408
      %v354 = vunpack.c.0.s8 %v353
      %v355 = vperm.slane %v349, %v354
      %v357 = vunpack.c.l.s4 1934713408
      %v358 = vunpack.c.0.s8 %v357
      %v359 = vperm.slane %v351, %v358
      %v360 = vrot.slane %v355, 4
      %v361 = vsel %vm240, %v360, %v343
      %v362 = vrot.slane %v343, 4
      %v363 = vsel %vm240, %v355, %v362
      %v364 = vrot.slane %v359, 4
      %v365 = vsel %vm240, %v364, %v347
      %v366 = vrot.slane %v347, 4
      %v367 = vsel %vm240, %v359, %v366
      %v369 = vunpack.c.l.s4 1983009808
      %v370 = vunpack.c.0.s8 %v369
      %v371 = vperm.slane %v313, %v370
      %v372 = vrot.slane %v313, 4
      %v373 = vsel %vm240, 0.0, %v372
      %v375 = vunpack.c.l.s4 1983009808
      %v376 = vunpack.c.0.s8 %v375
      %v377 = vperm.slane %v373, %v376
      %v378 = vrot.slane %v377, 4
      %v379 = vsel %vm240, %v378, %v371
      %v380 = vrot.slane %v371, 4
      %v381 = vsel %vm240, %v377, %v380
      %v383 = vunpack.c.l.s4 1934713408
      %v384 = vunpack.c.0.s8 %v383
      %v385 = vperm.slane %v379, %v384
      %v387 = vunpack.c.l.s4 1934713408
      %v388 = vunpack.c.0.s8 %v387
      %v389 = vperm.slane %v381, %v388
      %v390 = vrot.slane %v385, 4
      %v391 = vsel %vm240, 0.0, %v390
      %v392 = vrot.slane %v389, 4
      %v393 = vsel %vm240, 0.0, %v392
      %v394 = vpack.c.bf16 %v361, %v361
      %v395 = vpack.c.bf16 %v385, %v385
      %v396 = vpack.c.bf16 %v363, %v363
      %v397 = vpack.c.bf16 %v391, %v391
      %v398 = vpack.c.bf16 %v365, %v365
      %v399 = vpack.c.bf16 %v389, %v389
      %v400 = vpack.c.bf16 %v367, %v367
      %v401 = vpack.c.bf16 %v393, %v393
      %v402 = vld [vmem:[%s197] sm:$0xff]
      %v403 = vld [vmem:[%s197 + $0x8] sm:$0x3]
      %406 = vrot.lane.b32.xlu0 %v402, 112
      %v407 = vpop.permute.xlu0 %406
      %408 = vrot.lane.b32.xlu0 %v403, 112
      %v409 = vpop.permute.xlu0 %408
      %412 = vrot.lane.b32.xlu0 %v402, 96
      %v413 = vpop.permute.xlu0 %412
      %414 = vrot.lane.b32.xlu0 %v403, 96
      %v415 = vpop.permute.xlu0 %414
      %418 = vrot.lane.b32.xlu0 %v402, 80
      %v419 = vpop.permute.xlu0 %418
      %420 = vrot.lane.b32.xlu0 %v403, 80
      %v421 = vpop.permute.xlu0 %420
      %v424 = vrot.slane %v413, 4
      %v425 = vsel %vm240, %v424, %v402
      %v426 = vrot.slane %v402, 4
      %v427 = vsel %vm240, %v413, %v426
      %v429 = vunpack.c.l.s4 1983009808
      %v430 = vunpack.c.0.s8 %v429
      %v431 = vperm.slane %v425, %v430
      %v433 = vunpack.c.l.s4 1983009808
      %v434 = vunpack.c.0.s8 %v433
      %v435 = vperm.slane %v427, %v434
      %v436 = vrot.slane %v419, 4
      %v437 = vsel %vm240, %v436, %v407
      %v438 = vrot.slane %v407, 4
      %v439 = vsel %vm240, %v419, %v438
      %v441 = vunpack.c.l.s4 1983009808
      %v442 = vunpack.c.0.s8 %v441
      %v443 = vperm.slane %v437, %v442
      %v445 = vunpack.c.l.s4 1983009808
      %v446 = vunpack.c.0.s8 %v445
      %v447 = vperm.slane %v439, %v446
      %v448 = vrot.slane %v443, 4
      %v449 = vsel %vm240, %v448, %v431
      %v450 = vrot.slane %v431, 4
      %v451 = vsel %vm240, %v443, %v450
      %v453 = vunpack.c.l.s4 1934713408
      %v454 = vunpack.c.0.s8 %v453
      %v455 = vperm.slane %v449, %v454
      %v457 = vunpack.c.l.s4 1934713408
      %v458 = vunpack.c.0.s8 %v457
      %v459 = vperm.slane %v451, %v458
      %v460 = vrot.slane %v447, 4
      %v461 = vsel %vm240, %v460, %v435
      %v462 = vrot.slane %v435, 4
      %v463 = vsel %vm240, %v447, %v462
      %v465 = vunpack.c.l.s4 1934713408
      %v466 = vunpack.c.0.s8 %v465
      %v467 = vperm.slane %v461, %v466
      %v469 = vunpack.c.l.s4 1934713408
      %v470 = vunpack.c.0.s8 %v469
      %v471 = vperm.slane %v463, %v470
      %v472 = vrot.slane %v455, 4
      %v473 = vsel %vm240, 0.0, %v472
      %v474 = vrot.slane %v459, 4
      %v475 = vsel %vm240, 0.0, %v474
      %v476 = vrot.slane %v467, 4
      %v477 = vsel %vm240, 0.0, %v476
      %v478 = vrot.slane %v471, 4
      %v479 = vsel %vm240, 0.0, %v478
      %v480 = vrot.slane %v415, 4
      %v481 = vsel %vm240, %v480, %v403
      %v483 = vunpack.c.l.s4 1983009808
      %v484 = vunpack.c.0.s8 %v483
      %v485 = vperm.slane %v481, %v484
      %v486 = vrot.slane %v421, 4
      %v487 = vsel %vm240, %v486, %v409
      %v489 = vunpack.c.l.s4 1983009808
      %v490 = vunpack.c.0.s8 %v489
      %v491 = vperm.slane %v487, %v490
      %v492 = vrot.slane %v491, 4
      %v493 = vsel %vm240, %v492, %v485
      %v495 = vunpack.c.l.s4 1934713408
      %v496 = vunpack.c.0.s8 %v495
      %v497 = vperm.slane %v493, %v496
      %v498 = vsel %vm240, %v474, %v455
      %v500 = vunpack.c.l.s4 1983009808
      %v501 = vunpack.c.0.s8 %v500
      %v502 = vperm.slane %v498, %v501
      %v503 = vrot.slane %v475, 4
      %v504 = vsel %vm240, %v503, %v473
      %v506 = vunpack.c.l.s4 1983009808
      %v507 = vunpack.c.0.s8 %v506
      %v508 = vperm.slane %v504, %v507
      %v509 = vsel %vm240, %v478, %v467
      %v511 = vunpack.c.l.s4 1983009808
      %v512 = vunpack.c.0.s8 %v511
      %v513 = vperm.slane %v509, %v512
      %v514 = vrot.slane %v479, 4
      %v515 = vsel %vm240, %v514, %v477
      %v517 = vunpack.c.l.s4 1983009808
      %v518 = vunpack.c.0.s8 %v517
      %v519 = vperm.slane %v515, %v518
      %v520 = vrot.slane %v508, 4
      %v521 = vsel %vm240, %v520, %v502
      %v522 = vrot.slane %v502, 4
      %v523 = vsel %vm240, %v508, %v522
      %v525 = vunpack.c.l.s4 1934713408
      %v526 = vunpack.c.0.s8 %v525
      %v527 = vperm.slane %v521, %v526
      %v529 = vunpack.c.l.s4 1934713408
      %v530 = vunpack.c.0.s8 %v529
      %v531 = vperm.slane %v523, %v530
      %v532 = vrot.slane %v519, 4
      %v533 = vsel %vm240, %v532, %v513
      %v534 = vrot.slane %v513, 4
      %v535 = vsel %vm240, %v519, %v534
      %v537 = vunpack.c.l.s4 1934713408
      %v538 = vunpack.c.0.s8 %v537
      %v539 = vperm.slane %v533, %v538
      %v541 = vunpack.c.l.s4 1934713408
      %v542 = vunpack.c.0.s8 %v541
      %v543 = vperm.slane %v535, %v542
      %v544 = vrot.slane %v539, 4
      %v545 = vsel %vm240, %v544, %v527
      %v546 = vrot.slane %v527, 4
      %v547 = vsel %vm240, %v539, %v546
      %v548 = vrot.slane %v543, 4
      %v549 = vsel %vm240, %v548, %v531
      %v550 = vrot.slane %v531, 4
      %v551 = vsel %vm240, %v543, %v550
      %v553 = vunpack.c.l.s4 1983009808
      %v554 = vunpack.c.0.s8 %v553
      %v555 = vperm.slane %v497, %v554
      %v556 = vrot.slane %v497, 4
      %v557 = vsel %vm240, 0.0, %v556
      %v559 = vunpack.c.l.s4 1983009808
      %v560 = vunpack.c.0.s8 %v559
      %v561 = vperm.slane %v557, %v560
      %v562 = vrot.slane %v561, 4
      %v563 = vsel %vm240, %v562, %v555
      %v564 = vrot.slane %v555, 4
      %v565 = vsel %vm240, %v561, %v564
      %v567 = vunpack.c.l.s4 1934713408
      %v568 = vunpack.c.0.s8 %v567
      %v569 = vperm.slane %v563, %v568
      %v571 = vunpack.c.l.s4 1934713408
      %v572 = vunpack.c.0.s8 %v571
      %v573 = vperm.slane %v565, %v572
      %v574 = vrot.slane %v569, 4
      %v575 = vsel %vm240, 0.0, %v574
      %v576 = vrot.slane %v573, 4
      %v577 = vsel %vm240, 0.0, %v576
      %v578 = vpack.c.bf16 %v545, %v545
      %v579 = vpack.c.bf16 %v569, %v569
      %v580 = vpack.c.bf16 %v547, %v547
      %v581 = vpack.c.bf16 %v575, %v575
      %v582 = vpack.c.bf16 %v549, %v549
      %v583 = vpack.c.bf16 %v573, %v573
      %v584 = vpack.c.bf16 %v551, %v551
      %v585 = vpack.c.bf16 %v577, %v577
      %v588 = vunpack.c.l.b16 %v394
      %v589 = vunpack.c.l.b16 %v395
      %v590 = vpack.c.b16 %v589, %v588
      %vm591 = vcmask 130048
      %v593 = vsel %vm591, %v213, 0
      %v596 = vsel %vm591, %v590, 0
      %598 = vmatpush.bf16.xpose.msra.mxu0 0
      %599 = vmatpush.bf16.xpose.msra.mxu0 0
      %600 = vmatpush.bf16.xpose.msra.mxu0 0
      %601 = vmatpush.bf16.xpose.msra.mxu0 0
      %602 = vmatpush.bf16.xpose.msra.mxu0 0
      %603 = vmatpush.bf16.xpose.msra.mxu0 0
      %604 = vmatpush.bf16.xpose.msra.mxu0 0
      %605 = vmatpush.bf16.xpose.msra.mxu0 %v596
      %606 = vmatmul.bf16.gmra.mxu0 %v593
      %v607 = vpop.f32.mrf.mxu0
      %v608 = vadd.f32 0.0, %v607
      %v609 = vpop.f32.mrf.mxu0
      %610 = vdwg.mxu0
      %v613 = vunpack.c.l.b16 %v396
      %v614 = vunpack.c.l.b16 %v397
      %v615 = vpack.c.b16 %v614, %v613
      %v617 = vsel %vm591, %v214, 0
      %v620 = vsel %vm591, %v615, 0
      %622 = vmatpush.bf16.xpose.msra.mxu0 0
      %623 = vmatpush.bf16.xpose.msra.mxu0 0
      %624 = vmatpush.bf16.xpose.msra.mxu0 0
      %625 = vmatpush.bf16.xpose.msra.mxu0 0
      %626 = vmatpush.bf16.xpose.msra.mxu0 0
      %627 = vmatpush.bf16.xpose.msra.mxu0 0
      %628 = vmatpush.bf16.xpose.msra.mxu0 0
      %629 = vmatpush.bf16.xpose.msra.mxu0 %v620
      %630 = vmatmul.bf16.gmra.mxu0 %v617
      %v631 = vpop.f32.mrf.mxu0
      %v632 = vadd.f32 0.0, %v631
      %v633 = vpop.f32.mrf.mxu0
      %634 = vdwg.mxu0
      %v637 = vunpack.c.l.b16 %v398
      %v638 = vunpack.c.l.b16 %v399
      %v639 = vpack.c.b16 %v638, %v637
      %v641 = vsel %vm591, %v215, 0
      %v644 = vsel %vm591, %v639, 0
      %646 = vmatpush.bf16.xpose.msra.mxu0 0
      %647 = vmatpush.bf16.xpose.msra.mxu0 0
      %648 = vmatpush.bf16.xpose.msra.mxu0 0
      %649 = vmatpush.bf16.xpose.msra.mxu0 0
      %650 = vmatpush.bf16.xpose.msra.mxu0 0
      %651 = vmatpush.bf16.xpose.msra.mxu0 0
      %652 = vmatpush.bf16.xpose.msra.mxu0 0
      %653 = vmatpush.bf16.xpose.msra.mxu0 %v644
      %654 = vmatmul.bf16.gmra.mxu0 %v641
      %v655 = vpop.f32.mrf.mxu0
      %v656 = vadd.f32 0.0, %v655
      %v657 = vpop.f32.mrf.mxu0
      %658 = vdwg.mxu0
      %v661 = vunpack.c.l.b16 %v400
      %v662 = vunpack.c.l.b16 %v401
      %v663 = vpack.c.b16 %v662, %v661
      %v665 = vsel %vm591, %v216, 0
      %v668 = vsel %vm591, %v663, 0
      %670 = vmatpush.bf16.xpose.msra.mxu0 0
      %671 = vmatpush.bf16.xpose.msra.mxu0 0
      %672 = vmatpush.bf16.xpose.msra.mxu0 0
      %673 = vmatpush.bf16.xpose.msra.mxu0 0
      %674 = vmatpush.bf16.xpose.msra.mxu0 0
      %675 = vmatpush.bf16.xpose.msra.mxu0 0
      %676 = vmatpush.bf16.xpose.msra.mxu0 0
      %677 = vmatpush.bf16.xpose.msra.mxu0 %v668
      %678 = vmatmul.bf16.gmra.mxu0 %v665
      %v679 = vpop.f32.mrf.mxu0
      %v680 = vadd.f32 0.0, %v679
      %v681 = vpop.f32.mrf.mxu0
      %682 = vdwg.mxu0
      %v683 = vmul.f32 %v608, 0.25
      %v684 = vmul.f32 %v632, 0.25
      %v685 = vmul.f32 %v656, 0.25
      %v686 = vmul.f32 %v680, 0.25
      %vm687 = vcmask 73728
      %v688 = vsel %vm687, %v683, -inf
      %689 = vmax.xlane.f32.xlu0 %v688
      %v690 = vpop.xlane.xlu0 %689
      %v691 = vsel %vm687, %v684, -inf
      %692 = vmax.xlane.f32.xlu0 %v691
      %v693 = vpop.xlane.xlu0 %692
      %v694 = vsel %vm687, %v685, -inf
      %695 = vmax.xlane.f32.xlu0 %v694
      %v696 = vpop.xlane.xlu0 %695
      %v697 = vsel %vm687, %v686, -inf
      %698 = vmax.xlane.f32.xlu0 %v697
      %v699 = vpop.xlane.xlu0 %698
      %v700 = vsub.f32 %v683, %v690
      %v701 = vsub.f32 %v684, %v693
      %v702 = vsub.f32 %v685, %v696
      %v703 = vsub.f32 %v686, %v699
      %v704 = vmul.f32 %v700, 1.442695
      %v705 = vpow.pop %v704
      %v706 = vmul.f32 %v701, 1.442695
      %v707 = vpow.pop %v706
      %v708 = vmul.f32 %v702, 1.442695
      %v709 = vpow.pop %v708
      %v710 = vmul.f32 %v703, 1.442695
      %v711 = vpow.pop %v710
      %v712 = vsel %vm687, %v705, 0.0
      %713 = vadd.xlane.f32.xlu0 %v712
      %v714 = vpop.xlane.xlu0 %713
      %v715 = vsel %vm687, %v707, 0.0
      %716 = vadd.xlane.f32.xlu0 %v715
      %v717 = vpop.xlane.xlu0 %716
      %v718 = vsel %vm687, %v709, 0.0
      %719 = vadd.xlane.f32.xlu0 %v718
      %v720 = vpop.xlane.xlu0 %719
      %v721 = vsel %vm687, %v711, 0.0
      %722 = vadd.xlane.f32.xlu0 %v721
      %v723 = vpop.xlane.xlu0 %722
      %v724 = vrcp.pop %v714
      %v725 = vrcp.pop %v717
      %v726 = vrcp.pop %v720
      %v727 = vrcp.pop %v723
      %v728 = vmul.f32 %v705, %v724
      %v729 = vmul.f32 %v707, %v725
      %v730 = vmul.f32 %v709, %v726
      %v731 = vmul.f32 %v711, %v727
      %v732 = vpack.c.bf16 %v728, %v728
      %v733 = vpack.c.bf16 %v729, %v729
      %v734 = vpack.c.bf16 %v730, %v730
      %v735 = vpack.c.bf16 %v731, %v731
      %v738 = vunpack.c.l.b16 %v578
      %v739 = vunpack.c.l.b16 %v579
      %v740 = vpack.c.b16 %v739, %v738
      %vm741 = vcmask 80896
      %v743 = vsel %vm741, %v732, 0
      %vm745 = vcmask 1044480
      %v747 = vsel %vm745, %v740, 0
      %749 = vmatpush.bf16.msra.mxu0 0
      %750 = vmatpush.bf16.msra.mxu0 0
      %751 = vmatpush.bf16.msra.mxu0 0
      %752 = vmatpush.bf16.msra.mxu0 0
      %753 = vmatpush.bf16.msra.mxu0 0
      %754 = vmatpush.bf16.msra.mxu0 0
      %755 = vmatpush.bf16.msra.mxu0 0
      %756 = vmatpush.bf16.msra.mxu0 %v747
      %757 = vmatmul.bf16.gmra.mxu0 %v743
      %v758 = vpop.f32.mrf.mxu0
      %v759 = vadd.f32 0.0, %v758
      %v760 = vpop.f32.mrf.mxu0
      %761 = vdwg.mxu0
      %v764 = vunpack.c.l.b16 %v580
      %v765 = vunpack.c.l.b16 %v581
      %v766 = vpack.c.b16 %v765, %v764
      %v768 = vsel %vm741, %v733, 0
      %v771 = vsel %vm745, %v766, 0
      %773 = vmatpush.bf16.msra.mxu0 0
      %774 = vmatpush.bf16.msra.mxu0 0
      %775 = vmatpush.bf16.msra.mxu0 0
      %776 = vmatpush.bf16.msra.mxu0 0
      %777 = vmatpush.bf16.msra.mxu0 0
      %778 = vmatpush.bf16.msra.mxu0 0
      %779 = vmatpush.bf16.msra.mxu0 0
      %780 = vmatpush.bf16.msra.mxu0 %v771
      %781 = vmatmul.bf16.gmra.mxu0 %v768
      %v782 = vpop.f32.mrf.mxu0
      %v783 = vadd.f32 0.0, %v782
      %v784 = vpop.f32.mrf.mxu0
      %785 = vdwg.mxu0
      %v788 = vunpack.c.l.b16 %v582
      %v789 = vunpack.c.l.b16 %v583
      %v790 = vpack.c.b16 %v789, %v788
      %v792 = vsel %vm741, %v734, 0
      %v795 = vsel %vm745, %v790, 0
      %797 = vmatpush.bf16.msra.mxu0 0
      %798 = vmatpush.bf16.msra.mxu0 0
      %799 = vmatpush.bf16.msra.mxu0 0
      %800 = vmatpush.bf16.msra.mxu0 0
      %801 = vmatpush.bf16.msra.mxu0 0
      %802 = vmatpush.bf16.msra.mxu0 0
      %803 = vmatpush.bf16.msra.mxu0 0
      %804 = vmatpush.bf16.msra.mxu0 %v795
      %805 = vmatmul.bf16.gmra.mxu0 %v792
      %v806 = vpop.f32.mrf.mxu0
      %v807 = vadd.f32 0.0, %v806
      %v808 = vpop.f32.mrf.mxu0
      %809 = vdwg.mxu0
      %v812 = vunpack.c.l.b16 %v584
      %v813 = vunpack.c.l.b16 %v585
      %v814 = vpack.c.b16 %v813, %v812
      %v816 = vsel %vm741, %v735, 0
      %v819 = vsel %vm745, %v814, 0
      %821 = vmatpush.bf16.msra.mxu0 0
      %822 = vmatpush.bf16.msra.mxu0 0
      %823 = vmatpush.bf16.msra.mxu0 0
      %824 = vmatpush.bf16.msra.mxu0 0
      %825 = vmatpush.bf16.msra.mxu0 0
      %826 = vmatpush.bf16.msra.mxu0 0
      %827 = vmatpush.bf16.msra.mxu0 0
      %828 = vmatpush.bf16.msra.mxu0 %v819
      %829 = vmatmul.bf16.gmra.mxu0 %v816
      %v830 = vpop.f32.mrf.mxu0
      %v831 = vadd.f32 0.0, %v830
      %v832 = vpop.f32.mrf.mxu0
      %833 = vdwg.mxu0
      %v834 = vrot.slane %v807, 4
      %v835 = vsel %vm240, %v834, %v759
      %v837 = vunpack.c.l.s4 1983009808
      %v838 = vunpack.c.0.s8 %v837
      %v839 = vperm.slane %v835, %v838
      %v840 = vrot.slane %v831, 4
      %v841 = vsel %vm240, %v840, %v783
      %v843 = vunpack.c.l.s4 1983009808
      %v844 = vunpack.c.0.s8 %v843
      %v845 = vperm.slane %v841, %v844
      %v846 = vrot.slane %v845, 4
      %v847 = vsel %vm240, %v846, %v839
      %v849 = vunpack.c.l.s4 1934713408
      %v850 = vunpack.c.0.s8 %v849
      %v851 = vperm.slane %v847, %v850
      %v853 = vunpack.c.l.s4 1983009808
      %v854 = vunpack.c.0.s8 %v853
      %v855 = vperm.slane %v851, %v854
      %v856 = vrot.slane %v855, 4
      %v857 = vsel %vm240, 0.0, %v856
      %v859 = vunpack.c.l.s4 1934713408
      %v860 = vunpack.c.0.s8 %v859
      %v861 = vperm.slane %v855, %v860
      %v863 = vunpack.c.l.s4 1934713408
      %v864 = vunpack.c.0.s8 %v863
      %v865 = vperm.slane %v857, %v864
      %v866 = vrot.slane %v861, 4
      %v867 = vsel %vm240, 0.0, %v866
      %v868 = vrot.slane %v865, 4
      %v869 = vsel %vm240, 0.0, %v868
      %871 = vrot.lane.b32.xlu0 %v867, 16
      %v872 = vpop.permute.xlu0 %871
      %875 = vrot.lane.b32.xlu0 %v865, 32
      %v876 = vpop.permute.xlu0 %875
      %879 = vrot.lane.b32.xlu0 %v869, 48
      %v880 = vpop.permute.xlu0 %879
      %v882 = vsel %vm591, %v861, %v872
      %vm883 = vcmask 261120
      %v884 = vsel %vm883, %v882, %v876
      %vm885 = vcmask 392192
      %v886 = vsel %vm885, %v884, %v880
      %vm887 = vcmask 516096
      %888 = vst.msk [vmem:[%s200] sm:$0x1] %vm887, %v886
      %p889 = scmp.lt.s32.totalorder %s14, 1
      %s890 = scalar_select %p889, %s14, 1
      %s891 = scalar_lea.vmem %s3, %s890
      // Predicated region
      $region33: #{transformer_forward.28} parent=31 // pred_check
        %p892 = pneg %p110
      $region34: #{transformer_forward.28} parent=31 // pred_check_branch
        %894 = sbr.rel (%p892) target = $region36
      $region35: #{transformer_forward.28} parent=31 // pred_region
        _
      $region36: #{transformer_forward.28} parent=31 // pred_fallthru
        _
    $region32: #{transformer_forward.28} parent=5 // pred_fallthru
      _
    %p895 = scmp.le.s32.totalorder 2, %s9
    // Predicated region
    $region37: #{transformer_forward.28} parent=5 // pred_check
      %p896 = pneg %p895
    $region38: #{transformer_forward.28} parent=5 // pred_check_branch
      %898 = sbr.rel (%p896) target = $region40
    $region39: #{transformer_forward.28} parent=5 // pred_region
      %s899 = ssub.s32 %s9, 2
      // Predicated region
      $region41: #{transformer_forward.28} parent=39 // pred_check
        %p900 = pneg %p116
      $region42: #{transformer_forward.28} parent=39 // pred_check_branch
        %902 = sbr.rel (%p900) target = $region44
      $region43: #{transformer_forward.28} parent=39 // pred_region
        %p903 = scmp.lt.s32.totalorder %s15, 1
        %s904 = scalar_select %p903, %s15, 1
        %s905 = scalar_lea.vmem %s3, %s904
      $region44: #{transformer_forward.28} parent=39 // pred_fallthru
        _
    $region40: #{transformer_forward.28} parent=5 // pred_fallthru
      _
  $region6: #{transformer_forward.28} parent=0 // loop_footer
    %s13 = sadd.s32 1, %s9
  $region7: #{transformer_forward.28} parent=0 // loop_footer_branch
    %8 = sbr.rel target = $region3
  $region8: #{transformer_forward.28} parent=0 // loop_exit
    _

// kernel: transformer_forward.30
$region0: #{transformer_forward.30}
  #allocation0 [shape = 'u32[]', space=smem, size = 0x4, offset = 0x4, fixed_abs, tag = 'smem constant byte address 0x4 - core index']
  #allocation1 [shape = 'u32[72,128]{1,0:T(1,128)}', space=vmem, size = 0x9000, scoped, tag = 'internal scratch']
  %s0 = inlined_call_operand.vmem [shape: f32[2,64], index: 0, kind: input, shape index: {}]
  %s1 = inlined_call_operand.vmem [shape: f32[1,64], index: 1, kind: input, shape index: {}]
  %s2 = inlined_call_operand.vmem [shape: f32[1,64], index: 2, kind: input, shape index: {}]
  %s3 = inlined_call_operand.vmem [shape: f32[64,256], index: 3, kind: input, shape index: {}]
  %s4 = inlined_call_operand.vmem [shape: f32[1,256], index: 4, kind: input, shape index: {}]
  %s5 = inlined_call_operand.vmem [shape: f32[256,64], index: 5, kind: input, shape index: {}]
  %s6 = inlined_call_operand.vmem [shape: f32[1,64], index: 6, kind: input, shape index: {}]
  %s7 = inlined_call_operand.vmem [shape: f32[2,64], index: 7, kind: output, shape index: {}]
  %s8 = sld [smem:[#allocation0]]
  $region38: #{transformer_forward.30} parent=0
    _
  %s10 = ssub.s32 1, %s8
  %s11 = scalar_select 0, %s10, %s8
  // Predicated region
  $region2: #{transformer_forward.30} parent=0 // pred_check
    _
  $region3: #{transformer_forward.30} parent=0 // pred_check_branch
    %13 = sbr.rel (0) target = $region5
  $region4: #{transformer_forward.30} parent=0 // pred_region
    _
  $region5: #{transformer_forward.30} parent=0 // pred_fallthru
    _
  // Predicated region
  $region6: #{transformer_forward.30} parent=0 // pred_check
    _
  $region7: #{transformer_forward.30} parent=0 // pred_check_branch
    %15 = sbr.rel (0) target = $region9
  $region8: #{transformer_forward.30} parent=0 // pred_region
    _
  $region9: #{transformer_forward.30} parent=0 // pred_fallthru
    _
  // Predicated region
  $region10: #{transformer_forward.30} parent=0 // pred_check
    _
  $region11: #{transformer_forward.30} parent=0 // pred_check_branch
    %17 = sbr.rel (0) target = $region13
  $region12: #{transformer_forward.30} parent=0 // pred_region
    _
  $region13: #{transformer_forward.30} parent=0 // pred_fallthru
    _
  // Predicated region
  $region14: #{transformer_forward.30} parent=0 // pred_check
    _
  $region15: #{transformer_forward.30} parent=0 // pred_check_branch
    %19 = sbr.rel (0) target = $region17
  $region16: #{transformer_forward.30} parent=0 // pred_region
    _
  $region17: #{transformer_forward.30} parent=0 // pred_fallthru
    _
  // Predicated region
  $region18: #{transformer_forward.30} parent=0 // pred_check
    _
  $region19: #{transformer_forward.30} parent=0 // pred_check_branch
    %21 = sbr.rel (0) target = $region21
  $region20: #{transformer_forward.30} parent=0 // pred_region
    _
  $region21: #{transformer_forward.30} parent=0 // pred_fallthru
    _
  // Predicated region
  $region22: #{transformer_forward.30} parent=0 // pred_check
    _
  $region23: #{transformer_forward.30} parent=0 // pred_check_branch
    %23 = sbr.rel (0) target = $region25
  $region24: #{transformer_forward.30} parent=0 // pred_region
    _
  $region25: #{transformer_forward.30} parent=0 // pred_fallthru
    _
  // Predicated region
  $region26: #{transformer_forward.30} parent=0 // pred_check
    _
  $region27: #{transformer_forward.30} parent=0 // pred_check_branch
    %25 = sbr.rel (0) target = $region29
  $region28: #{transformer_forward.30} parent=0 // pred_region
    _
  $region29: #{transformer_forward.30} parent=0 // pred_fallthru
    _
  %v27 = vld [vmem:[%s0] sm:$0x3]
  %vm28 = vcmask 517120
  %v29 = vsel %vm28, %v27, 0.0
  %30 = vadd.xlane.f32.xlu0 %v29
  %v31 = vpop.xlane.xlu0 %30
  %v32 = vrcp.pop 64.0
  %v33 = vmul.f32 64.0, %v32
  %v34 = vsub.f32 1.0, %v33
  %v35 = vmul.f32 %v32, %v34
  %v36 = vadd.f32 %v32, %v35
  %vm37 = vweird.f32 %v32
  %v38 = vsel %vm37, %v32, %v36
  %v39 = vmul.f32 %v31, %v38
  %v40 = vsub.f32 %v27, %v39
  %v41 = vmul.f32 %v40, %v40
  %v42 = vsel %vm28, %v41, 0.0
  %43 = vadd.xlane.f32.xlu0 %v42
  %v44 = vpop.xlane.xlu0 %43
  %v45 = vmul.f32 %v44, %v38
  %v46 = vadd.f32 %v45, 1e-05
  %v47 = vrsqrt.pop %v46
  %v48 = vmul.f32 %v47, %v46
  %v49 = vmul.f32 %v48, %v47
  %v50 = vmul.f32 0.5, %v49
  %v51 = vsub.f32 1.5, %v50
  %v52 = vmul.f32 %v47, %v51
  %vm53 = vweird.f32 %v46
  %vm54 = vweird.f32 %v47
  %vm55 = vmor %vm53, %vm54
  %v56 = vsel %vm55, %v47, %v52
  %v57 = vmul.f32 %v40, %v56
  %v58 = vld [vmem:[%s1] sm:$0x1]
  %v60 = vperm.slane %v58, 0
  %v62 = vmul.f32 %v57, %v60
  %v63 = vld [vmem:[%s2] sm:$0x1]
  %v65 = vperm.slane %v63, 0
  %v67 = vadd.f32 %v62, %v65
  %v68 = vpack.c.bf16 %v67, %v67
  %v69 = vld [vmem:[%s3] sm:$0xff]
  %v70 = vld [vmem:[%s3 + $0x8] sm:$0xff]
  %v71 = vld [vmem:[%s3 + $0x10] sm:$0xff]
  %v72 = vld [vmem:[%s3 + $0x18] sm:$0xff]
  %v73 = vld [vmem:[%s3 + $0x20] sm:$0xff]
  %v74 = vld [vmem:[%s3 + $0x28] sm:$0xff]
  %v75 = vld [vmem:[%s3 + $0x30] sm:$0xff]
  %v76 = vld [vmem:[%s3 + $0x38] sm:$0xff]
  %v77 = vld [vmem:[%s3 + $0x40] sm:$0xff]
  %v78 = vld [vmem:[%s3 + $0x48] sm:$0xff]
  %v79 = vld [vmem:[%s3 + $0x50] sm:$0xff]
  %v80 = vld [vmem:[%s3 + $0x58] sm:$0xff]
  %v81 = vld [vmem:[%s3 + $0x60] sm:$0xff]
  %v82 = vld [vmem:[%s3 + $0x68] sm:$0xff]
  %v83 = vld [vmem:[%s3 + $0x70] sm:$0xff]
  %v84 = vld [vmem:[%s3 + $0x78] sm:$0xff]
  %v85 = vpack.c.bf16 %v71, %v69
  %v86 = vpack.c.bf16 %v72, %v70
  %v87 = vpack.c.bf16 %v75, %v73
  %v88 = vpack.c.bf16 %v76, %v74
  %v89 = vpack.c.bf16 %v79, %v77
  %v90 = vpack.c.bf16 %v80, %v78
  %v91 = vpack.c.bf16 %v83, %v81
  %v92 = vpack.c.bf16 %v84, %v82
  %v93 = vld [vmem:[%s4] sm:$0x3]
  %v95 = vperm.slane %v93, 0
  %v96 = vperm.slane %v93, 1
  %vm99 = vcmask 523264
  %v101 = vsel %vm99, %v68, 0
  %103 = vmatpush.bf16.msra.mxu0 0
  %104 = vmatpush.bf16.msra.mxu0 0
  %105 = vmatpush.bf16.msra.mxu0 0
  %106 = vmatpush.bf16.msra.mxu0 0
  %107 = vmatpush.bf16.msra.mxu0 %v91
  %108 = vmatpush.bf16.msra.mxu0 %v89
  %109 = vmatpush.bf16.msra.mxu0 %v87
  %110 = vmatpush.bf16.msra.mxu0 %v85
  %111 = vmatmul.bf16.gmra.mxu0 %v101
  %v112 = vpop.f32.mrf.mxu0
  %v113 = vadd.f32 %v95, %v112
  %v114 = vpop.f32.mrf.mxu0
  %115 = vdwg.mxu0
  %116 = vmatpush.bf16.msra.mxu0 0
  %117 = vmatpush.bf16.msra.mxu0 0
  %118 = vmatpush.bf16.msra.mxu0 0
  %119 = vmatpush.bf16.msra.mxu0 0
  %120 = vmatpush.bf16.msra.mxu0 %v92
  %121 = vmatpush.bf16.msra.mxu0 %v90
  %122 = vmatpush.bf16.msra.mxu0 %v88
  %123 = vmatpush.bf16.msra.mxu0 %v86
  %124 = vmatmul.bf16.gmra.mxu0 %v101
  %v125 = vpop.f32.mrf.mxu0
  %v126 = vadd.f32 %v96, %v125
  %v127 = vpop.f32.mrf.mxu0
  %128 = vdwg.mxu0
  %v129 = vmul.f32 %v113, 1.702
  %v130 = vmul.f32 %v126, 1.702
  %v131 = vxor.u32 %v129, 2147483648
  %v132 = vxor.u32 %v130, 2147483648
  %v133 = vmul.f32 %v131, 1.442695
  %v134 = vpow.pop %v133
  %v135 = vmul.f32 %v132, 1.442695
  %v136 = vpow.pop %v135
  %v137 = vadd.f32 %v134, 1.0
  %v138 = vadd.f32 %v136, 1.0
  %v139 = vrcp.pop %v137
  %v140 = vmul.f32 %v137, %v139
  %v141 = vsub.f32 1.0, %v140
  %v142 = vmul.f32 %v139, %v141
  %v143 = vadd.f32 %v139, %v142
  %vm144 = vweird.f32 %v137
  %vm145 = vweird.f32 %v139
  %vm146 = vmor %vm144, %vm145
  %v147 = vsel %vm146, %v139, %v143
  %v148 = vand.u32 2147483647, %v137
  %vm149 = vcmp.eq.f32.partialorder %v148, 8.507059e+37
  %v150 = vand.u32 %v137, 2147483648
  %v151 = vor.u32 1.1754944e-38, %v150
  %v152 = vsel %vm149, %v151, %v147
  %v153 = vmul.f32 1.0, %v152
  %v154 = vrcp.pop %v138
  %v155 = vmul.f32 %v138, %v154
  %v156 = vsub.f32 1.0, %v155
  %v157 = vmul.f32 %v154, %v156
  %v158 = vadd.f32 %v154, %v157
  %vm159 = vweird.f32 %v138
  %vm160 = vweird.f32 %v154
  %vm161 = vmor %vm159, %vm160
  %v162 = vsel %vm161, %v154, %v158
  %v163 = vand.u32 2147483647, %v138
  %vm164 = vcmp.eq.f32.partialorder %v163, 8.507059e+37
  %v165 = vand.u32 %v138, 2147483648
  %v166 = vor.u32 1.1754944e-38, %v165
  %v167 = vsel %vm164, %v166, %v162
  %v168 = vmul.f32 1.0, %v167
  %v169 = vmul.f32 %v113, %v153
  %v170 = vmul.f32 %v126, %v168
  %v171 = vpack.c.bf16 %v169, %v169
  %v172 = vpack.c.bf16 %v170, %v170
  %v173 = vld [vmem:[%s5] sm:$0xff]
  %v174 = vld [vmem:[%s5 + $0x8] sm:$0xff]
  %v175 = vld [vmem:[%s5 + $0x10] sm:$0xff]
  %v176 = vld [vmem:[%s5 + $0x18] sm:$0xff]
  %v177 = vld [vmem:[%s5 + $0x20] sm:$0xff]
  %v178 = vld [vmem:[%s5 + $0x28] sm:$0xff]
  %v179 = vld [vmem:[%s5 + $0x30] sm:$0xff]
  %v180 = vld [vmem:[%s5 + $0x38] sm:$0xff]
  %v181 = vld [vmem:[%s5 + $0x40] sm:$0xff]
  %v182 = vld [vmem:[%s5 + $0x48] sm:$0xff]
  %v183 = vld [vmem:[%s5 + $0x50] sm:$0xff]
  %v184 = vld [vmem:[%s5 + $0x58] sm:$0xff]
  %v185 = vld [vmem:[%s5 + $0x60] sm:$0xff]
  %v186 = vld [vmem:[%s5 + $0x68] sm:$0xff]
  %v187 = vld [vmem:[%s5 + $0x70] sm:$0xff]
  %v188 = vld [vmem:[%s5 + $0x78] sm:$0xff]
  %v189 = vld [vmem:[%s5 + $0x80] sm:$0xff]
  %v190 = vld [vmem:[%s5 + $0x88] sm:$0xff]
  %v191 = vld [vmem:[%s5 + $0x90] sm:$0xff]
  %v192 = vld [vmem:[%s5 + $0x98] sm:$0xff]
  %v193 = vld [vmem:[%s5 + $0xa0] sm:$0xff]
  %v194 = vld [vmem:[%s5 + $0xa8] sm:$0xff]
  %v195 = vld [vmem:[%s5 + $0xb0] sm:$0xff]
  %v196 = vld [vmem:[%s5 + $0xb8] sm:$0xff]
  %v197 = vld [vmem:[%s5 + $0xc0] sm:$0xff]
  %v198 = vld [vmem:[%s5 + $0xc8] sm:$0xff]
  %v199 = vld [vmem:[%s5 + $0xd0] sm:$0xff]
  %v200 = vld [vmem:[%s5 + $0xd8] sm:$0xff]
  %v201 = vld [vmem:[%s5 + $0xe0] sm:$0xff]
  %v202 = vld [vmem:[%s5 + $0xe8] sm:$0xff]
  %v203 = vld [vmem:[%s5 + $0xf0] sm:$0xff]
  %v204 = vld [vmem:[%s5 + $0xf8] sm:$0xff]
  %v205 = vpack.c.bf16 %v174, %v173
  %v206 = vpack.c.bf16 %v176, %v175
  %v207 = vpack.c.bf16 %v178, %v177
  %v208 = vpack.c.bf16 %v180, %v179
  %v209 = vpack.c.bf16 %v182, %v181
  %v210 = vpack.c.bf16 %v184, %v183
  %v211 = vpack.c.bf16 %v186, %v185
  %v212 = vpack.c.bf16 %v188, %v187
  %v213 = vpack.c.bf16 %v190, %v189
  %v214 = vpack.c.bf16 %v192, %v191
  %v215 = vpack.c.bf16 %v194, %v193
  %v216 = vpack.c.bf16 %v196, %v195
  %v217 = vpack.c.bf16 %v198, %v197
  %v218 = vpack.c.bf16 %v200, %v199
  %v219 = vpack.c.bf16 %v202, %v201
  %v220 = vpack.c.bf16 %v204, %v203
  %v221 = vld [vmem:[%s6] sm:$0x1]
  %v223 = vperm.slane %v221, 0
  %225 = vmatpush.bf16.msra.mxu0 %v212
  %226 = vmatpush.bf16.msra.mxu0 %v211
  %227 = vmatpush.bf16.msra.mxu0 %v210
  %228 = vmatpush.bf16.msra.mxu0 %v209
  %229 = vmatpush.bf16.msra.mxu0 %v208
  %230 = vmatpush.bf16.msra.mxu0 %v207
  %231 = vmatpush.bf16.msra.mxu0 %v206
  %232 = vmatpush.bf16.msra.mxu0 %v205
  %233 = vmatmul.bf16.gmra.mxu0 %v171
  %v234 = vpop.f32.mrf.mxu0
  %v235 = vadd.f32 %v223, %v234
  %v236 = vpop.f32.mrf.mxu0
  %237 = vdwg.mxu0
  %238 = vmatpush.bf16.msra.mxu0 %v220
  %239 = vmatpush.bf16.msra.mxu0 %v219
  %240 = vmatpush.bf16.msra.mxu0 %v218
  %241 = vmatpush.bf16.msra.mxu0 %v217
  %242 = vmatpush.bf16.msra.mxu0 %v216
  %243 = vmatpush.bf16.msra.mxu0 %v215
  %244 = vmatpush.bf16.msra.mxu0 %v214
  %245 = vmatpush.bf16.msra.mxu0 %v213
  %246 = vmatmul.bf16.gmra.mxu0 %v172
  %v247 = vpop.f32.mrf.mxu0
  %v248 = vadd.f32 %v235, %v247
  %v249 = vpop.f32.mrf.mxu0
  %250 = vdwg.mxu0
  %v251 = vadd.f32 %v27, %v248
  %252 = vst.msk [vmem:[%s7] sm:$0x3] %vm28, %v251
  // Predicated region
  $region30: #{transformer_forward.30} parent=0 // pred_check
    _
  $region31: #{transformer_forward.30} parent=0 // pred_check_branch
    %254 = sbr.rel (0) target = $region33
  $region32: #{transformer_forward.30} parent=0 // pred_region
    _
  $region33: #{transformer_forward.30} parent=0 // pred_fallthru
    _
  // Predicated region
  $region34: #{transformer_forward.30} parent=0 // pred_check
    _
  $region35: #{transformer_forward.30} parent=0 // pred_check_branch
    %256 = sbr.rel (0) target = $region37
  $region36: #{transformer_forward.30} parent=0 // pred_region
    _
  $region37: #{transformer_forward.30} parent=0 // pred_fallthru
    _

// kernel: transformer_forward.41
$region0: #{transformer_forward.41}
  #allocation0 [shape = 'u32[]', space=smem, size = 0x4, offset = 0x4, fixed_abs, tag = 'smem constant byte address 0x4 - core index']
  #allocation1 [shape = 'u32[72,128]{1,0:T(1,128)}', space=vmem, size = 0x9000, scoped, tag = 'internal scratch']
  %s0 = inlined_call_operand.vmem [shape: f32[2,2,5,64], index: 0, kind: input, shape index: {}]
  %s1 = inlined_call_operand.vmem [shape: f32[2,1,64], index: 1, kind: input, shape index: {}]
  %s2 = inlined_call_operand.vmem [shape: f32[1,1,64], index: 2, kind: input, shape index: {}]
  %s3 = inlined_call_operand.hbm [shape: f32[2,1,64], index: 3, kind: output, shape index: {0}]
  %s4 = inlined_call_operand.vmem [shape: f32[2,2,5,64], index: 4, kind: output, shape index: {1}]
  %5 = xla_tuple %s3, %s4
  %s6 = sld [smem:[#allocation0]]
  $region53: #{transformer_forward.41} parent=0
    _
  %s8 = ssub.s32 1, %s6
  %s9 = scalar_select 0, %s8, %s6
  $region1: #{transformer_forward.41} parent=0
    #allocation2 [shape = 'u8[1024]{0}', space=vmem, size = 0x400, scoped, tag = 'output window, operand 0']
    #allocation3 [shape = 's32[2]{0}', space=sflag, size = 0x8, scoped, tag = 'scoped memory for transformer_forward.41']
    %10 = vsyncpa [#allocation3], 0
    %s11 = scalar_lea.sflag [#allocation3], 1
    %12 = vsyncpa %s11, 0
    loop: start=0, step=1, limit=4
    $region2: #{transformer_forward.41} parent=1 // loop_pre_header
      _
    $region3: #{transformer_forward.41} parent=1 // loop_header
      %s14 = sphi 0, %s18
      %p15 = scmp.ge.s32.totalorder %s14, 4
      %s24 = sphi 0, %s26
      %s27 = sphi 0, %s24
      %s28 = sphi 0, %s27
      %s44 = sphi 0, %s28
      %s50 = sphi 0, %s52
      %s53 = sphi 0, %s50
      %s54 = sphi 0, %s53
      %s70 = sphi 0, %s54
      %s74 = sphi 0, %s74
      %s76 = sphi 0, %s74
      %s77 = sphi 0, %s76
      %s91 = sphi 0, %s77
      %s97 = sphi 0, %s99
      %s100 = sphi 0, %s97
      %s101 = sphi 0, %s100
      %s117 = sphi 0, %s101
      %s123 = sphi 0, %s125
      %s126 = sphi 0, %s123
      %s127 = sphi 0, %s126
      %s143 = sphi 0, %s127
    $region4: #{transformer_forward.41} parent=1 // loop_header_branch
      %17 = sbr.rel (%p15) target = $region8
    $region5: #{transformer_forward.41} parent=1 // loop_body
      %s19 = ssub.s32 %s14, 1
      %s20 = ssub.s32 %s14, 2
      %s21 = sadd.s32 %s14, 1
      %s22 = ssub.s32 %s14, %s21
      %p23 = scmp.eq.s32.totalorder %s22, 0
      %s25 = sadd.s32 %s24, 1
      %s26 = scalar_select %p23, %s24, %s25
      %p29 = pneg %p23
      %p30 = scmp.eq.s32.totalorder %s14, 1
      %p31 = por %p29, %p30
      %p32 = scmp.ne.s32.totalorder %s24, %s27
      %p33 = scmp.eq.s32.totalorder %s14, 0
      %p34 = por %p32, %p33
      %p35 = scmp.ne.s32.totalorder %s24, %s27
      %p36 = scmp.eq.s32.totalorder %s19, 1
      %p37 = por %p35, %p36
      %p38 = scmp.ne.s32.totalorder %s27, %s28
      %p39 = scmp.eq.s32.totalorder %s19, 0
      %p40 = por %p38, %p39
      %p41 = scmp.ne.s32.totalorder %s27, %s28
      %p42 = scmp.eq.s32.totalorder %s20, 1
      %p43 = por %p41, %p42
      %p45 = scmp.ne.s32.totalorder %s28, %s44
      %p46 = scmp.eq.s32.totalorder %s20, 0
      %p47 = por %p45, %p46
      %s48 = ssub.s32 %s14, %s21
      %p49 = scmp.eq.s32.totalorder %s48, 0
      %s51 = sadd.s32 %s50, 1
      %s52 = scalar_select %p49, %s50, %s51
      %p55 = pneg %p49
      %p56 = scmp.eq.s32.totalorder %s14, 1
      %p57 = por %p55, %p56
      %p58 = scmp.ne.s32.totalorder %s50, %s53
      %p59 = scmp.eq.s32.totalorder %s14, 0
      %p60 = por %p58, %p59
      %p61 = scmp.ne.s32.totalorder %s50, %s53
      %p62 = scmp.eq.s32.totalorder %s19, 1
      %p63 = por %p61, %p62
      %p64 = scmp.ne.s32.totalorder %s53, %s54
      %p65 = scmp.eq.s32.totalorder %s19, 0
      %p66 = por %p64, %p65
      %p67 = scmp.ne.s32.totalorder %s53, %s54
      %p68 = scmp.eq.s32.totalorder %s20, 1
      %p69 = por %p67, %p68
      %p71 = scmp.ne.s32.totalorder %s54, %s70
      %p72 = scmp.eq.s32.totalorder %s20, 0
      %p73 = por %p71, %p72
      %s75 = sadd.s32 %s74, 1
      %p78 = scmp.eq.s32.totalorder %s14, 1
      %p79 = scmp.ne.s32.totalorder %s74, %s76
      %p80 = scmp.eq.s32.totalorder %s14, 0
      %p81 = por %p79, %p80
      %p82 = scmp.ne.s32.totalorder %s74, %s76
      %p83 = scmp.eq.s32.totalorder %s19, 1
      %p84 = por %p82, %p83
      %p85 = scmp.ne.s32.totalorder %s76, %s77
      %p86 = scmp.eq.s32.totalorder %s19, 0
      %p87 = por %p85, %p86
      %p88 = scmp.ne.s32.totalorder %s76, %s77
      %p89 = scmp.eq.s32.totalorder %s20, 1
      %p90 = por %p88, %p89
      %p92 = scmp.ne.s32.totalorder %s77, %s91
      %p93 = scmp.eq.s32.totalorder %s20, 0
      %p94 = por %p92, %p93
      %s95 = ssub.s32 %s14, %s21
      %p96 = scmp.eq.s32.totalorder %s95, 0
      %s98 = sadd.s32 %s97, 1
      %s99 = scalar_select %p96, %s97, %s98
      %p102 = pneg %p96
      %p103 = scmp.eq.s32.totalorder %s14, 1
      %p104 = por %p102, %p103
      %p105 = scmp.ne.s32.totalorder %s97, %s100
      %p106 = scmp.eq.s32.totalorder %s14, 0
      %p107 = por %p105, %p106
      %p108 = scmp.ne.s32.totalorder %s97, %s100
      %p109 = scmp.eq.s32.totalorder %s19, 1
      %p110 = por %p108, %p109
      %p111 = scmp.ne.s32.totalorder %s100, %s101
      %p112 = scmp.eq.s32.totalorder %s19, 0
      %p113 = por %p111, %p112
      %p114 = scmp.ne.s32.totalorder %s100, %s101
      %p115 = scmp.eq.s32.totalorder %s20, 1
      %p116 = por %p114, %p115
      %p118 = scmp.ne.s32.totalorder %s101, %s117
      %p119 = scmp.eq.s32.totalorder %s20, 0
      %p120 = por %p118, %p119
      %s121 = ssub.s32 %s14, %s21
      %p122 = scmp.eq.s32.totalorder %s121, 0
      %s124 = sadd.s32 %s123, 1
      %s125 = scalar_select %p122, %s123, %s124
      %p128 = pneg %p122
      %p129 = scmp.eq.s32.totalorder %s14, 1
      %p130 = por %p128, %p129
      %p131 = scmp.ne.s32.totalorder %s123, %s126
      %p132 = scmp.eq.s32.totalorder %s14, 0
      %p133 = por %p131, %p132
      %p134 = scmp.ne.s32.totalorder %s123, %s126
      %p135 = scmp.eq.s32.totalorder %s19, 1
      %p136 = por %p134, %p135
      %p137 = scmp.ne.s32.totalorder %s126, %s127
      %p138 = scmp.eq.s32.totalorder %s19, 0
      %p139 = por %p137, %p138
      %p140 = scmp.ne.s32.totalorder %s126, %s127
      %p141 = scmp.eq.s32.totalorder %s20, 1
      %p142 = por %p140, %p141
      %p144 = scmp.ne.s32.totalorder %s127, %s143
      %p145 = scmp.eq.s32.totalorder %s20, 0
      %p146 = por %p144, %p145
      %p147 = scmp.le.s32.totalorder 1, %s14
      %p148 = scmp.lt.s32.totalorder %s14, 3
      %p149 = pnand %p147, %p148
      %p150 = pneg %p149
      // Predicated region
      $region9: #{transformer_forward.41} parent=5 // pred_check
        _
      $region10: #{transformer_forward.41} parent=5 // pred_check_branch
        %152 = sbr.rel (%p149) target = $region12
      $region11: #{transformer_forward.41} parent=5 // pred_region
        %s153 = ssub.s32 %s14, 1
        // Predicated region
        $region13: #{transformer_forward.41} parent=11 // pred_check
          %p154 = pneg %p87
        $region14: #{transformer_forward.41} parent=11 // pred_check_branch
          %156 = sbr.rel (%p154) target = $region16
        $region15: #{transformer_forward.41} parent=11 // pred_region
          _
        $region16: #{transformer_forward.41} parent=11 // pred_fallthru
          _
      $region12: #{transformer_forward.41} parent=5 // pred_fallthru
        _
      %p157 = scmp.lt.s32.totalorder %s14, 2
      // Predicated region
      $region17: #{transformer_forward.41} parent=5 // pred_check
        %p158 = pneg %p157
      $region18: #{transformer_forward.41} parent=5 // pred_check_branch
        %160 = sbr.rel (%p158) target = $region20
      $region19: #{transformer_forward.41} parent=5 // pred_region
        // Predicated region
        $region21: #{transformer_forward.41} parent=19 // pred_check
          %p161 = pneg %p34
        $region22: #{transformer_forward.41} parent=19 // pred_check_branch
          %163 = sbr.rel (%p161) target = $region24
        $region23: #{transformer_forward.41} parent=19 // pred_region
          %p164 = scmp.lt.s32.totalorder %s14, 1
          %s165 = scalar_select %p164, %s14, 1
          %s166 = smul.addr %s165, 2
          %s167 = smul.addr %s166, 8
          %s168 = scalar_lea.vmem %s0, %s167
        $region24: #{transformer_forward.41} parent=19 // pred_fallthru
          _
        // Predicated region
        $region25: #{transformer_forward.41} parent=19 // pred_check
          %p169 = pneg %p60
        $region26: #{transformer_forward.41} parent=19 // pred_check_branch
          %171 = sbr.rel (%p169) target = $region28
        $region27: #{transformer_forward.41} parent=19 // pred_region
          %p172 = scmp.lt.s32.totalorder %s14, 1
          %s173 = scalar_select %p172, %s14, 1
          %s174 = scalar_lea.vmem %s1, %s173
        $region28: #{transformer_forward.41} parent=19 // pred_fallthru
          _
      $region20: #{transformer_forward.41} parent=5 // pred_fallthru
        _
      %p175 = scmp.le.s32.totalorder 1, %s14
      %p176 = scmp.lt.s32.totalorder %s14, 3
      %p177 = pnand %p175, %p176
      %p178 = pneg %p177
      // Predicated region
      $region29: #{transformer_forward.41} parent=5 // pred_check
        _
      $region30: #{transformer_forward.41} parent=5 // pred_check_branch
        %180 = sbr.rel (%p177) target = $region32
      $region31: #{transformer_forward.41} parent=5 // pred_region
        %s181 = ssub.s32 %s14, 1
        %p182 = scmp.lt.s32.totalorder %s19, 1
        %s183 = scalar_select %p182, %s19, 1
        %s184 = smul.addr %s183, 2
        %s185 = smul.addr %s184, 8
        %s186 = scalar_lea.vmem %s0, %s185
        %p187 = pneg %p40
        %p188 = pneg %p37
        %p189 = scmp.lt.s32.totalorder %s19, 1
        %s190 = scalar_select %p189, %s19, 1
        %s191 = scalar_lea.vmem %s1, %s190
        %p192 = pneg %p66
        %p193 = pneg %p63
        %p194 = pneg %p87
        %p195 = pneg %p84
        %p196 = pneg %p113
        %p197 = pneg %p110
        %s198 = sand.u32 %s100, 1
        %s199 = scalar_lea.sflag [#allocation3], %s198
        %s200 = sand.u32 %s100, 1
        %s201 = scalar_lea.vmem [#allocation2], %s200
        %p202 = pneg %p139
        %p203 = pneg %p136
        %p204 = scmp.lt.s32.totalorder %s19, 1
        %s205 = scalar_select %p204, %s19, 1
        %s206 = smul.addr %s205, 2
        %s207 = smul.addr %s206, 8
        %s208 = scalar_lea.vmem %s4, %s207
        %p209 = scmp.lt.s32.totalorder %s19, 1
        %s210 = scalar_select %p209, %s19, 1
        %s211 = smul.addr %s210, 2
        %s212 = smul.addr %s211, 8
        %s213 = scalar_lea.vmem %s0, %s212
        %p214 = scmp.lt.s32.totalorder %s19, 1
        %s215 = scalar_select %p214, %s19, 1
        %s216 = scalar_lea.vmem %s1, %s215
        %p217 = scmp.lt.s32.totalorder %s19, 1
        %s218 = scalar_select %p217, %s19, 1
        %s219 = smul.addr %s218, 2
        %s220 = smul.addr %s219, 8
        %s221 = scalar_lea.vmem %s4, %s220
        %v222 = vld [vmem:[%s2] sm:$0x1]
        %v223 = vxor.u32 %v222, 2147483648
        %v224 = vmul.f32 %v223, 1.442695
        %v225 = vpow.pop %v224
        %v226 = vadd.f32 %v225, 1.0
        %v227 = vrcp.pop %v226
        %v228 = vmul.f32 %v226, %v227
        %v229 = vsub.f32 1.0, %v228
        %v230 = vmul.f32 %v227, %v229
        %v231 = vadd.f32 %v227, %v230
        %vm232 = vweird.f32 %v226
        %vm233 = vweird.f32 %v227
        %vm234 = vmor %vm232, %vm233
        %v235 = vsel %vm234, %v227, %v231
        %v236 = vand.u32 2147483647, %v226
        %vm237 = vcmp.eq.f32.partialorder %v236, 8.507059e+37
        %v238 = vand.u32 %v226, 2147483648
        %v239 = vor.u32 1.1754944e-38, %v238
        %v240 = vsel %vm237, %v239, %v235
        %v241 = vmul.f32 1.0, %v240
        %v242 = vld [vmem:[%s213] sm:$0x1f]
        %v243 = vld [vmem:[%s213 + $0x8] sm:$0x1f]
        %v244 = vld [vmem:[%s216] sm:$0x1]
        %v247 = vrot.slane %v243, 7
        %vm248 = vcmask 1041409
        %v249 = vsel %vm248, %v247, %v242
        %vm251 = vcmask 517120
        %v252 = vsel %vm251, %v249, 0.0
        %v253 = vrot.slane %v252, 4
        %v254 = vadd.f32 %v252, %v253
        %v255 = vrot.slane %v254, 2
        %v256 = vadd.f32 %v254, %v255
        %v257 = vrot.slane %v256, 1
        %v258 = vadd.f32 %v256, %v257
        %v259 = vrcp.pop 2.0
        %v260 = vmul.f32 2.0, %v259
        %v261 = vsub.f32 1.0, %v260
        %v262 = vmul.f32 %v259, %v261
        %v263 = vadd.f32 %v259, %v262
        %vm264 = vweird.f32 %v259
        %v265 = vsel %vm264, %v259, %v263
        %v266 = vmul.f32 %v258, %v265
        %v267 = vsub.f32 1.0, %v241
        %v268 = vmul.f32 %v267, %v244
        %v269 = vmul.f32 %v241, %v266
        %v270 = vadd.f32 %v268, %v269
        %vm271 = vcmask 516096
        %272 = vst.msk [vmem:[%s201] sm:$0x1] %vm271, %v270
        %v274 = vperm.slane %v241, 0
        %v276 = vmul.f32 %v274, %v242
        %v277 = vmul.f32 %v274, %v243
        %v279 = vperm.slane %v268, 0
        %v281 = vadd.f32 %v279, %v276
        %v282 = vadd.f32 %v279, %v277
        %vm283 = vcmask 520192
        %284 = vst.msk [vmem:[%s221] sm:$0x1f] %vm283, %v281
        %285 = vst.msk [vmem:[%s221 + $0x8] sm:$0x1f] %vm283, %v282
        %s286 = sand.u32 %s100, 1
        %s287 = scalar_lea.sflag [#allocation3], %s286
        %s288 = sand.u32 %s100, 1
        %s289 = scalar_lea.vmem [#allocation2], %s288
        %p290 = scmp.lt.s32.totalorder %s19, 1
        %s291 = scalar_select %p290, %s19, 1
        %s292 = smul.addr %s291, 2
        %s293 = smul.addr %s292, 8
        %s294 = scalar_lea.vmem %s4, %s293
        // Predicated region
        $region33: #{transformer_forward.41} parent=31 // pred_check
          %p295 = pneg %p110
        $region34: #{transformer_forward.41} parent=31 // pred_check_branch
          %297 = sbr.rel (%p295) target = $region36
        $region35: #{transformer_forward.41} parent=31 // pred_region
          %299 = vsyncadd %s287, 0
          %s300 = scalar_lea.hbm %s3, %s19
          %s302 = sshll.u32 %s289, 4
          %s303 = int_to_ptr.vmem [resolvable:$true] %s302
          %s304 = sshll.u32 %s300, 4
          %s305 = int_to_ptr.hbm [resolvable:$true] %s304
          %307 = dma.vmem_to_hbm [thread:$0]  %s303, 16, %s305, %s287
        $region36: #{transformer_forward.41} parent=31 // pred_fallthru
          _
        // Predicated region
        $region37: #{transformer_forward.41} parent=31 // pred_check
          %p308 = pneg %p136
        $region38: #{transformer_forward.41} parent=31 // pred_check_branch
          %310 = sbr.rel (%p308) target = $region40
        $region39: #{transformer_forward.41} parent=31 // pred_region
          _
        $region40: #{transformer_forward.41} parent=31 // pred_fallthru
          _
      $region32: #{transformer_forward.41} parent=5 // pred_fallthru
        _
      %p311 = scmp.le.s32.totalorder 2, %s14
      // Predicated region
      $region41: #{transformer_forward.41} parent=5 // pred_check
        %p312 = pneg %p311
      $region42: #{transformer_forward.41} parent=5 // pred_check_branch
        %314 = sbr.rel (%p312) target = $region44
      $region43: #{transformer_forward.41} parent=5 // pred_region
        %s315 = ssub.s32 %s14, 2
        // Predicated region
        $region45: #{transformer_forward.41} parent=43 // pred_check
          %p316 = pneg %p116
        $region46: #{transformer_forward.41} parent=43 // pred_check_branch
          %318 = sbr.rel (%p316) target = $region48
        $region47: #{transformer_forward.41} parent=43 // pred_region
          %s319 = sand.u32 %s101, 1
          %s320 = scalar_lea.sflag [#allocation3], %s319
          %s321 = sand.u32 %s101, 1
          %s322 = scalar_lea.vmem [#allocation2], %s321
          %324 = dma.done %s320, 16
        $region48: #{transformer_forward.41} parent=43 // pred_fallthru
          _
        // Predicated region
        $region49: #{transformer_forward.41} parent=43 // pred_check
          %p325 = pneg %p142
        $region50: #{transformer_forward.41} parent=43 // pred_check_branch
          %327 = sbr.rel (%p325) target = $region52
        $region51: #{transformer_forward.41} parent=43 // pred_region
          %p328 = scmp.lt.s32.totalorder %s20, 1
          %s329 = scalar_select %p328, %s20, 1
          %s330 = smul.addr %s329, 2
          %s331 = smul.addr %s330, 8
          %s332 = scalar_lea.vmem %s4, %s331
        $region52: #{transformer_forward.41} parent=43 // pred_fallthru
          _
      $region44: #{transformer_forward.41} parent=5 // pred_fallthru
        _
    $region6: #{transformer_forward.41} parent=1 // loop_footer
      %s18 = sadd.s32 1, %s14
    $region7: #{transformer_forward.41} parent=1 // loop_footer_branch
      %13 = sbr.rel target = $region3
    $region8: #{transformer_forward.41} parent=1 // loop_exit
      _
    %333 = vsyncpa [#allocation3], 1
    %s334 = scalar_lea.sflag [#allocation3], 1
    %335 = vsyncpa %s334, 1

</llo_original>
